<compile_context>
chip_gen: v6e
topology: v6e:2x2x1
jax: 0.10.0
libtpu: 0.0.40
codegen_flags: <defaults>
</compile_context>

<pallas_src>
import jax
import jax.numpy as jnp
import numpy as np
from jax.experimental import pallas as pl
from jax.experimental.pallas import tpu as pltpu

LORDER = 20


# ---------------------------------------------------------------------------
# Fused kernel: one batch element per grid step, (F, T) layout.
#   xr_ref/xi_ref : (F, T)   real / imaginary inputs
#   per layer:
#     w1c : (2H, F) bf16   concat([W_re, W_im]) linear weights (torch layout)
#     b1c : (2H, 1) f32    concat([b_re, b_im]) biases
#     w2r : (F, H)  bf16   project weight of the "re" FSMN
#     w2i : (F, H)  bf16   project weight of the "im" FSMN
#     cr  : (F, L)  f32    reversed causal taps of the "re" FSMN conv
#     ci  : (F, L)  f32    reversed causal taps of the "im" FSMN conv
#   or_ref/oi_ref : (F, T)  real / imaginary outputs
# ---------------------------------------------------------------------------
def _complex_fsmn_kernel(
    xr_ref, xi_ref,
    w1c1_ref, b1c1_ref, w2r1_ref, w2i1_ref, cr1_ref, ci1_ref,
    w1c2_ref, b1c2_ref, w2r2_ref, w2i2_ref, cr2_ref, ci2_ref,
    or_ref, oi_ref,
):
    F, T = xr_ref.shape
    L = cr1_ref.shape[1]

    # Causal masks, one per delay tap, precomputed once and shared by both
    # layers and all four FIR streams.  (1, T) f32 so each use is a single
    # broadcast multiply on the VPU (no per-tap (F,T) iota/compare/select).
    lane_t = jax.lax.broadcasted_iota(jnp.int32, (1, T), 1)
    masks = [(lane_t >= j).astype(jnp.float32) for j in range(1, L)]

    def layer(ar, ai, w1c_ref, b1c_ref, w2r_ref, w2i_ref, cr_ref, ci_ref):
        H = w2r_ref.shape[1]   # H expected to be a multiple of 8 (128 in FRCRN)

        # ---- GEMMs merged along N (bf16 operands, f32 MXU accumulation) ----
        x_cat = jnp.concatenate([ar, ai], axis=1).astype(jnp.bfloat16)     # (F, 2T)
        h = jnp.dot(w1c_ref[...], x_cat,
                    preferred_element_type=jnp.float32) + b1c_ref[...]     # (2H, 2T)
        h = jnp.maximum(h, 0.0)
        h_re = h[:H, :].astype(jnp.bfloat16)   # relu(W_re @ [ar|ai] + b_re)
        h_im = h[H:, :].astype(jnp.bfloat16)   # relu(W_im @ [ar|ai] + b_im)
        pR = jnp.dot(w2r_ref[...], h_re, preferred_element_type=jnp.float32)  # [pR_r | pR_i]
        pI = jnp.dot(w2i_ref[...], h_im, preferred_element_type=jnp.float32)  # [pI_r | pI_i]
        # Lane slices at T: keep T a multiple of 128 so these are free.
        pR_r, pR_i = pR[:, :T], pR[:, T:]
        pI_r, pI_i = pI[:, :T], pI[:, T:]

        cR = cr_ref[...]                      # (F, L) reversed taps (delay-j order)
        cI = ci_ref[...]
        sR0 = 1.0 + cR[:, 0:1]                # residual + tap-0 folded into init
        sI0 = 1.0 + cI[:, 0:1]
        acc_r = (ar - ai) + pR_r * sR0 - pI_i * sI0
        acc_i = (ar + ai) + pR_i * sR0 + pI_r * sI0

        # ---- merged causal FIR: one unrolled tap loop, both accumulators ----
        # (If a bundle dump ever shows vreg spills here, switch to a
        #  lax.fori_loop with pl.ds tap indexing to bound live ranges.)
        for j in range(1, L):
            cR_j = cR[:, j:j + 1]             # materialized once, used by both accs
            cI_j = cI[:, j:j + 1]
            m = masks[j - 1]
            rRr = pltpu.roll(pR_r, j, 1)      # delay-by-j along time (XLU slot)
            rIi = pltpu.roll(pI_i, j, 1)
            rRi = pltpu.roll(pR_i, j, 1)
            rIr = pltpu.roll(pI_r, j, 1)
            acc_r = acc_r + (cR_j * rRr - cI_j * rIi) * m
            acc_i = acc_i + (cR_j * rRi + cI_j * rIr) * m
        return acc_r, acc_i

    xr = xr_ref[...]
    xi = xi_ref[...]
    r1, i1 = layer(xr, xi, w1c1_ref, b1c1_ref, w2r1_ref, w2i1_ref, cr1_ref, ci1_ref)
    r2, i2 = layer(r1, i1, w1c2_ref, b1c2_ref, w2r2_ref, w2i2_ref, cr2_ref, ci2_ref)
    or_ref[...] = r2.astype(or_ref.dtype)
    oi_ref[...] = i2.astype(oi_ref.dtype)


def _vmem_limit_bytes():
    # ~3/4 of physical VMEM: ~48 MiB on v7x (64 MiB / TensorCore), ~96 MiB on
    # v5e / v6e (128 MiB).  Falls back to a v7x-safe 48 MiB.
    try:
        cap = getattr(pltpu.get_tpu_info(), "vmem_capacity_bytes", None)
        if cap:
            return int(cap) * 3 // 4
    except Exception:
        pass
    return 48 * 1024 * 1024


def _fused_forward(xr, xi, l1_params, l2_params):
    """xr, xi: (B, F, T) -> (real, imag) each (B, F, T), dtype follows inputs.

    bf16 inputs are accepted (and produce bf16 outputs) to halve HBM I/O on
    bandwidth-limited chips; accumulation inside the kernel is always f32.
    """
    B, F, T = xr.shape
    weight_args = list(l1_params) + list(l2_params)

    def w_spec(a):
        return pl.BlockSpec(a.shape, lambda b: (0,) * a.ndim)

    x_spec = pl.BlockSpec((None, F, T), lambda b: (b, 0, 0))
    out_spec = pl.BlockSpec((None, F, T), lambda b: (b, 0, 0))

    # NOTE: grid=(B,) 'parallel' keeps both v7x TensorCores busy when B >= 2;
    # for B == 1 / odd B the planned T-tiling axis should lead instead.
    return pl.pallas_call(
        _complex_fsmn_kernel,
        out_shape=(jax.ShapeDtypeStruct((B, F, T), xr.dtype),
                   jax.ShapeDtypeStruct((B, F, T), xr.dtype)),
        grid_spec=pltpu.PrefetchScalarGridSpec(
            num_scalar_prefetch=0,
            grid=(B,),
            in_specs=[x_spec, x_spec] + [w_spec(a) for a in weight_args],
            out_specs=(out_spec, out_spec),
        ),
        compiler_params=pltpu.CompilerParams(
            dimension_semantics=("parallel",),
            vmem_limit_bytes=_vmem_limit_bytes(),
        ),
    )(xr, xi, *weight_args)


# ---------------------------------------------------------------------------
# Parameter handling (torch layout -> kernel layout) and module forward.
# Torch-layout per-FSMN params: (W (H,F), b (H,), P (F,H), taps (F,L)).
# ---------------------------------------------------------------------------
def _prep_layer(p_re, p_im):
    W_re, b_re, P_re, taps_re = p_re
    W_im, b_im, P_im, taps_im = p_im
    # H should be a multiple of 8 (128 in the real FRCRN model) so the
    # in-kernel sublane split of the concatenated activations is free.
    w1cat = jnp.concatenate([W_re, W_im], axis=0).astype(jnp.bfloat16)          # (2H, F)
    b1cat = jnp.concatenate([b_re, b_im], axis=0)[:, None].astype(jnp.float32)  # (2H, 1)
    w2r = P_re.astype(jnp.bfloat16)                                             # (F, H)
    w2i = P_im.astype(jnp.bfloat16)
    cr = taps_re[:, ::-1].astype(jnp.float32)   # reversed: cr[ch, j] = taps[ch, L-1-j]
    ci = taps_im[:, ::-1].astype(jnp.float32)
    return (w1cat, b1cat, w2r, w2i, cr, ci)


def complex_uni_deep_fsmn(x, params):
    """x: (b, c, h, T, 2) -> (b, c, h, T, 2).  params = 4 UniDeepFsmn tuples."""
    b, c, h, T, d = x.shape
    F = c * h
    x2 = x.reshape(b, F, T, d)
    xr = x2[..., 0]          # (b, F, T) — native layout, no T<->F transpose
    xi = x2[..., 1]
    p_re1, p_im1, p_re2, p_im2 = params
    real, imag = _fused_forward(
        xr, xi, _prep_layer(p_re1, p_im1), _prep_layer(p_re2, p_im2))
    out = jnp.stack((real, imag), axis=-1)      # (b, F, T, 2)
    return out.reshape(b, c, h, T, d)


def init_fsmn_params(key, input_dim, hidden, output_dim, lorder):
    k1, k2, k3, k4 = jax.random.split(key, 4)
    W = jax.random.normal(k1, (hidden, input_dim), jnp.float32) * 0.05    # linear.weight
    b = jax.random.normal(k2, (hidden,), jnp.float32) * 0.05              # linear.bias
    P = jax.random.normal(k3, (output_dim, hidden), jnp.float32) * 0.05   # project.weight
    taps = jax.random.normal(k4, (output_dim, lorder), jnp.float32) * 0.05  # conv1.weight
    return (W, b, P, taps)


# ---------------------------------------------------------------------------
# Pure-JAX f32 reference (follows the torch code in (B, T, F) layout).
# ---------------------------------------------------------------------------
def _fsmn_ref(x, p):
    W, b, P, taps = p
    f1 = jax.nn.relu(x @ W.T + b)
    p1 = f1 @ P.T
    B, T, F = x.shape
    L = taps.shape[1]
    padded = jnp.pad(p1, ((0, 0), (L - 1, 0), (0, 0)))
    conv = sum(taps[:, k][None, None, :] * padded[:, k:k + T, :] for k in range(L))
    return x + p1 + conv


def _complex_ref(x, params):
    b, c, h, T, d = x.shape
    x2 = jnp.transpose(x.reshape(b, c * h, T, d), (0, 2, 1, 3))
    xr, xi = x2[..., 0], x2[..., 1]
    p_re1, p_im1, p_re2, p_im2 = params
    real_L1 = _fsmn_ref(xr, p_re1) - _fsmn_ref(xi, p_im1)
    imag_L1 = _fsmn_ref(xi, p_re1) + _fsmn_ref(xr, p_im1)
    real = _fsmn_ref(real_L1, p_re2) - _fsmn_ref(imag_L1, p_im2)
    imag = _fsmn_ref(imag_L1, p_re2) + _fsmn_ref(real_L1, p_im2)
    out = jnp.transpose(jnp.stack((real, imag), axis=-1), (0, 2, 1, 3))
    return out.reshape(b, c, h, T, d)


if __name__ == "__main__":
    key = jax.random.PRNGKey(0)
    # Small but layout-representative: batch=2, c=2, h=16 (F=32), T=128 frames.
    b, c, h, T = 2, 2, 16, 128
    F = c * h
    nIn = nHidden = nOut = F   # residual + reshape require nIn == nHidden == nOut == c*h

    kx, kp = jax.random.split(key)
    x = jax.random.normal(kx, (b, c, h, T, 2), jnp.float32)

    kk = jax.random.split(kp, 4)
    params = (
        init_fsmn_params(kk[0], nIn, nHidden, nHidden, LORDER),   # fsmn_re_L1
        init_fsmn_params(kk[1], nIn, nHidden, nHidden, LORDER),   # fsmn_im_L1
        init_fsmn_params(kk[2], nHidden, nHidden, nOut, LORDER),  # fsmn_re_L2
        init_fsmn_params(kk[3], nHidden, nHidden, nOut, LORDER),  # fsmn_im_L2
    )

    fwd = jax.jit(complex_uni_deep_fsmn)
    out = jax.block_until_ready(fwd(x, params))

    ref = _complex_ref(x, params)
    # bf16 MXU operands vs f32 reference -> loosened tolerance.
    np.testing.assert_allclose(np.asarray(out), np.asarray(ref), rtol=2e-2, atol=2e-2)

    print("KERNEL_OK")
</pallas_src>

<mosaic_0001>
module attributes {stable_mosaic.version = 11 : i64} {
  func.func @_complex_fsmn_kernel(%arg0: i32, %arg1: memref<1x32x128xf32, #tpu.memory_space<vmem>>, %arg2: memref<1x32x128xf32, #tpu.memory_space<vmem>>, %arg3: memref<64x32xbf16, #tpu.memory_space<vmem>>, %arg4: memref<64x1xf32, #tpu.memory_space<vmem>>, %arg5: memref<32x32xbf16, #tpu.memory_space<vmem>>, %arg6: memref<32x32xbf16, #tpu.memory_space<vmem>>, %arg7: memref<32x20xf32, #tpu.memory_space<vmem>>, %arg8: memref<32x20xf32, #tpu.memory_space<vmem>>, %arg9: memref<64x32xbf16, #tpu.memory_space<vmem>>, %arg10: memref<64x1xf32, #tpu.memory_space<vmem>>, %arg11: memref<32x32xbf16, #tpu.memory_space<vmem>>, %arg12: memref<32x32xbf16, #tpu.memory_space<vmem>>, %arg13: memref<32x20xf32, #tpu.memory_space<vmem>>, %arg14: memref<32x20xf32, #tpu.memory_space<vmem>>, %arg15: memref<1x32x128xf32, #tpu.memory_space<vmem>>, %arg16: memref<1x32x128xf32, #tpu.memory_space<vmem>>) attributes {dimension_semantics = [#tpu.dimension_semantics<parallel>], iteration_bounds = array<i64: 2>, scalar_prefetch = 0 : i64, scratch_operands = 0 : i64, tpu.core_type = #tpu.core_type<tc>, window_params = [{transform_indices = @transform_0, window_bounds = array<i64: 1, 32, 128>}, {transform_indices = @transform_1, window_bounds = array<i64: 1, 32, 128>}, {pipeline_mode = #tpu.pipeline_mode<synchronous>, transform_indices = @transform_2, window_bounds = array<i64: 64, 32>}, {pipeline_mode = #tpu.pipeline_mode<synchronous>, transform_indices = @transform_3, window_bounds = array<i64: 64, 1>}, {pipeline_mode = #tpu.pipeline_mode<synchronous>, transform_indices = @transform_4, window_bounds = array<i64: 32, 32>}, {pipeline_mode = #tpu.pipeline_mode<synchronous>, transform_indices = @transform_5, window_bounds = array<i64: 32, 32>}, {pipeline_mode = #tpu.pipeline_mode<synchronous>, transform_indices = @transform_6, window_bounds = array<i64: 32, 20>}, {pipeline_mode = #tpu.pipeline_mode<synchronous>, transform_indices = @transform_7, window_bounds = array<i64: 32, 20>}, {pipeline_mode = #tpu.pipeline_mode<synchronous>, transform_indices = @transform_8, window_bounds = array<i64: 64, 32>}, {pipeline_mode = #tpu.pipeline_mode<synchronous>, transform_indices = @transform_9, window_bounds = array<i64: 64, 1>}, {pipeline_mode = #tpu.pipeline_mode<synchronous>, transform_indices = @transform_10, window_bounds = array<i64: 32, 32>}, {pipeline_mode = #tpu.pipeline_mode<synchronous>, transform_indices = @transform_11, window_bounds = array<i64: 32, 32>}, {pipeline_mode = #tpu.pipeline_mode<synchronous>, transform_indices = @transform_12, window_bounds = array<i64: 32, 20>}, {pipeline_mode = #tpu.pipeline_mode<synchronous>, transform_indices = @transform_13, window_bounds = array<i64: 32, 20>}, {transform_indices = @transform_14, window_bounds = array<i64: 1, 32, 128>}, {transform_indices = @transform_15, window_bounds = array<i64: 1, 32, 128>}]} {
    %0 = tpu.iota {dimensions = array<i32: 1>} : vector<1x128xi32>
    %c1_i32 = arith.constant 1 : i32
    %1 = vector.broadcast %c1_i32 : i32 to vector<1x128xi32>
    %2 = arith.cmpi sge, %0, %1 : vector<1x128xi32>
    %3 = arith.extui %2 : vector<1x128xi1> to vector<1x128xi32>
    %4 = arith.sitofp %3 : vector<1x128xi32> to vector<1x128xf32>
    %c2_i32 = arith.constant 2 : i32
    %5 = vector.broadcast %c2_i32 : i32 to vector<1x128xi32>
    %6 = arith.cmpi sge, %0, %5 : vector<1x128xi32>
    %7 = arith.extui %6 : vector<1x128xi1> to vector<1x128xi32>
    %8 = arith.sitofp %7 : vector<1x128xi32> to vector<1x128xf32>
    %c3_i32 = arith.constant 3 : i32
    %9 = vector.broadcast %c3_i32 : i32 to vector<1x128xi32>
    %10 = arith.cmpi sge, %0, %9 : vector<1x128xi32>
    %11 = arith.extui %10 : vector<1x128xi1> to vector<1x128xi32>
    %12 = arith.sitofp %11 : vector<1x128xi32> to vector<1x128xf32>
    %c4_i32 = arith.constant 4 : i32
    %13 = vector.broadcast %c4_i32 : i32 to vector<1x128xi32>
    %14 = arith.cmpi sge, %0, %13 : vector<1x128xi32>
    %15 = arith.extui %14 : vector<1x128xi1> to vector<1x128xi32>
    %16 = arith.sitofp %15 : vector<1x128xi32> to vector<1x128xf32>
    %c5_i32 = arith.constant 5 : i32
    %17 = vector.broadcast %c5_i32 : i32 to vector<1x128xi32>
    %18 = arith.cmpi sge, %0, %17 : vector<1x128xi32>
    %19 = arith.extui %18 : vector<1x128xi1> to vector<1x128xi32>
    %20 = arith.sitofp %19 : vector<1x128xi32> to vector<1x128xf32>
    %c6_i32 = arith.constant 6 : i32
    %21 = vector.broadcast %c6_i32 : i32 to vector<1x128xi32>
    %22 = arith.cmpi sge, %0, %21 : vector<1x128xi32>
    %23 = arith.extui %22 : vector<1x128xi1> to vector<1x128xi32>
    %24 = arith.sitofp %23 : vector<1x128xi32> to vector<1x128xf32>
    %c7_i32 = arith.constant 7 : i32
    %25 = vector.broadcast %c7_i32 : i32 to vector<1x128xi32>
    %26 = arith.cmpi sge, %0, %25 : vector<1x128xi32>
    %27 = arith.extui %26 : vector<1x128xi1> to vector<1x128xi32>
    %28 = arith.sitofp %27 : vector<1x128xi32> to vector<1x128xf32>
    %c8_i32 = arith.constant 8 : i32
    %29 = vector.broadcast %c8_i32 : i32 to vector<1x128xi32>
    %30 = arith.cmpi sge, %0, %29 : vector<1x128xi32>
    %31 = arith.extui %30 : vector<1x128xi1> to vector<1x128xi32>
    %32 = arith.sitofp %31 : vector<1x128xi32> to vector<1x128xf32>
    %c9_i32 = arith.constant 9 : i32
    %33 = vector.broadcast %c9_i32 : i32 to vector<1x128xi32>
    %34 = arith.cmpi sge, %0, %33 : vector<1x128xi32>
    %35 = arith.extui %34 : vector<1x128xi1> to vector<1x128xi32>
    %36 = arith.sitofp %35 : vector<1x128xi32> to vector<1x128xf32>
    %c10_i32 = arith.constant 10 : i32
    %37 = vector.broadcast %c10_i32 : i32 to vector<1x128xi32>
    %38 = arith.cmpi sge, %0, %37 : vector<1x128xi32>
    %39 = arith.extui %38 : vector<1x128xi1> to vector<1x128xi32>
    %40 = arith.sitofp %39 : vector<1x128xi32> to vector<1x128xf32>
    %c11_i32 = arith.constant 11 : i32
    %41 = vector.broadcast %c11_i32 : i32 to vector<1x128xi32>
    %42 = arith.cmpi sge, %0, %41 : vector<1x128xi32>
    %43 = arith.extui %42 : vector<1x128xi1> to vector<1x128xi32>
    %44 = arith.sitofp %43 : vector<1x128xi32> to vector<1x128xf32>
    %c12_i32 = arith.constant 12 : i32
    %45 = vector.broadcast %c12_i32 : i32 to vector<1x128xi32>
    %46 = arith.cmpi sge, %0, %45 : vector<1x128xi32>
    %47 = arith.extui %46 : vector<1x128xi1> to vector<1x128xi32>
    %48 = arith.sitofp %47 : vector<1x128xi32> to vector<1x128xf32>
    %c13_i32 = arith.constant 13 : i32
    %49 = vector.broadcast %c13_i32 : i32 to vector<1x128xi32>
    %50 = arith.cmpi sge, %0, %49 : vector<1x128xi32>
    %51 = arith.extui %50 : vector<1x128xi1> to vector<1x128xi32>
    %52 = arith.sitofp %51 : vector<1x128xi32> to vector<1x128xf32>
    %c14_i32 = arith.constant 14 : i32
    %53 = vector.broadcast %c14_i32 : i32 to vector<1x128xi32>
    %54 = arith.cmpi sge, %0, %53 : vector<1x128xi32>
    %55 = arith.extui %54 : vector<1x128xi1> to vector<1x128xi32>
    %56 = arith.sitofp %55 : vector<1x128xi32> to vector<1x128xf32>
    %c15_i32 = arith.constant 15 : i32
    %57 = vector.broadcast %c15_i32 : i32 to vector<1x128xi32>
    %58 = arith.cmpi sge, %0, %57 : vector<1x128xi32>
    %59 = arith.extui %58 : vector<1x128xi1> to vector<1x128xi32>
    %60 = arith.sitofp %59 : vector<1x128xi32> to vector<1x128xf32>
    %c16_i32 = arith.constant 16 : i32
    %61 = vector.broadcast %c16_i32 : i32 to vector<1x128xi32>
    %62 = arith.cmpi sge, %0, %61 : vector<1x128xi32>
    %63 = arith.extui %62 : vector<1x128xi1> to vector<1x128xi32>
    %64 = arith.sitofp %63 : vector<1x128xi32> to vector<1x128xf32>
    %c17_i32 = arith.constant 17 : i32
    %65 = vector.broadcast %c17_i32 : i32 to vector<1x128xi32>
    %66 = arith.cmpi sge, %0, %65 : vector<1x128xi32>
    %67 = arith.extui %66 : vector<1x128xi1> to vector<1x128xi32>
    %68 = arith.sitofp %67 : vector<1x128xi32> to vector<1x128xf32>
    %c18_i32 = arith.constant 18 : i32
    %69 = vector.broadcast %c18_i32 : i32 to vector<1x128xi32>
    %70 = arith.cmpi sge, %0, %69 : vector<1x128xi32>
    %71 = arith.extui %70 : vector<1x128xi1> to vector<1x128xi32>
    %72 = arith.sitofp %71 : vector<1x128xi32> to vector<1x128xf32>
    %c19_i32 = arith.constant 19 : i32
    %73 = vector.broadcast %c19_i32 : i32 to vector<1x128xi32>
    %74 = arith.cmpi sge, %0, %73 : vector<1x128xi32>
    %75 = arith.extui %74 : vector<1x128xi1> to vector<1x128xi32>
    %76 = arith.sitofp %75 : vector<1x128xi32> to vector<1x128xf32>
    %c0 = arith.constant 0 : index
    %c0_0 = arith.constant 0 : index
    %c0_1 = arith.constant 0 : index
    %77 = vector.load %arg1[%c0, %c0_0, %c0_1] : memref<1x32x128xf32, #tpu.memory_space<vmem>>, vector<1x32x128xf32>
    %78 = vector.shape_cast %77 : vector<1x32x128xf32> to vector<32x128xf32>
    %c0_2 = arith.constant 0 : index
    %c0_3 = arith.constant 0 : index
    %c0_4 = arith.constant 0 : index
    %79 = vector.load %arg2[%c0_2, %c0_3, %c0_4] : memref<1x32x128xf32, #tpu.memory_space<vmem>>, vector<1x32x128xf32>
    %80 = vector.shape_cast %79 : vector<1x32x128xf32> to vector<32x128xf32>
    %81 = tpu.concatenate %78, %80 in 1 : vector<32x128xf32>, vector<32x128xf32> -> vector<32x256xf32>
    %82 = arith.truncf %81 : vector<32x256xf32> to vector<32x256xbf16>
    %c0_5 = arith.constant 0 : index
    %c0_6 = arith.constant 0 : index
    %83 = vector.load %arg3[%c0_5, %c0_6] : memref<64x32xbf16, #tpu.memory_space<vmem>>, vector<64x32xbf16>
    %cst = arith.constant dense<0.000000e+00> : vector<64x256xf32>
    %84 = tpu.matmul %83, %82, %cst {dimension_numbers = #tpu.dot_dimension_numbers<[1], [0], [0], [1], [0, 0, 1, 1], [], []>} : vector<64x32xbf16>, vector<32x256xbf16>, vector<64x256xf32> -> vector<64x256xf32>
    %c0_7 = arith.constant 0 : index
    %c0_8 = arith.constant 0 : index
    %85 = vector.load %arg4[%c0_7, %c0_8] : memref<64x1xf32, #tpu.memory_space<vmem>>, vector<64x1xf32>
    %86 = vector.broadcast %85 : vector<64x1xf32> to vector<64x256xf32>
    %87 = arith.addf %84, %86 : vector<64x256xf32>
    %cst_9 = arith.constant 0.000000e+00 : f32
    %88 = vector.broadcast %cst_9 : f32 to vector<64x256xf32>
    %89 = arith.maximumf %87, %88 : vector<64x256xf32>
    %90 = vector.extract_strided_slice %89 {offsets = [0, 0], sizes = [32, 256], strides = [1, 1]} : vector<64x256xf32> to vector<32x256xf32>
    %91 = arith.truncf %90 : vector<32x256xf32> to vector<32x256xbf16>
    %92 = vector.extract_strided_slice %89 {offsets = [32, 0], sizes = [32, 256], strides = [1, 1]} : vector<64x256xf32> to vector<32x256xf32>
    %93 = arith.truncf %92 : vector<32x256xf32> to vector<32x256xbf16>
    %c0_10 = arith.constant 0 : index
    %c0_11 = arith.constant 0 : index
    %94 = vector.load %arg5[%c0_10, %c0_11] : memref<32x32xbf16, #tpu.memory_space<vmem>>, vector<32x32xbf16>
    %cst_12 = arith.constant dense<0.000000e+00> : vector<32x256xf32>
    %95 = tpu.matmul %94, %91, %cst_12 {dimension_numbers = #tpu.dot_dimension_numbers<[1], [0], [0], [1], [0, 0, 1, 1], [], []>} : vector<32x32xbf16>, vector<32x256xbf16>, vector<32x256xf32> -> vector<32x256xf32>
    %c0_13 = arith.constant 0 : index
    %c0_14 = arith.constant 0 : index
    %96 = vector.load %arg6[%c0_13, %c0_14] : memref<32x32xbf16, #tpu.memory_space<vmem>>, vector<32x32xbf16>
    %cst_15 = arith.constant dense<0.000000e+00> : vector<32x256xf32>
    %97 = tpu.matmul %96, %93, %cst_15 {dimension_numbers = #tpu.dot_dimension_numbers<[1], [0], [0], [1], [0, 0, 1, 1], [], []>} : vector<32x32xbf16>, vector<32x256xbf16>, vector<32x256xf32> -> vector<32x256xf32>
    %98 = vector.extract_strided_slice %95 {offsets = [0, 0], sizes = [32, 128], strides = [1, 1]} : vector<32x256xf32> to vector<32x128xf32>
    %99 = vector.extract_strided_slice %95 {offsets = [0, 128], sizes = [32, 128], strides = [1, 1]} : vector<32x256xf32> to vector<32x128xf32>
    %100 = vector.extract_strided_slice %97 {offsets = [0, 0], sizes = [32, 128], strides = [1, 1]} : vector<32x256xf32> to vector<32x128xf32>
    %101 = vector.extract_strided_slice %97 {offsets = [0, 128], sizes = [32, 128], strides = [1, 1]} : vector<32x256xf32> to vector<32x128xf32>
    %c0_16 = arith.constant 0 : index
    %c0_17 = arith.constant 0 : index
    %102 = vector.load %arg7[%c0_16, %c0_17] : memref<32x20xf32, #tpu.memory_space<vmem>>, vector<32x20xf32>
    %c0_18 = arith.constant 0 : index
    %c0_19 = arith.constant 0 : index
    %103 = vector.load %arg8[%c0_18, %c0_19] : memref<32x20xf32, #tpu.memory_space<vmem>>, vector<32x20xf32>
    %104 = vector.extract_strided_slice %102 {offsets = [0, 0], sizes = [32, 1], strides = [1, 1]} : vector<32x20xf32> to vector<32x1xf32>
    %cst_20 = arith.constant 1.000000e+00 : f32
    %105 = vector.broadcast %cst_20 : f32 to vector<32x1xf32>
    %106 = arith.addf %105, %104 : vector<32x1xf32>
    %107 = vector.extract_strided_slice %103 {offsets = [0, 0], sizes = [32, 1], strides = [1, 1]} : vector<32x20xf32> to vector<32x1xf32>
    %cst_21 = arith.constant 1.000000e+00 : f32
    %108 = vector.broadcast %cst_21 : f32 to vector<32x1xf32>
    %109 = arith.addf %108, %107 : vector<32x1xf32>
    %110 = arith.subf %78, %80 : vector<32x128xf32>
    %111 = vector.broadcast %106 : vector<32x1xf32> to vector<32x128xf32>
    %112 = arith.mulf %98, %111 : vector<32x128xf32>
    %113 = arith.addf %110, %112 : vector<32x128xf32>
    %114 = vector.broadcast %109 : vector<32x1xf32> to vector<32x128xf32>
    %115 = arith.mulf %101, %114 : vector<32x128xf32>
    %116 = arith.subf %113, %115 : vector<32x128xf32>
    %117 = arith.addf %78, %80 : vector<32x128xf32>
    %118 = vector.broadcast %106 : vector<32x1xf32> to vector<32x128xf32>
    %119 = arith.mulf %99, %118 : vector<32x128xf32>
    %120 = arith.addf %117, %119 : vector<32x128xf32>
    %121 = vector.broadcast %109 : vector<32x1xf32> to vector<32x128xf32>
    %122 = arith.mulf %100, %121 : vector<32x128xf32>
    %123 = arith.addf %120, %122 : vector<32x128xf32>
    %124 = vector.extract_strided_slice %102 {offsets = [0, 1], sizes = [32, 1], strides = [1, 1]} : vector<32x20xf32> to vector<32x1xf32>
    %125 = vector.extract_strided_slice %103 {offsets = [0, 1], sizes = [32, 1], strides = [1, 1]} : vector<32x20xf32> to vector<32x1xf32>
    %c1_i32_22 = arith.constant 1 : i32
    %126 = tpu.dynamic_rotate %98 by %c1_i32_22 dim 1 : vector<32x128xf32>, i32 -> vector<32x128xf32>
    %c1_i32_23 = arith.constant 1 : i32
    %127 = tpu.dynamic_rotate %101 by %c1_i32_23 dim 1 : vector<32x128xf32>, i32 -> vector<32x128xf32>
    %c1_i32_24 = arith.constant 1 : i32
    %128 = tpu.dynamic_rotate %99 by %c1_i32_24 dim 1 : vector<32x128xf32>, i32 -> vector<32x128xf32>
    %c1_i32_25 = arith.constant 1 : i32
    %129 = tpu.dynamic_rotate %100 by %c1_i32_25 dim 1 : vector<32x128xf32>, i32 -> vector<32x128xf32>
    %130 = vector.broadcast %124 : vector<32x1xf32> to vector<32x128xf32>
    %131 = arith.mulf %130, %126 : vector<32x128xf32>
    %132 = vector.broadcast %125 : vector<32x1xf32> to vector<32x128xf32>
    %133 = arith.mulf %132, %127 : vector<32x128xf32>
    %134 = arith.subf %131, %133 : vector<32x128xf32>
    %135 = vector.broadcast %4 : vector<1x128xf32> to vector<32x128xf32>
    %136 = arith.mulf %134, %135 : vector<32x128xf32>
    %137 = arith.addf %116, %136 : vector<32x128xf32>
    %138 = vector.broadcast %124 : vector<32x1xf32> to vector<32x128xf32>
    %139 = arith.mulf %138, %128 : vector<32x128xf32>
    %140 = vector.broadcast %125 : vector<32x1xf32> to vector<32x128xf32>
    %141 = arith.mulf %140, %129 : vector<32x128xf32>
    %142 = arith.addf %139, %141 : vector<32x128xf32>
    %143 = vector.broadcast %4 : vector<1x128xf32> to vector<32x128xf32>
    %144 = arith.mulf %142, %143 : vector<32x128xf32>
    %145 = arith.addf %123, %144 : vector<32x128xf32>
    %146 = vector.extract_strided_slice %102 {offsets = [0, 2], sizes = [32, 1], strides = [1, 1]} : vector<32x20xf32> to vector<32x1xf32>
    %147 = vector.extract_strided_slice %103 {offsets = [0, 2], sizes = [32, 1], strides = [1, 1]} : vector<32x20xf32> to vector<32x1xf32>
    %c2_i32_26 = arith.constant 2 : i32
    %148 = tpu.dynamic_rotate %98 by %c2_i32_26 dim 1 : vector<32x128xf32>, i32 -> vector<32x128xf32>
    %c2_i32_27 = arith.constant 2 : i32
    %149 = tpu.dynamic_rotate %101 by %c2_i32_27 dim 1 : vector<32x128xf32>, i32 -> vector<32x128xf32>
    %c2_i32_28 = arith.constant 2 : i32
    %150 = tpu.dynamic_rotate %99 by %c2_i32_28 dim 1 : vector<32x128xf32>, i32 -> vector<32x128xf32>
    %c2_i32_29 = arith.constant 2 : i32
    %151 = tpu.dynamic_rotate %100 by %c2_i32_29 dim 1 : vector<32x128xf32>, i32 -> vector<32x128xf32>
    %152 = vector.broadcast %146 : vector<32x1xf32> to vector<32x128xf32>
    %153 = arith.mulf %152, %148 : vector<32x128xf32>
    %154 = vector.broadcast %147 : vector<32x1xf32> to vector<32x128xf32>
    %155 = arith.mulf %154, %149 : vector<32x128xf32>
    %156 = arith.subf %153, %155 : vector<32x128xf32>
    %157 = vector.broadcast %8 : vector<1x128xf32> to vector<32x128xf32>
    %158 = arith.mulf %156, %157 : vector<32x128xf32>
    %159 = arith.addf %137, %158 : vector<32x128xf32>
    %160 = vector.broadcast %146 : vector<32x1xf32> to vector<32x128xf32>
    %161 = arith.mulf %160, %150 : vector<32x128xf32>
    %162 = vector.broadcast %147 : vector<32x1xf32> to vector<32x128xf32>
    %163 = arith.mulf %162, %151 : vector<32x128xf32>
    %164 = arith.addf %161, %163 : vector<32x128xf32>
    %165 = vector.broadcast %8 : vector<1x128xf32> to vector<32x128xf32>
    %166 = arith.mulf %164, %165 : vector<32x128xf32>
    %167 = arith.addf %145, %166 : vector<32x128xf32>
    %168 = vector.extract_strided_slice %102 {offsets = [0, 3], sizes = [32, 1], strides = [1, 1]} : vector<32x20xf32> to vector<32x1xf32>
    %169 = vector.extract_strided_slice %103 {offsets = [0, 3], sizes = [32, 1], strides = [1, 1]} : vector<32x20xf32> to vector<32x1xf32>
    %c3_i32_30 = arith.constant 3 : i32
    %170 = tpu.dynamic_rotate %98 by %c3_i32_30 dim 1 : vector<32x128xf32>, i32 -> vector<32x128xf32>
    %c3_i32_31 = arith.constant 3 : i32
    %171 = tpu.dynamic_rotate %101 by %c3_i32_31 dim 1 : vector<32x128xf32>, i32 -> vector<32x128xf32>
    %c3_i32_32 = arith.constant 3 : i32
    %172 = tpu.dynamic_rotate %99 by %c3_i32_32 dim 1 : vector<32x128xf32>, i32 -> vector<32x128xf32>
    %c3_i32_33 = arith.constant 3 : i32
    %173 = tpu.dynamic_rotate %100 by %c3_i32_33 dim 1 : vector<32x128xf32>, i32 -> vector<32x128xf32>
    %174 = vector.broadcast %168 : vector<32x1xf32> to vector<32x128xf32>
    %175 = arith.mulf %174, %170 : vector<32x128xf32>
    %176 = vector.broadcast %169 : vector<32x1xf32> to vector<32x128xf32>
    %177 = arith.mulf %176, %171 : vector<32x128xf32>
    %178 = arith.subf %175, %177 : vector<32x128xf32>
    %179 = vector.broadcast %12 : vector<1x128xf32> to vector<32x128xf32>
    %180 = arith.mulf %178, %179 : vector<32x128xf32>
    %181 = arith.addf %159, %180 : vector<32x128xf32>
    %182 = vector.broadcast %168 : vector<32x1xf32> to vector<32x128xf32>
    %183 = arith.mulf %182, %172 : vector<32x128xf32>
    %184 = vector.broadcast %169 : vector<32x1xf32> to vector<32x128xf32>
    %185 = arith.mulf %184, %173 : vector<32x128xf32>
    %186 = arith.addf %183, %185 : vector<32x128xf32>
    %187 = vector.broadcast %12 : vector<1x128xf32> to vector<32x128xf32>
    %188 = arith.mulf %186, %187 : vector<32x128xf32>
    %189 = arith.addf %167, %188 : vector<32x128xf32>
    %190 = vector.extract_strided_slice %102 {offsets = [0, 4], sizes = [32, 1], strides = [1, 1]} : vector<32x20xf32> to vector<32x1xf32>
    %191 = vector.extract_strided_slice %103 {offsets = [0, 4], sizes = [32, 1], strides = [1, 1]} : vector<32x20xf32> to vector<32x1xf32>
    %c4_i32_34 = arith.constant 4 : i32
    %192 = tpu.dynamic_rotate %98 by %c4_i32_34 dim 1 : vector<32x128xf32>, i32 -> vector<32x128xf32>
    %c4_i32_35 = arith.constant 4 : i32
    %193 = tpu.dynamic_rotate %101 by %c4_i32_35 dim 1 : vector<32x128xf32>, i32 -> vector<32x128xf32>
    %c4_i32_36 = arith.constant 4 : i32
    %194 = tpu.dynamic_rotate %99 by %c4_i32_36 dim 1 : vector<32x128xf32>, i32 -> vector<32x128xf32>
    %c4_i32_37 = arith.constant 4 : i32
    %195 = tpu.dynamic_rotate %100 by %c4_i32_37 dim 1 : vector<32x128xf32>, i32 -> vector<32x128xf32>
    %196 = vector.broadcast %190 : vector<32x1xf32> to vector<32x128xf32>
    %197 = arith.mulf %196, %192 : vector<32x128xf32>
    %198 = vector.broadcast %191 : vector<32x1xf32> to vector<32x128xf32>
    %199 = arith.mulf %198, %193 : vector<32x128xf32>
    %200 = arith.subf %197, %199 : vector<32x128xf32>
    %201 = vector.broadcast %16 : vector<1x128xf32> to vector<32x128xf32>
    %202 = arith.mulf %200, %201 : vector<32x128xf32>
    %203 = arith.addf %181, %202 : vector<32x128xf32>
    %204 = vector.broadcast %190 : vector<32x1xf32> to vector<32x128xf32>
    %205 = arith.mulf %204, %194 : vector<32x128xf32>
    %206 = vector.broadcast %191 : vector<32x1xf32> to vector<32x128xf32>
    %207 = arith.mulf %206, %195 : vector<32x128xf32>
    %208 = arith.addf %205, %207 : vector<32x128xf32>
    %209 = vector.broadcast %16 : vector<1x128xf32> to vector<32x128xf32>
    %210 = arith.mulf %208, %209 : vector<32x128xf32>
    %211 = arith.addf %189, %210 : vector<32x128xf32>
    %212 = vector.extract_strided_slice %102 {offsets = [0, 5], sizes = [32, 1], strides = [1, 1]} : vector<32x20xf32> to vector<32x1xf32>
    %213 = vector.extract_strided_slice %103 {offsets = [0, 5], sizes = [32, 1], strides = [1, 1]} : vector<32x20xf32> to vector<32x1xf32>
    %c5_i32_38 = arith.constant 5 : i32
    %214 = tpu.dynamic_rotate %98 by %c5_i32_38 dim 1 : vector<32x128xf32>, i32 -> vector<32x128xf32>
    %c5_i32_39 = arith.constant 5 : i32
    %215 = tpu.dynamic_rotate %101 by %c5_i32_39 dim 1 : vector<32x128xf32>, i32 -> vector<32x128xf32>
    %c5_i32_40 = arith.constant 5 : i32
    %216 = tpu.dynamic_rotate %99 by %c5_i32_40 dim 1 : vector<32x128xf32>, i32 -> vector<32x128xf32>
    %c5_i32_41 = arith.constant 5 : i32
    %217 = tpu.dynamic_rotate %100 by %c5_i32_41 dim 1 : vector<32x128xf32>, i32 -> vector<32x128xf32>
    %218 = vector.broadcast %212 : vector<32x1xf32> to vector<32x128xf32>
    %219 = arith.mulf %218, %214 : vector<32x128xf32>
    %220 = vector.broadcast %213 : vector<32x1xf32> to vector<32x128xf32>
    %221 = arith.mulf %220, %215 : vector<32x128xf32>
    %222 = arith.subf %219, %221 : vector<32x128xf32>
    %223 = vector.broadcast %20 : vector<1x128xf32> to vector<32x128xf32>
    %224 = arith.mulf %222, %223 : vector<32x128xf32>
    %225 = arith.addf %203, %224 : vector<32x128xf32>
    %226 = vector.broadcast %212 : vector<32x1xf32> to vector<32x128xf32>
    %227 = arith.mulf %226, %216 : vector<32x128xf32>
    %228 = vector.broadcast %213 : vector<32x1xf32> to vector<32x128xf32>
    %229 = arith.mulf %228, %217 : vector<32x128xf32>
    %230 = arith.addf %227, %229 : vector<32x128xf32>
    %231 = vector.broadcast %20 : vector<1x128xf32> to vector<32x128xf32>
    %232 = arith.mulf %230, %231 : vector<32x128xf32>
    %233 = arith.addf %211, %232 : vector<32x128xf32>
    %234 = vector.extract_strided_slice %102 {offsets = [0, 6], sizes = [32, 1], strides = [1, 1]} : vector<32x20xf32> to vector<32x1xf32>
    %235 = vector.extract_strided_slice %103 {offsets = [0, 6], sizes = [32, 1], strides = [1, 1]} : vector<32x20xf32> to vector<32x1xf32>
    %c6_i32_42 = arith.constant 6 : i32
    %236 = tpu.dynamic_rotate %98 by %c6_i32_42 dim 1 : vector<32x128xf32>, i32 -> vector<32x128xf32>
    %c6_i32_43 = arith.constant 6 : i32
    %237 = tpu.dynamic_rotate %101 by %c6_i32_43 dim 1 : vector<32x128xf32>, i32 -> vector<32x128xf32>
    %c6_i32_44 = arith.constant 6 : i32
    %238 = tpu.dynamic_rotate %99 by %c6_i32_44 dim 1 : vector<32x128xf32>, i32 -> vector<32x128xf32>
    %c6_i32_45 = arith.constant 6 : i32
    %239 = tpu.dynamic_rotate %100 by %c6_i32_45 dim 1 : vector<32x128xf32>, i32 -> vector<32x128xf32>
    %240 = vector.broadcast %234 : vector<32x1xf32> to vector<32x128xf32>
    %241 = arith.mulf %240, %236 : vector<32x128xf32>
    %242 = vector.broadcast %235 : vector<32x1xf32> to vector<32x128xf32>
    %243 = arith.mulf %242, %237 : vector<32x128xf32>
    %244 = arith.subf %241, %243 : vector<32x128xf32>
    %245 = vector.broadcast %24 : vector<1x128xf32> to vector<32x128xf32>
    %246 = arith.mulf %244, %245 : vector<32x128xf32>
    %247 = arith.addf %225, %246 : vector<32x128xf32>
    %248 = vector.broadcast %234 : vector<32x1xf32> to vector<32x128xf32>
    %249 = arith.mulf %248, %238 : vector<32x128xf32>
    %250 = vector.broadcast %235 : vector<32x1xf32> to vector<32x128xf32>
    %251 = arith.mulf %250, %239 : vector<32x128xf32>
    %252 = arith.addf %249, %251 : vector<32x128xf32>
    %253 = vector.broadcast %24 : vector<1x128xf32> to vector<32x128xf32>
    %254 = arith.mulf %252, %253 : vector<32x128xf32>
    %255 = arith.addf %233, %254 : vector<32x128xf32>
    %256 = vector.extract_strided_slice %102 {offsets = [0, 7], sizes = [32, 1], strides = [1, 1]} : vector<32x20xf32> to vector<32x1xf32>
    %257 = vector.extract_strided_slice %103 {offsets = [0, 7], sizes = [32, 1], strides = [1, 1]} : vector<32x20xf32> to vector<32x1xf32>
    %c7_i32_46 = arith.constant 7 : i32
    %258 = tpu.dynamic_rotate %98 by %c7_i32_46 dim 1 : vector<32x128xf32>, i32 -> vector<32x128xf32>
    %c7_i32_47 = arith.constant 7 : i32
    %259 = tpu.dynamic_rotate %101 by %c7_i32_47 dim 1 : vector<32x128xf32>, i32 -> vector<32x128xf32>
    %c7_i32_48 = arith.constant 7 : i32
    %260 = tpu.dynamic_rotate %99 by %c7_i32_48 dim 1 : vector<32x128xf32>, i32 -> vector<32x128xf32>
    %c7_i32_49 = arith.constant 7 : i32
    %261 = tpu.dynamic_rotate %100 by %c7_i32_49 dim 1 : vector<32x128xf32>, i32 -> vector<32x128xf32>
    %262 = vector.broadcast %256 : vector<32x1xf32> to vector<32x128xf32>
    %263 = arith.mulf %262, %258 : vector<32x128xf32>
    %264 = vector.broadcast %257 : vector<32x1xf32> to vector<32x128xf32>
    %265 = arith.mulf %264, %259 : vector<32x128xf32>
    %266 = arith.subf %263, %265 : vector<32x128xf32>
    %267 = vector.broadcast %28 : vector<1x128xf32> to vector<32x128xf32>
    %268 = arith.mulf %266, %267 : vector<32x128xf32>
    %269 = arith.addf %247, %268 : vector<32x128xf32>
    %270 = vector.broadcast %256 : vector<32x1xf32> to vector<32x128xf32>
    %271 = arith.mulf %270, %260 : vector<32x128xf32>
    %272 = vector.broadcast %257 : vector<32x1xf32> to vector<32x128xf32>
    %273 = arith.mulf %272, %261 : vector<32x128xf32>
    %274 = arith.addf %271, %273 : vector<32x128xf32>
    %275 = vector.broadcast %28 : vector<1x128xf32> to vector<32x128xf32>
    %276 = arith.mulf %274, %275 : vector<32x128xf32>
    %277 = arith.addf %255, %276 : vector<32x128xf32>
    %278 = vector.extract_strided_slice %102 {offsets = [0, 8], sizes = [32, 1], strides = [1, 1]} : vector<32x20xf32> to vector<32x1xf32>
    %279 = vector.extract_strided_slice %103 {offsets = [0, 8], sizes = [32, 1], strides = [1, 1]} : vector<32x20xf32> to vector<32x1xf32>
    %c8_i32_50 = arith.constant 8 : i32
    %280 = tpu.dynamic_rotate %98 by %c8_i32_50 dim 1 : vector<32x128xf32>, i32 -> vector<32x128xf32>
    %c8_i32_51 = arith.constant 8 : i32
    %281 = tpu.dynamic_rotate %101 by %c8_i32_51 dim 1 : vector<32x128xf32>, i32 -> vector<32x128xf32>
    %c8_i32_52 = arith.constant 8 : i32
    %282 = tpu.dynamic_rotate %99 by %c8_i32_52 dim 1 : vector<32x128xf32>, i32 -> vector<32x128xf32>
    %c8_i32_53 = arith.constant 8 : i32
    %283 = tpu.dynamic_rotate %100 by %c8_i32_53 dim 1 : vector<32x128xf32>, i32 -> vector<32x128xf32>
    %284 = vector.broadcast %278 : vector<32x1xf32> to vector<32x128xf32>
    %285 = arith.mulf %284, %280 : vector<32x128xf32>
    %286 = vector.broadcast %279 : vector<32x1xf32> to vector<32x128xf32>
    %287 = arith.mulf %286, %281 : vector<32x128xf32>
    %288 = arith.subf %285, %287 : vector<32x128xf32>
    %289 = vector.broadcast %32 : vector<1x128xf32> to vector<32x128xf32>
    %290 = arith.mulf %288, %289 : vector<32x128xf32>
    %291 = arith.addf %269, %290 : vector<32x128xf32>
    %292 = vector.broadcast %278 : vector<32x1xf32> to vector<32x128xf32>
    %293 = arith.mulf %292, %282 : vector<32x128xf32>
    %294 = vector.broadcast %279 : vector<32x1xf32> to vector<32x128xf32>
    %295 = arith.mulf %294, %283 : vector<32x128xf32>
    %296 = arith.addf %293, %295 : vector<32x128xf32>
    %297 = vector.broadcast %32 : vector<1x128xf32> to vector<32x128xf32>
    %298 = arith.mulf %296, %297 : vector<32x128xf32>
    %299 = arith.addf %277, %298 : vector<32x128xf32>
    %300 = vector.extract_strided_slice %102 {offsets = [0, 9], sizes = [32, 1], strides = [1, 1]} : vector<32x20xf32> to vector<32x1xf32>
    %301 = vector.extract_strided_slice %103 {offsets = [0, 9], sizes = [32, 1], strides = [1, 1]} : vector<32x20xf32> to vector<32x1xf32>
    %c9_i32_54 = arith.constant 9 : i32
    %302 = tpu.dynamic_rotate %98 by %c9_i32_54 dim 1 : vector<32x128xf32>, i32 -> vector<32x128xf32>
    %c9_i32_55 = arith.constant 9 : i32
    %303 = tpu.dynamic_rotate %101 by %c9_i32_55 dim 1 : vector<32x128xf32>, i32 -> vector<32x128xf32>
    %c9_i32_56 = arith.constant 9 : i32
    %304 = tpu.dynamic_rotate %99 by %c9_i32_56 dim 1 : vector<32x128xf32>, i32 -> vector<32x128xf32>
    %c9_i32_57 = arith.constant 9 : i32
    %305 = tpu.dynamic_rotate %100 by %c9_i32_57 dim 1 : vector<32x128xf32>, i32 -> vector<32x128xf32>
    %306 = vector.broadcast %300 : vector<32x1xf32> to vector<32x128xf32>
    %307 = arith.mulf %306, %302 : vector<32x128xf32>
    %308 = vector.broadcast %301 : vector<32x1xf32> to vector<32x128xf32>
    %309 = arith.mulf %308, %303 : vector<32x128xf32>
    %310 = arith.subf %307, %309 : vector<32x128xf32>
    %311 = vector.broadcast %36 : vector<1x128xf32> to vector<32x128xf32>
    %312 = arith.mulf %310, %311 : vector<32x128xf32>
    %313 = arith.addf %291, %312 : vector<32x128xf32>
    %314 = vector.broadcast %300 : vector<32x1xf32> to vector<32x128xf32>
    %315 = arith.mulf %314, %304 : vector<32x128xf32>
    %316 = vector.broadcast %301 : vector<32x1xf32> to vector<32x128xf32>
    %317 = arith.mulf %316, %305 : vector<32x128xf32>
    %318 = arith.addf %315, %317 : vector<32x128xf32>
    %319 = vector.broadcast %36 : vector<1x128xf32> to vector<32x128xf32>
    %320 = arith.mulf %318, %319 : vector<32x128xf32>
    %321 = arith.addf %299, %320 : vector<32x128xf32>
    %322 = vector.extract_strided_slice %102 {offsets = [0, 10], sizes = [32, 1], strides = [1, 1]} : vector<32x20xf32> to vector<32x1xf32>
    %323 = vector.extract_strided_slice %103 {offsets = [0, 10], sizes = [32, 1], strides = [1, 1]} : vector<32x20xf32> to vector<32x1xf32>
    %c10_i32_58 = arith.constant 10 : i32
    %324 = tpu.dynamic_rotate %98 by %c10_i32_58 dim 1 : vector<32x128xf32>, i32 -> vector<32x128xf32>
    %c10_i32_59 = arith.constant 10 : i32
    %325 = tpu.dynamic_rotate %101 by %c10_i32_59 dim 1 : vector<32x128xf32>, i32 -> vector<32x128xf32>
    %c10_i32_60 = arith.constant 10 : i32
    %326 = tpu.dynamic_rotate %99 by %c10_i32_60 dim 1 : vector<32x128xf32>, i32 -> vector<32x128xf32>
    %c10_i32_61 = arith.constant 10 : i32
    %327 = tpu.dynamic_rotate %100 by %c10_i32_61 dim 1 : vector<32x128xf32>, i32 -> vector<32x128xf32>
    %328 = vector.broadcast %322 : vector<32x1xf32> to vector<32x128xf32>
    %329 = arith.mulf %328, %324 : vector<32x128xf32>
    %330 = vector.broadcast %323 : vector<32x1xf32> to vector<32x128xf32>
    %331 = arith.mulf %330, %325 : vector<32x128xf32>
    %332 = arith.subf %329, %331 : vector<32x128xf32>
    %333 = vector.broadcast %40 : vector<1x128xf32> to vector<32x128xf32>
    %334 = arith.mulf %332, %333 : vector<32x128xf32>
    %335 = arith.addf %313, %334 : vector<32x128xf32>
    %336 = vector.broadcast %322 : vector<32x1xf32> to vector<32x128xf32>
    %337 = arith.mulf %336, %326 : vector<32x128xf32>
    %338 = vector.broadcast %323 : vector<32x1xf32> to vector<32x128xf32>
    %339 = arith.mulf %338, %327 : vector<32x128xf32>
    %340 = arith.addf %337, %339 : vector<32x128xf32>
    %341 = vector.broadcast %40 : vector<1x128xf32> to vector<32x128xf32>
    %342 = arith.mulf %340, %341 : vector<32x128xf32>
    %343 = arith.addf %321, %342 : vector<32x128xf32>
    %344 = vector.extract_strided_slice %102 {offsets = [0, 11], sizes = [32, 1], strides = [1, 1]} : vector<32x20xf32> to vector<32x1xf32>
    %345 = vector.extract_strided_slice %103 {offsets = [0, 11], sizes = [32, 1], strides = [1, 1]} : vector<32x20xf32> to vector<32x1xf32>
    %c11_i32_62 = arith.constant 11 : i32
    %346 = tpu.dynamic_rotate %98 by %c11_i32_62 dim 1 : vector<32x128xf32>, i32 -> vector<32x128xf32>
    %c11_i32_63 = arith.constant 11 : i32
    %347 = tpu.dynamic_rotate %101 by %c11_i32_63 dim 1 : vector<32x128xf32>, i32 -> vector<32x128xf32>
    %c11_i32_64 = arith.constant 11 : i32
    %348 = tpu.dynamic_rotate %99 by %c11_i32_64 dim 1 : vector<32x128xf32>, i32 -> vector<32x128xf32>
    %c11_i32_65 = arith.constant 11 : i32
    %349 = tpu.dynamic_rotate %100 by %c11_i32_65 dim 1 : vector<32x128xf32>, i32 -> vector<32x128xf32>
    %350 = vector.broadcast %344 : vector<32x1xf32> to vector<32x128xf32>
    %351 = arith.mulf %350, %346 : vector<32x128xf32>
    %352 = vector.broadcast %345 : vector<32x1xf32> to vector<32x128xf32>
    %353 = arith.mulf %352, %347 : vector<32x128xf32>
    %354 = arith.subf %351, %353 : vector<32x128xf32>
    %355 = vector.broadcast %44 : vector<1x128xf32> to vector<32x128xf32>
    %356 = arith.mulf %354, %355 : vector<32x128xf32>
    %357 = arith.addf %335, %356 : vector<32x128xf32>
    %358 = vector.broadcast %344 : vector<32x1xf32> to vector<32x128xf32>
    %359 = arith.mulf %358, %348 : vector<32x128xf32>
    %360 = vector.broadcast %345 : vector<32x1xf32> to vector<32x128xf32>
    %361 = arith.mulf %360, %349 : vector<32x128xf32>
    %362 = arith.addf %359, %361 : vector<32x128xf32>
    %363 = vector.broadcast %44 : vector<1x128xf32> to vector<32x128xf32>
    %364 = arith.mulf %362, %363 : vector<32x128xf32>
    %365 = arith.addf %343, %364 : vector<32x128xf32>
    %366 = vector.extract_strided_slice %102 {offsets = [0, 12], sizes = [32, 1], strides = [1, 1]} : vector<32x20xf32> to vector<32x1xf32>
    %367 = vector.extract_strided_slice %103 {offsets = [0, 12], sizes = [32, 1], strides = [1, 1]} : vector<32x20xf32> to vector<32x1xf32>
    %c12_i32_66 = arith.constant 12 : i32
    %368 = tpu.dynamic_rotate %98 by %c12_i32_66 dim 1 : vector<32x128xf32>, i32 -> vector<32x128xf32>
    %c12_i32_67 = arith.constant 12 : i32
    %369 = tpu.dynamic_rotate %101 by %c12_i32_67 dim 1 : vector<32x128xf32>, i32 -> vector<32x128xf32>
    %c12_i32_68 = arith.constant 12 : i32
    %370 = tpu.dynamic_rotate %99 by %c12_i32_68 dim 1 : vector<32x128xf32>, i32 -> vector<32x128xf32>
    %c12_i32_69 = arith.constant 12 : i32
    %371 = tpu.dynamic_rotate %100 by %c12_i32_69 dim 1 : vector<32x128xf32>, i32 -> vector<32x128xf32>
    %372 = vector.broadcast %366 : vector<32x1xf32> to vector<32x128xf32>
    %373 = arith.mulf %372, %368 : vector<32x128xf32>
    %374 = vector.broadcast %367 : vector<32x1xf32> to vector<32x128xf32>
    %375 = arith.mulf %374, %369 : vector<32x128xf32>
    %376 = arith.subf %373, %375 : vector<32x128xf32>
    %377 = vector.broadcast %48 : vector<1x128xf32> to vector<32x128xf32>
    %378 = arith.mulf %376, %377 : vector<32x128xf32>
    %379 = arith.addf %357, %378 : vector<32x128xf32>
    %380 = vector.broadcast %366 : vector<32x1xf32> to vector<32x128xf32>
    %381 = arith.mulf %380, %370 : vector<32x128xf32>
    %382 = vector.broadcast %367 : vector<32x1xf32> to vector<32x128xf32>
    %383 = arith.mulf %382, %371 : vector<32x128xf32>
    %384 = arith.addf %381, %383 : vector<32x128xf32>
    %385 = vector.broadcast %48 : vector<1x128xf32> to vector<32x128xf32>
    %386 = arith.mulf %384, %385 : vector<32x128xf32>
    %387 = arith.addf %365, %386 : vector<32x128xf32>
    %388 = vector.extract_strided_slice %102 {offsets = [0, 13], sizes = [32, 1], strides = [1, 1]} : vector<32x20xf32> to vector<32x1xf32>
    %389 = vector.extract_strided_slice %103 {offsets = [0, 13], sizes = [32, 1], strides = [1, 1]} : vector<32x20xf32> to vector<32x1xf32>
    %c13_i32_70 = arith.constant 13 : i32
    %390 = tpu.dynamic_rotate %98 by %c13_i32_70 dim 1 : vector<32x128xf32>, i32 -> vector<32x128xf32>
    %c13_i32_71 = arith.constant 13 : i32
    %391 = tpu.dynamic_rotate %101 by %c13_i32_71 dim 1 : vector<32x128xf32>, i32 -> vector<32x128xf32>
    %c13_i32_72 = arith.constant 13 : i32
    %392 = tpu.dynamic_rotate %99 by %c13_i32_72 dim 1 : vector<32x128xf32>, i32 -> vector<32x128xf32>
    %c13_i32_73 = arith.constant 13 : i32
    %393 = tpu.dynamic_rotate %100 by %c13_i32_73 dim 1 : vector<32x128xf32>, i32 -> vector<32x128xf32>
    %394 = vector.broadcast %388 : vector<32x1xf32> to vector<32x128xf32>
    %395 = arith.mulf %394, %390 : vector<32x128xf32>
    %396 = vector.broadcast %389 : vector<32x1xf32> to vector<32x128xf32>
    %397 = arith.mulf %396, %391 : vector<32x128xf32>
    %398 = arith.subf %395, %397 : vector<32x128xf32>
    %399 = vector.broadcast %52 : vector<1x128xf32> to vector<32x128xf32>
    %400 = arith.mulf %398, %399 : vector<32x128xf32>
    %401 = arith.addf %379, %400 : vector<32x128xf32>
    %402 = vector.broadcast %388 : vector<32x1xf32> to vector<32x128xf32>
    %403 = arith.mulf %402, %392 : vector<32x128xf32>
    %404 = vector.broadcast %389 : vector<32x1xf32> to vector<32x128xf32>
    %405 = arith.mulf %404, %393 : vector<32x128xf32>
    %406 = arith.addf %403, %405 : vector<32x128xf32>
    %407 = vector.broadcast %52 : vector<1x128xf32> to vector<32x128xf32>
    %408 = arith.mulf %406, %407 : vector<32x128xf32>
    %409 = arith.addf %387, %408 : vector<32x128xf32>
    %410 = vector.extract_strided_slice %102 {offsets = [0, 14], sizes = [32, 1], strides = [1, 1]} : vector<32x20xf32> to vector<32x1xf32>
    %411 = vector.extract_strided_slice %103 {offsets = [0, 14], sizes = [32, 1], strides = [1, 1]} : vector<32x20xf32> to vector<32x1xf32>
    %c14_i32_74 = arith.constant 14 : i32
    %412 = tpu.dynamic_rotate %98 by %c14_i32_74 dim 1 : vector<32x128xf32>, i32 -> vector<32x128xf32>
    %c14_i32_75 = arith.constant 14 : i32
    %413 = tpu.dynamic_rotate %101 by %c14_i32_75 dim 1 : vector<32x128xf32>, i32 -> vector<32x128xf32>
    %c14_i32_76 = arith.constant 14 : i32
    %414 = tpu.dynamic_rotate %99 by %c14_i32_76 dim 1 : vector<32x128xf32>, i32 -> vector<32x128xf32>
    %c14_i32_77 = arith.constant 14 : i32
    %415 = tpu.dynamic_rotate %100 by %c14_i32_77 dim 1 : vector<32x128xf32>, i32 -> vector<32x128xf32>
    %416 = vector.broadcast %410 : vector<32x1xf32> to vector<32x128xf32>
    %417 = arith.mulf %416, %412 : vector<32x128xf32>
    %418 = vector.broadcast %411 : vector<32x1xf32> to vector<32x128xf32>
    %419 = arith.mulf %418, %413 : vector<32x128xf32>
    %420 = arith.subf %417, %419 : vector<32x128xf32>
    %421 = vector.broadcast %56 : vector<1x128xf32> to vector<32x128xf32>
    %422 = arith.mulf %420, %421 : vector<32x128xf32>
    %423 = arith.addf %401, %422 : vector<32x128xf32>
    %424 = vector.broadcast %410 : vector<32x1xf32> to vector<32x128xf32>
    %425 = arith.mulf %424, %414 : vector<32x128xf32>
    %426 = vector.broadcast %411 : vector<32x1xf32> to vector<32x128xf32>
    %427 = arith.mulf %426, %415 : vector<32x128xf32>
    %428 = arith.addf %425, %427 : vector<32x128xf32>
    %429 = vector.broadcast %56 : vector<1x128xf32> to vector<32x128xf32>
    %430 = arith.mulf %428, %429 : vector<32x128xf32>
    %431 = arith.addf %409, %430 : vector<32x128xf32>
    %432 = vector.extract_strided_slice %102 {offsets = [0, 15], sizes = [32, 1], strides = [1, 1]} : vector<32x20xf32> to vector<32x1xf32>
    %433 = vector.extract_strided_slice %103 {offsets = [0, 15], sizes = [32, 1], strides = [1, 1]} : vector<32x20xf32> to vector<32x1xf32>
    %c15_i32_78 = arith.constant 15 : i32
    %434 = tpu.dynamic_rotate %98 by %c15_i32_78 dim 1 : vector<32x128xf32>, i32 -> vector<32x128xf32>
    %c15_i32_79 = arith.constant 15 : i32
    %435 = tpu.dynamic_rotate %101 by %c15_i32_79 dim 1 : vector<32x128xf32>, i32 -> vector<32x128xf32>
    %c15_i32_80 = arith.constant 15 : i32
    %436 = tpu.dynamic_rotate %99 by %c15_i32_80 dim 1 : vector<32x128xf32>, i32 -> vector<32x128xf32>
    %c15_i32_81 = arith.constant 15 : i32
    %437 = tpu.dynamic_rotate %100 by %c15_i32_81 dim 1 : vector<32x128xf32>, i32 -> vector<32x128xf32>
    %438 = vector.broadcast %432 : vector<32x1xf32> to vector<32x128xf32>
    %439 = arith.mulf %438, %434 : vector<32x128xf32>
    %440 = vector.broadcast %433 : vector<32x1xf32> to vector<32x128xf32>
    %441 = arith.mulf %440, %435 : vector<32x128xf32>
    %442 = arith.subf %439, %441 : vector<32x128xf32>
    %443 = vector.broadcast %60 : vector<1x128xf32> to vector<32x128xf32>
    %444 = arith.mulf %442, %443 : vector<32x128xf32>
    %445 = arith.addf %423, %444 : vector<32x128xf32>
    %446 = vector.broadcast %432 : vector<32x1xf32> to vector<32x128xf32>
    %447 = arith.mulf %446, %436 : vector<32x128xf32>
    %448 = vector.broadcast %433 : vector<32x1xf32> to vector<32x128xf32>
    %449 = arith.mulf %448, %437 : vector<32x128xf32>
    %450 = arith.addf %447, %449 : vector<32x128xf32>
    %451 = vector.broadcast %60 : vector<1x128xf32> to vector<32x128xf32>
    %452 = arith.mulf %450, %451 : vector<32x128xf32>
    %453 = arith.addf %431, %452 : vector<32x128xf32>
    %454 = vector.extract_strided_slice %102 {offsets = [0, 16], sizes = [32, 1], strides = [1, 1]} : vector<32x20xf32> to vector<32x1xf32>
    %455 = vector.extract_strided_slice %103 {offsets = [0, 16], sizes = [32, 1], strides = [1, 1]} : vector<32x20xf32> to vector<32x1xf32>
    %c16_i32_82 = arith.constant 16 : i32
    %456 = tpu.dynamic_rotate %98 by %c16_i32_82 dim 1 : vector<32x128xf32>, i32 -> vector<32x128xf32>
    %c16_i32_83 = arith.constant 16 : i32
    %457 = tpu.dynamic_rotate %101 by %c16_i32_83 dim 1 : vector<32x128xf32>, i32 -> vector<32x128xf32>
    %c16_i32_84 = arith.constant 16 : i32
    %458 = tpu.dynamic_rotate %99 by %c16_i32_84 dim 1 : vector<32x128xf32>, i32 -> vector<32x128xf32>
    %c16_i32_85 = arith.constant 16 : i32
    %459 = tpu.dynamic_rotate %100 by %c16_i32_85 dim 1 : vector<32x128xf32>, i32 -> vector<32x128xf32>
    %460 = vector.broadcast %454 : vector<32x1xf32> to vector<32x128xf32>
    %461 = arith.mulf %460, %456 : vector<32x128xf32>
    %462 = vector.broadcast %455 : vector<32x1xf32> to vector<32x128xf32>
    %463 = arith.mulf %462, %457 : vector<32x128xf32>
    %464 = arith.subf %461, %463 : vector<32x128xf32>
    %465 = vector.broadcast %64 : vector<1x128xf32> to vector<32x128xf32>
    %466 = arith.mulf %464, %465 : vector<32x128xf32>
    %467 = arith.addf %445, %466 : vector<32x128xf32>
    %468 = vector.broadcast %454 : vector<32x1xf32> to vector<32x128xf32>
    %469 = arith.mulf %468, %458 : vector<32x128xf32>
    %470 = vector.broadcast %455 : vector<32x1xf32> to vector<32x128xf32>
    %471 = arith.mulf %470, %459 : vector<32x128xf32>
    %472 = arith.addf %469, %471 : vector<32x128xf32>
    %473 = vector.broadcast %64 : vector<1x128xf32> to vector<32x128xf32>
    %474 = arith.mulf %472, %473 : vector<32x128xf32>
    %475 = arith.addf %453, %474 : vector<32x128xf32>
    %476 = vector.extract_strided_slice %102 {offsets = [0, 17], sizes = [32, 1], strides = [1, 1]} : vector<32x20xf32> to vector<32x1xf32>
    %477 = vector.extract_strided_slice %103 {offsets = [0, 17], sizes = [32, 1], strides = [1, 1]} : vector<32x20xf32> to vector<32x1xf32>
    %c17_i32_86 = arith.constant 17 : i32
    %478 = tpu.dynamic_rotate %98 by %c17_i32_86 dim 1 : vector<32x128xf32>, i32 -> vector<32x128xf32>
    %c17_i32_87 = arith.constant 17 : i32
    %479 = tpu.dynamic_rotate %101 by %c17_i32_87 dim 1 : vector<32x128xf32>, i32 -> vector<32x128xf32>
    %c17_i32_88 = arith.constant 17 : i32
    %480 = tpu.dynamic_rotate %99 by %c17_i32_88 dim 1 : vector<32x128xf32>, i32 -> vector<32x128xf32>
    %c17_i32_89 = arith.constant 17 : i32
    %481 = tpu.dynamic_rotate %100 by %c17_i32_89 dim 1 : vector<32x128xf32>, i32 -> vector<32x128xf32>
    %482 = vector.broadcast %476 : vector<32x1xf32> to vector<32x128xf32>
    %483 = arith.mulf %482, %478 : vector<32x128xf32>
    %484 = vector.broadcast %477 : vector<32x1xf32> to vector<32x128xf32>
    %485 = arith.mulf %484, %479 : vector<32x128xf32>
    %486 = arith.subf %483, %485 : vector<32x128xf32>
    %487 = vector.broadcast %68 : vector<1x128xf32> to vector<32x128xf32>
    %488 = arith.mulf %486, %487 : vector<32x128xf32>
    %489 = arith.addf %467, %488 : vector<32x128xf32>
    %490 = vector.broadcast %476 : vector<32x1xf32> to vector<32x128xf32>
    %491 = arith.mulf %490, %480 : vector<32x128xf32>
    %492 = vector.broadcast %477 : vector<32x1xf32> to vector<32x128xf32>
    %493 = arith.mulf %492, %481 : vector<32x128xf32>
    %494 = arith.addf %491, %493 : vector<32x128xf32>
    %495 = vector.broadcast %68 : vector<1x128xf32> to vector<32x128xf32>
    %496 = arith.mulf %494, %495 : vector<32x128xf32>
    %497 = arith.addf %475, %496 : vector<32x128xf32>
    %498 = vector.extract_strided_slice %102 {offsets = [0, 18], sizes = [32, 1], strides = [1, 1]} : vector<32x20xf32> to vector<32x1xf32>
    %499 = vector.extract_strided_slice %103 {offsets = [0, 18], sizes = [32, 1], strides = [1, 1]} : vector<32x20xf32> to vector<32x1xf32>
    %c18_i32_90 = arith.constant 18 : i32
    %500 = tpu.dynamic_rotate %98 by %c18_i32_90 dim 1 : vector<32x128xf32>, i32 -> vector<32x128xf32>
    %c18_i32_91 = arith.constant 18 : i32
    %501 = tpu.dynamic_rotate %101 by %c18_i32_91 dim 1 : vector<32x128xf32>, i32 -> vector<32x128xf32>
    %c18_i32_92 = arith.constant 18 : i32
    %502 = tpu.dynamic_rotate %99 by %c18_i32_92 dim 1 : vector<32x128xf32>, i32 -> vector<32x128xf32>
    %c18_i32_93 = arith.constant 18 : i32
    %503 = tpu.dynamic_rotate %100 by %c18_i32_93 dim 1 : vector<32x128xf32>, i32 -> vector<32x128xf32>
    %504 = vector.broadcast %498 : vector<32x1xf32> to vector<32x128xf32>
    %505 = arith.mulf %504, %500 : vector<32x128xf32>
    %506 = vector.broadcast %499 : vector<32x1xf32> to vector<32x128xf32>
    %507 = arith.mulf %506, %501 : vector<32x128xf32>
    %508 = arith.subf %505, %507 : vector<32x128xf32>
    %509 = vector.broadcast %72 : vector<1x128xf32> to vector<32x128xf32>
    %510 = arith.mulf %508, %509 : vector<32x128xf32>
    %511 = arith.addf %489, %510 : vector<32x128xf32>
    %512 = vector.broadcast %498 : vector<32x1xf32> to vector<32x128xf32>
    %513 = arith.mulf %512, %502 : vector<32x128xf32>
    %514 = vector.broadcast %499 : vector<32x1xf32> to vector<32x128xf32>
    %515 = arith.mulf %514, %503 : vector<32x128xf32>
    %516 = arith.addf %513, %515 : vector<32x128xf32>
    %517 = vector.broadcast %72 : vector<1x128xf32> to vector<32x128xf32>
    %518 = arith.mulf %516, %517 : vector<32x128xf32>
    %519 = arith.addf %497, %518 : vector<32x128xf32>
    %520 = vector.extract_strided_slice %102 {offsets = [0, 19], sizes = [32, 1], strides = [1, 1]} : vector<32x20xf32> to vector<32x1xf32>
    %521 = vector.extract_strided_slice %103 {offsets = [0, 19], sizes = [32, 1], strides = [1, 1]} : vector<32x20xf32> to vector<32x1xf32>
    %c19_i32_94 = arith.constant 19 : i32
    %522 = tpu.dynamic_rotate %98 by %c19_i32_94 dim 1 : vector<32x128xf32>, i32 -> vector<32x128xf32>
    %c19_i32_95 = arith.constant 19 : i32
    %523 = tpu.dynamic_rotate %101 by %c19_i32_95 dim 1 : vector<32x128xf32>, i32 -> vector<32x128xf32>
    %c19_i32_96 = arith.constant 19 : i32
    %524 = tpu.dynamic_rotate %99 by %c19_i32_96 dim 1 : vector<32x128xf32>, i32 -> vector<32x128xf32>
    %c19_i32_97 = arith.constant 19 : i32
    %525 = tpu.dynamic_rotate %100 by %c19_i32_97 dim 1 : vector<32x128xf32>, i32 -> vector<32x128xf32>
    %526 = vector.broadcast %520 : vector<32x1xf32> to vector<32x128xf32>
    %527 = arith.mulf %526, %522 : vector<32x128xf32>
    %528 = vector.broadcast %521 : vector<32x1xf32> to vector<32x128xf32>
    %529 = arith.mulf %528, %523 : vector<32x128xf32>
    %530 = arith.subf %527, %529 : vector<32x128xf32>
    %531 = vector.broadcast %76 : vector<1x128xf32> to vector<32x128xf32>
    %532 = arith.mulf %530, %531 : vector<32x128xf32>
    %533 = arith.addf %511, %532 : vector<32x128xf32>
    %534 = vector.broadcast %520 : vector<32x1xf32> to vector<32x128xf32>
    %535 = arith.mulf %534, %524 : vector<32x128xf32>
    %536 = vector.broadcast %521 : vector<32x1xf32> to vector<32x128xf32>
    %537 = arith.mulf %536, %525 : vector<32x128xf32>
    %538 = arith.addf %535, %537 : vector<32x128xf32>
    %539 = vector.broadcast %76 : vector<1x128xf32> to vector<32x128xf32>
    %540 = arith.mulf %538, %539 : vector<32x128xf32>
    %541 = arith.addf %519, %540 : vector<32x128xf32>
    %542 = tpu.concatenate %533, %541 in 1 : vector<32x128xf32>, vector<32x128xf32> -> vector<32x256xf32>
    %543 = arith.truncf %542 : vector<32x256xf32> to vector<32x256xbf16>
    %c0_98 = arith.constant 0 : index
    %c0_99 = arith.constant 0 : index
    %544 = vector.load %arg9[%c0_98, %c0_99] : memref<64x32xbf16, #tpu.memory_space<vmem>>, vector<64x32xbf16>
    %cst_100 = arith.constant dense<0.000000e+00> : vector<64x256xf32>
    %545 = tpu.matmul %544, %543, %cst_100 {dimension_numbers = #tpu.dot_dimension_numbers<[1], [0], [0], [1], [0, 0, 1, 1], [], []>} : vector<64x32xbf16>, vector<32x256xbf16>, vector<64x256xf32> -> vector<64x256xf32>
    %c0_101 = arith.constant 0 : index
    %c0_102 = arith.constant 0 : index
    %546 = vector.load %arg10[%c0_101, %c0_102] : memref<64x1xf32, #tpu.memory_space<vmem>>, vector<64x1xf32>
    %547 = vector.broadcast %546 : vector<64x1xf32> to vector<64x256xf32>
    %548 = arith.addf %545, %547 : vector<64x256xf32>
    %cst_103 = arith.constant 0.000000e+00 : f32
    %549 = vector.broadcast %cst_103 : f32 to vector<64x256xf32>
    %550 = arith.maximumf %548, %549 : vector<64x256xf32>
    %551 = vector.extract_strided_slice %550 {offsets = [0, 0], sizes = [32, 256], strides = [1, 1]} : vector<64x256xf32> to vector<32x256xf32>
    %552 = arith.truncf %551 : vector<32x256xf32> to vector<32x256xbf16>
    %553 = vector.extract_strided_slice %550 {offsets = [32, 0], sizes = [32, 256], strides = [1, 1]} : vector<64x256xf32> to vector<32x256xf32>
    %554 = arith.truncf %553 : vector<32x256xf32> to vector<32x256xbf16>
    %c0_104 = arith.constant 0 : index
    %c0_105 = arith.constant 0 : index
    %555 = vector.load %arg11[%c0_104, %c0_105] : memref<32x32xbf16, #tpu.memory_space<vmem>>, vector<32x32xbf16>
    %cst_106 = arith.constant dense<0.000000e+00> : vector<32x256xf32>
    %556 = tpu.matmul %555, %552, %cst_106 {dimension_numbers = #tpu.dot_dimension_numbers<[1], [0], [0], [1], [0, 0, 1, 1], [], []>} : vector<32x32xbf16>, vector<32x256xbf16>, vector<32x256xf32> -> vector<32x256xf32>
    %c0_107 = arith.constant 0 : index
    %c0_108 = arith.constant 0 : index
    %557 = vector.load %arg12[%c0_107, %c0_108] : memref<32x32xbf16, #tpu.memory_space<vmem>>, vector<32x32xbf16>
    %cst_109 = arith.constant dense<0.000000e+00> : vector<32x256xf32>
    %558 = tpu.matmul %557, %554, %cst_109 {dimension_numbers = #tpu.dot_dimension_numbers<[1], [0], [0], [1], [0, 0, 1, 1], [], []>} : vector<32x32xbf16>, vector<32x256xbf16>, vector<32x256xf32> -> vector<32x256xf32>
    %559 = vector.extract_strided_slice %556 {offsets = [0, 0], sizes = [32, 128], strides = [1, 1]} : vector<32x256xf32> to vector<32x128xf32>
    %560 = vector.extract_strided_slice %556 {offsets = [0, 128], sizes = [32, 128], strides = [1, 1]} : vector<32x256xf32> to vector<32x128xf32>
    %561 = vector.extract_strided_slice %558 {offsets = [0, 0], sizes = [32, 128], strides = [1, 1]} : vector<32x256xf32> to vector<32x128xf32>
    %562 = vector.extract_strided_slice %558 {offsets = [0, 128], sizes = [32, 128], strides = [1, 1]} : vector<32x256xf32> to vector<32x128xf32>
    %c0_110 = arith.constant 0 : index
    %c0_111 = arith.constant 0 : index
    %563 = vector.load %arg13[%c0_110, %c0_111] : memref<32x20xf32, #tpu.memory_space<vmem>>, vector<32x20xf32>
    %c0_112 = arith.constant 0 : index
    %c0_113 = arith.constant 0 : index
    %564 = vector.load %arg14[%c0_112, %c0_113] : memref<32x20xf32, #tpu.memory_space<vmem>>, vector<32x20xf32>
    %565 = vector.extract_strided_slice %563 {offsets = [0, 0], sizes = [32, 1], strides = [1, 1]} : vector<32x20xf32> to vector<32x1xf32>
    %cst_114 = arith.constant 1.000000e+00 : f32
    %566 = vector.broadcast %cst_114 : f32 to vector<32x1xf32>
    %567 = arith.addf %566, %565 : vector<32x1xf32>
    %568 = vector.extract_strided_slice %564 {offsets = [0, 0], sizes = [32, 1], strides = [1, 1]} : vector<32x20xf32> to vector<32x1xf32>
    %cst_115 = arith.constant 1.000000e+00 : f32
    %569 = vector.broadcast %cst_115 : f32 to vector<32x1xf32>
    %570 = arith.addf %569, %568 : vector<32x1xf32>
    %571 = arith.subf %533, %541 : vector<32x128xf32>
    %572 = vector.broadcast %567 : vector<32x1xf32> to vector<32x128xf32>
    %573 = arith.mulf %559, %572 : vector<32x128xf32>
    %574 = arith.addf %571, %573 : vector<32x128xf32>
    %575 = vector.broadcast %570 : vector<32x1xf32> to vector<32x128xf32>
    %576 = arith.mulf %562, %575 : vector<32x128xf32>
    %577 = arith.subf %574, %576 : vector<32x128xf32>
    %578 = arith.addf %533, %541 : vector<32x128xf32>
    %579 = vector.broadcast %567 : vector<32x1xf32> to vector<32x128xf32>
    %580 = arith.mulf %560, %579 : vector<32x128xf32>
    %581 = arith.addf %578, %580 : vector<32x128xf32>
    %582 = vector.broadcast %570 : vector<32x1xf32> to vector<32x128xf32>
    %583 = arith.mulf %561, %582 : vector<32x128xf32>
    %584 = arith.addf %581, %583 : vector<32x128xf32>
    %585 = vector.extract_strided_slice %563 {offsets = [0, 1], sizes = [32, 1], strides = [1, 1]} : vector<32x20xf32> to vector<32x1xf32>
    %586 = vector.extract_strided_slice %564 {offsets = [0, 1], sizes = [32, 1], strides = [1, 1]} : vector<32x20xf32> to vector<32x1xf32>
    %c1_i32_116 = arith.constant 1 : i32
    %587 = tpu.dynamic_rotate %559 by %c1_i32_116 dim 1 : vector<32x128xf32>, i32 -> vector<32x128xf32>
    %c1_i32_117 = arith.constant 1 : i32
    %588 = tpu.dynamic_rotate %562 by %c1_i32_117 dim 1 : vector<32x128xf32>, i32 -> vector<32x128xf32>
    %c1_i32_118 = arith.constant 1 : i32
    %589 = tpu.dynamic_rotate %560 by %c1_i32_118 dim 1 : vector<32x128xf32>, i32 -> vector<32x128xf32>
    %c1_i32_119 = arith.constant 1 : i32
    %590 = tpu.dynamic_rotate %561 by %c1_i32_119 dim 1 : vector<32x128xf32>, i32 -> vector<32x128xf32>
    %591 = vector.broadcast %585 : vector<32x1xf32> to vector<32x128xf32>
    %592 = arith.mulf %591, %587 : vector<32x128xf32>
    %593 = vector.broadcast %586 : vector<32x1xf32> to vector<32x128xf32>
    %594 = arith.mulf %593, %588 : vector<32x128xf32>
    %595 = arith.subf %592, %594 : vector<32x128xf32>
    %596 = vector.broadcast %4 : vector<1x128xf32> to vector<32x128xf32>
    %597 = arith.mulf %595, %596 : vector<32x128xf32>
    %598 = arith.addf %577, %597 : vector<32x128xf32>
    %599 = vector.broadcast %585 : vector<32x1xf32> to vector<32x128xf32>
    %600 = arith.mulf %599, %589 : vector<32x128xf32>
    %601 = vector.broadcast %586 : vector<32x1xf32> to vector<32x128xf32>
    %602 = arith.mulf %601, %590 : vector<32x128xf32>
    %603 = arith.addf %600, %602 : vector<32x128xf32>
    %604 = vector.broadcast %4 : vector<1x128xf32> to vector<32x128xf32>
    %605 = arith.mulf %603, %604 : vector<32x128xf32>
    %606 = arith.addf %584, %605 : vector<32x128xf32>
    %607 = vector.extract_strided_slice %563 {offsets = [0, 2], sizes = [32, 1], strides = [1, 1]} : vector<32x20xf32> to vector<32x1xf32>
    %608 = vector.extract_strided_slice %564 {offsets = [0, 2], sizes = [32, 1], strides = [1, 1]} : vector<32x20xf32> to vector<32x1xf32>
    %c2_i32_120 = arith.constant 2 : i32
    %609 = tpu.dynamic_rotate %559 by %c2_i32_120 dim 1 : vector<32x128xf32>, i32 -> vector<32x128xf32>
    %c2_i32_121 = arith.constant 2 : i32
    %610 = tpu.dynamic_rotate %562 by %c2_i32_121 dim 1 : vector<32x128xf32>, i32 -> vector<32x128xf32>
    %c2_i32_122 = arith.constant 2 : i32
    %611 = tpu.dynamic_rotate %560 by %c2_i32_122 dim 1 : vector<32x128xf32>, i32 -> vector<32x128xf32>
    %c2_i32_123 = arith.constant 2 : i32
    %612 = tpu.dynamic_rotate %561 by %c2_i32_123 dim 1 : vector<32x128xf32>, i32 -> vector<32x128xf32>
    %613 = vector.broadcast %607 : vector<32x1xf32> to vector<32x128xf32>
    %614 = arith.mulf %613, %609 : vector<32x128xf32>
    %615 = vector.broadcast %608 : vector<32x1xf32> to vector<32x128xf32>
    %616 = arith.mulf %615, %610 : vector<32x128xf32>
    %617 = arith.subf %614, %616 : vector<32x128xf32>
    %618 = vector.broadcast %8 : vector<1x128xf32> to vector<32x128xf32>
    %619 = arith.mulf %617, %618 : vector<32x128xf32>
    %620 = arith.addf %598, %619 : vector<32x128xf32>
    %621 = vector.broadcast %607 : vector<32x1xf32> to vector<32x128xf32>
    %622 = arith.mulf %621, %611 : vector<32x128xf32>
    %623 = vector.broadcast %608 : vector<32x1xf32> to vector<32x128xf32>
    %624 = arith.mulf %623, %612 : vector<32x128xf32>
    %625 = arith.addf %622, %624 : vector<32x128xf32>
    %626 = vector.broadcast %8 : vector<1x128xf32> to vector<32x128xf32>
    %627 = arith.mulf %625, %626 : vector<32x128xf32>
    %628 = arith.addf %606, %627 : vector<32x128xf32>
    %629 = vector.extract_strided_slice %563 {offsets = [0, 3], sizes = [32, 1], strides = [1, 1]} : vector<32x20xf32> to vector<32x1xf32>
    %630 = vector.extract_strided_slice %564 {offsets = [0, 3], sizes = [32, 1], strides = [1, 1]} : vector<32x20xf32> to vector<32x1xf32>
    %c3_i32_124 = arith.constant 3 : i32
    %631 = tpu.dynamic_rotate %559 by %c3_i32_124 dim 1 : vector<32x128xf32>, i32 -> vector<32x128xf32>
    %c3_i32_125 = arith.constant 3 : i32
    %632 = tpu.dynamic_rotate %562 by %c3_i32_125 dim 1 : vector<32x128xf32>, i32 -> vector<32x128xf32>
    %c3_i32_126 = arith.constant 3 : i32
    %633 = tpu.dynamic_rotate %560 by %c3_i32_126 dim 1 : vector<32x128xf32>, i32 -> vector<32x128xf32>
    %c3_i32_127 = arith.constant 3 : i32
    %634 = tpu.dynamic_rotate %561 by %c3_i32_127 dim 1 : vector<32x128xf32>, i32 -> vector<32x128xf32>
    %635 = vector.broadcast %629 : vector<32x1xf32> to vector<32x128xf32>
    %636 = arith.mulf %635, %631 : vector<32x128xf32>
    %637 = vector.broadcast %630 : vector<32x1xf32> to vector<32x128xf32>
    %638 = arith.mulf %637, %632 : vector<32x128xf32>
    %639 = arith.subf %636, %638 : vector<32x128xf32>
    %640 = vector.broadcast %12 : vector<1x128xf32> to vector<32x128xf32>
    %641 = arith.mulf %639, %640 : vector<32x128xf32>
    %642 = arith.addf %620, %641 : vector<32x128xf32>
    %643 = vector.broadcast %629 : vector<32x1xf32> to vector<32x128xf32>
    %644 = arith.mulf %643, %633 : vector<32x128xf32>
    %645 = vector.broadcast %630 : vector<32x1xf32> to vector<32x128xf32>
    %646 = arith.mulf %645, %634 : vector<32x128xf32>
    %647 = arith.addf %644, %646 : vector<32x128xf32>
    %648 = vector.broadcast %12 : vector<1x128xf32> to vector<32x128xf32>
    %649 = arith.mulf %647, %648 : vector<32x128xf32>
    %650 = arith.addf %628, %649 : vector<32x128xf32>
    %651 = vector.extract_strided_slice %563 {offsets = [0, 4], sizes = [32, 1], strides = [1, 1]} : vector<32x20xf32> to vector<32x1xf32>
    %652 = vector.extract_strided_slice %564 {offsets = [0, 4], sizes = [32, 1], strides = [1, 1]} : vector<32x20xf32> to vector<32x1xf32>
    %c4_i32_128 = arith.constant 4 : i32
    %653 = tpu.dynamic_rotate %559 by %c4_i32_128 dim 1 : vector<32x128xf32>, i32 -> vector<32x128xf32>
    %c4_i32_129 = arith.constant 4 : i32
    %654 = tpu.dynamic_rotate %562 by %c4_i32_129 dim 1 : vector<32x128xf32>, i32 -> vector<32x128xf32>
    %c4_i32_130 = arith.constant 4 : i32
    %655 = tpu.dynamic_rotate %560 by %c4_i32_130 dim 1 : vector<32x128xf32>, i32 -> vector<32x128xf32>
    %c4_i32_131 = arith.constant 4 : i32
    %656 = tpu.dynamic_rotate %561 by %c4_i32_131 dim 1 : vector<32x128xf32>, i32 -> vector<32x128xf32>
    %657 = vector.broadcast %651 : vector<32x1xf32> to vector<32x128xf32>
    %658 = arith.mulf %657, %653 : vector<32x128xf32>
    %659 = vector.broadcast %652 : vector<32x1xf32> to vector<32x128xf32>
    %660 = arith.mulf %659, %654 : vector<32x128xf32>
    %661 = arith.subf %658, %660 : vector<32x128xf32>
    %662 = vector.broadcast %16 : vector<1x128xf32> to vector<32x128xf32>
    %663 = arith.mulf %661, %662 : vector<32x128xf32>
    %664 = arith.addf %642, %663 : vector<32x128xf32>
    %665 = vector.broadcast %651 : vector<32x1xf32> to vector<32x128xf32>
    %666 = arith.mulf %665, %655 : vector<32x128xf32>
    %667 = vector.broadcast %652 : vector<32x1xf32> to vector<32x128xf32>
    %668 = arith.mulf %667, %656 : vector<32x128xf32>
    %669 = arith.addf %666, %668 : vector<32x128xf32>
    %670 = vector.broadcast %16 : vector<1x128xf32> to vector<32x128xf32>
    %671 = arith.mulf %669, %670 : vector<32x128xf32>
    %672 = arith.addf %650, %671 : vector<32x128xf32>
    %673 = vector.extract_strided_slice %563 {offsets = [0, 5], sizes = [32, 1], strides = [1, 1]} : vector<32x20xf32> to vector<32x1xf32>
    %674 = vector.extract_strided_slice %564 {offsets = [0, 5], sizes = [32, 1], strides = [1, 1]} : vector<32x20xf32> to vector<32x1xf32>
    %c5_i32_132 = arith.constant 5 : i32
    %675 = tpu.dynamic_rotate %559 by %c5_i32_132 dim 1 : vector<32x128xf32>, i32 -> vector<32x128xf32>
    %c5_i32_133 = arith.constant 5 : i32
    %676 = tpu.dynamic_rotate %562 by %c5_i32_133 dim 1 : vector<32x128xf32>, i32 -> vector<32x128xf32>
    %c5_i32_134 = arith.constant 5 : i32
    %677 = tpu.dynamic_rotate %560 by %c5_i32_134 dim 1 : vector<32x128xf32>, i32 -> vector<32x128xf32>
    %c5_i32_135 = arith.constant 5 : i32
    %678 = tpu.dynamic_rotate %561 by %c5_i32_135 dim 1 : vector<32x128xf32>, i32 -> vector<32x128xf32>
    %679 = vector.broadcast %673 : vector<32x1xf32> to vector<32x128xf32>
    %680 = arith.mulf %679, %675 : vector<32x128xf32>
    %681 = vector.broadcast %674 : vector<32x1xf32> to vector<32x128xf32>
    %682 = arith.mulf %681, %676 : vector<32x128xf32>
    %683 = arith.subf %680, %682 : vector<32x128xf32>
    %684 = vector.broadcast %20 : vector<1x128xf32> to vector<32x128xf32>
    %685 = arith.mulf %683, %684 : vector<32x128xf32>
    %686 = arith.addf %664, %685 : vector<32x128xf32>
    %687 = vector.broadcast %673 : vector<32x1xf32> to vector<32x128xf32>
    %688 = arith.mulf %687, %677 : vector<32x128xf32>
    %689 = vector.broadcast %674 : vector<32x1xf32> to vector<32x128xf32>
    %690 = arith.mulf %689, %678 : vector<32x128xf32>
    %691 = arith.addf %688, %690 : vector<32x128xf32>
    %692 = vector.broadcast %20 : vector<1x128xf32> to vector<32x128xf32>
    %693 = arith.mulf %691, %692 : vector<32x128xf32>
    %694 = arith.addf %672, %693 : vector<32x128xf32>
    %695 = vector.extract_strided_slice %563 {offsets = [0, 6], sizes = [32, 1], strides = [1, 1]} : vector<32x20xf32> to vector<32x1xf32>
    %696 = vector.extract_strided_slice %564 {offsets = [0, 6], sizes = [32, 1], strides = [1, 1]} : vector<32x20xf32> to vector<32x1xf32>
    %c6_i32_136 = arith.constant 6 : i32
    %697 = tpu.dynamic_rotate %559 by %c6_i32_136 dim 1 : vector<32x128xf32>, i32 -> vector<32x128xf32>
    %c6_i32_137 = arith.constant 6 : i32
    %698 = tpu.dynamic_rotate %562 by %c6_i32_137 dim 1 : vector<32x128xf32>, i32 -> vector<32x128xf32>
    %c6_i32_138 = arith.constant 6 : i32
    %699 = tpu.dynamic_rotate %560 by %c6_i32_138 dim 1 : vector<32x128xf32>, i32 -> vector<32x128xf32>
    %c6_i32_139 = arith.constant 6 : i32
    %700 = tpu.dynamic_rotate %561 by %c6_i32_139 dim 1 : vector<32x128xf32>, i32 -> vector<32x128xf32>
    %701 = vector.broadcast %695 : vector<32x1xf32> to vector<32x128xf32>
    %702 = arith.mulf %701, %697 : vector<32x128xf32>
    %703 = vector.broadcast %696 : vector<32x1xf32> to vector<32x128xf32>
    %704 = arith.mulf %703, %698 : vector<32x128xf32>
    %705 = arith.subf %702, %704 : vector<32x128xf32>
    %706 = vector.broadcast %24 : vector<1x128xf32> to vector<32x128xf32>
    %707 = arith.mulf %705, %706 : vector<32x128xf32>
    %708 = arith.addf %686, %707 : vector<32x128xf32>
    %709 = vector.broadcast %695 : vector<32x1xf32> to vector<32x128xf32>
    %710 = arith.mulf %709, %699 : vector<32x128xf32>
    %711 = vector.broadcast %696 : vector<32x1xf32> to vector<32x128xf32>
    %712 = arith.mulf %711, %700 : vector<32x128xf32>
    %713 = arith.addf %710, %712 : vector<32x128xf32>
    %714 = vector.broadcast %24 : vector<1x128xf32> to vector<32x128xf32>
    %715 = arith.mulf %713, %714 : vector<32x128xf32>
    %716 = arith.addf %694, %715 : vector<32x128xf32>
    %717 = vector.extract_strided_slice %563 {offsets = [0, 7], sizes = [32, 1], strides = [1, 1]} : vector<32x20xf32> to vector<32x1xf32>
    %718 = vector.extract_strided_slice %564 {offsets = [0, 7], sizes = [32, 1], strides = [1, 1]} : vector<32x20xf32> to vector<32x1xf32>
    %c7_i32_140 = arith.constant 7 : i32
    %719 = tpu.dynamic_rotate %559 by %c7_i32_140 dim 1 : vector<32x128xf32>, i32 -> vector<32x128xf32>
    %c7_i32_141 = arith.constant 7 : i32
    %720 = tpu.dynamic_rotate %562 by %c7_i32_141 dim 1 : vector<32x128xf32>, i32 -> vector<32x128xf32>
    %c7_i32_142 = arith.constant 7 : i32
    %721 = tpu.dynamic_rotate %560 by %c7_i32_142 dim 1 : vector<32x128xf32>, i32 -> vector<32x128xf32>
    %c7_i32_143 = arith.constant 7 : i32
    %722 = tpu.dynamic_rotate %561 by %c7_i32_143 dim 1 : vector<32x128xf32>, i32 -> vector<32x128xf32>
    %723 = vector.broadcast %717 : vector<32x1xf32> to vector<32x128xf32>
    %724 = arith.mulf %723, %719 : vector<32x128xf32>
    %725 = vector.broadcast %718 : vector<32x1xf32> to vector<32x128xf32>
    %726 = arith.mulf %725, %720 : vector<32x128xf32>
    %727 = arith.subf %724, %726 : vector<32x128xf32>
    %728 = vector.broadcast %28 : vector<1x128xf32> to vector<32x128xf32>
    %729 = arith.mulf %727, %728 : vector<32x128xf32>
    %730 = arith.addf %708, %729 : vector<32x128xf32>
    %731 = vector.broadcast %717 : vector<32x1xf32> to vector<32x128xf32>
    %732 = arith.mulf %731, %721 : vector<32x128xf32>
    %733 = vector.broadcast %718 : vector<32x1xf32> to vector<32x128xf32>
    %734 = arith.mulf %733, %722 : vector<32x128xf32>
    %735 = arith.addf %732, %734 : vector<32x128xf32>
    %736 = vector.broadcast %28 : vector<1x128xf32> to vector<32x128xf32>
    %737 = arith.mulf %735, %736 : vector<32x128xf32>
    %738 = arith.addf %716, %737 : vector<32x128xf32>
    %739 = vector.extract_strided_slice %563 {offsets = [0, 8], sizes = [32, 1], strides = [1, 1]} : vector<32x20xf32> to vector<32x1xf32>
    %740 = vector.extract_strided_slice %564 {offsets = [0, 8], sizes = [32, 1], strides = [1, 1]} : vector<32x20xf32> to vector<32x1xf32>
    %c8_i32_144 = arith.constant 8 : i32
    %741 = tpu.dynamic_rotate %559 by %c8_i32_144 dim 1 : vector<32x128xf32>, i32 -> vector<32x128xf32>
    %c8_i32_145 = arith.constant 8 : i32
    %742 = tpu.dynamic_rotate %562 by %c8_i32_145 dim 1 : vector<32x128xf32>, i32 -> vector<32x128xf32>
    %c8_i32_146 = arith.constant 8 : i32
    %743 = tpu.dynamic_rotate %560 by %c8_i32_146 dim 1 : vector<32x128xf32>, i32 -> vector<32x128xf32>
    %c8_i32_147 = arith.constant 8 : i32
    %744 = tpu.dynamic_rotate %561 by %c8_i32_147 dim 1 : vector<32x128xf32>, i32 -> vector<32x128xf32>
    %745 = vector.broadcast %739 : vector<32x1xf32> to vector<32x128xf32>
    %746 = arith.mulf %745, %741 : vector<32x128xf32>
    %747 = vector.broadcast %740 : vector<32x1xf32> to vector<32x128xf32>
    %748 = arith.mulf %747, %742 : vector<32x128xf32>
    %749 = arith.subf %746, %748 : vector<32x128xf32>
    %750 = vector.broadcast %32 : vector<1x128xf32> to vector<32x128xf32>
    %751 = arith.mulf %749, %750 : vector<32x128xf32>
    %752 = arith.addf %730, %751 : vector<32x128xf32>
    %753 = vector.broadcast %739 : vector<32x1xf32> to vector<32x128xf32>
    %754 = arith.mulf %753, %743 : vector<32x128xf32>
    %755 = vector.broadcast %740 : vector<32x1xf32> to vector<32x128xf32>
    %756 = arith.mulf %755, %744 : vector<32x128xf32>
    %757 = arith.addf %754, %756 : vector<32x128xf32>
    %758 = vector.broadcast %32 : vector<1x128xf32> to vector<32x128xf32>
    %759 = arith.mulf %757, %758 : vector<32x128xf32>
    %760 = arith.addf %738, %759 : vector<32x128xf32>
    %761 = vector.extract_strided_slice %563 {offsets = [0, 9], sizes = [32, 1], strides = [1, 1]} : vector<32x20xf32> to vector<32x1xf32>
    %762 = vector.extract_strided_slice %564 {offsets = [0, 9], sizes = [32, 1], strides = [1, 1]} : vector<32x20xf32> to vector<32x1xf32>
    %c9_i32_148 = arith.constant 9 : i32
    %763 = tpu.dynamic_rotate %559 by %c9_i32_148 dim 1 : vector<32x128xf32>, i32 -> vector<32x128xf32>
    %c9_i32_149 = arith.constant 9 : i32
    %764 = tpu.dynamic_rotate %562 by %c9_i32_149 dim 1 : vector<32x128xf32>, i32 -> vector<32x128xf32>
    %c9_i32_150 = arith.constant 9 : i32
    %765 = tpu.dynamic_rotate %560 by %c9_i32_150 dim 1 : vector<32x128xf32>, i32 -> vector<32x128xf32>
    %c9_i32_151 = arith.constant 9 : i32
    %766 = tpu.dynamic_rotate %561 by %c9_i32_151 dim 1 : vector<32x128xf32>, i32 -> vector<32x128xf32>
    %767 = vector.broadcast %761 : vector<32x1xf32> to vector<32x128xf32>
    %768 = arith.mulf %767, %763 : vector<32x128xf32>
    %769 = vector.broadcast %762 : vector<32x1xf32> to vector<32x128xf32>
    %770 = arith.mulf %769, %764 : vector<32x128xf32>
    %771 = arith.subf %768, %770 : vector<32x128xf32>
    %772 = vector.broadcast %36 : vector<1x128xf32> to vector<32x128xf32>
    %773 = arith.mulf %771, %772 : vector<32x128xf32>
    %774 = arith.addf %752, %773 : vector<32x128xf32>
    %775 = vector.broadcast %761 : vector<32x1xf32> to vector<32x128xf32>
    %776 = arith.mulf %775, %765 : vector<32x128xf32>
    %777 = vector.broadcast %762 : vector<32x1xf32> to vector<32x128xf32>
    %778 = arith.mulf %777, %766 : vector<32x128xf32>
    %779 = arith.addf %776, %778 : vector<32x128xf32>
    %780 = vector.broadcast %36 : vector<1x128xf32> to vector<32x128xf32>
    %781 = arith.mulf %779, %780 : vector<32x128xf32>
    %782 = arith.addf %760, %781 : vector<32x128xf32>
    %783 = vector.extract_strided_slice %563 {offsets = [0, 10], sizes = [32, 1], strides = [1, 1]} : vector<32x20xf32> to vector<32x1xf32>
    %784 = vector.extract_strided_slice %564 {offsets = [0, 10], sizes = [32, 1], strides = [1, 1]} : vector<32x20xf32> to vector<32x1xf32>
    %c10_i32_152 = arith.constant 10 : i32
    %785 = tpu.dynamic_rotate %559 by %c10_i32_152 dim 1 : vector<32x128xf32>, i32 -> vector<32x128xf32>
    %c10_i32_153 = arith.constant 10 : i32
    %786 = tpu.dynamic_rotate %562 by %c10_i32_153 dim 1 : vector<32x128xf32>, i32 -> vector<32x128xf32>
    %c10_i32_154 = arith.constant 10 : i32
    %787 = tpu.dynamic_rotate %560 by %c10_i32_154 dim 1 : vector<32x128xf32>, i32 -> vector<32x128xf32>
    %c10_i32_155 = arith.constant 10 : i32
    %788 = tpu.dynamic_rotate %561 by %c10_i32_155 dim 1 : vector<32x128xf32>, i32 -> vector<32x128xf32>
    %789 = vector.broadcast %783 : vector<32x1xf32> to vector<32x128xf32>
    %790 = arith.mulf %789, %785 : vector<32x128xf32>
    %791 = vector.broadcast %784 : vector<32x1xf32> to vector<32x128xf32>
    %792 = arith.mulf %791, %786 : vector<32x128xf32>
    %793 = arith.subf %790, %792 : vector<32x128xf32>
    %794 = vector.broadcast %40 : vector<1x128xf32> to vector<32x128xf32>
    %795 = arith.mulf %793, %794 : vector<32x128xf32>
    %796 = arith.addf %774, %795 : vector<32x128xf32>
    %797 = vector.broadcast %783 : vector<32x1xf32> to vector<32x128xf32>
    %798 = arith.mulf %797, %787 : vector<32x128xf32>
    %799 = vector.broadcast %784 : vector<32x1xf32> to vector<32x128xf32>
    %800 = arith.mulf %799, %788 : vector<32x128xf32>
    %801 = arith.addf %798, %800 : vector<32x128xf32>
    %802 = vector.broadcast %40 : vector<1x128xf32> to vector<32x128xf32>
    %803 = arith.mulf %801, %802 : vector<32x128xf32>
    %804 = arith.addf %782, %803 : vector<32x128xf32>
    %805 = vector.extract_strided_slice %563 {offsets = [0, 11], sizes = [32, 1], strides = [1, 1]} : vector<32x20xf32> to vector<32x1xf32>
    %806 = vector.extract_strided_slice %564 {offsets = [0, 11], sizes = [32, 1], strides = [1, 1]} : vector<32x20xf32> to vector<32x1xf32>
    %c11_i32_156 = arith.constant 11 : i32
    %807 = tpu.dynamic_rotate %559 by %c11_i32_156 dim 1 : vector<32x128xf32>, i32 -> vector<32x128xf32>
    %c11_i32_157 = arith.constant 11 : i32
    %808 = tpu.dynamic_rotate %562 by %c11_i32_157 dim 1 : vector<32x128xf32>, i32 -> vector<32x128xf32>
    %c11_i32_158 = arith.constant 11 : i32
    %809 = tpu.dynamic_rotate %560 by %c11_i32_158 dim 1 : vector<32x128xf32>, i32 -> vector<32x128xf32>
    %c11_i32_159 = arith.constant 11 : i32
    %810 = tpu.dynamic_rotate %561 by %c11_i32_159 dim 1 : vector<32x128xf32>, i32 -> vector<32x128xf32>
    %811 = vector.broadcast %805 : vector<32x1xf32> to vector<32x128xf32>
    %812 = arith.mulf %811, %807 : vector<32x128xf32>
    %813 = vector.broadcast %806 : vector<32x1xf32> to vector<32x128xf32>
    %814 = arith.mulf %813, %808 : vector<32x128xf32>
    %815 = arith.subf %812, %814 : vector<32x128xf32>
    %816 = vector.broadcast %44 : vector<1x128xf32> to vector<32x128xf32>
    %817 = arith.mulf %815, %816 : vector<32x128xf32>
    %818 = arith.addf %796, %817 : vector<32x128xf32>
    %819 = vector.broadcast %805 : vector<32x1xf32> to vector<32x128xf32>
    %820 = arith.mulf %819, %809 : vector<32x128xf32>
    %821 = vector.broadcast %806 : vector<32x1xf32> to vector<32x128xf32>
    %822 = arith.mulf %821, %810 : vector<32x128xf32>
    %823 = arith.addf %820, %822 : vector<32x128xf32>
    %824 = vector.broadcast %44 : vector<1x128xf32> to vector<32x128xf32>
    %825 = arith.mulf %823, %824 : vector<32x128xf32>
    %826 = arith.addf %804, %825 : vector<32x128xf32>
    %827 = vector.extract_strided_slice %563 {offsets = [0, 12], sizes = [32, 1], strides = [1, 1]} : vector<32x20xf32> to vector<32x1xf32>
    %828 = vector.extract_strided_slice %564 {offsets = [0, 12], sizes = [32, 1], strides = [1, 1]} : vector<32x20xf32> to vector<32x1xf32>
    %c12_i32_160 = arith.constant 12 : i32
    %829 = tpu.dynamic_rotate %559 by %c12_i32_160 dim 1 : vector<32x128xf32>, i32 -> vector<32x128xf32>
    %c12_i32_161 = arith.constant 12 : i32
    %830 = tpu.dynamic_rotate %562 by %c12_i32_161 dim 1 : vector<32x128xf32>, i32 -> vector<32x128xf32>
    %c12_i32_162 = arith.constant 12 : i32
    %831 = tpu.dynamic_rotate %560 by %c12_i32_162 dim 1 : vector<32x128xf32>, i32 -> vector<32x128xf32>
    %c12_i32_163 = arith.constant 12 : i32
    %832 = tpu.dynamic_rotate %561 by %c12_i32_163 dim 1 : vector<32x128xf32>, i32 -> vector<32x128xf32>
    %833 = vector.broadcast %827 : vector<32x1xf32> to vector<32x128xf32>
    %834 = arith.mulf %833, %829 : vector<32x128xf32>
    %835 = vector.broadcast %828 : vector<32x1xf32> to vector<32x128xf32>
    %836 = arith.mulf %835, %830 : vector<32x128xf32>
    %837 = arith.subf %834, %836 : vector<32x128xf32>
    %838 = vector.broadcast %48 : vector<1x128xf32> to vector<32x128xf32>
    %839 = arith.mulf %837, %838 : vector<32x128xf32>
    %840 = arith.addf %818, %839 : vector<32x128xf32>
    %841 = vector.broadcast %827 : vector<32x1xf32> to vector<32x128xf32>
    %842 = arith.mulf %841, %831 : vector<32x128xf32>
    %843 = vector.broadcast %828 : vector<32x1xf32> to vector<32x128xf32>
    %844 = arith.mulf %843, %832 : vector<32x128xf32>
    %845 = arith.addf %842, %844 : vector<32x128xf32>
    %846 = vector.broadcast %48 : vector<1x128xf32> to vector<32x128xf32>
    %847 = arith.mulf %845, %846 : vector<32x128xf32>
    %848 = arith.addf %826, %847 : vector<32x128xf32>
    %849 = vector.extract_strided_slice %563 {offsets = [0, 13], sizes = [32, 1], strides = [1, 1]} : vector<32x20xf32> to vector<32x1xf32>
    %850 = vector.extract_strided_slice %564 {offsets = [0, 13], sizes = [32, 1], strides = [1, 1]} : vector<32x20xf32> to vector<32x1xf32>
    %c13_i32_164 = arith.constant 13 : i32
    %851 = tpu.dynamic_rotate %559 by %c13_i32_164 dim 1 : vector<32x128xf32>, i32 -> vector<32x128xf32>
    %c13_i32_165 = arith.constant 13 : i32
    %852 = tpu.dynamic_rotate %562 by %c13_i32_165 dim 1 : vector<32x128xf32>, i32 -> vector<32x128xf32>
    %c13_i32_166 = arith.constant 13 : i32
    %853 = tpu.dynamic_rotate %560 by %c13_i32_166 dim 1 : vector<32x128xf32>, i32 -> vector<32x128xf32>
    %c13_i32_167 = arith.constant 13 : i32
    %854 = tpu.dynamic_rotate %561 by %c13_i32_167 dim 1 : vector<32x128xf32>, i32 -> vector<32x128xf32>
    %855 = vector.broadcast %849 : vector<32x1xf32> to vector<32x128xf32>
    %856 = arith.mulf %855, %851 : vector<32x128xf32>
    %857 = vector.broadcast %850 : vector<32x1xf32> to vector<32x128xf32>
    %858 = arith.mulf %857, %852 : vector<32x128xf32>
    %859 = arith.subf %856, %858 : vector<32x128xf32>
    %860 = vector.broadcast %52 : vector<1x128xf32> to vector<32x128xf32>
    %861 = arith.mulf %859, %860 : vector<32x128xf32>
    %862 = arith.addf %840, %861 : vector<32x128xf32>
    %863 = vector.broadcast %849 : vector<32x1xf32> to vector<32x128xf32>
    %864 = arith.mulf %863, %853 : vector<32x128xf32>
    %865 = vector.broadcast %850 : vector<32x1xf32> to vector<32x128xf32>
    %866 = arith.mulf %865, %854 : vector<32x128xf32>
    %867 = arith.addf %864, %866 : vector<32x128xf32>
    %868 = vector.broadcast %52 : vector<1x128xf32> to vector<32x128xf32>
    %869 = arith.mulf %867, %868 : vector<32x128xf32>
    %870 = arith.addf %848, %869 : vector<32x128xf32>
    %871 = vector.extract_strided_slice %563 {offsets = [0, 14], sizes = [32, 1], strides = [1, 1]} : vector<32x20xf32> to vector<32x1xf32>
    %872 = vector.extract_strided_slice %564 {offsets = [0, 14], sizes = [32, 1], strides = [1, 1]} : vector<32x20xf32> to vector<32x1xf32>
    %c14_i32_168 = arith.constant 14 : i32
    %873 = tpu.dynamic_rotate %559 by %c14_i32_168 dim 1 : vector<32x128xf32>, i32 -> vector<32x128xf32>
    %c14_i32_169 = arith.constant 14 : i32
    %874 = tpu.dynamic_rotate %562 by %c14_i32_169 dim 1 : vector<32x128xf32>, i32 -> vector<32x128xf32>
    %c14_i32_170 = arith.constant 14 : i32
    %875 = tpu.dynamic_rotate %560 by %c14_i32_170 dim 1 : vector<32x128xf32>, i32 -> vector<32x128xf32>
    %c14_i32_171 = arith.constant 14 : i32
    %876 = tpu.dynamic_rotate %561 by %c14_i32_171 dim 1 : vector<32x128xf32>, i32 -> vector<32x128xf32>
    %877 = vector.broadcast %871 : vector<32x1xf32> to vector<32x128xf32>
    %878 = arith.mulf %877, %873 : vector<32x128xf32>
    %879 = vector.broadcast %872 : vector<32x1xf32> to vector<32x128xf32>
    %880 = arith.mulf %879, %874 : vector<32x128xf32>
    %881 = arith.subf %878, %880 : vector<32x128xf32>
    %882 = vector.broadcast %56 : vector<1x128xf32> to vector<32x128xf32>
    %883 = arith.mulf %881, %882 : vector<32x128xf32>
    %884 = arith.addf %862, %883 : vector<32x128xf32>
    %885 = vector.broadcast %871 : vector<32x1xf32> to vector<32x128xf32>
    %886 = arith.mulf %885, %875 : vector<32x128xf32>
    %887 = vector.broadcast %872 : vector<32x1xf32> to vector<32x128xf32>
    %888 = arith.mulf %887, %876 : vector<32x128xf32>
    %889 = arith.addf %886, %888 : vector<32x128xf32>
    %890 = vector.broadcast %56 : vector<1x128xf32> to vector<32x128xf32>
    %891 = arith.mulf %889, %890 : vector<32x128xf32>
    %892 = arith.addf %870, %891 : vector<32x128xf32>
    %893 = vector.extract_strided_slice %563 {offsets = [0, 15], sizes = [32, 1], strides = [1, 1]} : vector<32x20xf32> to vector<32x1xf32>
    %894 = vector.extract_strided_slice %564 {offsets = [0, 15], sizes = [32, 1], strides = [1, 1]} : vector<32x20xf32> to vector<32x1xf32>
    %c15_i32_172 = arith.constant 15 : i32
    %895 = tpu.dynamic_rotate %559 by %c15_i32_172 dim 1 : vector<32x128xf32>, i32 -> vector<32x128xf32>
    %c15_i32_173 = arith.constant 15 : i32
    %896 = tpu.dynamic_rotate %562 by %c15_i32_173 dim 1 : vector<32x128xf32>, i32 -> vector<32x128xf32>
    %c15_i32_174 = arith.constant 15 : i32
    %897 = tpu.dynamic_rotate %560 by %c15_i32_174 dim 1 : vector<32x128xf32>, i32 -> vector<32x128xf32>
    %c15_i32_175 = arith.constant 15 : i32
    %898 = tpu.dynamic_rotate %561 by %c15_i32_175 dim 1 : vector<32x128xf32>, i32 -> vector<32x128xf32>
    %899 = vector.broadcast %893 : vector<32x1xf32> to vector<32x128xf32>
    %900 = arith.mulf %899, %895 : vector<32x128xf32>
    %901 = vector.broadcast %894 : vector<32x1xf32> to vector<32x128xf32>
    %902 = arith.mulf %901, %896 : vector<32x128xf32>
    %903 = arith.subf %900, %902 : vector<32x128xf32>
    %904 = vector.broadcast %60 : vector<1x128xf32> to vector<32x128xf32>
    %905 = arith.mulf %903, %904 : vector<32x128xf32>
    %906 = arith.addf %884, %905 : vector<32x128xf32>
    %907 = vector.broadcast %893 : vector<32x1xf32> to vector<32x128xf32>
    %908 = arith.mulf %907, %897 : vector<32x128xf32>
    %909 = vector.broadcast %894 : vector<32x1xf32> to vector<32x128xf32>
    %910 = arith.mulf %909, %898 : vector<32x128xf32>
    %911 = arith.addf %908, %910 : vector<32x128xf32>
    %912 = vector.broadcast %60 : vector<1x128xf32> to vector<32x128xf32>
    %913 = arith.mulf %911, %912 : vector<32x128xf32>
    %914 = arith.addf %892, %913 : vector<32x128xf32>
    %915 = vector.extract_strided_slice %563 {offsets = [0, 16], sizes = [32, 1], strides = [1, 1]} : vector<32x20xf32> to vector<32x1xf32>
    %916 = vector.extract_strided_slice %564 {offsets = [0, 16], sizes = [32, 1], strides = [1, 1]} : vector<32x20xf32> to vector<32x1xf32>
    %c16_i32_176 = arith.constant 16 : i32
    %917 = tpu.dynamic_rotate %559 by %c16_i32_176 dim 1 : vector<32x128xf32>, i32 -> vector<32x128xf32>
    %c16_i32_177 = arith.constant 16 : i32
    %918 = tpu.dynamic_rotate %562 by %c16_i32_177 dim 1 : vector<32x128xf32>, i32 -> vector<32x128xf32>
    %c16_i32_178 = arith.constant 16 : i32
    %919 = tpu.dynamic_rotate %560 by %c16_i32_178 dim 1 : vector<32x128xf32>, i32 -> vector<32x128xf32>
    %c16_i32_179 = arith.constant 16 : i32
    %920 = tpu.dynamic_rotate %561 by %c16_i32_179 dim 1 : vector<32x128xf32>, i32 -> vector<32x128xf32>
    %921 = vector.broadcast %915 : vector<32x1xf32> to vector<32x128xf32>
    %922 = arith.mulf %921, %917 : vector<32x128xf32>
    %923 = vector.broadcast %916 : vector<32x1xf32> to vector<32x128xf32>
    %924 = arith.mulf %923, %918 : vector<32x128xf32>
    %925 = arith.subf %922, %924 : vector<32x128xf32>
    %926 = vector.broadcast %64 : vector<1x128xf32> to vector<32x128xf32>
    %927 = arith.mulf %925, %926 : vector<32x128xf32>
    %928 = arith.addf %906, %927 : vector<32x128xf32>
    %929 = vector.broadcast %915 : vector<32x1xf32> to vector<32x128xf32>
    %930 = arith.mulf %929, %919 : vector<32x128xf32>
    %931 = vector.broadcast %916 : vector<32x1xf32> to vector<32x128xf32>
    %932 = arith.mulf %931, %920 : vector<32x128xf32>
    %933 = arith.addf %930, %932 : vector<32x128xf32>
    %934 = vector.broadcast %64 : vector<1x128xf32> to vector<32x128xf32>
    %935 = arith.mulf %933, %934 : vector<32x128xf32>
    %936 = arith.addf %914, %935 : vector<32x128xf32>
    %937 = vector.extract_strided_slice %563 {offsets = [0, 17], sizes = [32, 1], strides = [1, 1]} : vector<32x20xf32> to vector<32x1xf32>
    %938 = vector.extract_strided_slice %564 {offsets = [0, 17], sizes = [32, 1], strides = [1, 1]} : vector<32x20xf32> to vector<32x1xf32>
    %c17_i32_180 = arith.constant 17 : i32
    %939 = tpu.dynamic_rotate %559 by %c17_i32_180 dim 1 : vector<32x128xf32>, i32 -> vector<32x128xf32>
    %c17_i32_181 = arith.constant 17 : i32
    %940 = tpu.dynamic_rotate %562 by %c17_i32_181 dim 1 : vector<32x128xf32>, i32 -> vector<32x128xf32>
    %c17_i32_182 = arith.constant 17 : i32
    %941 = tpu.dynamic_rotate %560 by %c17_i32_182 dim 1 : vector<32x128xf32>, i32 -> vector<32x128xf32>
    %c17_i32_183 = arith.constant 17 : i32
    %942 = tpu.dynamic_rotate %561 by %c17_i32_183 dim 1 : vector<32x128xf32>, i32 -> vector<32x128xf32>
    %943 = vector.broadcast %937 : vector<32x1xf32> to vector<32x128xf32>
    %944 = arith.mulf %943, %939 : vector<32x128xf32>
    %945 = vector.broadcast %938 : vector<32x1xf32> to vector<32x128xf32>
    %946 = arith.mulf %945, %940 : vector<32x128xf32>
    %947 = arith.subf %944, %946 : vector<32x128xf32>
    %948 = vector.broadcast %68 : vector<1x128xf32> to vector<32x128xf32>
    %949 = arith.mulf %947, %948 : vector<32x128xf32>
    %950 = arith.addf %928, %949 : vector<32x128xf32>
    %951 = vector.broadcast %937 : vector<32x1xf32> to vector<32x128xf32>
    %952 = arith.mulf %951, %941 : vector<32x128xf32>
    %953 = vector.broadcast %938 : vector<32x1xf32> to vector<32x128xf32>
    %954 = arith.mulf %953, %942 : vector<32x128xf32>
    %955 = arith.addf %952, %954 : vector<32x128xf32>
    %956 = vector.broadcast %68 : vector<1x128xf32> to vector<32x128xf32>
    %957 = arith.mulf %955, %956 : vector<32x128xf32>
    %958 = arith.addf %936, %957 : vector<32x128xf32>
    %959 = vector.extract_strided_slice %563 {offsets = [0, 18], sizes = [32, 1], strides = [1, 1]} : vector<32x20xf32> to vector<32x1xf32>
    %960 = vector.extract_strided_slice %564 {offsets = [0, 18], sizes = [32, 1], strides = [1, 1]} : vector<32x20xf32> to vector<32x1xf32>
    %c18_i32_184 = arith.constant 18 : i32
    %961 = tpu.dynamic_rotate %559 by %c18_i32_184 dim 1 : vector<32x128xf32>, i32 -> vector<32x128xf32>
    %c18_i32_185 = arith.constant 18 : i32
    %962 = tpu.dynamic_rotate %562 by %c18_i32_185 dim 1 : vector<32x128xf32>, i32 -> vector<32x128xf32>
    %c18_i32_186 = arith.constant 18 : i32
    %963 = tpu.dynamic_rotate %560 by %c18_i32_186 dim 1 : vector<32x128xf32>, i32 -> vector<32x128xf32>
    %c18_i32_187 = arith.constant 18 : i32
    %964 = tpu.dynamic_rotate %561 by %c18_i32_187 dim 1 : vector<32x128xf32>, i32 -> vector<32x128xf32>
    %965 = vector.broadcast %959 : vector<32x1xf32> to vector<32x128xf32>
    %966 = arith.mulf %965, %961 : vector<32x128xf32>
    %967 = vector.broadcast %960 : vector<32x1xf32> to vector<32x128xf32>
    %968 = arith.mulf %967, %962 : vector<32x128xf32>
    %969 = arith.subf %966, %968 : vector<32x128xf32>
    %970 = vector.broadcast %72 : vector<1x128xf32> to vector<32x128xf32>
    %971 = arith.mulf %969, %970 : vector<32x128xf32>
    %972 = arith.addf %950, %971 : vector<32x128xf32>
    %973 = vector.broadcast %959 : vector<32x1xf32> to vector<32x128xf32>
    %974 = arith.mulf %973, %963 : vector<32x128xf32>
    %975 = vector.broadcast %960 : vector<32x1xf32> to vector<32x128xf32>
    %976 = arith.mulf %975, %964 : vector<32x128xf32>
    %977 = arith.addf %974, %976 : vector<32x128xf32>
    %978 = vector.broadcast %72 : vector<1x128xf32> to vector<32x128xf32>
    %979 = arith.mulf %977, %978 : vector<32x128xf32>
    %980 = arith.addf %958, %979 : vector<32x128xf32>
    %981 = vector.extract_strided_slice %563 {offsets = [0, 19], sizes = [32, 1], strides = [1, 1]} : vector<32x20xf32> to vector<32x1xf32>
    %982 = vector.extract_strided_slice %564 {offsets = [0, 19], sizes = [32, 1], strides = [1, 1]} : vector<32x20xf32> to vector<32x1xf32>
    %c19_i32_188 = arith.constant 19 : i32
    %983 = tpu.dynamic_rotate %559 by %c19_i32_188 dim 1 : vector<32x128xf32>, i32 -> vector<32x128xf32>
    %c19_i32_189 = arith.constant 19 : i32
    %984 = tpu.dynamic_rotate %562 by %c19_i32_189 dim 1 : vector<32x128xf32>, i32 -> vector<32x128xf32>
    %c19_i32_190 = arith.constant 19 : i32
    %985 = tpu.dynamic_rotate %560 by %c19_i32_190 dim 1 : vector<32x128xf32>, i32 -> vector<32x128xf32>
    %c19_i32_191 = arith.constant 19 : i32
    %986 = tpu.dynamic_rotate %561 by %c19_i32_191 dim 1 : vector<32x128xf32>, i32 -> vector<32x128xf32>
    %987 = vector.broadcast %981 : vector<32x1xf32> to vector<32x128xf32>
    %988 = arith.mulf %987, %983 : vector<32x128xf32>
    %989 = vector.broadcast %982 : vector<32x1xf32> to vector<32x128xf32>
    %990 = arith.mulf %989, %984 : vector<32x128xf32>
    %991 = arith.subf %988, %990 : vector<32x128xf32>
    %992 = vector.broadcast %76 : vector<1x128xf32> to vector<32x128xf32>
    %993 = arith.mulf %991, %992 : vector<32x128xf32>
    %994 = arith.addf %972, %993 : vector<32x128xf32>
    %995 = vector.broadcast %981 : vector<32x1xf32> to vector<32x128xf32>
    %996 = arith.mulf %995, %985 : vector<32x128xf32>
    %997 = vector.broadcast %982 : vector<32x1xf32> to vector<32x128xf32>
    %998 = arith.mulf %997, %986 : vector<32x128xf32>
    %999 = arith.addf %996, %998 : vector<32x128xf32>
    %1000 = vector.broadcast %76 : vector<1x128xf32> to vector<32x128xf32>
    %1001 = arith.mulf %999, %1000 : vector<32x128xf32>
    %1002 = arith.addf %980, %1001 : vector<32x128xf32>
    %c0_192 = arith.constant 0 : index
    %c0_193 = arith.constant 0 : index
    %c0_194 = arith.constant 0 : index
    %1003 = vector.load %arg15[%c0_192, %c0_193, %c0_194] : memref<1x32x128xf32, #tpu.memory_space<vmem>>, vector<1x32x128xf32>
    %1004 = vector.shape_cast %1003 : vector<1x32x128xf32> to vector<32x128xf32>
    %1005 = vector.shape_cast %994 : vector<32x128xf32> to vector<1x32x128xf32>
    tpu.vector_store %arg15[%c0_192, %c0_193, %c0_194], %1005 {strides = array<i32>} : memref<1x32x128xf32, #tpu.memory_space<vmem>>, vector<1x32x128xf32>,
    %c0_195 = arith.constant 0 : index
    %c0_196 = arith.constant 0 : index
    %c0_197 = arith.constant 0 : index
    %1006 = vector.load %arg16[%c0_195, %c0_196, %c0_197] : memref<1x32x128xf32, #tpu.memory_space<vmem>>, vector<1x32x128xf32>
    %1007 = vector.shape_cast %1006 : vector<1x32x128xf32> to vector<32x128xf32>
    %1008 = vector.shape_cast %1002 : vector<32x128xf32> to vector<1x32x128xf32>
    tpu.vector_store %arg16[%c0_195, %c0_196, %c0_197], %1008 {strides = array<i32>} : memref<1x32x128xf32, #tpu.memory_space<vmem>>, vector<1x32x128xf32>,
    return
  }
  func.func @transform_0(%arg0: i32) -> (i32, i32, i32) {
    %c0_i32 = arith.constant 0 : i32
    %c0_i32_0 = arith.constant 0 : i32
    %c0_i32_1 = arith.constant 0 : i32
    return %arg0, %c0_i32, %c0_i32_0 : i32, i32, i32
  }
  func.func @transform_1(%arg0: i32) -> (i32, i32, i32) {
    %c0_i32 = arith.constant 0 : i32
    %c0_i32_0 = arith.constant 0 : i32
    %c0_i32_1 = arith.constant 0 : i32
    return %arg0, %c0_i32, %c0_i32_0 : i32, i32, i32
  }
  func.func @transform_2(%arg0: i32) -> (i32, i32) {
    %c0_i32 = arith.constant 0 : i32
    %c0_i32_0 = arith.constant 0 : i32
    %c0_i32_1 = arith.constant 0 : i32
    return %c0_i32, %c0_i32_0 : i32, i32
  }
  func.func @transform_3(%arg0: i32) -> (i32, i32) {
    %c0_i32 = arith.constant 0 : i32
    %c0_i32_0 = arith.constant 0 : i32
    %c0_i32_1 = arith.constant 0 : i32
    return %c0_i32, %c0_i32_0 : i32, i32
  }
  func.func @transform_4(%arg0: i32) -> (i32, i32) {
    %c0_i32 = arith.constant 0 : i32
    %c0_i32_0 = arith.constant 0 : i32
    %c0_i32_1 = arith.constant 0 : i32
    return %c0_i32, %c0_i32_0 : i32, i32
  }
  func.func @transform_5(%arg0: i32) -> (i32, i32) {
    %c0_i32 = arith.constant 0 : i32
    %c0_i32_0 = arith.constant 0 : i32
    %c0_i32_1 = arith.constant 0 : i32
    return %c0_i32, %c0_i32_0 : i32, i32
  }
  func.func @transform_6(%arg0: i32) -> (i32, i32) {
    %c0_i32 = arith.constant 0 : i32
    %c0_i32_0 = arith.constant 0 : i32
    %c0_i32_1 = arith.constant 0 : i32
    return %c0_i32, %c0_i32_0 : i32, i32
  }
  func.func @transform_7(%arg0: i32) -> (i32, i32) {
    %c0_i32 = arith.constant 0 : i32
    %c0_i32_0 = arith.constant 0 : i32
    %c0_i32_1 = arith.constant 0 : i32
    return %c0_i32, %c0_i32_0 : i32, i32
  }
  func.func @transform_8(%arg0: i32) -> (i32, i32) {
    %c0_i32 = arith.constant 0 : i32
    %c0_i32_0 = arith.constant 0 : i32
    %c0_i32_1 = arith.constant 0 : i32
    return %c0_i32, %c0_i32_0 : i32, i32
  }
  func.func @transform_9(%arg0: i32) -> (i32, i32) {
    %c0_i32 = arith.constant 0 : i32
    %c0_i32_0 = arith.constant 0 : i32
    %c0_i32_1 = arith.constant 0 : i32
    return %c0_i32, %c0_i32_0 : i32, i32
  }
  func.func @transform_10(%arg0: i32) -> (i32, i32) {
    %c0_i32 = arith.constant 0 : i32
    %c0_i32_0 = arith.constant 0 : i32
    %c0_i32_1 = arith.constant 0 : i32
    return %c0_i32, %c0_i32_0 : i32, i32
  }
  func.func @transform_11(%arg0: i32) -> (i32, i32) {
    %c0_i32 = arith.constant 0 : i32
    %c0_i32_0 = arith.constant 0 : i32
    %c0_i32_1 = arith.constant 0 : i32
    return %c0_i32, %c0_i32_0 : i32, i32
  }
  func.func @transform_12(%arg0: i32) -> (i32, i32) {
    %c0_i32 = arith.constant 0 : i32
    %c0_i32_0 = arith.constant 0 : i32
    %c0_i32_1 = arith.constant 0 : i32
    return %c0_i32, %c0_i32_0 : i32, i32
  }
  func.func @transform_13(%arg0: i32) -> (i32, i32) {
    %c0_i32 = arith.constant 0 : i32
    %c0_i32_0 = arith.constant 0 : i32
    %c0_i32_1 = arith.constant 0 : i32
    return %c0_i32, %c0_i32_0 : i32, i32
  }
  func.func @transform_14(%arg0: i32) -> (i32, i32, i32) {
    %c0_i32 = arith.constant 0 : i32
    %c0_i32_0 = arith.constant 0 : i32
    %c0_i32_1 = arith.constant 0 : i32
    return %arg0, %c0_i32, %c0_i32_0 : i32, i32, i32
  }
  func.func @transform_15(%arg0: i32) -> (i32, i32, i32) {
    %c0_i32 = arith.constant 0 : i32
    %c0_i32_0 = arith.constant 0 : i32
    %c0_i32_1 = arith.constant 0 : i32
    return %arg0, %c0_i32, %c0_i32_0 : i32, i32, i32
  }
}

</mosaic_0001>

<llo_original>
// kernel: complex_uni_deep_fsmn.1
$region0: #{complex_uni_deep_fsmn.1}
  #allocation0 [shape = 'u32[]', space=smem, size = 0x4, offset = 0x4, fixed_abs, tag = 'smem constant byte address 0x4 - core index']
  #allocation1 [shape = 'u32[144,128]{1,0:T(1,128)}', space=vmem, size = 0x12000, scoped, tag = 'internal scratch']
  %s0 = inlined_call_operand.vmem [shape: f32[2,32,128], index: 0, kind: input, shape index: {}]
  %s1 = inlined_call_operand.vmem [shape: f32[2,32,128], index: 1, kind: input, shape index: {}]
  %s2 = inlined_call_operand.vmem [shape: bf16[64,32], index: 2, kind: input, shape index: {}]
  %s3 = inlined_call_operand.vmem [shape: f32[64,1], index: 3, kind: input, shape index: {}]
  %s4 = inlined_call_operand.vmem [shape: bf16[32,32], index: 4, kind: input, shape index: {}]
  %s5 = inlined_call_operand.vmem [shape: bf16[32,32], index: 5, kind: input, shape index: {}]
  %s6 = inlined_call_operand.vmem [shape: f32[32,20], index: 6, kind: input, shape index: {}]
  %s7 = inlined_call_operand.vmem [shape: f32[32,20], index: 7, kind: input, shape index: {}]
  %s8 = inlined_call_operand.vmem [shape: bf16[64,32], index: 8, kind: input, shape index: {}]
  %s9 = inlined_call_operand.vmem [shape: f32[64,1], index: 9, kind: input, shape index: {}]
  %s10 = inlined_call_operand.vmem [shape: bf16[32,32], index: 10, kind: input, shape index: {}]
  %s11 = inlined_call_operand.vmem [shape: bf16[32,32], index: 11, kind: input, shape index: {}]
  %s12 = inlined_call_operand.vmem [shape: f32[32,20], index: 12, kind: input, shape index: {}]
  %s13 = inlined_call_operand.vmem [shape: f32[32,20], index: 13, kind: input, shape index: {}]
  %s14 = inlined_call_operand.vmem [shape: f32[2,32,128], index: 14, kind: output, shape index: {0}]
  %s15 = inlined_call_operand.vmem [shape: f32[2,32,128], index: 15, kind: output, shape index: {1}]
  %16 = xla_tuple %s14, %s15
  %s17 = sld [smem:[#allocation0]]
  $region97: #{complex_uni_deep_fsmn.1} parent=0
    _
  %s19 = ssub.s32 1, %s17
  %s20 = scalar_select 0, %s19, %s17
  loop: start=0, step=1, limit=4
  $region2: #{complex_uni_deep_fsmn.1} parent=0 // loop_pre_header
    _
  $region3: #{complex_uni_deep_fsmn.1} parent=0 // loop_header
    %s22 = sphi 0, %s26
    %p23 = scmp.ge.s32.totalorder %s22, 4
    %s32 = sphi 0, %s34
    %s35 = sphi 0, %s32
    %s36 = sphi 0, %s35
    %s52 = sphi 0, %s36
    %s58 = sphi 0, %s60
    %s61 = sphi 0, %s58
    %s62 = sphi 0, %s61
    %s78 = sphi 0, %s62
    %s82 = sphi 0, %s82
    %s84 = sphi 0, %s82
    %s85 = sphi 0, %s84
    %s99 = sphi 0, %s85
    %s103 = sphi 0, %s103
    %s105 = sphi 0, %s103
    %s106 = sphi 0, %s105
    %s120 = sphi 0, %s106
    %s124 = sphi 0, %s124
    %s126 = sphi 0, %s124
    %s127 = sphi 0, %s126
    %s141 = sphi 0, %s127
    %s145 = sphi 0, %s145
    %s147 = sphi 0, %s145
    %s148 = sphi 0, %s147
    %s162 = sphi 0, %s148
    %s166 = sphi 0, %s166
    %s168 = sphi 0, %s166
    %s169 = sphi 0, %s168
    %s183 = sphi 0, %s169
    %s187 = sphi 0, %s187
    %s189 = sphi 0, %s187
    %s190 = sphi 0, %s189
    %s204 = sphi 0, %s190
    %s208 = sphi 0, %s208
    %s210 = sphi 0, %s208
    %s211 = sphi 0, %s210
    %s225 = sphi 0, %s211
    %s229 = sphi 0, %s229
    %s231 = sphi 0, %s229
    %s232 = sphi 0, %s231
    %s246 = sphi 0, %s232
    %s250 = sphi 0, %s250
    %s252 = sphi 0, %s250
    %s253 = sphi 0, %s252
    %s267 = sphi 0, %s253
    %s271 = sphi 0, %s271
    %s273 = sphi 0, %s271
    %s274 = sphi 0, %s273
    %s288 = sphi 0, %s274
    %s292 = sphi 0, %s292
    %s294 = sphi 0, %s292
    %s295 = sphi 0, %s294
    %s309 = sphi 0, %s295
    %s313 = sphi 0, %s313
    %s315 = sphi 0, %s313
    %s316 = sphi 0, %s315
    %s330 = sphi 0, %s316
    %s336 = sphi 0, %s338
    %s339 = sphi 0, %s336
    %s340 = sphi 0, %s339
    %s356 = sphi 0, %s340
    %s362 = sphi 0, %s364
    %s365 = sphi 0, %s362
    %s366 = sphi 0, %s365
    %s382 = sphi 0, %s366
  $region4: #{complex_uni_deep_fsmn.1} parent=0 // loop_header_branch
    %25 = sbr.rel (%p23) target = $region8
  $region5: #{complex_uni_deep_fsmn.1} parent=0 // loop_body
    %s27 = ssub.s32 %s22, 1
    %s28 = ssub.s32 %s22, 2
    %s29 = sadd.s32 %s22, 1
    %s30 = ssub.s32 %s22, %s29
    %p31 = scmp.eq.s32.totalorder %s30, 0
    %s33 = sadd.s32 %s32, 1
    %s34 = scalar_select %p31, %s32, %s33
    %p37 = pneg %p31
    %p38 = scmp.eq.s32.totalorder %s22, 1
    %p39 = por %p37, %p38
    %p40 = scmp.ne.s32.totalorder %s32, %s35
    %p41 = scmp.eq.s32.totalorder %s22, 0
    %p42 = por %p40, %p41
    %p43 = scmp.ne.s32.totalorder %s32, %s35
    %p44 = scmp.eq.s32.totalorder %s27, 1
    %p45 = por %p43, %p44
    %p46 = scmp.ne.s32.totalorder %s35, %s36
    %p47 = scmp.eq.s32.totalorder %s27, 0
    %p48 = por %p46, %p47
    %p49 = scmp.ne.s32.totalorder %s35, %s36
    %p50 = scmp.eq.s32.totalorder %s28, 1
    %p51 = por %p49, %p50
    %p53 = scmp.ne.s32.totalorder %s36, %s52
    %p54 = scmp.eq.s32.totalorder %s28, 0
    %p55 = por %p53, %p54
    %s56 = ssub.s32 %s22, %s29
    %p57 = scmp.eq.s32.totalorder %s56, 0
    %s59 = sadd.s32 %s58, 1
    %s60 = scalar_select %p57, %s58, %s59
    %p63 = pneg %p57
    %p64 = scmp.eq.s32.totalorder %s22, 1
    %p65 = por %p63, %p64
    %p66 = scmp.ne.s32.totalorder %s58, %s61
    %p67 = scmp.eq.s32.totalorder %s22, 0
    %p68 = por %p66, %p67
    %p69 = scmp.ne.s32.totalorder %s58, %s61
    %p70 = scmp.eq.s32.totalorder %s27, 1
    %p71 = por %p69, %p70
    %p72 = scmp.ne.s32.totalorder %s61, %s62
    %p73 = scmp.eq.s32.totalorder %s27, 0
    %p74 = por %p72, %p73
    %p75 = scmp.ne.s32.totalorder %s61, %s62
    %p76 = scmp.eq.s32.totalorder %s28, 1
    %p77 = por %p75, %p76
    %p79 = scmp.ne.s32.totalorder %s62, %s78
    %p80 = scmp.eq.s32.totalorder %s28, 0
    %p81 = por %p79, %p80
    %s83 = sadd.s32 %s82, 1
    %p86 = scmp.eq.s32.totalorder %s22, 1
    %p87 = scmp.ne.s32.totalorder %s82, %s84
    %p88 = scmp.eq.s32.totalorder %s22, 0
    %p89 = por %p87, %p88
    %p90 = scmp.ne.s32.totalorder %s82, %s84
    %p91 = scmp.eq.s32.totalorder %s27, 1
    %p92 = por %p90, %p91
    %p93 = scmp.ne.s32.totalorder %s84, %s85
    %p94 = scmp.eq.s32.totalorder %s27, 0
    %p95 = por %p93, %p94
    %p96 = scmp.ne.s32.totalorder %s84, %s85
    %p97 = scmp.eq.s32.totalorder %s28, 1
    %p98 = por %p96, %p97
    %p100 = scmp.ne.s32.totalorder %s85, %s99
    %p101 = scmp.eq.s32.totalorder %s28, 0
    %p102 = por %p100, %p101
    %s104 = sadd.s32 %s103, 1
    %p107 = scmp.eq.s32.totalorder %s22, 1
    %p108 = scmp.ne.s32.totalorder %s103, %s105
    %p109 = scmp.eq.s32.totalorder %s22, 0
    %p110 = por %p108, %p109
    %p111 = scmp.ne.s32.totalorder %s103, %s105
    %p112 = scmp.eq.s32.totalorder %s27, 1
    %p113 = por %p111, %p112
    %p114 = scmp.ne.s32.totalorder %s105, %s106
    %p115 = scmp.eq.s32.totalorder %s27, 0
    %p116 = por %p114, %p115
    %p117 = scmp.ne.s32.totalorder %s105, %s106
    %p118 = scmp.eq.s32.totalorder %s28, 1
    %p119 = por %p117, %p118
    %p121 = scmp.ne.s32.totalorder %s106, %s120
    %p122 = scmp.eq.s32.totalorder %s28, 0
    %p123 = por %p121, %p122
    %s125 = sadd.s32 %s124, 1
    %p128 = scmp.eq.s32.totalorder %s22, 1
    %p129 = scmp.ne.s32.totalorder %s124, %s126
    %p130 = scmp.eq.s32.totalorder %s22, 0
    %p131 = por %p129, %p130
    %p132 = scmp.ne.s32.totalorder %s124, %s126
    %p133 = scmp.eq.s32.totalorder %s27, 1
    %p134 = por %p132, %p133
    %p135 = scmp.ne.s32.totalorder %s126, %s127
    %p136 = scmp.eq.s32.totalorder %s27, 0
    %p137 = por %p135, %p136
    %p138 = scmp.ne.s32.totalorder %s126, %s127
    %p139 = scmp.eq.s32.totalorder %s28, 1
    %p140 = por %p138, %p139
    %p142 = scmp.ne.s32.totalorder %s127, %s141
    %p143 = scmp.eq.s32.totalorder %s28, 0
    %p144 = por %p142, %p143
    %s146 = sadd.s32 %s145, 1
    %p149 = scmp.eq.s32.totalorder %s22, 1
    %p150 = scmp.ne.s32.totalorder %s145, %s147
    %p151 = scmp.eq.s32.totalorder %s22, 0
    %p152 = por %p150, %p151
    %p153 = scmp.ne.s32.totalorder %s145, %s147
    %p154 = scmp.eq.s32.totalorder %s27, 1
    %p155 = por %p153, %p154
    %p156 = scmp.ne.s32.totalorder %s147, %s148
    %p157 = scmp.eq.s32.totalorder %s27, 0
    %p158 = por %p156, %p157
    %p159 = scmp.ne.s32.totalorder %s147, %s148
    %p160 = scmp.eq.s32.totalorder %s28, 1
    %p161 = por %p159, %p160
    %p163 = scmp.ne.s32.totalorder %s148, %s162
    %p164 = scmp.eq.s32.totalorder %s28, 0
    %p165 = por %p163, %p164
    %s167 = sadd.s32 %s166, 1
    %p170 = scmp.eq.s32.totalorder %s22, 1
    %p171 = scmp.ne.s32.totalorder %s166, %s168
    %p172 = scmp.eq.s32.totalorder %s22, 0
    %p173 = por %p171, %p172
    %p174 = scmp.ne.s32.totalorder %s166, %s168
    %p175 = scmp.eq.s32.totalorder %s27, 1
    %p176 = por %p174, %p175
    %p177 = scmp.ne.s32.totalorder %s168, %s169
    %p178 = scmp.eq.s32.totalorder %s27, 0
    %p179 = por %p177, %p178
    %p180 = scmp.ne.s32.totalorder %s168, %s169
    %p181 = scmp.eq.s32.totalorder %s28, 1
    %p182 = por %p180, %p181
    %p184 = scmp.ne.s32.totalorder %s169, %s183
    %p185 = scmp.eq.s32.totalorder %s28, 0
    %p186 = por %p184, %p185
    %s188 = sadd.s32 %s187, 1
    %p191 = scmp.eq.s32.totalorder %s22, 1
    %p192 = scmp.ne.s32.totalorder %s187, %s189
    %p193 = scmp.eq.s32.totalorder %s22, 0
    %p194 = por %p192, %p193
    %p195 = scmp.ne.s32.totalorder %s187, %s189
    %p196 = scmp.eq.s32.totalorder %s27, 1
    %p197 = por %p195, %p196
    %p198 = scmp.ne.s32.totalorder %s189, %s190
    %p199 = scmp.eq.s32.totalorder %s27, 0
    %p200 = por %p198, %p199
    %p201 = scmp.ne.s32.totalorder %s189, %s190
    %p202 = scmp.eq.s32.totalorder %s28, 1
    %p203 = por %p201, %p202
    %p205 = scmp.ne.s32.totalorder %s190, %s204
    %p206 = scmp.eq.s32.totalorder %s28, 0
    %p207 = por %p205, %p206
    %s209 = sadd.s32 %s208, 1
    %p212 = scmp.eq.s32.totalorder %s22, 1
    %p213 = scmp.ne.s32.totalorder %s208, %s210
    %p214 = scmp.eq.s32.totalorder %s22, 0
    %p215 = por %p213, %p214
    %p216 = scmp.ne.s32.totalorder %s208, %s210
    %p217 = scmp.eq.s32.totalorder %s27, 1
    %p218 = por %p216, %p217
    %p219 = scmp.ne.s32.totalorder %s210, %s211
    %p220 = scmp.eq.s32.totalorder %s27, 0
    %p221 = por %p219, %p220
    %p222 = scmp.ne.s32.totalorder %s210, %s211
    %p223 = scmp.eq.s32.totalorder %s28, 1
    %p224 = por %p222, %p223
    %p226 = scmp.ne.s32.totalorder %s211, %s225
    %p227 = scmp.eq.s32.totalorder %s28, 0
    %p228 = por %p226, %p227
    %s230 = sadd.s32 %s229, 1
    %p233 = scmp.eq.s32.totalorder %s22, 1
    %p234 = scmp.ne.s32.totalorder %s229, %s231
    %p235 = scmp.eq.s32.totalorder %s22, 0
    %p236 = por %p234, %p235
    %p237 = scmp.ne.s32.totalorder %s229, %s231
    %p238 = scmp.eq.s32.totalorder %s27, 1
    %p239 = por %p237, %p238
    %p240 = scmp.ne.s32.totalorder %s231, %s232
    %p241 = scmp.eq.s32.totalorder %s27, 0
    %p242 = por %p240, %p241
    %p243 = scmp.ne.s32.totalorder %s231, %s232
    %p244 = scmp.eq.s32.totalorder %s28, 1
    %p245 = por %p243, %p244
    %p247 = scmp.ne.s32.totalorder %s232, %s246
    %p248 = scmp.eq.s32.totalorder %s28, 0
    %p249 = por %p247, %p248
    %s251 = sadd.s32 %s250, 1
    %p254 = scmp.eq.s32.totalorder %s22, 1
    %p255 = scmp.ne.s32.totalorder %s250, %s252
    %p256 = scmp.eq.s32.totalorder %s22, 0
    %p257 = por %p255, %p256
    %p258 = scmp.ne.s32.totalorder %s250, %s252
    %p259 = scmp.eq.s32.totalorder %s27, 1
    %p260 = por %p258, %p259
    %p261 = scmp.ne.s32.totalorder %s252, %s253
    %p262 = scmp.eq.s32.totalorder %s27, 0
    %p263 = por %p261, %p262
    %p264 = scmp.ne.s32.totalorder %s252, %s253
    %p265 = scmp.eq.s32.totalorder %s28, 1
    %p266 = por %p264, %p265
    %p268 = scmp.ne.s32.totalorder %s253, %s267
    %p269 = scmp.eq.s32.totalorder %s28, 0
    %p270 = por %p268, %p269
    %s272 = sadd.s32 %s271, 1
    %p275 = scmp.eq.s32.totalorder %s22, 1
    %p276 = scmp.ne.s32.totalorder %s271, %s273
    %p277 = scmp.eq.s32.totalorder %s22, 0
    %p278 = por %p276, %p277
    %p279 = scmp.ne.s32.totalorder %s271, %s273
    %p280 = scmp.eq.s32.totalorder %s27, 1
    %p281 = por %p279, %p280
    %p282 = scmp.ne.s32.totalorder %s273, %s274
    %p283 = scmp.eq.s32.totalorder %s27, 0
    %p284 = por %p282, %p283
    %p285 = scmp.ne.s32.totalorder %s273, %s274
    %p286 = scmp.eq.s32.totalorder %s28, 1
    %p287 = por %p285, %p286
    %p289 = scmp.ne.s32.totalorder %s274, %s288
    %p290 = scmp.eq.s32.totalorder %s28, 0
    %p291 = por %p289, %p290
    %s293 = sadd.s32 %s292, 1
    %p296 = scmp.eq.s32.totalorder %s22, 1
    %p297 = scmp.ne.s32.totalorder %s292, %s294
    %p298 = scmp.eq.s32.totalorder %s22, 0
    %p299 = por %p297, %p298
    %p300 = scmp.ne.s32.totalorder %s292, %s294
    %p301 = scmp.eq.s32.totalorder %s27, 1
    %p302 = por %p300, %p301
    %p303 = scmp.ne.s32.totalorder %s294, %s295
    %p304 = scmp.eq.s32.totalorder %s27, 0
    %p305 = por %p303, %p304
    %p306 = scmp.ne.s32.totalorder %s294, %s295
    %p307 = scmp.eq.s32.totalorder %s28, 1
    %p308 = por %p306, %p307
    %p310 = scmp.ne.s32.totalorder %s295, %s309
    %p311 = scmp.eq.s32.totalorder %s28, 0
    %p312 = por %p310, %p311
    %s314 = sadd.s32 %s313, 1
    %p317 = scmp.eq.s32.totalorder %s22, 1
    %p318 = scmp.ne.s32.totalorder %s313, %s315
    %p319 = scmp.eq.s32.totalorder %s22, 0
    %p320 = por %p318, %p319
    %p321 = scmp.ne.s32.totalorder %s313, %s315
    %p322 = scmp.eq.s32.totalorder %s27, 1
    %p323 = por %p321, %p322
    %p324 = scmp.ne.s32.totalorder %s315, %s316
    %p325 = scmp.eq.s32.totalorder %s27, 0
    %p326 = por %p324, %p325
    %p327 = scmp.ne.s32.totalorder %s315, %s316
    %p328 = scmp.eq.s32.totalorder %s28, 1
    %p329 = por %p327, %p328
    %p331 = scmp.ne.s32.totalorder %s316, %s330
    %p332 = scmp.eq.s32.totalorder %s28, 0
    %p333 = por %p331, %p332
    %s334 = ssub.s32 %s22, %s29
    %p335 = scmp.eq.s32.totalorder %s334, 0
    %s337 = sadd.s32 %s336, 1
    %s338 = scalar_select %p335, %s336, %s337
    %p341 = pneg %p335
    %p342 = scmp.eq.s32.totalorder %s22, 1
    %p343 = por %p341, %p342
    %p344 = scmp.ne.s32.totalorder %s336, %s339
    %p345 = scmp.eq.s32.totalorder %s22, 0
    %p346 = por %p344, %p345
    %p347 = scmp.ne.s32.totalorder %s336, %s339
    %p348 = scmp.eq.s32.totalorder %s27, 1
    %p349 = por %p347, %p348
    %p350 = scmp.ne.s32.totalorder %s339, %s340
    %p351 = scmp.eq.s32.totalorder %s27, 0
    %p352 = por %p350, %p351
    %p353 = scmp.ne.s32.totalorder %s339, %s340
    %p354 = scmp.eq.s32.totalorder %s28, 1
    %p355 = por %p353, %p354
    %p357 = scmp.ne.s32.totalorder %s340, %s356
    %p358 = scmp.eq.s32.totalorder %s28, 0
    %p359 = por %p357, %p358
    %s360 = ssub.s32 %s22, %s29
    %p361 = scmp.eq.s32.totalorder %s360, 0
    %s363 = sadd.s32 %s362, 1
    %s364 = scalar_select %p361, %s362, %s363
    %p367 = pneg %p361
    %p368 = scmp.eq.s32.totalorder %s22, 1
    %p369 = por %p367, %p368
    %p370 = scmp.ne.s32.totalorder %s362, %s365
    %p371 = scmp.eq.s32.totalorder %s22, 0
    %p372 = por %p370, %p371
    %p373 = scmp.ne.s32.totalorder %s362, %s365
    %p374 = scmp.eq.s32.totalorder %s27, 1
    %p375 = por %p373, %p374
    %p376 = scmp.ne.s32.totalorder %s365, %s366
    %p377 = scmp.eq.s32.totalorder %s27, 0
    %p378 = por %p376, %p377
    %p379 = scmp.ne.s32.totalorder %s365, %s366
    %p380 = scmp.eq.s32.totalorder %s28, 1
    %p381 = por %p379, %p380
    %p383 = scmp.ne.s32.totalorder %s366, %s382
    %p384 = scmp.eq.s32.totalorder %s28, 0
    %p385 = por %p383, %p384
    %p386 = scmp.le.s32.totalorder 1, %s22
    %p387 = scmp.lt.s32.totalorder %s22, 3
    %p388 = pnand %p386, %p387
    %p389 = pneg %p388
    // Predicated region
    $region9: #{complex_uni_deep_fsmn.1} parent=5 // pred_check
      _
    $region10: #{complex_uni_deep_fsmn.1} parent=5 // pred_check_branch
      %391 = sbr.rel (%p388) target = $region12
    $region11: #{complex_uni_deep_fsmn.1} parent=5 // pred_region
      %s392 = ssub.s32 %s22, 1
      // Predicated region
      $region13: #{complex_uni_deep_fsmn.1} parent=11 // pred_check
        %p393 = pneg %p95
      $region14: #{complex_uni_deep_fsmn.1} parent=11 // pred_check_branch
        %395 = sbr.rel (%p393) target = $region16
      $region15: #{complex_uni_deep_fsmn.1} parent=11 // pred_region
        _
      $region16: #{complex_uni_deep_fsmn.1} parent=11 // pred_fallthru
        _
      // Predicated region
      $region17: #{complex_uni_deep_fsmn.1} parent=11 // pred_check
        %p396 = pneg %p116
      $region18: #{complex_uni_deep_fsmn.1} parent=11 // pred_check_branch
        %398 = sbr.rel (%p396) target = $region20
      $region19: #{complex_uni_deep_fsmn.1} parent=11 // pred_region
        _
      $region20: #{complex_uni_deep_fsmn.1} parent=11 // pred_fallthru
        _
      // Predicated region
      $region21: #{complex_uni_deep_fsmn.1} parent=11 // pred_check
        %p399 = pneg %p137
      $region22: #{complex_uni_deep_fsmn.1} parent=11 // pred_check_branch
        %401 = sbr.rel (%p399) target = $region24
      $region23: #{complex_uni_deep_fsmn.1} parent=11 // pred_region
        _
      $region24: #{complex_uni_deep_fsmn.1} parent=11 // pred_fallthru
        _
      // Predicated region
      $region25: #{complex_uni_deep_fsmn.1} parent=11 // pred_check
        %p402 = pneg %p158
      $region26: #{complex_uni_deep_fsmn.1} parent=11 // pred_check_branch
        %404 = sbr.rel (%p402) target = $region28
      $region27: #{complex_uni_deep_fsmn.1} parent=11 // pred_region
        _
      $region28: #{complex_uni_deep_fsmn.1} parent=11 // pred_fallthru
        _
      // Predicated region
      $region29: #{complex_uni_deep_fsmn.1} parent=11 // pred_check
        %p405 = pneg %p179
      $region30: #{complex_uni_deep_fsmn.1} parent=11 // pred_check_branch
        %407 = sbr.rel (%p405) target = $region32
      $region31: #{complex_uni_deep_fsmn.1} parent=11 // pred_region
        _
      $region32: #{complex_uni_deep_fsmn.1} parent=11 // pred_fallthru
        _
      // Predicated region
      $region33: #{complex_uni_deep_fsmn.1} parent=11 // pred_check
        %p408 = pneg %p200
      $region34: #{complex_uni_deep_fsmn.1} parent=11 // pred_check_branch
        %410 = sbr.rel (%p408) target = $region36
      $region35: #{complex_uni_deep_fsmn.1} parent=11 // pred_region
        _
      $region36: #{complex_uni_deep_fsmn.1} parent=11 // pred_fallthru
        _
      // Predicated region
      $region37: #{complex_uni_deep_fsmn.1} parent=11 // pred_check
        %p411 = pneg %p221
      $region38: #{complex_uni_deep_fsmn.1} parent=11 // pred_check_branch
        %413 = sbr.rel (%p411) target = $region40
      $region39: #{complex_uni_deep_fsmn.1} parent=11 // pred_region
        _
      $region40: #{complex_uni_deep_fsmn.1} parent=11 // pred_fallthru
        _
      // Predicated region
      $region41: #{complex_uni_deep_fsmn.1} parent=11 // pred_check
        %p414 = pneg %p242
      $region42: #{complex_uni_deep_fsmn.1} parent=11 // pred_check_branch
        %416 = sbr.rel (%p414) target = $region44
      $region43: #{complex_uni_deep_fsmn.1} parent=11 // pred_region
        _
      $region44: #{complex_uni_deep_fsmn.1} parent=11 // pred_fallthru
        _
      // Predicated region
      $region45: #{complex_uni_deep_fsmn.1} parent=11 // pred_check
        %p417 = pneg %p263
      $region46: #{complex_uni_deep_fsmn.1} parent=11 // pred_check_branch
        %419 = sbr.rel (%p417) target = $region48
      $region47: #{complex_uni_deep_fsmn.1} parent=11 // pred_region
        _
      $region48: #{complex_uni_deep_fsmn.1} parent=11 // pred_fallthru
        _
      // Predicated region
      $region49: #{complex_uni_deep_fsmn.1} parent=11 // pred_check
        %p420 = pneg %p284
      $region50: #{complex_uni_deep_fsmn.1} parent=11 // pred_check_branch
        %422 = sbr.rel (%p420) target = $region52
      $region51: #{complex_uni_deep_fsmn.1} parent=11 // pred_region
        _
      $region52: #{complex_uni_deep_fsmn.1} parent=11 // pred_fallthru
        _
      // Predicated region
      $region53: #{complex_uni_deep_fsmn.1} parent=11 // pred_check
        %p423 = pneg %p305
      $region54: #{complex_uni_deep_fsmn.1} parent=11 // pred_check_branch
        %425 = sbr.rel (%p423) target = $region56
      $region55: #{complex_uni_deep_fsmn.1} parent=11 // pred_region
        _
      $region56: #{complex_uni_deep_fsmn.1} parent=11 // pred_fallthru
        _
      // Predicated region
      $region57: #{complex_uni_deep_fsmn.1} parent=11 // pred_check
        %p426 = pneg %p326
      $region58: #{complex_uni_deep_fsmn.1} parent=11 // pred_check_branch
        %428 = sbr.rel (%p426) target = $region60
      $region59: #{complex_uni_deep_fsmn.1} parent=11 // pred_region
        _
      $region60: #{complex_uni_deep_fsmn.1} parent=11 // pred_fallthru
        _
    $region12: #{complex_uni_deep_fsmn.1} parent=5 // pred_fallthru
      _
    %p429 = scmp.lt.s32.totalorder %s22, 2
    // Predicated region
    $region61: #{complex_uni_deep_fsmn.1} parent=5 // pred_check
      %p430 = pneg %p429
    $region62: #{complex_uni_deep_fsmn.1} parent=5 // pred_check_branch
      %432 = sbr.rel (%p430) target = $region64
    $region63: #{complex_uni_deep_fsmn.1} parent=5 // pred_region
      // Predicated region
      $region65: #{complex_uni_deep_fsmn.1} parent=63 // pred_check
        %p433 = pneg %p42
      $region66: #{complex_uni_deep_fsmn.1} parent=63 // pred_check_branch
        %435 = sbr.rel (%p433) target = $region68
      $region67: #{complex_uni_deep_fsmn.1} parent=63 // pred_region
        %p436 = scmp.lt.s32.totalorder %s22, 1
        %s437 = scalar_select %p436, %s22, 1
        %s438 = smul.addr %s437, 4
        %s439 = smul.addr %s438, 8
        %s440 = scalar_lea.vmem %s0, %s439
      $region68: #{complex_uni_deep_fsmn.1} parent=63 // pred_fallthru
        _
      // Predicated region
      $region69: #{complex_uni_deep_fsmn.1} parent=63 // pred_check
        %p441 = pneg %p68
      $region70: #{complex_uni_deep_fsmn.1} parent=63 // pred_check_branch
        %443 = sbr.rel (%p441) target = $region72
      $region71: #{complex_uni_deep_fsmn.1} parent=63 // pred_region
        %p444 = scmp.lt.s32.totalorder %s22, 1
        %s445 = scalar_select %p444, %s22, 1
        %s446 = smul.addr %s445, 4
        %s447 = smul.addr %s446, 8
        %s448 = scalar_lea.vmem %s1, %s447
      $region72: #{complex_uni_deep_fsmn.1} parent=63 // pred_fallthru
        _
    $region64: #{complex_uni_deep_fsmn.1} parent=5 // pred_fallthru
      _
    %p449 = scmp.le.s32.totalorder 1, %s22
    %p450 = scmp.lt.s32.totalorder %s22, 3
    %p451 = pnand %p449, %p450
    %p452 = pneg %p451
    // Predicated region
    $region73: #{complex_uni_deep_fsmn.1} parent=5 // pred_check
      _
    $region74: #{complex_uni_deep_fsmn.1} parent=5 // pred_check_branch
      %454 = sbr.rel (%p451) target = $region76
    $region75: #{complex_uni_deep_fsmn.1} parent=5 // pred_region
      %s455 = ssub.s32 %s22, 1
      %p456 = scmp.lt.s32.totalorder %s27, 1
      %s457 = scalar_select %p456, %s27, 1
      %s458 = smul.addr %s457, 4
      %s459 = smul.addr %s458, 8
      %s460 = scalar_lea.vmem %s0, %s459
      %p461 = pneg %p48
      %p462 = pneg %p45
      %p463 = scmp.lt.s32.totalorder %s27, 1
      %s464 = scalar_select %p463, %s27, 1
      %s465 = smul.addr %s464, 4
      %s466 = smul.addr %s465, 8
      %s467 = scalar_lea.vmem %s1, %s466
      %p468 = pneg %p74
      %p469 = pneg %p71
      %p470 = pneg %p95
      %p471 = pneg %p92
      %p472 = pneg %p116
      %p473 = pneg %p113
      %p474 = pneg %p137
      %p475 = pneg %p134
      %p476 = pneg %p158
      %p477 = pneg %p155
      %p478 = pneg %p179
      %p479 = pneg %p176
      %p480 = pneg %p200
      %p481 = pneg %p197
      %p482 = pneg %p221
      %p483 = pneg %p218
      %p484 = pneg %p242
      %p485 = pneg %p239
      %p486 = pneg %p263
      %p487 = pneg %p260
      %p488 = pneg %p284
      %p489 = pneg %p281
      %p490 = pneg %p305
      %p491 = pneg %p302
      %p492 = pneg %p326
      %p493 = pneg %p323
      %p494 = pneg %p352
      %p495 = pneg %p349
      %p496 = scmp.lt.s32.totalorder %s27, 1
      %s497 = scalar_select %p496, %s27, 1
      %s498 = smul.addr %s497, 4
      %s499 = smul.addr %s498, 8
      %s500 = scalar_lea.vmem %s14, %s499
      %p501 = pneg %p378
      %p502 = pneg %p375
      %p503 = scmp.lt.s32.totalorder %s27, 1
      %s504 = scalar_select %p503, %s27, 1
      %s505 = smul.addr %s504, 4
      %s506 = smul.addr %s505, 8
      %s507 = scalar_lea.vmem %s15, %s506
      %p508 = scmp.lt.s32.totalorder %s27, 1
      %s509 = scalar_select %p508, %s27, 1
      %s510 = smul.addr %s509, 4
      %s511 = smul.addr %s510, 8
      %s512 = scalar_lea.vmem %s0, %s511
      %p513 = scmp.lt.s32.totalorder %s27, 1
      %s514 = scalar_select %p513, %s27, 1
      %s515 = smul.addr %s514, 4
      %s516 = smul.addr %s515, 8
      %s517 = scalar_lea.vmem %s1, %s516
      %p518 = scmp.lt.s32.totalorder %s27, 1
      %s519 = scalar_select %p518, %s27, 1
      %s520 = smul.addr %s519, 4
      %s521 = smul.addr %s520, 8
      %s522 = scalar_lea.vmem %s14, %s521
      %p523 = scmp.lt.s32.totalorder %s27, 1
      %s524 = scalar_select %p523, %s27, 1
      %s525 = smul.addr %s524, 4
      %s526 = smul.addr %s525, 8
      %s527 = scalar_lea.vmem %s15, %s526
      %v529 = vlaneseq
      %v530 = vand.u32 %v529, 127
      %vm531 = vcmp.ge.s32.totalorder %v530, 1
      %v532 = vsel %vm531, 1, 0
      %v533 = vcvt.s32.f32 %v532
      %vm534 = vcmp.ge.s32.totalorder %v530, 2
      %v535 = vsel %vm534, 1, 0
      %v536 = vcvt.s32.f32 %v535
      %vm537 = vcmp.ge.s32.totalorder %v530, 3
      %v538 = vsel %vm537, 1, 0
      %v539 = vcvt.s32.f32 %v538
      %vm540 = vcmp.ge.s32.totalorder %v530, 4
      %v541 = vsel %vm540, 1, 0
      %v542 = vcvt.s32.f32 %v541
      %vm543 = vcmp.ge.s32.totalorder %v530, 5
      %v544 = vsel %vm543, 1, 0
      %v545 = vcvt.s32.f32 %v544
      %vm546 = vcmp.ge.s32.totalorder %v530, 6
      %v547 = vsel %vm546, 1, 0
      %v548 = vcvt.s32.f32 %v547
      %vm549 = vcmp.ge.s32.totalorder %v530, 7
      %v550 = vsel %vm549, 1, 0
      %v551 = vcvt.s32.f32 %v550
      %vm552 = vcmp.ge.s32.totalorder %v530, 8
      %v553 = vsel %vm552, 1, 0
      %v554 = vcvt.s32.f32 %v553
      %vm555 = vcmp.ge.s32.totalorder %v530, 9
      %v556 = vsel %vm555, 1, 0
      %v557 = vcvt.s32.f32 %v556
      %vm558 = vcmp.ge.s32.totalorder %v530, 10
      %v559 = vsel %vm558, 1, 0
      %v560 = vcvt.s32.f32 %v559
      %vm561 = vcmp.ge.s32.totalorder %v530, 11
      %v562 = vsel %vm561, 1, 0
      %v563 = vcvt.s32.f32 %v562
      %vm564 = vcmp.ge.s32.totalorder %v530, 12
      %v565 = vsel %vm564, 1, 0
      %v566 = vcvt.s32.f32 %v565
      %vm567 = vcmp.ge.s32.totalorder %v530, 13
      %v568 = vsel %vm567, 1, 0
      %v569 = vcvt.s32.f32 %v568
      %vm570 = vcmp.ge.s32.totalorder %v530, 14
      %v571 = vsel %vm570, 1, 0
      %v572 = vcvt.s32.f32 %v571
      %vm573 = vcmp.ge.s32.totalorder %v530, 15
      %v574 = vsel %vm573, 1, 0
      %v575 = vcvt.s32.f32 %v574
      %vm576 = vcmp.ge.s32.totalorder %v530, 16
      %v577 = vsel %vm576, 1, 0
      %v578 = vcvt.s32.f32 %v577
      %vm579 = vcmp.ge.s32.totalorder %v530, 17
      %v580 = vsel %vm579, 1, 0
      %v581 = vcvt.s32.f32 %v580
      %vm582 = vcmp.ge.s32.totalorder %v530, 18
      %v583 = vsel %vm582, 1, 0
      %v584 = vcvt.s32.f32 %v583
      %vm585 = vcmp.ge.s32.totalorder %v530, 19
      %v586 = vsel %vm585, 1, 0
      %v587 = vcvt.s32.f32 %v586
      %v588 = vld [vmem:[%s512] sm:$0xff]
      %v589 = vld [vmem:[%s512 + $0x8] sm:$0xff]
      %v590 = vld [vmem:[%s512 + $0x10] sm:$0xff]
      %v591 = vld [vmem:[%s512 + $0x18] sm:$0xff]
      %v592 = vld [vmem:[%s517] sm:$0xff]
      %v593 = vld [vmem:[%s517 + $0x8] sm:$0xff]
      %v594 = vld [vmem:[%s517 + $0x10] sm:$0xff]
      %v595 = vld [vmem:[%s517 + $0x18] sm:$0xff]
      %v596 = vpack.c.bf16 %v589, %v588
      %v597 = vpack.c.bf16 %v593, %v592
      %v598 = vpack.c.bf16 %v591, %v590
      %v599 = vpack.c.bf16 %v595, %v594
      %v600 = vld [vmem:[%s2] sm:$0xf]
      %v601 = vld [vmem:[%s2 + $0x4] sm:$0xf]
      %v602 = vld [vmem:[%s2 + $0x8] sm:$0xf]
      %v603 = vld [vmem:[%s2 + $0xc] sm:$0xf]
      %v604 = vld [vmem:[%s2 + $0x10] sm:$0xf]
      %v605 = vld [vmem:[%s2 + $0x14] sm:$0xf]
      %v606 = vld [vmem:[%s2 + $0x18] sm:$0xf]
      %v607 = vld [vmem:[%s2 + $0x1c] sm:$0xf]
      %v608 = vld [vmem:[%s3] sm:$0xff]
      %v609 = vld [vmem:[%s3 + $0x8] sm:$0xff]
      %v610 = vld [vmem:[%s3 + $0x10] sm:$0xff]
      %v611 = vld [vmem:[%s3 + $0x18] sm:$0xff]
      %v612 = vld [vmem:[%s3 + $0x20] sm:$0xff]
      %v613 = vld [vmem:[%s3 + $0x28] sm:$0xff]
      %v614 = vld [vmem:[%s3 + $0x30] sm:$0xff]
      %v615 = vld [vmem:[%s3 + $0x38] sm:$0xff]
      %617 = vset.pattern.permute.xlu0 0
      %618 = vperm.xlu0 %617, %v608
      %v619 = vpop.permute.xlu0 %618
      %622 = vset.pattern.permute.xlu0 0
      %623 = vperm.xlu0 %622, %v609
      %v624 = vpop.permute.xlu0 %623
      %627 = vset.pattern.permute.xlu0 0
      %628 = vperm.xlu0 %627, %v610
      %v629 = vpop.permute.xlu0 %628
      %632 = vset.pattern.permute.xlu0 0
      %633 = vperm.xlu0 %632, %v611
      %v634 = vpop.permute.xlu0 %633
      %637 = vset.pattern.permute.xlu0 0
      %638 = vperm.xlu0 %637, %v612
      %v639 = vpop.permute.xlu0 %638
      %642 = vset.pattern.permute.xlu0 0
      %643 = vperm.xlu0 %642, %v613
      %v644 = vpop.permute.xlu0 %643
      %647 = vset.pattern.permute.xlu0 0
      %648 = vperm.xlu0 %647, %v614
      %v649 = vpop.permute.xlu0 %648
      %652 = vset.pattern.permute.xlu0 0
      %653 = vperm.xlu0 %652, %v615
      %v654 = vpop.permute.xlu0 %653
      %v664 = vunpack.c.l.b16 %v600
      %v665 = vunpack.c.l.b16 %v601
      %v666 = vunpack.c.l.b16 %v602
      %v667 = vunpack.c.l.b16 %v603
      %v668 = vunpack.c.l.b16 %v604
      %v669 = vunpack.c.l.b16 %v605
      %v670 = vunpack.c.l.b16 %v606
      %v671 = vunpack.c.l.b16 %v607
      %v672 = vpack.c.b16 %v665, %v664
      %v673 = vpack.c.b16 %v667, %v666
      %v674 = vpack.c.b16 %v669, %v668
      %v675 = vpack.c.b16 %v671, %v670
      %vm676 = vcmask 261120
      %v678 = vsel %vm676, %v672, 0
      %v681 = vsel %vm676, %v673, 0
      %v684 = vsel %vm676, %v674, 0
      %v687 = vsel %vm676, %v675, 0
      %689 = vmatprep.subr.bf16.mxu0 0
      %690 = vmatpush1.bf16.msra.mxu0 0
      %691 = vmatprep.subr.bf16.mxu0 0
      %692 = vmatpush1.bf16.msra.mxu0 0
      %693 = vmatprep.subr.bf16.mxu0 0
      %694 = vmatpush1.bf16.msra.mxu0 0
      %695 = vmatprep.subr.bf16.mxu0 0
      %696 = vmatpush1.bf16.msra.mxu0 0
      %697 = vmatprep.subr.bf16.mxu0 0
      %698 = vmatpush1.bf16.msra.mxu0 0
      %699 = vmatprep.subr.bf16.mxu0 0
      %700 = vmatpush1.bf16.msra.mxu0 0
      %701 = vmatprep.subr.bf16.mxu0 %v599
      %702 = vmatpush1.bf16.msra.mxu0 %v598
      %703 = vmatprep.subr.bf16.mxu0 %v597
      %704 = vmatpush1.bf16.msra.mxu0 %v596
      %705 = vmatprep.subr.bf16.mxu0 0
      %706 = vmatpush2.bf16.msra.mxu0 0
      %707 = vmatprep.subr.bf16.mxu0 0
      %708 = vmatpush2.bf16.msra.mxu0 0
      %709 = vmatprep.subr.bf16.mxu0 0
      %710 = vmatpush2.bf16.msra.mxu0 0
      %711 = vmatprep.subr.bf16.mxu0 0
      %712 = vmatpush2.bf16.msra.mxu0 0
      %713 = vmatprep.subr.bf16.mxu0 0
      %714 = vmatpush2.bf16.msra.mxu0 0
      %715 = vmatprep.subr.bf16.mxu0 0
      %716 = vmatpush2.bf16.msra.mxu0 0
      %717 = vmatprep.subr.bf16.mxu0 0
      %718 = vmatpush2.bf16.msra.mxu0 0
      %719 = vmatprep.subr.bf16.mxu0 0
      %720 = vmatpush2.bf16.msra.mxu0 0
      %721 = vmatprep.mubr.bf16.mxu0 0
      %722 = vmatmul.mubr.bf16.gmra.mxu0 %v678
      %v723 = vpop.f32.mrf.mxu0
      %v724 = vadd.f32 %v619, %v723
      %v725 = vpop.f32.mrf.mxu0
      %v726 = vadd.f32 %v619, %v725
      %v727 = vpop.f32.mrf.mxu0
      %v728 = vadd.f32 %v624, %v727
      %v729 = vpop.f32.mrf.mxu0
      %v730 = vadd.f32 %v624, %v729
      %731 = vmatprep.mubr.bf16.mxu0 0
      %732 = vmatmul.mubr.bf16.gmra.mxu0 %v681
      %v733 = vpop.f32.mrf.mxu0
      %v734 = vadd.f32 %v629, %v733
      %v735 = vpop.f32.mrf.mxu0
      %v736 = vadd.f32 %v629, %v735
      %v737 = vpop.f32.mrf.mxu0
      %v738 = vadd.f32 %v634, %v737
      %v739 = vpop.f32.mrf.mxu0
      %v740 = vadd.f32 %v634, %v739
      %741 = vmatprep.mubr.bf16.mxu0 0
      %742 = vmatmul.mubr.bf16.gmra.mxu0 %v684
      %v743 = vpop.f32.mrf.mxu0
      %v744 = vadd.f32 %v639, %v743
      %v745 = vpop.f32.mrf.mxu0
      %v746 = vadd.f32 %v639, %v745
      %v747 = vpop.f32.mrf.mxu0
      %v748 = vadd.f32 %v644, %v747
      %v749 = vpop.f32.mrf.mxu0
      %v750 = vadd.f32 %v644, %v749
      %751 = vmatprep.mubr.bf16.mxu0 0
      %752 = vmatmul.mubr.bf16.gmra.mxu0 %v687
      %v753 = vpop.f32.mrf.mxu0
      %v754 = vadd.f32 %v649, %v753
      %v755 = vpop.f32.mrf.mxu0
      %v756 = vadd.f32 %v649, %v755
      %v757 = vpop.f32.mrf.mxu0
      %v758 = vadd.f32 %v654, %v757
      %v759 = vpop.f32.mrf.mxu0
      %v760 = vadd.f32 %v654, %v759
      %761 = vdwg.mxu0
      %v762 = vmax.f32 %v724, 0.0
      %v763 = vmax.f32 %v726, 0.0
      %v764 = vmax.f32 %v728, 0.0
      %v765 = vmax.f32 %v730, 0.0
      %v766 = vmax.f32 %v734, 0.0
      %v767 = vmax.f32 %v736, 0.0
      %v768 = vmax.f32 %v738, 0.0
      %v769 = vmax.f32 %v740, 0.0
      %v770 = vmax.f32 %v744, 0.0
      %v771 = vmax.f32 %v746, 0.0
      %v772 = vmax.f32 %v748, 0.0
      %v773 = vmax.f32 %v750, 0.0
      %v774 = vmax.f32 %v754, 0.0
      %v775 = vmax.f32 %v756, 0.0
      %v776 = vmax.f32 %v758, 0.0
      %v777 = vmax.f32 %v760, 0.0
      %v778 = vpack.c.bf16 %v764, %v762
      %v779 = vpack.c.bf16 %v765, %v763
      %v780 = vpack.c.bf16 %v768, %v766
      %v781 = vpack.c.bf16 %v769, %v767
      %v782 = vpack.c.bf16 %v772, %v770
      %v783 = vpack.c.bf16 %v773, %v771
      %v784 = vpack.c.bf16 %v776, %v774
      %v785 = vpack.c.bf16 %v777, %v775
      %v786 = vld [vmem:[%s4] sm:$0xf]
      %v787 = vld [vmem:[%s4 + $0x4] sm:$0xf]
      %v788 = vld [vmem:[%s4 + $0x8] sm:$0xf]
      %v789 = vld [vmem:[%s4 + $0xc] sm:$0xf]
      %v794 = vunpack.c.l.b16 %v786
      %v795 = vunpack.c.l.b16 %v787
      %v796 = vunpack.c.l.b16 %v788
      %v797 = vunpack.c.l.b16 %v789
      %v798 = vpack.c.b16 %v795, %v794
      %v799 = vpack.c.b16 %v797, %v796
      %v801 = vsel %vm676, %v798, 0
      %v804 = vsel %vm676, %v799, 0
      %806 = vmatprep.subr.bf16.mxu0 0
      %807 = vmatpush1.bf16.msra.mxu0 0
      %808 = vmatprep.subr.bf16.mxu0 0
      %809 = vmatpush1.bf16.msra.mxu0 0
      %810 = vmatprep.subr.bf16.mxu0 0
      %811 = vmatpush1.bf16.msra.mxu0 0
      %812 = vmatprep.subr.bf16.mxu0 0
      %813 = vmatpush1.bf16.msra.mxu0 0
      %814 = vmatprep.subr.bf16.mxu0 0
      %815 = vmatpush1.bf16.msra.mxu0 0
      %816 = vmatprep.subr.bf16.mxu0 0
      %817 = vmatpush1.bf16.msra.mxu0 0
      %818 = vmatprep.subr.bf16.mxu0 %v781
      %819 = vmatpush1.bf16.msra.mxu0 %v780
      %820 = vmatprep.subr.bf16.mxu0 %v779
      %821 = vmatpush1.bf16.msra.mxu0 %v778
      %822 = vmatprep.subr.bf16.mxu0 0
      %823 = vmatpush2.bf16.msra.mxu0 0
      %824 = vmatprep.subr.bf16.mxu0 0
      %825 = vmatpush2.bf16.msra.mxu0 0
      %826 = vmatprep.subr.bf16.mxu0 0
      %827 = vmatpush2.bf16.msra.mxu0 0
      %828 = vmatprep.subr.bf16.mxu0 0
      %829 = vmatpush2.bf16.msra.mxu0 0
      %830 = vmatprep.subr.bf16.mxu0 0
      %831 = vmatpush2.bf16.msra.mxu0 0
      %832 = vmatprep.subr.bf16.mxu0 0
      %833 = vmatpush2.bf16.msra.mxu0 0
      %834 = vmatprep.subr.bf16.mxu0 0
      %835 = vmatpush2.bf16.msra.mxu0 0
      %836 = vmatprep.subr.bf16.mxu0 0
      %837 = vmatpush2.bf16.msra.mxu0 0
      %838 = vmatprep.mubr.bf16.mxu0 0
      %839 = vmatmul.mubr.bf16.gmra.mxu0 %v801
      %v840 = vpop.f32.mrf.mxu0
      %v841 = vadd.f32 0.0, %v840
      %v842 = vpop.f32.mrf.mxu0
      %v843 = vadd.f32 0.0, %v842
      %v844 = vpop.f32.mrf.mxu0
      %v845 = vadd.f32 0.0, %v844
      %v846 = vpop.f32.mrf.mxu0
      %v847 = vadd.f32 0.0, %v846
      %848 = vmatprep.mubr.bf16.mxu0 0
      %849 = vmatmul.mubr.bf16.gmra.mxu0 %v804
      %v850 = vpop.f32.mrf.mxu0
      %v851 = vadd.f32 0.0, %v850
      %v852 = vpop.f32.mrf.mxu0
      %v853 = vadd.f32 0.0, %v852
      %v854 = vpop.f32.mrf.mxu0
      %v855 = vadd.f32 0.0, %v854
      %v856 = vpop.f32.mrf.mxu0
      %v857 = vadd.f32 0.0, %v856
      %858 = vdwg.mxu0
      %v859 = vld [vmem:[%s5] sm:$0xf]
      %v860 = vld [vmem:[%s5 + $0x4] sm:$0xf]
      %v861 = vld [vmem:[%s5 + $0x8] sm:$0xf]
      %v862 = vld [vmem:[%s5 + $0xc] sm:$0xf]
      %v867 = vunpack.c.l.b16 %v859
      %v868 = vunpack.c.l.b16 %v860
      %v869 = vunpack.c.l.b16 %v861
      %v870 = vunpack.c.l.b16 %v862
      %v871 = vpack.c.b16 %v868, %v867
      %v872 = vpack.c.b16 %v870, %v869
      %v874 = vsel %vm676, %v871, 0
      %v877 = vsel %vm676, %v872, 0
      %879 = vmatprep.subr.bf16.mxu0 0
      %880 = vmatpush1.bf16.msra.mxu0 0
      %881 = vmatprep.subr.bf16.mxu0 0
      %882 = vmatpush1.bf16.msra.mxu0 0
      %883 = vmatprep.subr.bf16.mxu0 0
      %884 = vmatpush1.bf16.msra.mxu0 0
      %885 = vmatprep.subr.bf16.mxu0 0
      %886 = vmatpush1.bf16.msra.mxu0 0
      %887 = vmatprep.subr.bf16.mxu0 0
      %888 = vmatpush1.bf16.msra.mxu0 0
      %889 = vmatprep.subr.bf16.mxu0 0
      %890 = vmatpush1.bf16.msra.mxu0 0
      %891 = vmatprep.subr.bf16.mxu0 %v785
      %892 = vmatpush1.bf16.msra.mxu0 %v784
      %893 = vmatprep.subr.bf16.mxu0 %v783
      %894 = vmatpush1.bf16.msra.mxu0 %v782
      %895 = vmatprep.subr.bf16.mxu0 0
      %896 = vmatpush2.bf16.msra.mxu0 0
      %897 = vmatprep.subr.bf16.mxu0 0
      %898 = vmatpush2.bf16.msra.mxu0 0
      %899 = vmatprep.subr.bf16.mxu0 0
      %900 = vmatpush2.bf16.msra.mxu0 0
      %901 = vmatprep.subr.bf16.mxu0 0
      %902 = vmatpush2.bf16.msra.mxu0 0
      %903 = vmatprep.subr.bf16.mxu0 0
      %904 = vmatpush2.bf16.msra.mxu0 0
      %905 = vmatprep.subr.bf16.mxu0 0
      %906 = vmatpush2.bf16.msra.mxu0 0
      %907 = vmatprep.subr.bf16.mxu0 0
      %908 = vmatpush2.bf16.msra.mxu0 0
      %909 = vmatprep.subr.bf16.mxu0 0
      %910 = vmatpush2.bf16.msra.mxu0 0
      %911 = vmatprep.mubr.bf16.mxu0 0
      %912 = vmatmul.mubr.bf16.gmra.mxu0 %v874
      %v913 = vpop.f32.mrf.mxu0
      %v914 = vadd.f32 0.0, %v913
      %v915 = vpop.f32.mrf.mxu0
      %v916 = vadd.f32 0.0, %v915
      %v917 = vpop.f32.mrf.mxu0
      %v918 = vadd.f32 0.0, %v917
      %v919 = vpop.f32.mrf.mxu0
      %v920 = vadd.f32 0.0, %v919
      %921 = vmatprep.mubr.bf16.mxu0 0
      %922 = vmatmul.mubr.bf16.gmra.mxu0 %v877
      %v923 = vpop.f32.mrf.mxu0
      %v924 = vadd.f32 0.0, %v923
      %v925 = vpop.f32.mrf.mxu0
      %v926 = vadd.f32 0.0, %v925
      %v927 = vpop.f32.mrf.mxu0
      %v928 = vadd.f32 0.0, %v927
      %v929 = vpop.f32.mrf.mxu0
      %v930 = vadd.f32 0.0, %v929
      %931 = vdwg.mxu0
      %v932 = vld [vmem:[%s6] sm:$0xff]
      %v933 = vld [vmem:[%s6 + $0x8] sm:$0xff]
      %v934 = vld [vmem:[%s6 + $0x10] sm:$0xff]
      %v935 = vld [vmem:[%s6 + $0x18] sm:$0xff]
      %v936 = vld [vmem:[%s7] sm:$0xff]
      %v937 = vld [vmem:[%s7 + $0x8] sm:$0xff]
      %v938 = vld [vmem:[%s7 + $0x10] sm:$0xff]
      %v939 = vld [vmem:[%s7 + $0x18] sm:$0xff]
      %v940 = vadd.f32 %v932, 1.0
      %v941 = vadd.f32 %v933, 1.0
      %v942 = vadd.f32 %v934, 1.0
      %v943 = vadd.f32 %v935, 1.0
      %v944 = vadd.f32 %v936, 1.0
      %v945 = vadd.f32 %v937, 1.0
      %v946 = vadd.f32 %v938, 1.0
      %v947 = vadd.f32 %v939, 1.0
      %v948 = vsub.f32 %v588, %v592
      %v949 = vsub.f32 %v589, %v593
      %v950 = vsub.f32 %v590, %v594
      %v951 = vsub.f32 %v591, %v595
      %953 = vset.pattern.permute.xlu0 0
      %954 = vperm.xlu0 %953, %v940
      %v955 = vpop.permute.xlu0 %954
      %958 = vset.pattern.permute.xlu0 0
      %959 = vperm.xlu0 %958, %v941
      %v960 = vpop.permute.xlu0 %959
      %963 = vset.pattern.permute.xlu0 0
      %964 = vperm.xlu0 %963, %v942
      %v965 = vpop.permute.xlu0 %964
      %968 = vset.pattern.permute.xlu0 0
      %969 = vperm.xlu0 %968, %v943
      %v970 = vpop.permute.xlu0 %969
      %v972 = vmul.f32 %v841, %v955
      %v973 = vmul.f32 %v845, %v960
      %v974 = vmul.f32 %v851, %v965
      %v975 = vmul.f32 %v855, %v970
      %v976 = vadd.f32 %v948, %v972
      %v977 = vadd.f32 %v949, %v973
      %v978 = vadd.f32 %v950, %v974
      %v979 = vadd.f32 %v951, %v975
      %981 = vset.pattern.permute.xlu0 0
      %982 = vperm.xlu0 %981, %v944
      %v983 = vpop.permute.xlu0 %982
      %986 = vset.pattern.permute.xlu0 0
      %987 = vperm.xlu0 %986, %v945
      %v988 = vpop.permute.xlu0 %987
      %991 = vset.pattern.permute.xlu0 0
      %992 = vperm.xlu0 %991, %v946
      %v993 = vpop.permute.xlu0 %992
      %996 = vset.pattern.permute.xlu0 0
      %997 = vperm.xlu0 %996, %v947
      %v998 = vpop.permute.xlu0 %997
      %v1000 = vmul.f32 %v916, %v983
      %v1001 = vmul.f32 %v920, %v988
      %v1002 = vmul.f32 %v926, %v993
      %v1003 = vmul.f32 %v930, %v998
      %v1004 = vsub.f32 %v976, %v1000
      %v1005 = vsub.f32 %v977, %v1001
      %v1006 = vsub.f32 %v978, %v1002
      %v1007 = vsub.f32 %v979, %v1003
      %v1008 = vadd.f32 %v588, %v592
      %v1009 = vadd.f32 %v589, %v593
      %v1010 = vadd.f32 %v590, %v594
      %v1011 = vadd.f32 %v591, %v595
      %v1012 = vmul.f32 %v843, %v955
      %v1013 = vmul.f32 %v847, %v960
      %v1014 = vmul.f32 %v853, %v965
      %v1015 = vmul.f32 %v857, %v970
      %v1016 = vadd.f32 %v1008, %v1012
      %v1017 = vadd.f32 %v1009, %v1013
      %v1018 = vadd.f32 %v1010, %v1014
      %v1019 = vadd.f32 %v1011, %v1015
      %v1020 = vmul.f32 %v914, %v983
      %v1021 = vmul.f32 %v918, %v988
      %v1022 = vmul.f32 %v924, %v993
      %v1023 = vmul.f32 %v928, %v998
      %v1024 = vadd.f32 %v1016, %v1020
      %v1025 = vadd.f32 %v1017, %v1021
      %v1026 = vadd.f32 %v1018, %v1022
      %v1027 = vadd.f32 %v1019, %v1023
      %1028 = vrot.lane.b32.xlu0 %v841, 1
      %v1029 = vpop.permute.xlu0 %1028
      %1030 = vrot.lane.b32.xlu0 %v845, 1
      %v1031 = vpop.permute.xlu0 %1030
      %1032 = vrot.lane.b32.xlu0 %v851, 1
      %v1033 = vpop.permute.xlu0 %1032
      %1034 = vrot.lane.b32.xlu0 %v855, 1
      %v1035 = vpop.permute.xlu0 %1034
      %1036 = vrot.lane.b32.xlu0 %v916, 1
      %v1037 = vpop.permute.xlu0 %1036
      %1038 = vrot.lane.b32.xlu0 %v920, 1
      %v1039 = vpop.permute.xlu0 %1038
      %1040 = vrot.lane.b32.xlu0 %v926, 1
      %v1041 = vpop.permute.xlu0 %1040
      %1042 = vrot.lane.b32.xlu0 %v930, 1
      %v1043 = vpop.permute.xlu0 %1042
      %1044 = vrot.lane.b32.xlu0 %v843, 1
      %v1045 = vpop.permute.xlu0 %1044
      %1046 = vrot.lane.b32.xlu0 %v847, 1
      %v1047 = vpop.permute.xlu0 %1046
      %1048 = vrot.lane.b32.xlu0 %v853, 1
      %v1049 = vpop.permute.xlu0 %1048
      %1050 = vrot.lane.b32.xlu0 %v857, 1
      %v1051 = vpop.permute.xlu0 %1050
      %1052 = vrot.lane.b32.xlu0 %v914, 1
      %v1053 = vpop.permute.xlu0 %1052
      %1054 = vrot.lane.b32.xlu0 %v918, 1
      %v1055 = vpop.permute.xlu0 %1054
      %1056 = vrot.lane.b32.xlu0 %v924, 1
      %v1057 = vpop.permute.xlu0 %1056
      %1058 = vrot.lane.b32.xlu0 %v928, 1
      %v1059 = vpop.permute.xlu0 %1058
      %1061 = vset.pattern.permute.xlu0 1
      %1062 = vperm.xlu0 %1061, %v932
      %v1063 = vpop.permute.xlu0 %1062
      %1066 = vset.pattern.permute.xlu0 1
      %1067 = vperm.xlu0 %1066, %v933
      %v1068 = vpop.permute.xlu0 %1067
      %1071 = vset.pattern.permute.xlu0 1
      %1072 = vperm.xlu0 %1071, %v934
      %v1073 = vpop.permute.xlu0 %1072
      %1076 = vset.pattern.permute.xlu0 1
      %1077 = vperm.xlu0 %1076, %v935
      %v1078 = vpop.permute.xlu0 %1077
      %v1080 = vmul.f32 %v1063, %v1029
      %v1081 = vmul.f32 %v1068, %v1031
      %v1082 = vmul.f32 %v1073, %v1033
      %v1083 = vmul.f32 %v1078, %v1035
      %1085 = vset.pattern.permute.xlu0 1
      %1086 = vperm.xlu0 %1085, %v936
      %v1087 = vpop.permute.xlu0 %1086
      %1090 = vset.pattern.permute.xlu0 1
      %1091 = vperm.xlu0 %1090, %v937
      %v1092 = vpop.permute.xlu0 %1091
      %1095 = vset.pattern.permute.xlu0 1
      %1096 = vperm.xlu0 %1095, %v938
      %v1097 = vpop.permute.xlu0 %1096
      %1100 = vset.pattern.permute.xlu0 1
      %1101 = vperm.xlu0 %1100, %v939
      %v1102 = vpop.permute.xlu0 %1101
      %v1104 = vmul.f32 %v1087, %v1037
      %v1105 = vmul.f32 %v1092, %v1039
      %v1106 = vmul.f32 %v1097, %v1041
      %v1107 = vmul.f32 %v1102, %v1043
      %v1108 = vsub.f32 %v1080, %v1104
      %v1109 = vsub.f32 %v1081, %v1105
      %v1110 = vsub.f32 %v1082, %v1106
      %v1111 = vsub.f32 %v1083, %v1107
      %v1112 = vmul.f32 %v1108, %v533
      %v1113 = vmul.f32 %v1109, %v533
      %v1114 = vmul.f32 %v1110, %v533
      %v1115 = vmul.f32 %v1111, %v533
      %v1116 = vadd.f32 %v1004, %v1112
      %v1117 = vadd.f32 %v1005, %v1113
      %v1118 = vadd.f32 %v1006, %v1114
      %v1119 = vadd.f32 %v1007, %v1115
      %v1120 = vmul.f32 %v1063, %v1045
      %v1121 = vmul.f32 %v1068, %v1047
      %v1122 = vmul.f32 %v1073, %v1049
      %v1123 = vmul.f32 %v1078, %v1051
      %v1124 = vmul.f32 %v1087, %v1053
      %v1125 = vmul.f32 %v1092, %v1055
      %v1126 = vmul.f32 %v1097, %v1057
      %v1127 = vmul.f32 %v1102, %v1059
      %v1128 = vadd.f32 %v1120, %v1124
      %v1129 = vadd.f32 %v1121, %v1125
      %v1130 = vadd.f32 %v1122, %v1126
      %v1131 = vadd.f32 %v1123, %v1127
      %v1132 = vmul.f32 %v1128, %v533
      %v1133 = vmul.f32 %v1129, %v533
      %v1134 = vmul.f32 %v1130, %v533
      %v1135 = vmul.f32 %v1131, %v533
      %v1136 = vadd.f32 %v1024, %v1132
      %v1137 = vadd.f32 %v1025, %v1133
      %v1138 = vadd.f32 %v1026, %v1134
      %v1139 = vadd.f32 %v1027, %v1135
      %1140 = vrot.lane.b32.xlu0 %v841, 2
      %v1141 = vpop.permute.xlu0 %1140
      %1142 = vrot.lane.b32.xlu0 %v845, 2
      %v1143 = vpop.permute.xlu0 %1142
      %1144 = vrot.lane.b32.xlu0 %v851, 2
      %v1145 = vpop.permute.xlu0 %1144
      %1146 = vrot.lane.b32.xlu0 %v855, 2
      %v1147 = vpop.permute.xlu0 %1146
      %1148 = vrot.lane.b32.xlu0 %v916, 2
      %v1149 = vpop.permute.xlu0 %1148
      %1150 = vrot.lane.b32.xlu0 %v920, 2
      %v1151 = vpop.permute.xlu0 %1150
      %1152 = vrot.lane.b32.xlu0 %v926, 2
      %v1153 = vpop.permute.xlu0 %1152
      %1154 = vrot.lane.b32.xlu0 %v930, 2
      %v1155 = vpop.permute.xlu0 %1154
      %1156 = vrot.lane.b32.xlu0 %v843, 2
      %v1157 = vpop.permute.xlu0 %1156
      %1158 = vrot.lane.b32.xlu0 %v847, 2
      %v1159 = vpop.permute.xlu0 %1158
      %1160 = vrot.lane.b32.xlu0 %v853, 2
      %v1161 = vpop.permute.xlu0 %1160
      %1162 = vrot.lane.b32.xlu0 %v857, 2
      %v1163 = vpop.permute.xlu0 %1162
      %1164 = vrot.lane.b32.xlu0 %v914, 2
      %v1165 = vpop.permute.xlu0 %1164
      %1166 = vrot.lane.b32.xlu0 %v918, 2
      %v1167 = vpop.permute.xlu0 %1166
      %1168 = vrot.lane.b32.xlu0 %v924, 2
      %v1169 = vpop.permute.xlu0 %1168
      %1170 = vrot.lane.b32.xlu0 %v928, 2
      %v1171 = vpop.permute.xlu0 %1170
      %1172 = vset.pattern.permute.xlu0 2
      %1173 = vperm.xlu0 %1172, %v932
      %v1174 = vpop.permute.xlu0 %1173
      %1176 = vset.pattern.permute.xlu0 2
      %1177 = vperm.xlu0 %1176, %v933
      %v1178 = vpop.permute.xlu0 %1177
      %1180 = vset.pattern.permute.xlu0 2
      %1181 = vperm.xlu0 %1180, %v934
      %v1182 = vpop.permute.xlu0 %1181
      %1184 = vset.pattern.permute.xlu0 2
      %1185 = vperm.xlu0 %1184, %v935
      %v1186 = vpop.permute.xlu0 %1185
      %v1188 = vmul.f32 %v1174, %v1141
      %v1189 = vmul.f32 %v1178, %v1143
      %v1190 = vmul.f32 %v1182, %v1145
      %v1191 = vmul.f32 %v1186, %v1147
      %1192 = vset.pattern.permute.xlu0 2
      %1193 = vperm.xlu0 %1192, %v936
      %v1194 = vpop.permute.xlu0 %1193
      %1196 = vset.pattern.permute.xlu0 2
      %1197 = vperm.xlu0 %1196, %v937
      %v1198 = vpop.permute.xlu0 %1197
      %1200 = vset.pattern.permute.xlu0 2
      %1201 = vperm.xlu0 %1200, %v938
      %v1202 = vpop.permute.xlu0 %1201
      %1204 = vset.pattern.permute.xlu0 2
      %1205 = vperm.xlu0 %1204, %v939
      %v1206 = vpop.permute.xlu0 %1205
      %v1208 = vmul.f32 %v1194, %v1149
      %v1209 = vmul.f32 %v1198, %v1151
      %v1210 = vmul.f32 %v1202, %v1153
      %v1211 = vmul.f32 %v1206, %v1155
      %v1212 = vsub.f32 %v1188, %v1208
      %v1213 = vsub.f32 %v1189, %v1209
      %v1214 = vsub.f32 %v1190, %v1210
      %v1215 = vsub.f32 %v1191, %v1211
      %v1216 = vmul.f32 %v1212, %v536
      %v1217 = vmul.f32 %v1213, %v536
      %v1218 = vmul.f32 %v1214, %v536
      %v1219 = vmul.f32 %v1215, %v536
      %v1220 = vadd.f32 %v1116, %v1216
      %v1221 = vadd.f32 %v1117, %v1217
      %v1222 = vadd.f32 %v1118, %v1218
      %v1223 = vadd.f32 %v1119, %v1219
      %v1224 = vmul.f32 %v1174, %v1157
      %v1225 = vmul.f32 %v1178, %v1159
      %v1226 = vmul.f32 %v1182, %v1161
      %v1227 = vmul.f32 %v1186, %v1163
      %v1228 = vmul.f32 %v1194, %v1165
      %v1229 = vmul.f32 %v1198, %v1167
      %v1230 = vmul.f32 %v1202, %v1169
      %v1231 = vmul.f32 %v1206, %v1171
      %v1232 = vadd.f32 %v1224, %v1228
      %v1233 = vadd.f32 %v1225, %v1229
      %v1234 = vadd.f32 %v1226, %v1230
      %v1235 = vadd.f32 %v1227, %v1231
      %v1236 = vmul.f32 %v1232, %v536
      %v1237 = vmul.f32 %v1233, %v536
      %v1238 = vmul.f32 %v1234, %v536
      %v1239 = vmul.f32 %v1235, %v536
      %v1240 = vadd.f32 %v1136, %v1236
      %v1241 = vadd.f32 %v1137, %v1237
      %v1242 = vadd.f32 %v1138, %v1238
      %v1243 = vadd.f32 %v1139, %v1239
      %1244 = vrot.lane.b32.xlu0 %v841, 3
      %v1245 = vpop.permute.xlu0 %1244
      %1246 = vrot.lane.b32.xlu0 %v845, 3
      %v1247 = vpop.permute.xlu0 %1246
      %1248 = vrot.lane.b32.xlu0 %v851, 3
      %v1249 = vpop.permute.xlu0 %1248
      %1250 = vrot.lane.b32.xlu0 %v855, 3
      %v1251 = vpop.permute.xlu0 %1250
      %1252 = vrot.lane.b32.xlu0 %v916, 3
      %v1253 = vpop.permute.xlu0 %1252
      %1254 = vrot.lane.b32.xlu0 %v920, 3
      %v1255 = vpop.permute.xlu0 %1254
      %1256 = vrot.lane.b32.xlu0 %v926, 3
      %v1257 = vpop.permute.xlu0 %1256
      %1258 = vrot.lane.b32.xlu0 %v930, 3
      %v1259 = vpop.permute.xlu0 %1258
      %1260 = vrot.lane.b32.xlu0 %v843, 3
      %v1261 = vpop.permute.xlu0 %1260
      %1262 = vrot.lane.b32.xlu0 %v847, 3
      %v1263 = vpop.permute.xlu0 %1262
      %1264 = vrot.lane.b32.xlu0 %v853, 3
      %v1265 = vpop.permute.xlu0 %1264
      %1266 = vrot.lane.b32.xlu0 %v857, 3
      %v1267 = vpop.permute.xlu0 %1266
      %1268 = vrot.lane.b32.xlu0 %v914, 3
      %v1269 = vpop.permute.xlu0 %1268
      %1270 = vrot.lane.b32.xlu0 %v918, 3
      %v1271 = vpop.permute.xlu0 %1270
      %1272 = vrot.lane.b32.xlu0 %v924, 3
      %v1273 = vpop.permute.xlu0 %1272
      %1274 = vrot.lane.b32.xlu0 %v928, 3
      %v1275 = vpop.permute.xlu0 %1274
      %1276 = vset.pattern.permute.xlu0 3
      %1277 = vperm.xlu0 %1276, %v932
      %v1278 = vpop.permute.xlu0 %1277
      %1280 = vset.pattern.permute.xlu0 3
      %1281 = vperm.xlu0 %1280, %v933
      %v1282 = vpop.permute.xlu0 %1281
      %1284 = vset.pattern.permute.xlu0 3
      %1285 = vperm.xlu0 %1284, %v934
      %v1286 = vpop.permute.xlu0 %1285
      %1288 = vset.pattern.permute.xlu0 3
      %1289 = vperm.xlu0 %1288, %v935
      %v1290 = vpop.permute.xlu0 %1289
      %v1292 = vmul.f32 %v1278, %v1245
      %v1293 = vmul.f32 %v1282, %v1247
      %v1294 = vmul.f32 %v1286, %v1249
      %v1295 = vmul.f32 %v1290, %v1251
      %1296 = vset.pattern.permute.xlu0 3
      %1297 = vperm.xlu0 %1296, %v936
      %v1298 = vpop.permute.xlu0 %1297
      %1300 = vset.pattern.permute.xlu0 3
      %1301 = vperm.xlu0 %1300, %v937
      %v1302 = vpop.permute.xlu0 %1301
      %1304 = vset.pattern.permute.xlu0 3
      %1305 = vperm.xlu0 %1304, %v938
      %v1306 = vpop.permute.xlu0 %1305
      %1308 = vset.pattern.permute.xlu0 3
      %1309 = vperm.xlu0 %1308, %v939
      %v1310 = vpop.permute.xlu0 %1309
      %v1312 = vmul.f32 %v1298, %v1253
      %v1313 = vmul.f32 %v1302, %v1255
      %v1314 = vmul.f32 %v1306, %v1257
      %v1315 = vmul.f32 %v1310, %v1259
      %v1316 = vsub.f32 %v1292, %v1312
      %v1317 = vsub.f32 %v1293, %v1313
      %v1318 = vsub.f32 %v1294, %v1314
      %v1319 = vsub.f32 %v1295, %v1315
      %v1320 = vmul.f32 %v1316, %v539
      %v1321 = vmul.f32 %v1317, %v539
      %v1322 = vmul.f32 %v1318, %v539
      %v1323 = vmul.f32 %v1319, %v539
      %v1324 = vadd.f32 %v1220, %v1320
      %v1325 = vadd.f32 %v1221, %v1321
      %v1326 = vadd.f32 %v1222, %v1322
      %v1327 = vadd.f32 %v1223, %v1323
      %v1328 = vmul.f32 %v1278, %v1261
      %v1329 = vmul.f32 %v1282, %v1263
      %v1330 = vmul.f32 %v1286, %v1265
      %v1331 = vmul.f32 %v1290, %v1267
      %v1332 = vmul.f32 %v1298, %v1269
      %v1333 = vmul.f32 %v1302, %v1271
      %v1334 = vmul.f32 %v1306, %v1273
      %v1335 = vmul.f32 %v1310, %v1275
      %v1336 = vadd.f32 %v1328, %v1332
      %v1337 = vadd.f32 %v1329, %v1333
      %v1338 = vadd.f32 %v1330, %v1334
      %v1339 = vadd.f32 %v1331, %v1335
      %v1340 = vmul.f32 %v1336, %v539
      %v1341 = vmul.f32 %v1337, %v539
      %v1342 = vmul.f32 %v1338, %v539
      %v1343 = vmul.f32 %v1339, %v539
      %v1344 = vadd.f32 %v1240, %v1340
      %v1345 = vadd.f32 %v1241, %v1341
      %v1346 = vadd.f32 %v1242, %v1342
      %v1347 = vadd.f32 %v1243, %v1343
      %1348 = vrot.lane.b32.xlu0 %v841, 4
      %v1349 = vpop.permute.xlu0 %1348
      %1350 = vrot.lane.b32.xlu0 %v845, 4
      %v1351 = vpop.permute.xlu0 %1350
      %1352 = vrot.lane.b32.xlu0 %v851, 4
      %v1353 = vpop.permute.xlu0 %1352
      %1354 = vrot.lane.b32.xlu0 %v855, 4
      %v1355 = vpop.permute.xlu0 %1354
      %1356 = vrot.lane.b32.xlu0 %v916, 4
      %v1357 = vpop.permute.xlu0 %1356
      %1358 = vrot.lane.b32.xlu0 %v920, 4
      %v1359 = vpop.permute.xlu0 %1358
      %1360 = vrot.lane.b32.xlu0 %v926, 4
      %v1361 = vpop.permute.xlu0 %1360
      %1362 = vrot.lane.b32.xlu0 %v930, 4
      %v1363 = vpop.permute.xlu0 %1362
      %1364 = vrot.lane.b32.xlu0 %v843, 4
      %v1365 = vpop.permute.xlu0 %1364
      %1366 = vrot.lane.b32.xlu0 %v847, 4
      %v1367 = vpop.permute.xlu0 %1366
      %1368 = vrot.lane.b32.xlu0 %v853, 4
      %v1369 = vpop.permute.xlu0 %1368
      %1370 = vrot.lane.b32.xlu0 %v857, 4
      %v1371 = vpop.permute.xlu0 %1370
      %1372 = vrot.lane.b32.xlu0 %v914, 4
      %v1373 = vpop.permute.xlu0 %1372
      %1374 = vrot.lane.b32.xlu0 %v918, 4
      %v1375 = vpop.permute.xlu0 %1374
      %1376 = vrot.lane.b32.xlu0 %v924, 4
      %v1377 = vpop.permute.xlu0 %1376
      %1378 = vrot.lane.b32.xlu0 %v928, 4
      %v1379 = vpop.permute.xlu0 %1378
      %1380 = vset.pattern.permute.xlu0 4
      %1381 = vperm.xlu0 %1380, %v932
      %v1382 = vpop.permute.xlu0 %1381
      %1384 = vset.pattern.permute.xlu0 4
      %1385 = vperm.xlu0 %1384, %v933
      %v1386 = vpop.permute.xlu0 %1385
      %1388 = vset.pattern.permute.xlu0 4
      %1389 = vperm.xlu0 %1388, %v934
      %v1390 = vpop.permute.xlu0 %1389
      %1392 = vset.pattern.permute.xlu0 4
      %1393 = vperm.xlu0 %1392, %v935
      %v1394 = vpop.permute.xlu0 %1393
      %v1396 = vmul.f32 %v1382, %v1349
      %v1397 = vmul.f32 %v1386, %v1351
      %v1398 = vmul.f32 %v1390, %v1353
      %v1399 = vmul.f32 %v1394, %v1355
      %1400 = vset.pattern.permute.xlu0 4
      %1401 = vperm.xlu0 %1400, %v936
      %v1402 = vpop.permute.xlu0 %1401
      %1404 = vset.pattern.permute.xlu0 4
      %1405 = vperm.xlu0 %1404, %v937
      %v1406 = vpop.permute.xlu0 %1405
      %1408 = vset.pattern.permute.xlu0 4
      %1409 = vperm.xlu0 %1408, %v938
      %v1410 = vpop.permute.xlu0 %1409
      %1412 = vset.pattern.permute.xlu0 4
      %1413 = vperm.xlu0 %1412, %v939
      %v1414 = vpop.permute.xlu0 %1413
      %v1416 = vmul.f32 %v1402, %v1357
      %v1417 = vmul.f32 %v1406, %v1359
      %v1418 = vmul.f32 %v1410, %v1361
      %v1419 = vmul.f32 %v1414, %v1363
      %v1420 = vsub.f32 %v1396, %v1416
      %v1421 = vsub.f32 %v1397, %v1417
      %v1422 = vsub.f32 %v1398, %v1418
      %v1423 = vsub.f32 %v1399, %v1419
      %v1424 = vmul.f32 %v1420, %v542
      %v1425 = vmul.f32 %v1421, %v542
      %v1426 = vmul.f32 %v1422, %v542
      %v1427 = vmul.f32 %v1423, %v542
      %v1428 = vadd.f32 %v1324, %v1424
      %v1429 = vadd.f32 %v1325, %v1425
      %v1430 = vadd.f32 %v1326, %v1426
      %v1431 = vadd.f32 %v1327, %v1427
      %v1432 = vmul.f32 %v1382, %v1365
      %v1433 = vmul.f32 %v1386, %v1367
      %v1434 = vmul.f32 %v1390, %v1369
      %v1435 = vmul.f32 %v1394, %v1371
      %v1436 = vmul.f32 %v1402, %v1373
      %v1437 = vmul.f32 %v1406, %v1375
      %v1438 = vmul.f32 %v1410, %v1377
      %v1439 = vmul.f32 %v1414, %v1379
      %v1440 = vadd.f32 %v1432, %v1436
      %v1441 = vadd.f32 %v1433, %v1437
      %v1442 = vadd.f32 %v1434, %v1438
      %v1443 = vadd.f32 %v1435, %v1439
      %v1444 = vmul.f32 %v1440, %v542
      %v1445 = vmul.f32 %v1441, %v542
      %v1446 = vmul.f32 %v1442, %v542
      %v1447 = vmul.f32 %v1443, %v542
      %v1448 = vadd.f32 %v1344, %v1444
      %v1449 = vadd.f32 %v1345, %v1445
      %v1450 = vadd.f32 %v1346, %v1446
      %v1451 = vadd.f32 %v1347, %v1447
      %1452 = vrot.lane.b32.xlu0 %v841, 5
      %v1453 = vpop.permute.xlu0 %1452
      %1454 = vrot.lane.b32.xlu0 %v845, 5
      %v1455 = vpop.permute.xlu0 %1454
      %1456 = vrot.lane.b32.xlu0 %v851, 5
      %v1457 = vpop.permute.xlu0 %1456
      %1458 = vrot.lane.b32.xlu0 %v855, 5
      %v1459 = vpop.permute.xlu0 %1458
      %1460 = vrot.lane.b32.xlu0 %v916, 5
      %v1461 = vpop.permute.xlu0 %1460
      %1462 = vrot.lane.b32.xlu0 %v920, 5
      %v1463 = vpop.permute.xlu0 %1462
      %1464 = vrot.lane.b32.xlu0 %v926, 5
      %v1465 = vpop.permute.xlu0 %1464
      %1466 = vrot.lane.b32.xlu0 %v930, 5
      %v1467 = vpop.permute.xlu0 %1466
      %1468 = vrot.lane.b32.xlu0 %v843, 5
      %v1469 = vpop.permute.xlu0 %1468
      %1470 = vrot.lane.b32.xlu0 %v847, 5
      %v1471 = vpop.permute.xlu0 %1470
      %1472 = vrot.lane.b32.xlu0 %v853, 5
      %v1473 = vpop.permute.xlu0 %1472
      %1474 = vrot.lane.b32.xlu0 %v857, 5
      %v1475 = vpop.permute.xlu0 %1474
      %1476 = vrot.lane.b32.xlu0 %v914, 5
      %v1477 = vpop.permute.xlu0 %1476
      %1478 = vrot.lane.b32.xlu0 %v918, 5
      %v1479 = vpop.permute.xlu0 %1478
      %1480 = vrot.lane.b32.xlu0 %v924, 5
      %v1481 = vpop.permute.xlu0 %1480
      %1482 = vrot.lane.b32.xlu0 %v928, 5
      %v1483 = vpop.permute.xlu0 %1482
      %1484 = vset.pattern.permute.xlu0 5
      %1485 = vperm.xlu0 %1484, %v932
      %v1486 = vpop.permute.xlu0 %1485
      %1488 = vset.pattern.permute.xlu0 5
      %1489 = vperm.xlu0 %1488, %v933
      %v1490 = vpop.permute.xlu0 %1489
      %1492 = vset.pattern.permute.xlu0 5
      %1493 = vperm.xlu0 %1492, %v934
      %v1494 = vpop.permute.xlu0 %1493
      %1496 = vset.pattern.permute.xlu0 5
      %1497 = vperm.xlu0 %1496, %v935
      %v1498 = vpop.permute.xlu0 %1497
      %v1500 = vmul.f32 %v1486, %v1453
      %v1501 = vmul.f32 %v1490, %v1455
      %v1502 = vmul.f32 %v1494, %v1457
      %v1503 = vmul.f32 %v1498, %v1459
      %1504 = vset.pattern.permute.xlu0 5
      %1505 = vperm.xlu0 %1504, %v936
      %v1506 = vpop.permute.xlu0 %1505
      %1508 = vset.pattern.permute.xlu0 5
      %1509 = vperm.xlu0 %1508, %v937
      %v1510 = vpop.permute.xlu0 %1509
      %1512 = vset.pattern.permute.xlu0 5
      %1513 = vperm.xlu0 %1512, %v938
      %v1514 = vpop.permute.xlu0 %1513
      %1516 = vset.pattern.permute.xlu0 5
      %1517 = vperm.xlu0 %1516, %v939
      %v1518 = vpop.permute.xlu0 %1517
      %v1520 = vmul.f32 %v1506, %v1461
      %v1521 = vmul.f32 %v1510, %v1463
      %v1522 = vmul.f32 %v1514, %v1465
      %v1523 = vmul.f32 %v1518, %v1467
      %v1524 = vsub.f32 %v1500, %v1520
      %v1525 = vsub.f32 %v1501, %v1521
      %v1526 = vsub.f32 %v1502, %v1522
      %v1527 = vsub.f32 %v1503, %v1523
      %v1528 = vmul.f32 %v1524, %v545
      %v1529 = vmul.f32 %v1525, %v545
      %v1530 = vmul.f32 %v1526, %v545
      %v1531 = vmul.f32 %v1527, %v545
      %v1532 = vadd.f32 %v1428, %v1528
      %v1533 = vadd.f32 %v1429, %v1529
      %v1534 = vadd.f32 %v1430, %v1530
      %v1535 = vadd.f32 %v1431, %v1531
      %v1536 = vmul.f32 %v1486, %v1469
      %v1537 = vmul.f32 %v1490, %v1471
      %v1538 = vmul.f32 %v1494, %v1473
      %v1539 = vmul.f32 %v1498, %v1475
      %v1540 = vmul.f32 %v1506, %v1477
      %v1541 = vmul.f32 %v1510, %v1479
      %v1542 = vmul.f32 %v1514, %v1481
      %v1543 = vmul.f32 %v1518, %v1483
      %v1544 = vadd.f32 %v1536, %v1540
      %v1545 = vadd.f32 %v1537, %v1541
      %v1546 = vadd.f32 %v1538, %v1542
      %v1547 = vadd.f32 %v1539, %v1543
      %v1548 = vmul.f32 %v1544, %v545
      %v1549 = vmul.f32 %v1545, %v545
      %v1550 = vmul.f32 %v1546, %v545
      %v1551 = vmul.f32 %v1547, %v545
      %v1552 = vadd.f32 %v1448, %v1548
      %v1553 = vadd.f32 %v1449, %v1549
      %v1554 = vadd.f32 %v1450, %v1550
      %v1555 = vadd.f32 %v1451, %v1551
      %1556 = vrot.lane.b32.xlu0 %v841, 6
      %v1557 = vpop.permute.xlu0 %1556
      %1558 = vrot.lane.b32.xlu0 %v845, 6
      %v1559 = vpop.permute.xlu0 %1558
      %1560 = vrot.lane.b32.xlu0 %v851, 6
      %v1561 = vpop.permute.xlu0 %1560
      %1562 = vrot.lane.b32.xlu0 %v855, 6
      %v1563 = vpop.permute.xlu0 %1562
      %1564 = vrot.lane.b32.xlu0 %v916, 6
      %v1565 = vpop.permute.xlu0 %1564
      %1566 = vrot.lane.b32.xlu0 %v920, 6
      %v1567 = vpop.permute.xlu0 %1566
      %1568 = vrot.lane.b32.xlu0 %v926, 6
      %v1569 = vpop.permute.xlu0 %1568
      %1570 = vrot.lane.b32.xlu0 %v930, 6
      %v1571 = vpop.permute.xlu0 %1570
      %1572 = vrot.lane.b32.xlu0 %v843, 6
      %v1573 = vpop.permute.xlu0 %1572
      %1574 = vrot.lane.b32.xlu0 %v847, 6
      %v1575 = vpop.permute.xlu0 %1574
      %1576 = vrot.lane.b32.xlu0 %v853, 6
      %v1577 = vpop.permute.xlu0 %1576
      %1578 = vrot.lane.b32.xlu0 %v857, 6
      %v1579 = vpop.permute.xlu0 %1578
      %1580 = vrot.lane.b32.xlu0 %v914, 6
      %v1581 = vpop.permute.xlu0 %1580
      %1582 = vrot.lane.b32.xlu0 %v918, 6
      %v1583 = vpop.permute.xlu0 %1582
      %1584 = vrot.lane.b32.xlu0 %v924, 6
      %v1585 = vpop.permute.xlu0 %1584
      %1586 = vrot.lane.b32.xlu0 %v928, 6
      %v1587 = vpop.permute.xlu0 %1586
      %1588 = vset.pattern.permute.xlu0 6
      %1589 = vperm.xlu0 %1588, %v932
      %v1590 = vpop.permute.xlu0 %1589
      %1592 = vset.pattern.permute.xlu0 6
      %1593 = vperm.xlu0 %1592, %v933
      %v1594 = vpop.permute.xlu0 %1593
      %1596 = vset.pattern.permute.xlu0 6
      %1597 = vperm.xlu0 %1596, %v934
      %v1598 = vpop.permute.xlu0 %1597
      %1600 = vset.pattern.permute.xlu0 6
      %1601 = vperm.xlu0 %1600, %v935
      %v1602 = vpop.permute.xlu0 %1601
      %v1604 = vmul.f32 %v1590, %v1557
      %v1605 = vmul.f32 %v1594, %v1559
      %v1606 = vmul.f32 %v1598, %v1561
      %v1607 = vmul.f32 %v1602, %v1563
      %1608 = vset.pattern.permute.xlu0 6
      %1609 = vperm.xlu0 %1608, %v936
      %v1610 = vpop.permute.xlu0 %1609
      %1612 = vset.pattern.permute.xlu0 6
      %1613 = vperm.xlu0 %1612, %v937
      %v1614 = vpop.permute.xlu0 %1613
      %1616 = vset.pattern.permute.xlu0 6
      %1617 = vperm.xlu0 %1616, %v938
      %v1618 = vpop.permute.xlu0 %1617
      %1620 = vset.pattern.permute.xlu0 6
      %1621 = vperm.xlu0 %1620, %v939
      %v1622 = vpop.permute.xlu0 %1621
      %v1624 = vmul.f32 %v1610, %v1565
      %v1625 = vmul.f32 %v1614, %v1567
      %v1626 = vmul.f32 %v1618, %v1569
      %v1627 = vmul.f32 %v1622, %v1571
      %v1628 = vsub.f32 %v1604, %v1624
      %v1629 = vsub.f32 %v1605, %v1625
      %v1630 = vsub.f32 %v1606, %v1626
      %v1631 = vsub.f32 %v1607, %v1627
      %v1632 = vmul.f32 %v1628, %v548
      %v1633 = vmul.f32 %v1629, %v548
      %v1634 = vmul.f32 %v1630, %v548
      %v1635 = vmul.f32 %v1631, %v548
      %v1636 = vadd.f32 %v1532, %v1632
      %v1637 = vadd.f32 %v1533, %v1633
      %v1638 = vadd.f32 %v1534, %v1634
      %v1639 = vadd.f32 %v1535, %v1635
      %v1640 = vmul.f32 %v1590, %v1573
      %v1641 = vmul.f32 %v1594, %v1575
      %v1642 = vmul.f32 %v1598, %v1577
      %v1643 = vmul.f32 %v1602, %v1579
      %v1644 = vmul.f32 %v1610, %v1581
      %v1645 = vmul.f32 %v1614, %v1583
      %v1646 = vmul.f32 %v1618, %v1585
      %v1647 = vmul.f32 %v1622, %v1587
      %v1648 = vadd.f32 %v1640, %v1644
      %v1649 = vadd.f32 %v1641, %v1645
      %v1650 = vadd.f32 %v1642, %v1646
      %v1651 = vadd.f32 %v1643, %v1647
      %v1652 = vmul.f32 %v1648, %v548
      %v1653 = vmul.f32 %v1649, %v548
      %v1654 = vmul.f32 %v1650, %v548
      %v1655 = vmul.f32 %v1651, %v548
      %v1656 = vadd.f32 %v1552, %v1652
      %v1657 = vadd.f32 %v1553, %v1653
      %v1658 = vadd.f32 %v1554, %v1654
      %v1659 = vadd.f32 %v1555, %v1655
      %1660 = vrot.lane.b32.xlu0 %v841, 7
      %v1661 = vpop.permute.xlu0 %1660
      %1662 = vrot.lane.b32.xlu0 %v845, 7
      %v1663 = vpop.permute.xlu0 %1662
      %1664 = vrot.lane.b32.xlu0 %v851, 7
      %v1665 = vpop.permute.xlu0 %1664
      %1666 = vrot.lane.b32.xlu0 %v855, 7
      %v1667 = vpop.permute.xlu0 %1666
      %1668 = vrot.lane.b32.xlu0 %v916, 7
      %v1669 = vpop.permute.xlu0 %1668
      %1670 = vrot.lane.b32.xlu0 %v920, 7
      %v1671 = vpop.permute.xlu0 %1670
      %1672 = vrot.lane.b32.xlu0 %v926, 7
      %v1673 = vpop.permute.xlu0 %1672
      %1674 = vrot.lane.b32.xlu0 %v930, 7
      %v1675 = vpop.permute.xlu0 %1674
      %1676 = vrot.lane.b32.xlu0 %v843, 7
      %v1677 = vpop.permute.xlu0 %1676
      %1678 = vrot.lane.b32.xlu0 %v847, 7
      %v1679 = vpop.permute.xlu0 %1678
      %1680 = vrot.lane.b32.xlu0 %v853, 7
      %v1681 = vpop.permute.xlu0 %1680
      %1682 = vrot.lane.b32.xlu0 %v857, 7
      %v1683 = vpop.permute.xlu0 %1682
      %1684 = vrot.lane.b32.xlu0 %v914, 7
      %v1685 = vpop.permute.xlu0 %1684
      %1686 = vrot.lane.b32.xlu0 %v918, 7
      %v1687 = vpop.permute.xlu0 %1686
      %1688 = vrot.lane.b32.xlu0 %v924, 7
      %v1689 = vpop.permute.xlu0 %1688
      %1690 = vrot.lane.b32.xlu0 %v928, 7
      %v1691 = vpop.permute.xlu0 %1690
      %1692 = vset.pattern.permute.xlu0 7
      %1693 = vperm.xlu0 %1692, %v932
      %v1694 = vpop.permute.xlu0 %1693
      %1696 = vset.pattern.permute.xlu0 7
      %1697 = vperm.xlu0 %1696, %v933
      %v1698 = vpop.permute.xlu0 %1697
      %1700 = vset.pattern.permute.xlu0 7
      %1701 = vperm.xlu0 %1700, %v934
      %v1702 = vpop.permute.xlu0 %1701
      %1704 = vset.pattern.permute.xlu0 7
      %1705 = vperm.xlu0 %1704, %v935
      %v1706 = vpop.permute.xlu0 %1705
      %v1708 = vmul.f32 %v1694, %v1661
      %v1709 = vmul.f32 %v1698, %v1663
      %v1710 = vmul.f32 %v1702, %v1665
      %v1711 = vmul.f32 %v1706, %v1667
      %1712 = vset.pattern.permute.xlu0 7
      %1713 = vperm.xlu0 %1712, %v936
      %v1714 = vpop.permute.xlu0 %1713
      %1716 = vset.pattern.permute.xlu0 7
      %1717 = vperm.xlu0 %1716, %v937
      %v1718 = vpop.permute.xlu0 %1717
      %1720 = vset.pattern.permute.xlu0 7
      %1721 = vperm.xlu0 %1720, %v938
      %v1722 = vpop.permute.xlu0 %1721
      %1724 = vset.pattern.permute.xlu0 7
      %1725 = vperm.xlu0 %1724, %v939
      %v1726 = vpop.permute.xlu0 %1725
      %v1728 = vmul.f32 %v1714, %v1669
      %v1729 = vmul.f32 %v1718, %v1671
      %v1730 = vmul.f32 %v1722, %v1673
      %v1731 = vmul.f32 %v1726, %v1675
      %v1732 = vsub.f32 %v1708, %v1728
      %v1733 = vsub.f32 %v1709, %v1729
      %v1734 = vsub.f32 %v1710, %v1730
      %v1735 = vsub.f32 %v1711, %v1731
      %v1736 = vmul.f32 %v1732, %v551
      %v1737 = vmul.f32 %v1733, %v551
      %v1738 = vmul.f32 %v1734, %v551
      %v1739 = vmul.f32 %v1735, %v551
      %v1740 = vadd.f32 %v1636, %v1736
      %v1741 = vadd.f32 %v1637, %v1737
      %v1742 = vadd.f32 %v1638, %v1738
      %v1743 = vadd.f32 %v1639, %v1739
      %v1744 = vmul.f32 %v1694, %v1677
      %v1745 = vmul.f32 %v1698, %v1679
      %v1746 = vmul.f32 %v1702, %v1681
      %v1747 = vmul.f32 %v1706, %v1683
      %v1748 = vmul.f32 %v1714, %v1685
      %v1749 = vmul.f32 %v1718, %v1687
      %v1750 = vmul.f32 %v1722, %v1689
      %v1751 = vmul.f32 %v1726, %v1691
      %v1752 = vadd.f32 %v1744, %v1748
      %v1753 = vadd.f32 %v1745, %v1749
      %v1754 = vadd.f32 %v1746, %v1750
      %v1755 = vadd.f32 %v1747, %v1751
      %v1756 = vmul.f32 %v1752, %v551
      %v1757 = vmul.f32 %v1753, %v551
      %v1758 = vmul.f32 %v1754, %v551
      %v1759 = vmul.f32 %v1755, %v551
      %v1760 = vadd.f32 %v1656, %v1756
      %v1761 = vadd.f32 %v1657, %v1757
      %v1762 = vadd.f32 %v1658, %v1758
      %v1763 = vadd.f32 %v1659, %v1759
      %1764 = vrot.lane.b32.xlu0 %v841, 8
      %v1765 = vpop.permute.xlu0 %1764
      %1766 = vrot.lane.b32.xlu0 %v845, 8
      %v1767 = vpop.permute.xlu0 %1766
      %1768 = vrot.lane.b32.xlu0 %v851, 8
      %v1769 = vpop.permute.xlu0 %1768
      %1770 = vrot.lane.b32.xlu0 %v855, 8
      %v1771 = vpop.permute.xlu0 %1770
      %1772 = vrot.lane.b32.xlu0 %v916, 8
      %v1773 = vpop.permute.xlu0 %1772
      %1774 = vrot.lane.b32.xlu0 %v920, 8
      %v1775 = vpop.permute.xlu0 %1774
      %1776 = vrot.lane.b32.xlu0 %v926, 8
      %v1777 = vpop.permute.xlu0 %1776
      %1778 = vrot.lane.b32.xlu0 %v930, 8
      %v1779 = vpop.permute.xlu0 %1778
      %1780 = vrot.lane.b32.xlu0 %v843, 8
      %v1781 = vpop.permute.xlu0 %1780
      %1782 = vrot.lane.b32.xlu0 %v847, 8
      %v1783 = vpop.permute.xlu0 %1782
      %1784 = vrot.lane.b32.xlu0 %v853, 8
      %v1785 = vpop.permute.xlu0 %1784
      %1786 = vrot.lane.b32.xlu0 %v857, 8
      %v1787 = vpop.permute.xlu0 %1786
      %1788 = vrot.lane.b32.xlu0 %v914, 8
      %v1789 = vpop.permute.xlu0 %1788
      %1790 = vrot.lane.b32.xlu0 %v918, 8
      %v1791 = vpop.permute.xlu0 %1790
      %1792 = vrot.lane.b32.xlu0 %v924, 8
      %v1793 = vpop.permute.xlu0 %1792
      %1794 = vrot.lane.b32.xlu0 %v928, 8
      %v1795 = vpop.permute.xlu0 %1794
      %1796 = vset.pattern.permute.xlu0 8
      %1797 = vperm.xlu0 %1796, %v932
      %v1798 = vpop.permute.xlu0 %1797
      %1800 = vset.pattern.permute.xlu0 8
      %1801 = vperm.xlu0 %1800, %v933
      %v1802 = vpop.permute.xlu0 %1801
      %1804 = vset.pattern.permute.xlu0 8
      %1805 = vperm.xlu0 %1804, %v934
      %v1806 = vpop.permute.xlu0 %1805
      %1808 = vset.pattern.permute.xlu0 8
      %1809 = vperm.xlu0 %1808, %v935
      %v1810 = vpop.permute.xlu0 %1809
      %v1812 = vmul.f32 %v1798, %v1765
      %v1813 = vmul.f32 %v1802, %v1767
      %v1814 = vmul.f32 %v1806, %v1769
      %v1815 = vmul.f32 %v1810, %v1771
      %1816 = vset.pattern.permute.xlu0 8
      %1817 = vperm.xlu0 %1816, %v936
      %v1818 = vpop.permute.xlu0 %1817
      %1820 = vset.pattern.permute.xlu0 8
      %1821 = vperm.xlu0 %1820, %v937
      %v1822 = vpop.permute.xlu0 %1821
      %1824 = vset.pattern.permute.xlu0 8
      %1825 = vperm.xlu0 %1824, %v938
      %v1826 = vpop.permute.xlu0 %1825
      %1828 = vset.pattern.permute.xlu0 8
      %1829 = vperm.xlu0 %1828, %v939
      %v1830 = vpop.permute.xlu0 %1829
      %v1832 = vmul.f32 %v1818, %v1773
      %v1833 = vmul.f32 %v1822, %v1775
      %v1834 = vmul.f32 %v1826, %v1777
      %v1835 = vmul.f32 %v1830, %v1779
      %v1836 = vsub.f32 %v1812, %v1832
      %v1837 = vsub.f32 %v1813, %v1833
      %v1838 = vsub.f32 %v1814, %v1834
      %v1839 = vsub.f32 %v1815, %v1835
      %v1840 = vmul.f32 %v1836, %v554
      %v1841 = vmul.f32 %v1837, %v554
      %v1842 = vmul.f32 %v1838, %v554
      %v1843 = vmul.f32 %v1839, %v554
      %v1844 = vadd.f32 %v1740, %v1840
      %v1845 = vadd.f32 %v1741, %v1841
      %v1846 = vadd.f32 %v1742, %v1842
      %v1847 = vadd.f32 %v1743, %v1843
      %v1848 = vmul.f32 %v1798, %v1781
      %v1849 = vmul.f32 %v1802, %v1783
      %v1850 = vmul.f32 %v1806, %v1785
      %v1851 = vmul.f32 %v1810, %v1787
      %v1852 = vmul.f32 %v1818, %v1789
      %v1853 = vmul.f32 %v1822, %v1791
      %v1854 = vmul.f32 %v1826, %v1793
      %v1855 = vmul.f32 %v1830, %v1795
      %v1856 = vadd.f32 %v1848, %v1852
      %v1857 = vadd.f32 %v1849, %v1853
      %v1858 = vadd.f32 %v1850, %v1854
      %v1859 = vadd.f32 %v1851, %v1855
      %v1860 = vmul.f32 %v1856, %v554
      %v1861 = vmul.f32 %v1857, %v554
      %v1862 = vmul.f32 %v1858, %v554
      %v1863 = vmul.f32 %v1859, %v554
      %v1864 = vadd.f32 %v1760, %v1860
      %v1865 = vadd.f32 %v1761, %v1861
      %v1866 = vadd.f32 %v1762, %v1862
      %v1867 = vadd.f32 %v1763, %v1863
      %1868 = vrot.lane.b32.xlu0 %v841, 9
      %v1869 = vpop.permute.xlu0 %1868
      %1870 = vrot.lane.b32.xlu0 %v845, 9
      %v1871 = vpop.permute.xlu0 %1870
      %1872 = vrot.lane.b32.xlu0 %v851, 9
      %v1873 = vpop.permute.xlu0 %1872
      %1874 = vrot.lane.b32.xlu0 %v855, 9
      %v1875 = vpop.permute.xlu0 %1874
      %1876 = vrot.lane.b32.xlu0 %v916, 9
      %v1877 = vpop.permute.xlu0 %1876
      %1878 = vrot.lane.b32.xlu0 %v920, 9
      %v1879 = vpop.permute.xlu0 %1878
      %1880 = vrot.lane.b32.xlu0 %v926, 9
      %v1881 = vpop.permute.xlu0 %1880
      %1882 = vrot.lane.b32.xlu0 %v930, 9
      %v1883 = vpop.permute.xlu0 %1882
      %1884 = vrot.lane.b32.xlu0 %v843, 9
      %v1885 = vpop.permute.xlu0 %1884
      %1886 = vrot.lane.b32.xlu0 %v847, 9
      %v1887 = vpop.permute.xlu0 %1886
      %1888 = vrot.lane.b32.xlu0 %v853, 9
      %v1889 = vpop.permute.xlu0 %1888
      %1890 = vrot.lane.b32.xlu0 %v857, 9
      %v1891 = vpop.permute.xlu0 %1890
      %1892 = vrot.lane.b32.xlu0 %v914, 9
      %v1893 = vpop.permute.xlu0 %1892
      %1894 = vrot.lane.b32.xlu0 %v918, 9
      %v1895 = vpop.permute.xlu0 %1894
      %1896 = vrot.lane.b32.xlu0 %v924, 9
      %v1897 = vpop.permute.xlu0 %1896
      %1898 = vrot.lane.b32.xlu0 %v928, 9
      %v1899 = vpop.permute.xlu0 %1898
      %1900 = vset.pattern.permute.xlu0 9
      %1901 = vperm.xlu0 %1900, %v932
      %v1902 = vpop.permute.xlu0 %1901
      %1904 = vset.pattern.permute.xlu0 9
      %1905 = vperm.xlu0 %1904, %v933
      %v1906 = vpop.permute.xlu0 %1905
      %1908 = vset.pattern.permute.xlu0 9
      %1909 = vperm.xlu0 %1908, %v934
      %v1910 = vpop.permute.xlu0 %1909
      %1912 = vset.pattern.permute.xlu0 9
      %1913 = vperm.xlu0 %1912, %v935
      %v1914 = vpop.permute.xlu0 %1913
      %v1916 = vmul.f32 %v1902, %v1869
      %v1917 = vmul.f32 %v1906, %v1871
      %v1918 = vmul.f32 %v1910, %v1873
      %v1919 = vmul.f32 %v1914, %v1875
      %1920 = vset.pattern.permute.xlu0 9
      %1921 = vperm.xlu0 %1920, %v936
      %v1922 = vpop.permute.xlu0 %1921
      %1924 = vset.pattern.permute.xlu0 9
      %1925 = vperm.xlu0 %1924, %v937
      %v1926 = vpop.permute.xlu0 %1925
      %1928 = vset.pattern.permute.xlu0 9
      %1929 = vperm.xlu0 %1928, %v938
      %v1930 = vpop.permute.xlu0 %1929
      %1932 = vset.pattern.permute.xlu0 9
      %1933 = vperm.xlu0 %1932, %v939
      %v1934 = vpop.permute.xlu0 %1933
      %v1936 = vmul.f32 %v1922, %v1877
      %v1937 = vmul.f32 %v1926, %v1879
      %v1938 = vmul.f32 %v1930, %v1881
      %v1939 = vmul.f32 %v1934, %v1883
      %v1940 = vsub.f32 %v1916, %v1936
      %v1941 = vsub.f32 %v1917, %v1937
      %v1942 = vsub.f32 %v1918, %v1938
      %v1943 = vsub.f32 %v1919, %v1939
      %v1944 = vmul.f32 %v1940, %v557
      %v1945 = vmul.f32 %v1941, %v557
      %v1946 = vmul.f32 %v1942, %v557
      %v1947 = vmul.f32 %v1943, %v557
      %v1948 = vadd.f32 %v1844, %v1944
      %v1949 = vadd.f32 %v1845, %v1945
      %v1950 = vadd.f32 %v1846, %v1946
      %v1951 = vadd.f32 %v1847, %v1947
      %v1952 = vmul.f32 %v1902, %v1885
      %v1953 = vmul.f32 %v1906, %v1887
      %v1954 = vmul.f32 %v1910, %v1889
      %v1955 = vmul.f32 %v1914, %v1891
      %v1956 = vmul.f32 %v1922, %v1893
      %v1957 = vmul.f32 %v1926, %v1895
      %v1958 = vmul.f32 %v1930, %v1897
      %v1959 = vmul.f32 %v1934, %v1899
      %v1960 = vadd.f32 %v1952, %v1956
      %v1961 = vadd.f32 %v1953, %v1957
      %v1962 = vadd.f32 %v1954, %v1958
      %v1963 = vadd.f32 %v1955, %v1959
      %v1964 = vmul.f32 %v1960, %v557
      %v1965 = vmul.f32 %v1961, %v557
      %v1966 = vmul.f32 %v1962, %v557
      %v1967 = vmul.f32 %v1963, %v557
      %v1968 = vadd.f32 %v1864, %v1964
      %v1969 = vadd.f32 %v1865, %v1965
      %v1970 = vadd.f32 %v1866, %v1966
      %v1971 = vadd.f32 %v1867, %v1967
      %1972 = vrot.lane.b32.xlu0 %v841, 10
      %v1973 = vpop.permute.xlu0 %1972
      %1974 = vrot.lane.b32.xlu0 %v845, 10
      %v1975 = vpop.permute.xlu0 %1974
      %1976 = vrot.lane.b32.xlu0 %v851, 10
      %v1977 = vpop.permute.xlu0 %1976
      %1978 = vrot.lane.b32.xlu0 %v855, 10
      %v1979 = vpop.permute.xlu0 %1978
      %1980 = vrot.lane.b32.xlu0 %v916, 10
      %v1981 = vpop.permute.xlu0 %1980
      %1982 = vrot.lane.b32.xlu0 %v920, 10
      %v1983 = vpop.permute.xlu0 %1982
      %1984 = vrot.lane.b32.xlu0 %v926, 10
      %v1985 = vpop.permute.xlu0 %1984
      %1986 = vrot.lane.b32.xlu0 %v930, 10
      %v1987 = vpop.permute.xlu0 %1986
      %1988 = vrot.lane.b32.xlu0 %v843, 10
      %v1989 = vpop.permute.xlu0 %1988
      %1990 = vrot.lane.b32.xlu0 %v847, 10
      %v1991 = vpop.permute.xlu0 %1990
      %1992 = vrot.lane.b32.xlu0 %v853, 10
      %v1993 = vpop.permute.xlu0 %1992
      %1994 = vrot.lane.b32.xlu0 %v857, 10
      %v1995 = vpop.permute.xlu0 %1994
      %1996 = vrot.lane.b32.xlu0 %v914, 10
      %v1997 = vpop.permute.xlu0 %1996
      %1998 = vrot.lane.b32.xlu0 %v918, 10
      %v1999 = vpop.permute.xlu0 %1998
      %2000 = vrot.lane.b32.xlu0 %v924, 10
      %v2001 = vpop.permute.xlu0 %2000
      %2002 = vrot.lane.b32.xlu0 %v928, 10
      %v2003 = vpop.permute.xlu0 %2002
      %2004 = vset.pattern.permute.xlu0 10
      %2005 = vperm.xlu0 %2004, %v932
      %v2006 = vpop.permute.xlu0 %2005
      %2008 = vset.pattern.permute.xlu0 10
      %2009 = vperm.xlu0 %2008, %v933
      %v2010 = vpop.permute.xlu0 %2009
      %2012 = vset.pattern.permute.xlu0 10
      %2013 = vperm.xlu0 %2012, %v934
      %v2014 = vpop.permute.xlu0 %2013
      %2016 = vset.pattern.permute.xlu0 10
      %2017 = vperm.xlu0 %2016, %v935
      %v2018 = vpop.permute.xlu0 %2017
      %v2020 = vmul.f32 %v2006, %v1973
      %v2021 = vmul.f32 %v2010, %v1975
      %v2022 = vmul.f32 %v2014, %v1977
      %v2023 = vmul.f32 %v2018, %v1979
      %2024 = vset.pattern.permute.xlu0 10
      %2025 = vperm.xlu0 %2024, %v936
      %v2026 = vpop.permute.xlu0 %2025
      %2028 = vset.pattern.permute.xlu0 10
      %2029 = vperm.xlu0 %2028, %v937
      %v2030 = vpop.permute.xlu0 %2029
      %2032 = vset.pattern.permute.xlu0 10
      %2033 = vperm.xlu0 %2032, %v938
      %v2034 = vpop.permute.xlu0 %2033
      %2036 = vset.pattern.permute.xlu0 10
      %2037 = vperm.xlu0 %2036, %v939
      %v2038 = vpop.permute.xlu0 %2037
      %v2040 = vmul.f32 %v2026, %v1981
      %v2041 = vmul.f32 %v2030, %v1983
      %v2042 = vmul.f32 %v2034, %v1985
      %v2043 = vmul.f32 %v2038, %v1987
      %v2044 = vsub.f32 %v2020, %v2040
      %v2045 = vsub.f32 %v2021, %v2041
      %v2046 = vsub.f32 %v2022, %v2042
      %v2047 = vsub.f32 %v2023, %v2043
      %v2048 = vmul.f32 %v2044, %v560
      %v2049 = vmul.f32 %v2045, %v560
      %v2050 = vmul.f32 %v2046, %v560
      %v2051 = vmul.f32 %v2047, %v560
      %v2052 = vadd.f32 %v1948, %v2048
      %v2053 = vadd.f32 %v1949, %v2049
      %v2054 = vadd.f32 %v1950, %v2050
      %v2055 = vadd.f32 %v1951, %v2051
      %v2056 = vmul.f32 %v2006, %v1989
      %v2057 = vmul.f32 %v2010, %v1991
      %v2058 = vmul.f32 %v2014, %v1993
      %v2059 = vmul.f32 %v2018, %v1995
      %v2060 = vmul.f32 %v2026, %v1997
      %v2061 = vmul.f32 %v2030, %v1999
      %v2062 = vmul.f32 %v2034, %v2001
      %v2063 = vmul.f32 %v2038, %v2003
      %v2064 = vadd.f32 %v2056, %v2060
      %v2065 = vadd.f32 %v2057, %v2061
      %v2066 = vadd.f32 %v2058, %v2062
      %v2067 = vadd.f32 %v2059, %v2063
      %v2068 = vmul.f32 %v2064, %v560
      %v2069 = vmul.f32 %v2065, %v560
      %v2070 = vmul.f32 %v2066, %v560
      %v2071 = vmul.f32 %v2067, %v560
      %v2072 = vadd.f32 %v1968, %v2068
      %v2073 = vadd.f32 %v1969, %v2069
      %v2074 = vadd.f32 %v1970, %v2070
      %v2075 = vadd.f32 %v1971, %v2071
      %2076 = vrot.lane.b32.xlu0 %v841, 11
      %v2077 = vpop.permute.xlu0 %2076
      %2078 = vrot.lane.b32.xlu0 %v845, 11
      %v2079 = vpop.permute.xlu0 %2078
      %2080 = vrot.lane.b32.xlu0 %v851, 11
      %v2081 = vpop.permute.xlu0 %2080
      %2082 = vrot.lane.b32.xlu0 %v855, 11
      %v2083 = vpop.permute.xlu0 %2082
      %2084 = vrot.lane.b32.xlu0 %v916, 11
      %v2085 = vpop.permute.xlu0 %2084
      %2086 = vrot.lane.b32.xlu0 %v920, 11
      %v2087 = vpop.permute.xlu0 %2086
      %2088 = vrot.lane.b32.xlu0 %v926, 11
      %v2089 = vpop.permute.xlu0 %2088
      %2090 = vrot.lane.b32.xlu0 %v930, 11
      %v2091 = vpop.permute.xlu0 %2090
      %2092 = vrot.lane.b32.xlu0 %v843, 11
      %v2093 = vpop.permute.xlu0 %2092
      %2094 = vrot.lane.b32.xlu0 %v847, 11
      %v2095 = vpop.permute.xlu0 %2094
      %2096 = vrot.lane.b32.xlu0 %v853, 11
      %v2097 = vpop.permute.xlu0 %2096
      %2098 = vrot.lane.b32.xlu0 %v857, 11
      %v2099 = vpop.permute.xlu0 %2098
      %2100 = vrot.lane.b32.xlu0 %v914, 11
      %v2101 = vpop.permute.xlu0 %2100
      %2102 = vrot.lane.b32.xlu0 %v918, 11
      %v2103 = vpop.permute.xlu0 %2102
      %2104 = vrot.lane.b32.xlu0 %v924, 11
      %v2105 = vpop.permute.xlu0 %2104
      %2106 = vrot.lane.b32.xlu0 %v928, 11
      %v2107 = vpop.permute.xlu0 %2106
      %2108 = vset.pattern.permute.xlu0 11
      %2109 = vperm.xlu0 %2108, %v932
      %v2110 = vpop.permute.xlu0 %2109
      %2112 = vset.pattern.permute.xlu0 11
      %2113 = vperm.xlu0 %2112, %v933
      %v2114 = vpop.permute.xlu0 %2113
      %2116 = vset.pattern.permute.xlu0 11
      %2117 = vperm.xlu0 %2116, %v934
      %v2118 = vpop.permute.xlu0 %2117
      %2120 = vset.pattern.permute.xlu0 11
      %2121 = vperm.xlu0 %2120, %v935
      %v2122 = vpop.permute.xlu0 %2121
      %v2124 = vmul.f32 %v2110, %v2077
      %v2125 = vmul.f32 %v2114, %v2079
      %v2126 = vmul.f32 %v2118, %v2081
      %v2127 = vmul.f32 %v2122, %v2083
      %2128 = vset.pattern.permute.xlu0 11
      %2129 = vperm.xlu0 %2128, %v936
      %v2130 = vpop.permute.xlu0 %2129
      %2132 = vset.pattern.permute.xlu0 11
      %2133 = vperm.xlu0 %2132, %v937
      %v2134 = vpop.permute.xlu0 %2133
      %2136 = vset.pattern.permute.xlu0 11
      %2137 = vperm.xlu0 %2136, %v938
      %v2138 = vpop.permute.xlu0 %2137
      %2140 = vset.pattern.permute.xlu0 11
      %2141 = vperm.xlu0 %2140, %v939
      %v2142 = vpop.permute.xlu0 %2141
      %v2144 = vmul.f32 %v2130, %v2085
      %v2145 = vmul.f32 %v2134, %v2087
      %v2146 = vmul.f32 %v2138, %v2089
      %v2147 = vmul.f32 %v2142, %v2091
      %v2148 = vsub.f32 %v2124, %v2144
      %v2149 = vsub.f32 %v2125, %v2145
      %v2150 = vsub.f32 %v2126, %v2146
      %v2151 = vsub.f32 %v2127, %v2147
      %v2152 = vmul.f32 %v2148, %v563
      %v2153 = vmul.f32 %v2149, %v563
      %v2154 = vmul.f32 %v2150, %v563
      %v2155 = vmul.f32 %v2151, %v563
      %v2156 = vadd.f32 %v2052, %v2152
      %v2157 = vadd.f32 %v2053, %v2153
      %v2158 = vadd.f32 %v2054, %v2154
      %v2159 = vadd.f32 %v2055, %v2155
      %v2160 = vmul.f32 %v2110, %v2093
      %v2161 = vmul.f32 %v2114, %v2095
      %v2162 = vmul.f32 %v2118, %v2097
      %v2163 = vmul.f32 %v2122, %v2099
      %v2164 = vmul.f32 %v2130, %v2101
      %v2165 = vmul.f32 %v2134, %v2103
      %v2166 = vmul.f32 %v2138, %v2105
      %v2167 = vmul.f32 %v2142, %v2107
      %v2168 = vadd.f32 %v2160, %v2164
      %v2169 = vadd.f32 %v2161, %v2165
      %v2170 = vadd.f32 %v2162, %v2166
      %v2171 = vadd.f32 %v2163, %v2167
      %v2172 = vmul.f32 %v2168, %v563
      %v2173 = vmul.f32 %v2169, %v563
      %v2174 = vmul.f32 %v2170, %v563
      %v2175 = vmul.f32 %v2171, %v563
      %v2176 = vadd.f32 %v2072, %v2172
      %v2177 = vadd.f32 %v2073, %v2173
      %v2178 = vadd.f32 %v2074, %v2174
      %v2179 = vadd.f32 %v2075, %v2175
      %2180 = vrot.lane.b32.xlu0 %v841, 12
      %v2181 = vpop.permute.xlu0 %2180
      %2182 = vrot.lane.b32.xlu0 %v845, 12
      %v2183 = vpop.permute.xlu0 %2182
      %2184 = vrot.lane.b32.xlu0 %v851, 12
      %v2185 = vpop.permute.xlu0 %2184
      %2186 = vrot.lane.b32.xlu0 %v855, 12
      %v2187 = vpop.permute.xlu0 %2186
      %2188 = vrot.lane.b32.xlu0 %v916, 12
      %v2189 = vpop.permute.xlu0 %2188
      %2190 = vrot.lane.b32.xlu0 %v920, 12
      %v2191 = vpop.permute.xlu0 %2190
      %2192 = vrot.lane.b32.xlu0 %v926, 12
      %v2193 = vpop.permute.xlu0 %2192
      %2194 = vrot.lane.b32.xlu0 %v930, 12
      %v2195 = vpop.permute.xlu0 %2194
      %2196 = vrot.lane.b32.xlu0 %v843, 12
      %v2197 = vpop.permute.xlu0 %2196
      %2198 = vrot.lane.b32.xlu0 %v847, 12
      %v2199 = vpop.permute.xlu0 %2198
      %2200 = vrot.lane.b32.xlu0 %v853, 12
      %v2201 = vpop.permute.xlu0 %2200
      %2202 = vrot.lane.b32.xlu0 %v857, 12
      %v2203 = vpop.permute.xlu0 %2202
      %2204 = vrot.lane.b32.xlu0 %v914, 12
      %v2205 = vpop.permute.xlu0 %2204
      %2206 = vrot.lane.b32.xlu0 %v918, 12
      %v2207 = vpop.permute.xlu0 %2206
      %2208 = vrot.lane.b32.xlu0 %v924, 12
      %v2209 = vpop.permute.xlu0 %2208
      %2210 = vrot.lane.b32.xlu0 %v928, 12
      %v2211 = vpop.permute.xlu0 %2210
      %2212 = vset.pattern.permute.xlu0 12
      %2213 = vperm.xlu0 %2212, %v932
      %v2214 = vpop.permute.xlu0 %2213
      %2216 = vset.pattern.permute.xlu0 12
      %2217 = vperm.xlu0 %2216, %v933
      %v2218 = vpop.permute.xlu0 %2217
      %2220 = vset.pattern.permute.xlu0 12
      %2221 = vperm.xlu0 %2220, %v934
      %v2222 = vpop.permute.xlu0 %2221
      %2224 = vset.pattern.permute.xlu0 12
      %2225 = vperm.xlu0 %2224, %v935
      %v2226 = vpop.permute.xlu0 %2225
      %v2228 = vmul.f32 %v2214, %v2181
      %v2229 = vmul.f32 %v2218, %v2183
      %v2230 = vmul.f32 %v2222, %v2185
      %v2231 = vmul.f32 %v2226, %v2187
      %2232 = vset.pattern.permute.xlu0 12
      %2233 = vperm.xlu0 %2232, %v936
      %v2234 = vpop.permute.xlu0 %2233
      %2236 = vset.pattern.permute.xlu0 12
      %2237 = vperm.xlu0 %2236, %v937
      %v2238 = vpop.permute.xlu0 %2237
      %2240 = vset.pattern.permute.xlu0 12
      %2241 = vperm.xlu0 %2240, %v938
      %v2242 = vpop.permute.xlu0 %2241
      %2244 = vset.pattern.permute.xlu0 12
      %2245 = vperm.xlu0 %2244, %v939
      %v2246 = vpop.permute.xlu0 %2245
      %v2248 = vmul.f32 %v2234, %v2189
      %v2249 = vmul.f32 %v2238, %v2191
      %v2250 = vmul.f32 %v2242, %v2193
      %v2251 = vmul.f32 %v2246, %v2195
      %v2252 = vsub.f32 %v2228, %v2248
      %v2253 = vsub.f32 %v2229, %v2249
      %v2254 = vsub.f32 %v2230, %v2250
      %v2255 = vsub.f32 %v2231, %v2251
      %v2256 = vmul.f32 %v2252, %v566
      %v2257 = vmul.f32 %v2253, %v566
      %v2258 = vmul.f32 %v2254, %v566
      %v2259 = vmul.f32 %v2255, %v566
      %v2260 = vadd.f32 %v2156, %v2256
      %v2261 = vadd.f32 %v2157, %v2257
      %v2262 = vadd.f32 %v2158, %v2258
      %v2263 = vadd.f32 %v2159, %v2259
      %v2264 = vmul.f32 %v2214, %v2197
      %v2265 = vmul.f32 %v2218, %v2199
      %v2266 = vmul.f32 %v2222, %v2201
      %v2267 = vmul.f32 %v2226, %v2203
      %v2268 = vmul.f32 %v2234, %v2205
      %v2269 = vmul.f32 %v2238, %v2207
      %v2270 = vmul.f32 %v2242, %v2209
      %v2271 = vmul.f32 %v2246, %v2211
      %v2272 = vadd.f32 %v2264, %v2268
      %v2273 = vadd.f32 %v2265, %v2269
      %v2274 = vadd.f32 %v2266, %v2270
      %v2275 = vadd.f32 %v2267, %v2271
      %v2276 = vmul.f32 %v2272, %v566
      %v2277 = vmul.f32 %v2273, %v566
      %v2278 = vmul.f32 %v2274, %v566
      %v2279 = vmul.f32 %v2275, %v566
      %v2280 = vadd.f32 %v2176, %v2276
      %v2281 = vadd.f32 %v2177, %v2277
      %v2282 = vadd.f32 %v2178, %v2278
      %v2283 = vadd.f32 %v2179, %v2279
      %2284 = vrot.lane.b32.xlu0 %v841, 13
      %v2285 = vpop.permute.xlu0 %2284
      %2286 = vrot.lane.b32.xlu0 %v845, 13
      %v2287 = vpop.permute.xlu0 %2286
      %2288 = vrot.lane.b32.xlu0 %v851, 13
      %v2289 = vpop.permute.xlu0 %2288
      %2290 = vrot.lane.b32.xlu0 %v855, 13
      %v2291 = vpop.permute.xlu0 %2290
      %2292 = vrot.lane.b32.xlu0 %v916, 13
      %v2293 = vpop.permute.xlu0 %2292
      %2294 = vrot.lane.b32.xlu0 %v920, 13
      %v2295 = vpop.permute.xlu0 %2294
      %2296 = vrot.lane.b32.xlu0 %v926, 13
      %v2297 = vpop.permute.xlu0 %2296
      %2298 = vrot.lane.b32.xlu0 %v930, 13
      %v2299 = vpop.permute.xlu0 %2298
      %2300 = vrot.lane.b32.xlu0 %v843, 13
      %v2301 = vpop.permute.xlu0 %2300
      %2302 = vrot.lane.b32.xlu0 %v847, 13
      %v2303 = vpop.permute.xlu0 %2302
      %2304 = vrot.lane.b32.xlu0 %v853, 13
      %v2305 = vpop.permute.xlu0 %2304
      %2306 = vrot.lane.b32.xlu0 %v857, 13
      %v2307 = vpop.permute.xlu0 %2306
      %2308 = vrot.lane.b32.xlu0 %v914, 13
      %v2309 = vpop.permute.xlu0 %2308
      %2310 = vrot.lane.b32.xlu0 %v918, 13
      %v2311 = vpop.permute.xlu0 %2310
      %2312 = vrot.lane.b32.xlu0 %v924, 13
      %v2313 = vpop.permute.xlu0 %2312
      %2314 = vrot.lane.b32.xlu0 %v928, 13
      %v2315 = vpop.permute.xlu0 %2314
      %2316 = vset.pattern.permute.xlu0 13
      %2317 = vperm.xlu0 %2316, %v932
      %v2318 = vpop.permute.xlu0 %2317
      %2320 = vset.pattern.permute.xlu0 13
      %2321 = vperm.xlu0 %2320, %v933
      %v2322 = vpop.permute.xlu0 %2321
      %2324 = vset.pattern.permute.xlu0 13
      %2325 = vperm.xlu0 %2324, %v934
      %v2326 = vpop.permute.xlu0 %2325
      %2328 = vset.pattern.permute.xlu0 13
      %2329 = vperm.xlu0 %2328, %v935
      %v2330 = vpop.permute.xlu0 %2329
      %v2332 = vmul.f32 %v2318, %v2285
      %v2333 = vmul.f32 %v2322, %v2287
      %v2334 = vmul.f32 %v2326, %v2289
      %v2335 = vmul.f32 %v2330, %v2291
      %2336 = vset.pattern.permute.xlu0 13
      %2337 = vperm.xlu0 %2336, %v936
      %v2338 = vpop.permute.xlu0 %2337
      %2340 = vset.pattern.permute.xlu0 13
      %2341 = vperm.xlu0 %2340, %v937
      %v2342 = vpop.permute.xlu0 %2341
      %2344 = vset.pattern.permute.xlu0 13
      %2345 = vperm.xlu0 %2344, %v938
      %v2346 = vpop.permute.xlu0 %2345
      %2348 = vset.pattern.permute.xlu0 13
      %2349 = vperm.xlu0 %2348, %v939
      %v2350 = vpop.permute.xlu0 %2349
      %v2352 = vmul.f32 %v2338, %v2293
      %v2353 = vmul.f32 %v2342, %v2295
      %v2354 = vmul.f32 %v2346, %v2297
      %v2355 = vmul.f32 %v2350, %v2299
      %v2356 = vsub.f32 %v2332, %v2352
      %v2357 = vsub.f32 %v2333, %v2353
      %v2358 = vsub.f32 %v2334, %v2354
      %v2359 = vsub.f32 %v2335, %v2355
      %v2360 = vmul.f32 %v2356, %v569
      %v2361 = vmul.f32 %v2357, %v569
      %v2362 = vmul.f32 %v2358, %v569
      %v2363 = vmul.f32 %v2359, %v569
      %v2364 = vadd.f32 %v2260, %v2360
      %v2365 = vadd.f32 %v2261, %v2361
      %v2366 = vadd.f32 %v2262, %v2362
      %v2367 = vadd.f32 %v2263, %v2363
      %v2368 = vmul.f32 %v2318, %v2301
      %v2369 = vmul.f32 %v2322, %v2303
      %v2370 = vmul.f32 %v2326, %v2305
      %v2371 = vmul.f32 %v2330, %v2307
      %v2372 = vmul.f32 %v2338, %v2309
      %v2373 = vmul.f32 %v2342, %v2311
      %v2374 = vmul.f32 %v2346, %v2313
      %v2375 = vmul.f32 %v2350, %v2315
      %v2376 = vadd.f32 %v2368, %v2372
      %v2377 = vadd.f32 %v2369, %v2373
      %v2378 = vadd.f32 %v2370, %v2374
      %v2379 = vadd.f32 %v2371, %v2375
      %v2380 = vmul.f32 %v2376, %v569
      %v2381 = vmul.f32 %v2377, %v569
      %v2382 = vmul.f32 %v2378, %v569
      %v2383 = vmul.f32 %v2379, %v569
      %v2384 = vadd.f32 %v2280, %v2380
      %v2385 = vadd.f32 %v2281, %v2381
      %v2386 = vadd.f32 %v2282, %v2382
      %v2387 = vadd.f32 %v2283, %v2383
      %2388 = vrot.lane.b32.xlu0 %v841, 14
      %v2389 = vpop.permute.xlu0 %2388
      %2390 = vrot.lane.b32.xlu0 %v845, 14
      %v2391 = vpop.permute.xlu0 %2390
      %2392 = vrot.lane.b32.xlu0 %v851, 14
      %v2393 = vpop.permute.xlu0 %2392
      %2394 = vrot.lane.b32.xlu0 %v855, 14
      %v2395 = vpop.permute.xlu0 %2394
      %2396 = vrot.lane.b32.xlu0 %v916, 14
      %v2397 = vpop.permute.xlu0 %2396
      %2398 = vrot.lane.b32.xlu0 %v920, 14
      %v2399 = vpop.permute.xlu0 %2398
      %2400 = vrot.lane.b32.xlu0 %v926, 14
      %v2401 = vpop.permute.xlu0 %2400
      %2402 = vrot.lane.b32.xlu0 %v930, 14
      %v2403 = vpop.permute.xlu0 %2402
      %2404 = vrot.lane.b32.xlu0 %v843, 14
      %v2405 = vpop.permute.xlu0 %2404
      %2406 = vrot.lane.b32.xlu0 %v847, 14
      %v2407 = vpop.permute.xlu0 %2406
      %2408 = vrot.lane.b32.xlu0 %v853, 14
      %v2409 = vpop.permute.xlu0 %2408
      %2410 = vrot.lane.b32.xlu0 %v857, 14
      %v2411 = vpop.permute.xlu0 %2410
      %2412 = vrot.lane.b32.xlu0 %v914, 14
      %v2413 = vpop.permute.xlu0 %2412
      %2414 = vrot.lane.b32.xlu0 %v918, 14
      %v2415 = vpop.permute.xlu0 %2414
      %2416 = vrot.lane.b32.xlu0 %v924, 14
      %v2417 = vpop.permute.xlu0 %2416
      %2418 = vrot.lane.b32.xlu0 %v928, 14
      %v2419 = vpop.permute.xlu0 %2418
      %2420 = vset.pattern.permute.xlu0 14
      %2421 = vperm.xlu0 %2420, %v932
      %v2422 = vpop.permute.xlu0 %2421
      %2424 = vset.pattern.permute.xlu0 14
      %2425 = vperm.xlu0 %2424, %v933
      %v2426 = vpop.permute.xlu0 %2425
      %2428 = vset.pattern.permute.xlu0 14
      %2429 = vperm.xlu0 %2428, %v934
      %v2430 = vpop.permute.xlu0 %2429
      %2432 = vset.pattern.permute.xlu0 14
      %2433 = vperm.xlu0 %2432, %v935
      %v2434 = vpop.permute.xlu0 %2433
      %v2436 = vmul.f32 %v2422, %v2389
      %v2437 = vmul.f32 %v2426, %v2391
      %v2438 = vmul.f32 %v2430, %v2393
      %v2439 = vmul.f32 %v2434, %v2395
      %2440 = vset.pattern.permute.xlu0 14
      %2441 = vperm.xlu0 %2440, %v936
      %v2442 = vpop.permute.xlu0 %2441
      %2444 = vset.pattern.permute.xlu0 14
      %2445 = vperm.xlu0 %2444, %v937
      %v2446 = vpop.permute.xlu0 %2445
      %2448 = vset.pattern.permute.xlu0 14
      %2449 = vperm.xlu0 %2448, %v938
      %v2450 = vpop.permute.xlu0 %2449
      %2452 = vset.pattern.permute.xlu0 14
      %2453 = vperm.xlu0 %2452, %v939
      %v2454 = vpop.permute.xlu0 %2453
      %v2456 = vmul.f32 %v2442, %v2397
      %v2457 = vmul.f32 %v2446, %v2399
      %v2458 = vmul.f32 %v2450, %v2401
      %v2459 = vmul.f32 %v2454, %v2403
      %v2460 = vsub.f32 %v2436, %v2456
      %v2461 = vsub.f32 %v2437, %v2457
      %v2462 = vsub.f32 %v2438, %v2458
      %v2463 = vsub.f32 %v2439, %v2459
      %v2464 = vmul.f32 %v2460, %v572
      %v2465 = vmul.f32 %v2461, %v572
      %v2466 = vmul.f32 %v2462, %v572
      %v2467 = vmul.f32 %v2463, %v572
      %v2468 = vadd.f32 %v2364, %v2464
      %v2469 = vadd.f32 %v2365, %v2465
      %v2470 = vadd.f32 %v2366, %v2466
      %v2471 = vadd.f32 %v2367, %v2467
      %v2472 = vmul.f32 %v2422, %v2405
      %v2473 = vmul.f32 %v2426, %v2407
      %v2474 = vmul.f32 %v2430, %v2409
      %v2475 = vmul.f32 %v2434, %v2411
      %v2476 = vmul.f32 %v2442, %v2413
      %v2477 = vmul.f32 %v2446, %v2415
      %v2478 = vmul.f32 %v2450, %v2417
      %v2479 = vmul.f32 %v2454, %v2419
      %v2480 = vadd.f32 %v2472, %v2476
      %v2481 = vadd.f32 %v2473, %v2477
      %v2482 = vadd.f32 %v2474, %v2478
      %v2483 = vadd.f32 %v2475, %v2479
      %v2484 = vmul.f32 %v2480, %v572
      %v2485 = vmul.f32 %v2481, %v572
      %v2486 = vmul.f32 %v2482, %v572
      %v2487 = vmul.f32 %v2483, %v572
      %v2488 = vadd.f32 %v2384, %v2484
      %v2489 = vadd.f32 %v2385, %v2485
      %v2490 = vadd.f32 %v2386, %v2486
      %v2491 = vadd.f32 %v2387, %v2487
      %2492 = vrot.lane.b32.xlu0 %v841, 15
      %v2493 = vpop.permute.xlu0 %2492
      %2494 = vrot.lane.b32.xlu0 %v845, 15
      %v2495 = vpop.permute.xlu0 %2494
      %2496 = vrot.lane.b32.xlu0 %v851, 15
      %v2497 = vpop.permute.xlu0 %2496
      %2498 = vrot.lane.b32.xlu0 %v855, 15
      %v2499 = vpop.permute.xlu0 %2498
      %2500 = vrot.lane.b32.xlu0 %v916, 15
      %v2501 = vpop.permute.xlu0 %2500
      %2502 = vrot.lane.b32.xlu0 %v920, 15
      %v2503 = vpop.permute.xlu0 %2502
      %2504 = vrot.lane.b32.xlu0 %v926, 15
      %v2505 = vpop.permute.xlu0 %2504
      %2506 = vrot.lane.b32.xlu0 %v930, 15
      %v2507 = vpop.permute.xlu0 %2506
      %2508 = vrot.lane.b32.xlu0 %v843, 15
      %v2509 = vpop.permute.xlu0 %2508
      %2510 = vrot.lane.b32.xlu0 %v847, 15
      %v2511 = vpop.permute.xlu0 %2510
      %2512 = vrot.lane.b32.xlu0 %v853, 15
      %v2513 = vpop.permute.xlu0 %2512
      %2514 = vrot.lane.b32.xlu0 %v857, 15
      %v2515 = vpop.permute.xlu0 %2514
      %2516 = vrot.lane.b32.xlu0 %v914, 15
      %v2517 = vpop.permute.xlu0 %2516
      %2518 = vrot.lane.b32.xlu0 %v918, 15
      %v2519 = vpop.permute.xlu0 %2518
      %2520 = vrot.lane.b32.xlu0 %v924, 15
      %v2521 = vpop.permute.xlu0 %2520
      %2522 = vrot.lane.b32.xlu0 %v928, 15
      %v2523 = vpop.permute.xlu0 %2522
      %2524 = vset.pattern.permute.xlu0 15
      %2525 = vperm.xlu0 %2524, %v932
      %v2526 = vpop.permute.xlu0 %2525
      %2528 = vset.pattern.permute.xlu0 15
      %2529 = vperm.xlu0 %2528, %v933
      %v2530 = vpop.permute.xlu0 %2529
      %2532 = vset.pattern.permute.xlu0 15
      %2533 = vperm.xlu0 %2532, %v934
      %v2534 = vpop.permute.xlu0 %2533
      %2536 = vset.pattern.permute.xlu0 15
      %2537 = vperm.xlu0 %2536, %v935
      %v2538 = vpop.permute.xlu0 %2537
      %v2540 = vmul.f32 %v2526, %v2493
      %v2541 = vmul.f32 %v2530, %v2495
      %v2542 = vmul.f32 %v2534, %v2497
      %v2543 = vmul.f32 %v2538, %v2499
      %2544 = vset.pattern.permute.xlu0 15
      %2545 = vperm.xlu0 %2544, %v936
      %v2546 = vpop.permute.xlu0 %2545
      %2548 = vset.pattern.permute.xlu0 15
      %2549 = vperm.xlu0 %2548, %v937
      %v2550 = vpop.permute.xlu0 %2549
      %2552 = vset.pattern.permute.xlu0 15
      %2553 = vperm.xlu0 %2552, %v938
      %v2554 = vpop.permute.xlu0 %2553
      %2556 = vset.pattern.permute.xlu0 15
      %2557 = vperm.xlu0 %2556, %v939
      %v2558 = vpop.permute.xlu0 %2557
      %v2560 = vmul.f32 %v2546, %v2501
      %v2561 = vmul.f32 %v2550, %v2503
      %v2562 = vmul.f32 %v2554, %v2505
      %v2563 = vmul.f32 %v2558, %v2507
      %v2564 = vsub.f32 %v2540, %v2560
      %v2565 = vsub.f32 %v2541, %v2561
      %v2566 = vsub.f32 %v2542, %v2562
      %v2567 = vsub.f32 %v2543, %v2563
      %v2568 = vmul.f32 %v2564, %v575
      %v2569 = vmul.f32 %v2565, %v575
      %v2570 = vmul.f32 %v2566, %v575
      %v2571 = vmul.f32 %v2567, %v575
      %v2572 = vadd.f32 %v2468, %v2568
      %v2573 = vadd.f32 %v2469, %v2569
      %v2574 = vadd.f32 %v2470, %v2570
      %v2575 = vadd.f32 %v2471, %v2571
      %v2576 = vmul.f32 %v2526, %v2509
      %v2577 = vmul.f32 %v2530, %v2511
      %v2578 = vmul.f32 %v2534, %v2513
      %v2579 = vmul.f32 %v2538, %v2515
      %v2580 = vmul.f32 %v2546, %v2517
      %v2581 = vmul.f32 %v2550, %v2519
      %v2582 = vmul.f32 %v2554, %v2521
      %v2583 = vmul.f32 %v2558, %v2523
      %v2584 = vadd.f32 %v2576, %v2580
      %v2585 = vadd.f32 %v2577, %v2581
      %v2586 = vadd.f32 %v2578, %v2582
      %v2587 = vadd.f32 %v2579, %v2583
      %v2588 = vmul.f32 %v2584, %v575
      %v2589 = vmul.f32 %v2585, %v575
      %v2590 = vmul.f32 %v2586, %v575
      %v2591 = vmul.f32 %v2587, %v575
      %v2592 = vadd.f32 %v2488, %v2588
      %v2593 = vadd.f32 %v2489, %v2589
      %v2594 = vadd.f32 %v2490, %v2590
      %v2595 = vadd.f32 %v2491, %v2591
      %2596 = vrot.lane.b32.xlu0 %v841, 16
      %v2597 = vpop.permute.xlu0 %2596
      %2598 = vrot.lane.b32.xlu0 %v845, 16
      %v2599 = vpop.permute.xlu0 %2598
      %2600 = vrot.lane.b32.xlu0 %v851, 16
      %v2601 = vpop.permute.xlu0 %2600
      %2602 = vrot.lane.b32.xlu0 %v855, 16
      %v2603 = vpop.permute.xlu0 %2602
      %2604 = vrot.lane.b32.xlu0 %v916, 16
      %v2605 = vpop.permute.xlu0 %2604
      %2606 = vrot.lane.b32.xlu0 %v920, 16
      %v2607 = vpop.permute.xlu0 %2606
      %2608 = vrot.lane.b32.xlu0 %v926, 16
      %v2609 = vpop.permute.xlu0 %2608
      %2610 = vrot.lane.b32.xlu0 %v930, 16
      %v2611 = vpop.permute.xlu0 %2610
      %2612 = vrot.lane.b32.xlu0 %v843, 16
      %v2613 = vpop.permute.xlu0 %2612
      %2614 = vrot.lane.b32.xlu0 %v847, 16
      %v2615 = vpop.permute.xlu0 %2614
      %2616 = vrot.lane.b32.xlu0 %v853, 16
      %v2617 = vpop.permute.xlu0 %2616
      %2618 = vrot.lane.b32.xlu0 %v857, 16
      %v2619 = vpop.permute.xlu0 %2618
      %2620 = vrot.lane.b32.xlu0 %v914, 16
      %v2621 = vpop.permute.xlu0 %2620
      %2622 = vrot.lane.b32.xlu0 %v918, 16
      %v2623 = vpop.permute.xlu0 %2622
      %2624 = vrot.lane.b32.xlu0 %v924, 16
      %v2625 = vpop.permute.xlu0 %2624
      %2626 = vrot.lane.b32.xlu0 %v928, 16
      %v2627 = vpop.permute.xlu0 %2626
      %2628 = vset.pattern.permute.xlu0 16
      %2629 = vperm.xlu0 %2628, %v932
      %v2630 = vpop.permute.xlu0 %2629
      %2632 = vset.pattern.permute.xlu0 16
      %2633 = vperm.xlu0 %2632, %v933
      %v2634 = vpop.permute.xlu0 %2633
      %2636 = vset.pattern.permute.xlu0 16
      %2637 = vperm.xlu0 %2636, %v934
      %v2638 = vpop.permute.xlu0 %2637
      %2640 = vset.pattern.permute.xlu0 16
      %2641 = vperm.xlu0 %2640, %v935
      %v2642 = vpop.permute.xlu0 %2641
      %v2644 = vmul.f32 %v2630, %v2597
      %v2645 = vmul.f32 %v2634, %v2599
      %v2646 = vmul.f32 %v2638, %v2601
      %v2647 = vmul.f32 %v2642, %v2603
      %2648 = vset.pattern.permute.xlu0 16
      %2649 = vperm.xlu0 %2648, %v936
      %v2650 = vpop.permute.xlu0 %2649
      %2652 = vset.pattern.permute.xlu0 16
      %2653 = vperm.xlu0 %2652, %v937
      %v2654 = vpop.permute.xlu0 %2653
      %2656 = vset.pattern.permute.xlu0 16
      %2657 = vperm.xlu0 %2656, %v938
      %v2658 = vpop.permute.xlu0 %2657
      %2660 = vset.pattern.permute.xlu0 16
      %2661 = vperm.xlu0 %2660, %v939
      %v2662 = vpop.permute.xlu0 %2661
      %v2664 = vmul.f32 %v2650, %v2605
      %v2665 = vmul.f32 %v2654, %v2607
      %v2666 = vmul.f32 %v2658, %v2609
      %v2667 = vmul.f32 %v2662, %v2611
      %v2668 = vsub.f32 %v2644, %v2664
      %v2669 = vsub.f32 %v2645, %v2665
      %v2670 = vsub.f32 %v2646, %v2666
      %v2671 = vsub.f32 %v2647, %v2667
      %v2672 = vmul.f32 %v2668, %v578
      %v2673 = vmul.f32 %v2669, %v578
      %v2674 = vmul.f32 %v2670, %v578
      %v2675 = vmul.f32 %v2671, %v578
      %v2676 = vadd.f32 %v2572, %v2672
      %v2677 = vadd.f32 %v2573, %v2673
      %v2678 = vadd.f32 %v2574, %v2674
      %v2679 = vadd.f32 %v2575, %v2675
      %v2680 = vmul.f32 %v2630, %v2613
      %v2681 = vmul.f32 %v2634, %v2615
      %v2682 = vmul.f32 %v2638, %v2617
      %v2683 = vmul.f32 %v2642, %v2619
      %v2684 = vmul.f32 %v2650, %v2621
      %v2685 = vmul.f32 %v2654, %v2623
      %v2686 = vmul.f32 %v2658, %v2625
      %v2687 = vmul.f32 %v2662, %v2627
      %v2688 = vadd.f32 %v2680, %v2684
      %v2689 = vadd.f32 %v2681, %v2685
      %v2690 = vadd.f32 %v2682, %v2686
      %v2691 = vadd.f32 %v2683, %v2687
      %v2692 = vmul.f32 %v2688, %v578
      %v2693 = vmul.f32 %v2689, %v578
      %v2694 = vmul.f32 %v2690, %v578
      %v2695 = vmul.f32 %v2691, %v578
      %v2696 = vadd.f32 %v2592, %v2692
      %v2697 = vadd.f32 %v2593, %v2693
      %v2698 = vadd.f32 %v2594, %v2694
      %v2699 = vadd.f32 %v2595, %v2695
      %2700 = vrot.lane.b32.xlu0 %v841, 17
      %v2701 = vpop.permute.xlu0 %2700
      %2702 = vrot.lane.b32.xlu0 %v845, 17
      %v2703 = vpop.permute.xlu0 %2702
      %2704 = vrot.lane.b32.xlu0 %v851, 17
      %v2705 = vpop.permute.xlu0 %2704
      %2706 = vrot.lane.b32.xlu0 %v855, 17
      %v2707 = vpop.permute.xlu0 %2706
      %2708 = vrot.lane.b32.xlu0 %v916, 17
      %v2709 = vpop.permute.xlu0 %2708
      %2710 = vrot.lane.b32.xlu0 %v920, 17
      %v2711 = vpop.permute.xlu0 %2710
      %2712 = vrot.lane.b32.xlu0 %v926, 17
      %v2713 = vpop.permute.xlu0 %2712
      %2714 = vrot.lane.b32.xlu0 %v930, 17
      %v2715 = vpop.permute.xlu0 %2714
      %2716 = vrot.lane.b32.xlu0 %v843, 17
      %v2717 = vpop.permute.xlu0 %2716
      %2718 = vrot.lane.b32.xlu0 %v847, 17
      %v2719 = vpop.permute.xlu0 %2718
      %2720 = vrot.lane.b32.xlu0 %v853, 17
      %v2721 = vpop.permute.xlu0 %2720
      %2722 = vrot.lane.b32.xlu0 %v857, 17
      %v2723 = vpop.permute.xlu0 %2722
      %2724 = vrot.lane.b32.xlu0 %v914, 17
      %v2725 = vpop.permute.xlu0 %2724
      %2726 = vrot.lane.b32.xlu0 %v918, 17
      %v2727 = vpop.permute.xlu0 %2726
      %2728 = vrot.lane.b32.xlu0 %v924, 17
      %v2729 = vpop.permute.xlu0 %2728
      %2730 = vrot.lane.b32.xlu0 %v928, 17
      %v2731 = vpop.permute.xlu0 %2730
      %2732 = vset.pattern.permute.xlu0 17
      %2733 = vperm.xlu0 %2732, %v932
      %v2734 = vpop.permute.xlu0 %2733
      %2736 = vset.pattern.permute.xlu0 17
      %2737 = vperm.xlu0 %2736, %v933
      %v2738 = vpop.permute.xlu0 %2737
      %2740 = vset.pattern.permute.xlu0 17
      %2741 = vperm.xlu0 %2740, %v934
      %v2742 = vpop.permute.xlu0 %2741
      %2744 = vset.pattern.permute.xlu0 17
      %2745 = vperm.xlu0 %2744, %v935
      %v2746 = vpop.permute.xlu0 %2745
      %v2748 = vmul.f32 %v2734, %v2701
      %v2749 = vmul.f32 %v2738, %v2703
      %v2750 = vmul.f32 %v2742, %v2705
      %v2751 = vmul.f32 %v2746, %v2707
      %2752 = vset.pattern.permute.xlu0 17
      %2753 = vperm.xlu0 %2752, %v936
      %v2754 = vpop.permute.xlu0 %2753
      %2756 = vset.pattern.permute.xlu0 17
      %2757 = vperm.xlu0 %2756, %v937
      %v2758 = vpop.permute.xlu0 %2757
      %2760 = vset.pattern.permute.xlu0 17
      %2761 = vperm.xlu0 %2760, %v938
      %v2762 = vpop.permute.xlu0 %2761
      %2764 = vset.pattern.permute.xlu0 17
      %2765 = vperm.xlu0 %2764, %v939
      %v2766 = vpop.permute.xlu0 %2765
      %v2768 = vmul.f32 %v2754, %v2709
      %v2769 = vmul.f32 %v2758, %v2711
      %v2770 = vmul.f32 %v2762, %v2713
      %v2771 = vmul.f32 %v2766, %v2715
      %v2772 = vsub.f32 %v2748, %v2768
      %v2773 = vsub.f32 %v2749, %v2769
      %v2774 = vsub.f32 %v2750, %v2770
      %v2775 = vsub.f32 %v2751, %v2771
      %v2776 = vmul.f32 %v2772, %v581
      %v2777 = vmul.f32 %v2773, %v581
      %v2778 = vmul.f32 %v2774, %v581
      %v2779 = vmul.f32 %v2775, %v581
      %v2780 = vadd.f32 %v2676, %v2776
      %v2781 = vadd.f32 %v2677, %v2777
      %v2782 = vadd.f32 %v2678, %v2778
      %v2783 = vadd.f32 %v2679, %v2779
      %v2784 = vmul.f32 %v2734, %v2717
      %v2785 = vmul.f32 %v2738, %v2719
      %v2786 = vmul.f32 %v2742, %v2721
      %v2787 = vmul.f32 %v2746, %v2723
      %v2788 = vmul.f32 %v2754, %v2725
      %v2789 = vmul.f32 %v2758, %v2727
      %v2790 = vmul.f32 %v2762, %v2729
      %v2791 = vmul.f32 %v2766, %v2731
      %v2792 = vadd.f32 %v2784, %v2788
      %v2793 = vadd.f32 %v2785, %v2789
      %v2794 = vadd.f32 %v2786, %v2790
      %v2795 = vadd.f32 %v2787, %v2791
      %v2796 = vmul.f32 %v2792, %v581
      %v2797 = vmul.f32 %v2793, %v581
      %v2798 = vmul.f32 %v2794, %v581
      %v2799 = vmul.f32 %v2795, %v581
      %v2800 = vadd.f32 %v2696, %v2796
      %v2801 = vadd.f32 %v2697, %v2797
      %v2802 = vadd.f32 %v2698, %v2798
      %v2803 = vadd.f32 %v2699, %v2799
      %2804 = vrot.lane.b32.xlu0 %v841, 18
      %v2805 = vpop.permute.xlu0 %2804
      %2806 = vrot.lane.b32.xlu0 %v845, 18
      %v2807 = vpop.permute.xlu0 %2806
      %2808 = vrot.lane.b32.xlu0 %v851, 18
      %v2809 = vpop.permute.xlu0 %2808
      %2810 = vrot.lane.b32.xlu0 %v855, 18
      %v2811 = vpop.permute.xlu0 %2810
      %2812 = vrot.lane.b32.xlu0 %v916, 18
      %v2813 = vpop.permute.xlu0 %2812
      %2814 = vrot.lane.b32.xlu0 %v920, 18
      %v2815 = vpop.permute.xlu0 %2814
      %2816 = vrot.lane.b32.xlu0 %v926, 18
      %v2817 = vpop.permute.xlu0 %2816
      %2818 = vrot.lane.b32.xlu0 %v930, 18
      %v2819 = vpop.permute.xlu0 %2818
      %2820 = vrot.lane.b32.xlu0 %v843, 18
      %v2821 = vpop.permute.xlu0 %2820
      %2822 = vrot.lane.b32.xlu0 %v847, 18
      %v2823 = vpop.permute.xlu0 %2822
      %2824 = vrot.lane.b32.xlu0 %v853, 18
      %v2825 = vpop.permute.xlu0 %2824
      %2826 = vrot.lane.b32.xlu0 %v857, 18
      %v2827 = vpop.permute.xlu0 %2826
      %2828 = vrot.lane.b32.xlu0 %v914, 18
      %v2829 = vpop.permute.xlu0 %2828
      %2830 = vrot.lane.b32.xlu0 %v918, 18
      %v2831 = vpop.permute.xlu0 %2830
      %2832 = vrot.lane.b32.xlu0 %v924, 18
      %v2833 = vpop.permute.xlu0 %2832
      %2834 = vrot.lane.b32.xlu0 %v928, 18
      %v2835 = vpop.permute.xlu0 %2834
      %2836 = vset.pattern.permute.xlu0 18
      %2837 = vperm.xlu0 %2836, %v932
      %v2838 = vpop.permute.xlu0 %2837
      %2840 = vset.pattern.permute.xlu0 18
      %2841 = vperm.xlu0 %2840, %v933
      %v2842 = vpop.permute.xlu0 %2841
      %2844 = vset.pattern.permute.xlu0 18
      %2845 = vperm.xlu0 %2844, %v934
      %v2846 = vpop.permute.xlu0 %2845
      %2848 = vset.pattern.permute.xlu0 18
      %2849 = vperm.xlu0 %2848, %v935
      %v2850 = vpop.permute.xlu0 %2849
      %v2852 = vmul.f32 %v2838, %v2805
      %v2853 = vmul.f32 %v2842, %v2807
      %v2854 = vmul.f32 %v2846, %v2809
      %v2855 = vmul.f32 %v2850, %v2811
      %2856 = vset.pattern.permute.xlu0 18
      %2857 = vperm.xlu0 %2856, %v936
      %v2858 = vpop.permute.xlu0 %2857
      %2860 = vset.pattern.permute.xlu0 18
      %2861 = vperm.xlu0 %2860, %v937
      %v2862 = vpop.permute.xlu0 %2861
      %2864 = vset.pattern.permute.xlu0 18
      %2865 = vperm.xlu0 %2864, %v938
      %v2866 = vpop.permute.xlu0 %2865
      %2868 = vset.pattern.permute.xlu0 18
      %2869 = vperm.xlu0 %2868, %v939
      %v2870 = vpop.permute.xlu0 %2869
      %v2872 = vmul.f32 %v2858, %v2813
      %v2873 = vmul.f32 %v2862, %v2815
      %v2874 = vmul.f32 %v2866, %v2817
      %v2875 = vmul.f32 %v2870, %v2819
      %v2876 = vsub.f32 %v2852, %v2872
      %v2877 = vsub.f32 %v2853, %v2873
      %v2878 = vsub.f32 %v2854, %v2874
      %v2879 = vsub.f32 %v2855, %v2875
      %v2880 = vmul.f32 %v2876, %v584
      %v2881 = vmul.f32 %v2877, %v584
      %v2882 = vmul.f32 %v2878, %v584
      %v2883 = vmul.f32 %v2879, %v584
      %v2884 = vadd.f32 %v2780, %v2880
      %v2885 = vadd.f32 %v2781, %v2881
      %v2886 = vadd.f32 %v2782, %v2882
      %v2887 = vadd.f32 %v2783, %v2883
      %v2888 = vmul.f32 %v2838, %v2821
      %v2889 = vmul.f32 %v2842, %v2823
      %v2890 = vmul.f32 %v2846, %v2825
      %v2891 = vmul.f32 %v2850, %v2827
      %v2892 = vmul.f32 %v2858, %v2829
      %v2893 = vmul.f32 %v2862, %v2831
      %v2894 = vmul.f32 %v2866, %v2833
      %v2895 = vmul.f32 %v2870, %v2835
      %v2896 = vadd.f32 %v2888, %v2892
      %v2897 = vadd.f32 %v2889, %v2893
      %v2898 = vadd.f32 %v2890, %v2894
      %v2899 = vadd.f32 %v2891, %v2895
      %v2900 = vmul.f32 %v2896, %v584
      %v2901 = vmul.f32 %v2897, %v584
      %v2902 = vmul.f32 %v2898, %v584
      %v2903 = vmul.f32 %v2899, %v584
      %v2904 = vadd.f32 %v2800, %v2900
      %v2905 = vadd.f32 %v2801, %v2901
      %v2906 = vadd.f32 %v2802, %v2902
      %v2907 = vadd.f32 %v2803, %v2903
      %2908 = vrot.lane.b32.xlu0 %v841, 19
      %v2909 = vpop.permute.xlu0 %2908
      %2910 = vrot.lane.b32.xlu0 %v845, 19
      %v2911 = vpop.permute.xlu0 %2910
      %2912 = vrot.lane.b32.xlu0 %v851, 19
      %v2913 = vpop.permute.xlu0 %2912
      %2914 = vrot.lane.b32.xlu0 %v855, 19
      %v2915 = vpop.permute.xlu0 %2914
      %2916 = vrot.lane.b32.xlu0 %v916, 19
      %v2917 = vpop.permute.xlu0 %2916
      %2918 = vrot.lane.b32.xlu0 %v920, 19
      %v2919 = vpop.permute.xlu0 %2918
      %2920 = vrot.lane.b32.xlu0 %v926, 19
      %v2921 = vpop.permute.xlu0 %2920
      %2922 = vrot.lane.b32.xlu0 %v930, 19
      %v2923 = vpop.permute.xlu0 %2922
      %2924 = vrot.lane.b32.xlu0 %v843, 19
      %v2925 = vpop.permute.xlu0 %2924
      %2926 = vrot.lane.b32.xlu0 %v847, 19
      %v2927 = vpop.permute.xlu0 %2926
      %2928 = vrot.lane.b32.xlu0 %v853, 19
      %v2929 = vpop.permute.xlu0 %2928
      %2930 = vrot.lane.b32.xlu0 %v857, 19
      %v2931 = vpop.permute.xlu0 %2930
      %2932 = vrot.lane.b32.xlu0 %v914, 19
      %v2933 = vpop.permute.xlu0 %2932
      %2934 = vrot.lane.b32.xlu0 %v918, 19
      %v2935 = vpop.permute.xlu0 %2934
      %2936 = vrot.lane.b32.xlu0 %v924, 19
      %v2937 = vpop.permute.xlu0 %2936
      %2938 = vrot.lane.b32.xlu0 %v928, 19
      %v2939 = vpop.permute.xlu0 %2938
      %2940 = vset.pattern.permute.xlu0 19
      %2941 = vperm.xlu0 %2940, %v932
      %v2942 = vpop.permute.xlu0 %2941
      %2944 = vset.pattern.permute.xlu0 19
      %2945 = vperm.xlu0 %2944, %v933
      %v2946 = vpop.permute.xlu0 %2945
      %2948 = vset.pattern.permute.xlu0 19
      %2949 = vperm.xlu0 %2948, %v934
      %v2950 = vpop.permute.xlu0 %2949
      %2952 = vset.pattern.permute.xlu0 19
      %2953 = vperm.xlu0 %2952, %v935
      %v2954 = vpop.permute.xlu0 %2953
      %v2956 = vmul.f32 %v2942, %v2909
      %v2957 = vmul.f32 %v2946, %v2911
      %v2958 = vmul.f32 %v2950, %v2913
      %v2959 = vmul.f32 %v2954, %v2915
      %2960 = vset.pattern.permute.xlu0 19
      %2961 = vperm.xlu0 %2960, %v936
      %v2962 = vpop.permute.xlu0 %2961
      %2964 = vset.pattern.permute.xlu0 19
      %2965 = vperm.xlu0 %2964, %v937
      %v2966 = vpop.permute.xlu0 %2965
      %2968 = vset.pattern.permute.xlu0 19
      %2969 = vperm.xlu0 %2968, %v938
      %v2970 = vpop.permute.xlu0 %2969
      %2972 = vset.pattern.permute.xlu0 19
      %2973 = vperm.xlu0 %2972, %v939
      %v2974 = vpop.permute.xlu0 %2973
      %v2976 = vmul.f32 %v2962, %v2917
      %v2977 = vmul.f32 %v2966, %v2919
      %v2978 = vmul.f32 %v2970, %v2921
      %v2979 = vmul.f32 %v2974, %v2923
      %v2980 = vsub.f32 %v2956, %v2976
      %v2981 = vsub.f32 %v2957, %v2977
      %v2982 = vsub.f32 %v2958, %v2978
      %v2983 = vsub.f32 %v2959, %v2979
      %v2984 = vmul.f32 %v2980, %v587
      %v2985 = vmul.f32 %v2981, %v587
      %v2986 = vmul.f32 %v2982, %v587
      %v2987 = vmul.f32 %v2983, %v587
      %v2988 = vadd.f32 %v2884, %v2984
      %v2989 = vadd.f32 %v2885, %v2985
      %v2990 = vadd.f32 %v2886, %v2986
      %v2991 = vadd.f32 %v2887, %v2987
      %v2992 = vmul.f32 %v2942, %v2925
      %v2993 = vmul.f32 %v2946, %v2927
      %v2994 = vmul.f32 %v2950, %v2929
      %v2995 = vmul.f32 %v2954, %v2931
      %v2996 = vmul.f32 %v2962, %v2933
      %v2997 = vmul.f32 %v2966, %v2935
      %v2998 = vmul.f32 %v2970, %v2937
      %v2999 = vmul.f32 %v2974, %v2939
      %v3000 = vadd.f32 %v2992, %v2996
      %v3001 = vadd.f32 %v2993, %v2997
      %v3002 = vadd.f32 %v2994, %v2998
      %v3003 = vadd.f32 %v2995, %v2999
      %v3004 = vmul.f32 %v3000, %v587
      %v3005 = vmul.f32 %v3001, %v587
      %v3006 = vmul.f32 %v3002, %v587
      %v3007 = vmul.f32 %v3003, %v587
      %v3008 = vadd.f32 %v2904, %v3004
      %v3009 = vadd.f32 %v2905, %v3005
      %v3010 = vadd.f32 %v2906, %v3006
      %v3011 = vadd.f32 %v2907, %v3007
      %v3012 = vpack.c.bf16 %v2989, %v2988
      %v3013 = vpack.c.bf16 %v3009, %v3008
      %v3014 = vpack.c.bf16 %v2991, %v2990
      %v3015 = vpack.c.bf16 %v3011, %v3010
      %v3016 = vld [vmem:[%s8] sm:$0xf]
      %v3017 = vld [vmem:[%s8 + $0x4] sm:$0xf]
      %v3018 = vld [vmem:[%s8 + $0x8] sm:$0xf]
      %v3019 = vld [vmem:[%s8 + $0xc] sm:$0xf]
      %v3020 = vld [vmem:[%s8 + $0x10] sm:$0xf]
      %v3021 = vld [vmem:[%s8 + $0x14] sm:$0xf]
      %v3022 = vld [vmem:[%s8 + $0x18] sm:$0xf]
      %v3023 = vld [vmem:[%s8 + $0x1c] sm:$0xf]
      %v3024 = vld [vmem:[%s9] sm:$0xff]
      %v3025 = vld [vmem:[%s9 + $0x8] sm:$0xff]
      %v3026 = vld [vmem:[%s9 + $0x10] sm:$0xff]
      %v3027 = vld [vmem:[%s9 + $0x18] sm:$0xff]
      %v3028 = vld [vmem:[%s9 + $0x20] sm:$0xff]
      %v3029 = vld [vmem:[%s9 + $0x28] sm:$0xff]
      %v3030 = vld [vmem:[%s9 + $0x30] sm:$0xff]
      %v3031 = vld [vmem:[%s9 + $0x38] sm:$0xff]
      %3033 = vset.pattern.permute.xlu0 0
      %3034 = vperm.xlu0 %3033, %v3024
      %v3035 = vpop.permute.xlu0 %3034
      %3038 = vset.pattern.permute.xlu0 0
      %3039 = vperm.xlu0 %3038, %v3025
      %v3040 = vpop.permute.xlu0 %3039
      %3043 = vset.pattern.permute.xlu0 0
      %3044 = vperm.xlu0 %3043, %v3026
      %v3045 = vpop.permute.xlu0 %3044
      %3048 = vset.pattern.permute.xlu0 0
      %3049 = vperm.xlu0 %3048, %v3027
      %v3050 = vpop.permute.xlu0 %3049
      %3053 = vset.pattern.permute.xlu0 0
      %3054 = vperm.xlu0 %3053, %v3028
      %v3055 = vpop.permute.xlu0 %3054
      %3058 = vset.pattern.permute.xlu0 0
      %3059 = vperm.xlu0 %3058, %v3029
      %v3060 = vpop.permute.xlu0 %3059
      %3063 = vset.pattern.permute.xlu0 0
      %3064 = vperm.xlu0 %3063, %v3030
      %v3065 = vpop.permute.xlu0 %3064
      %3068 = vset.pattern.permute.xlu0 0
      %3069 = vperm.xlu0 %3068, %v3031
      %v3070 = vpop.permute.xlu0 %3069
      %v3080 = vunpack.c.l.b16 %v3016
      %v3081 = vunpack.c.l.b16 %v3017
      %v3082 = vunpack.c.l.b16 %v3018
      %v3083 = vunpack.c.l.b16 %v3019
      %v3084 = vunpack.c.l.b16 %v3020
      %v3085 = vunpack.c.l.b16 %v3021
      %v3086 = vunpack.c.l.b16 %v3022
      %v3087 = vunpack.c.l.b16 %v3023
      %v3088 = vpack.c.b16 %v3081, %v3080
      %v3089 = vpack.c.b16 %v3083, %v3082
      %v3090 = vpack.c.b16 %v3085, %v3084
      %v3091 = vpack.c.b16 %v3087, %v3086
      %v3093 = vsel %vm676, %v3088, 0
      %v3096 = vsel %vm676, %v3089, 0
      %v3099 = vsel %vm676, %v3090, 0
      %v3102 = vsel %vm676, %v3091, 0
      %3104 = vmatprep.subr.bf16.mxu0 0
      %3105 = vmatpush1.bf16.msra.mxu0 0
      %3106 = vmatprep.subr.bf16.mxu0 0
      %3107 = vmatpush1.bf16.msra.mxu0 0
      %3108 = vmatprep.subr.bf16.mxu0 0
      %3109 = vmatpush1.bf16.msra.mxu0 0
      %3110 = vmatprep.subr.bf16.mxu0 0
      %3111 = vmatpush1.bf16.msra.mxu0 0
      %3112 = vmatprep.subr.bf16.mxu0 0
      %3113 = vmatpush1.bf16.msra.mxu0 0
      %3114 = vmatprep.subr.bf16.mxu0 0
      %3115 = vmatpush1.bf16.msra.mxu0 0
      %3116 = vmatprep.subr.bf16.mxu0 %v3015
      %3117 = vmatpush1.bf16.msra.mxu0 %v3014
      %3118 = vmatprep.subr.bf16.mxu0 %v3013
      %3119 = vmatpush1.bf16.msra.mxu0 %v3012
      %3120 = vmatprep.subr.bf16.mxu0 0
      %3121 = vmatpush2.bf16.msra.mxu0 0
      %3122 = vmatprep.subr.bf16.mxu0 0
      %3123 = vmatpush2.bf16.msra.mxu0 0
      %3124 = vmatprep.subr.bf16.mxu0 0
      %3125 = vmatpush2.bf16.msra.mxu0 0
      %3126 = vmatprep.subr.bf16.mxu0 0
      %3127 = vmatpush2.bf16.msra.mxu0 0
      %3128 = vmatprep.subr.bf16.mxu0 0
      %3129 = vmatpush2.bf16.msra.mxu0 0
      %3130 = vmatprep.subr.bf16.mxu0 0
      %3131 = vmatpush2.bf16.msra.mxu0 0
      %3132 = vmatprep.subr.bf16.mxu0 0
      %3133 = vmatpush2.bf16.msra.mxu0 0
      %3134 = vmatprep.subr.bf16.mxu0 0
      %3135 = vmatpush2.bf16.msra.mxu0 0
      %3136 = vmatprep.mubr.bf16.mxu0 0
      %3137 = vmatmul.mubr.bf16.gmra.mxu0 %v3093
      %v3138 = vpop.f32.mrf.mxu0
      %v3139 = vadd.f32 %v3035, %v3138
      %v3140 = vpop.f32.mrf.mxu0
      %v3141 = vadd.f32 %v3035, %v3140
      %v3142 = vpop.f32.mrf.mxu0
      %v3143 = vadd.f32 %v3040, %v3142
      %v3144 = vpop.f32.mrf.mxu0
      %v3145 = vadd.f32 %v3040, %v3144
      %3146 = vmatprep.mubr.bf16.mxu0 0
      %3147 = vmatmul.mubr.bf16.gmra.mxu0 %v3096
      %v3148 = vpop.f32.mrf.mxu0
      %v3149 = vadd.f32 %v3045, %v3148
      %v3150 = vpop.f32.mrf.mxu0
      %v3151 = vadd.f32 %v3045, %v3150
      %v3152 = vpop.f32.mrf.mxu0
      %v3153 = vadd.f32 %v3050, %v3152
      %v3154 = vpop.f32.mrf.mxu0
      %v3155 = vadd.f32 %v3050, %v3154
      %3156 = vmatprep.mubr.bf16.mxu0 0
      %3157 = vmatmul.mubr.bf16.gmra.mxu0 %v3099
      %v3158 = vpop.f32.mrf.mxu0
      %v3159 = vadd.f32 %v3055, %v3158
      %v3160 = vpop.f32.mrf.mxu0
      %v3161 = vadd.f32 %v3055, %v3160
      %v3162 = vpop.f32.mrf.mxu0
      %v3163 = vadd.f32 %v3060, %v3162
      %v3164 = vpop.f32.mrf.mxu0
      %v3165 = vadd.f32 %v3060, %v3164
      %3166 = vmatprep.mubr.bf16.mxu0 0
      %3167 = vmatmul.mubr.bf16.gmra.mxu0 %v3102
      %v3168 = vpop.f32.mrf.mxu0
      %v3169 = vadd.f32 %v3065, %v3168
      %v3170 = vpop.f32.mrf.mxu0
      %v3171 = vadd.f32 %v3065, %v3170
      %v3172 = vpop.f32.mrf.mxu0
      %v3173 = vadd.f32 %v3070, %v3172
      %v3174 = vpop.f32.mrf.mxu0
      %v3175 = vadd.f32 %v3070, %v3174
      %3176 = vdwg.mxu0
      %v3177 = vmax.f32 %v3139, 0.0
      %v3178 = vmax.f32 %v3141, 0.0
      %v3179 = vmax.f32 %v3143, 0.0
      %v3180 = vmax.f32 %v3145, 0.0
      %v3181 = vmax.f32 %v3149, 0.0
      %v3182 = vmax.f32 %v3151, 0.0
      %v3183 = vmax.f32 %v3153, 0.0
      %v3184 = vmax.f32 %v3155, 0.0
      %v3185 = vmax.f32 %v3159, 0.0
      %v3186 = vmax.f32 %v3161, 0.0
      %v3187 = vmax.f32 %v3163, 0.0
      %v3188 = vmax.f32 %v3165, 0.0
      %v3189 = vmax.f32 %v3169, 0.0
      %v3190 = vmax.f32 %v3171, 0.0
      %v3191 = vmax.f32 %v3173, 0.0
      %v3192 = vmax.f32 %v3175, 0.0
      %v3193 = vpack.c.bf16 %v3179, %v3177
      %v3194 = vpack.c.bf16 %v3180, %v3178
      %v3195 = vpack.c.bf16 %v3183, %v3181
      %v3196 = vpack.c.bf16 %v3184, %v3182
      %v3197 = vpack.c.bf16 %v3187, %v3185
      %v3198 = vpack.c.bf16 %v3188, %v3186
      %v3199 = vpack.c.bf16 %v3191, %v3189
      %v3200 = vpack.c.bf16 %v3192, %v3190
      %v3201 = vld [vmem:[%s10] sm:$0xf]
      %v3202 = vld [vmem:[%s10 + $0x4] sm:$0xf]
      %v3203 = vld [vmem:[%s10 + $0x8] sm:$0xf]
      %v3204 = vld [vmem:[%s10 + $0xc] sm:$0xf]
      %v3209 = vunpack.c.l.b16 %v3201
      %v3210 = vunpack.c.l.b16 %v3202
      %v3211 = vunpack.c.l.b16 %v3203
      %v3212 = vunpack.c.l.b16 %v3204
      %v3213 = vpack.c.b16 %v3210, %v3209
      %v3214 = vpack.c.b16 %v3212, %v3211
      %v3216 = vsel %vm676, %v3213, 0
      %v3219 = vsel %vm676, %v3214, 0
      %3221 = vmatprep.subr.bf16.mxu0 0
      %3222 = vmatpush1.bf16.msra.mxu0 0
      %3223 = vmatprep.subr.bf16.mxu0 0
      %3224 = vmatpush1.bf16.msra.mxu0 0
      %3225 = vmatprep.subr.bf16.mxu0 0
      %3226 = vmatpush1.bf16.msra.mxu0 0
      %3227 = vmatprep.subr.bf16.mxu0 0
      %3228 = vmatpush1.bf16.msra.mxu0 0
      %3229 = vmatprep.subr.bf16.mxu0 0
      %3230 = vmatpush1.bf16.msra.mxu0 0
      %3231 = vmatprep.subr.bf16.mxu0 0
      %3232 = vmatpush1.bf16.msra.mxu0 0
      %3233 = vmatprep.subr.bf16.mxu0 %v3196
      %3234 = vmatpush1.bf16.msra.mxu0 %v3195
      %3235 = vmatprep.subr.bf16.mxu0 %v3194
      %3236 = vmatpush1.bf16.msra.mxu0 %v3193
      %3237 = vmatprep.subr.bf16.mxu0 0
      %3238 = vmatpush2.bf16.msra.mxu0 0
      %3239 = vmatprep.subr.bf16.mxu0 0
      %3240 = vmatpush2.bf16.msra.mxu0 0
      %3241 = vmatprep.subr.bf16.mxu0 0
      %3242 = vmatpush2.bf16.msra.mxu0 0
      %3243 = vmatprep.subr.bf16.mxu0 0
      %3244 = vmatpush2.bf16.msra.mxu0 0
      %3245 = vmatprep.subr.bf16.mxu0 0
      %3246 = vmatpush2.bf16.msra.mxu0 0
      %3247 = vmatprep.subr.bf16.mxu0 0
      %3248 = vmatpush2.bf16.msra.mxu0 0
      %3249 = vmatprep.subr.bf16.mxu0 0
      %3250 = vmatpush2.bf16.msra.mxu0 0
      %3251 = vmatprep.subr.bf16.mxu0 0
      %3252 = vmatpush2.bf16.msra.mxu0 0
      %3253 = vmatprep.mubr.bf16.mxu0 0
      %3254 = vmatmul.mubr.bf16.gmra.mxu0 %v3216
      %v3255 = vpop.f32.mrf.mxu0
      %v3256 = vadd.f32 0.0, %v3255
      %v3257 = vpop.f32.mrf.mxu0
      %v3258 = vadd.f32 0.0, %v3257
      %v3259 = vpop.f32.mrf.mxu0
      %v3260 = vadd.f32 0.0, %v3259
      %v3261 = vpop.f32.mrf.mxu0
      %v3262 = vadd.f32 0.0, %v3261
      %3263 = vmatprep.mubr.bf16.mxu0 0
      %3264 = vmatmul.mubr.bf16.gmra.mxu0 %v3219
      %v3265 = vpop.f32.mrf.mxu0
      %v3266 = vadd.f32 0.0, %v3265
      %v3267 = vpop.f32.mrf.mxu0
      %v3268 = vadd.f32 0.0, %v3267
      %v3269 = vpop.f32.mrf.mxu0
      %v3270 = vadd.f32 0.0, %v3269
      %v3271 = vpop.f32.mrf.mxu0
      %v3272 = vadd.f32 0.0, %v3271
      %3273 = vdwg.mxu0
      %v3274 = vld [vmem:[%s11] sm:$0xf]
      %v3275 = vld [vmem:[%s11 + $0x4] sm:$0xf]
      %v3276 = vld [vmem:[%s11 + $0x8] sm:$0xf]
      %v3277 = vld [vmem:[%s11 + $0xc] sm:$0xf]
      %v3282 = vunpack.c.l.b16 %v3274
      %v3283 = vunpack.c.l.b16 %v3275
      %v3284 = vunpack.c.l.b16 %v3276
      %v3285 = vunpack.c.l.b16 %v3277
      %v3286 = vpack.c.b16 %v3283, %v3282
      %v3287 = vpack.c.b16 %v3285, %v3284
      %v3289 = vsel %vm676, %v3286, 0
      %v3292 = vsel %vm676, %v3287, 0
      %3294 = vmatprep.subr.bf16.mxu0 0
      %3295 = vmatpush1.bf16.msra.mxu0 0
      %3296 = vmatprep.subr.bf16.mxu0 0
      %3297 = vmatpush1.bf16.msra.mxu0 0
      %3298 = vmatprep.subr.bf16.mxu0 0
      %3299 = vmatpush1.bf16.msra.mxu0 0
      %3300 = vmatprep.subr.bf16.mxu0 0
      %3301 = vmatpush1.bf16.msra.mxu0 0
      %3302 = vmatprep.subr.bf16.mxu0 0
      %3303 = vmatpush1.bf16.msra.mxu0 0
      %3304 = vmatprep.subr.bf16.mxu0 0
      %3305 = vmatpush1.bf16.msra.mxu0 0
      %3306 = vmatprep.subr.bf16.mxu0 %v3200
      %3307 = vmatpush1.bf16.msra.mxu0 %v3199
      %3308 = vmatprep.subr.bf16.mxu0 %v3198
      %3309 = vmatpush1.bf16.msra.mxu0 %v3197
      %3310 = vmatprep.subr.bf16.mxu0 0
      %3311 = vmatpush2.bf16.msra.mxu0 0
      %3312 = vmatprep.subr.bf16.mxu0 0
      %3313 = vmatpush2.bf16.msra.mxu0 0
      %3314 = vmatprep.subr.bf16.mxu0 0
      %3315 = vmatpush2.bf16.msra.mxu0 0
      %3316 = vmatprep.subr.bf16.mxu0 0
      %3317 = vmatpush2.bf16.msra.mxu0 0
      %3318 = vmatprep.subr.bf16.mxu0 0
      %3319 = vmatpush2.bf16.msra.mxu0 0
      %3320 = vmatprep.subr.bf16.mxu0 0
      %3321 = vmatpush2.bf16.msra.mxu0 0
      %3322 = vmatprep.subr.bf16.mxu0 0
      %3323 = vmatpush2.bf16.msra.mxu0 0
      %3324 = vmatprep.subr.bf16.mxu0 0
      %3325 = vmatpush2.bf16.msra.mxu0 0
      %3326 = vmatprep.mubr.bf16.mxu0 0
      %3327 = vmatmul.mubr.bf16.gmra.mxu0 %v3289
      %v3328 = vpop.f32.mrf.mxu0
      %v3329 = vadd.f32 0.0, %v3328
      %v3330 = vpop.f32.mrf.mxu0
      %v3331 = vadd.f32 0.0, %v3330
      %v3332 = vpop.f32.mrf.mxu0
      %v3333 = vadd.f32 0.0, %v3332
      %v3334 = vpop.f32.mrf.mxu0
      %v3335 = vadd.f32 0.0, %v3334
      %3336 = vmatprep.mubr.bf16.mxu0 0
      %3337 = vmatmul.mubr.bf16.gmra.mxu0 %v3292
      %v3338 = vpop.f32.mrf.mxu0
      %v3339 = vadd.f32 0.0, %v3338
      %v3340 = vpop.f32.mrf.mxu0
      %v3341 = vadd.f32 0.0, %v3340
      %v3342 = vpop.f32.mrf.mxu0
      %v3343 = vadd.f32 0.0, %v3342
      %v3344 = vpop.f32.mrf.mxu0
      %v3345 = vadd.f32 0.0, %v3344
      %3346 = vdwg.mxu0
      %v3347 = vld [vmem:[%s12] sm:$0xff]
      %v3348 = vld [vmem:[%s12 + $0x8] sm:$0xff]
      %v3349 = vld [vmem:[%s12 + $0x10] sm:$0xff]
      %v3350 = vld [vmem:[%s12 + $0x18] sm:$0xff]
      %v3351 = vld [vmem:[%s13] sm:$0xff]
      %v3352 = vld [vmem:[%s13 + $0x8] sm:$0xff]
      %v3353 = vld [vmem:[%s13 + $0x10] sm:$0xff]
      %v3354 = vld [vmem:[%s13 + $0x18] sm:$0xff]
      %v3355 = vadd.f32 %v3347, 1.0
      %v3356 = vadd.f32 %v3348, 1.0
      %v3357 = vadd.f32 %v3349, 1.0
      %v3358 = vadd.f32 %v3350, 1.0
      %v3359 = vadd.f32 %v3351, 1.0
      %v3360 = vadd.f32 %v3352, 1.0
      %v3361 = vadd.f32 %v3353, 1.0
      %v3362 = vadd.f32 %v3354, 1.0
      %v3363 = vsub.f32 %v2988, %v3008
      %v3364 = vsub.f32 %v2989, %v3009
      %v3365 = vsub.f32 %v2990, %v3010
      %v3366 = vsub.f32 %v2991, %v3011
      %3368 = vset.pattern.permute.xlu0 0
      %3369 = vperm.xlu0 %3368, %v3355
      %v3370 = vpop.permute.xlu0 %3369
      %3373 = vset.pattern.permute.xlu0 0
      %3374 = vperm.xlu0 %3373, %v3356
      %v3375 = vpop.permute.xlu0 %3374
      %3378 = vset.pattern.permute.xlu0 0
      %3379 = vperm.xlu0 %3378, %v3357
      %v3380 = vpop.permute.xlu0 %3379
      %3383 = vset.pattern.permute.xlu0 0
      %3384 = vperm.xlu0 %3383, %v3358
      %v3385 = vpop.permute.xlu0 %3384
      %v3387 = vmul.f32 %v3256, %v3370
      %v3388 = vmul.f32 %v3260, %v3375
      %v3389 = vmul.f32 %v3266, %v3380
      %v3390 = vmul.f32 %v3270, %v3385
      %v3391 = vadd.f32 %v3363, %v3387
      %v3392 = vadd.f32 %v3364, %v3388
      %v3393 = vadd.f32 %v3365, %v3389
      %v3394 = vadd.f32 %v3366, %v3390
      %3396 = vset.pattern.permute.xlu0 0
      %3397 = vperm.xlu0 %3396, %v3359
      %v3398 = vpop.permute.xlu0 %3397
      %3401 = vset.pattern.permute.xlu0 0
      %3402 = vperm.xlu0 %3401, %v3360
      %v3403 = vpop.permute.xlu0 %3402
      %3406 = vset.pattern.permute.xlu0 0
      %3407 = vperm.xlu0 %3406, %v3361
      %v3408 = vpop.permute.xlu0 %3407
      %3411 = vset.pattern.permute.xlu0 0
      %3412 = vperm.xlu0 %3411, %v3362
      %v3413 = vpop.permute.xlu0 %3412
      %v3415 = vmul.f32 %v3331, %v3398
      %v3416 = vmul.f32 %v3335, %v3403
      %v3417 = vmul.f32 %v3341, %v3408
      %v3418 = vmul.f32 %v3345, %v3413
      %v3419 = vsub.f32 %v3391, %v3415
      %v3420 = vsub.f32 %v3392, %v3416
      %v3421 = vsub.f32 %v3393, %v3417
      %v3422 = vsub.f32 %v3394, %v3418
      %v3423 = vadd.f32 %v2988, %v3008
      %v3424 = vadd.f32 %v2989, %v3009
      %v3425 = vadd.f32 %v2990, %v3010
      %v3426 = vadd.f32 %v2991, %v3011
      %v3427 = vmul.f32 %v3258, %v3370
      %v3428 = vmul.f32 %v3262, %v3375
      %v3429 = vmul.f32 %v3268, %v3380
      %v3430 = vmul.f32 %v3272, %v3385
      %v3431 = vadd.f32 %v3423, %v3427
      %v3432 = vadd.f32 %v3424, %v3428
      %v3433 = vadd.f32 %v3425, %v3429
      %v3434 = vadd.f32 %v3426, %v3430
      %v3435 = vmul.f32 %v3329, %v3398
      %v3436 = vmul.f32 %v3333, %v3403
      %v3437 = vmul.f32 %v3339, %v3408
      %v3438 = vmul.f32 %v3343, %v3413
      %v3439 = vadd.f32 %v3431, %v3435
      %v3440 = vadd.f32 %v3432, %v3436
      %v3441 = vadd.f32 %v3433, %v3437
      %v3442 = vadd.f32 %v3434, %v3438
      %3443 = vrot.lane.b32.xlu0 %v3256, 1
      %v3444 = vpop.permute.xlu0 %3443
      %3445 = vrot.lane.b32.xlu0 %v3260, 1
      %v3446 = vpop.permute.xlu0 %3445
      %3447 = vrot.lane.b32.xlu0 %v3266, 1
      %v3448 = vpop.permute.xlu0 %3447
      %3449 = vrot.lane.b32.xlu0 %v3270, 1
      %v3450 = vpop.permute.xlu0 %3449
      %3451 = vrot.lane.b32.xlu0 %v3331, 1
      %v3452 = vpop.permute.xlu0 %3451
      %3453 = vrot.lane.b32.xlu0 %v3335, 1
      %v3454 = vpop.permute.xlu0 %3453
      %3455 = vrot.lane.b32.xlu0 %v3341, 1
      %v3456 = vpop.permute.xlu0 %3455
      %3457 = vrot.lane.b32.xlu0 %v3345, 1
      %v3458 = vpop.permute.xlu0 %3457
      %3459 = vrot.lane.b32.xlu0 %v3258, 1
      %v3460 = vpop.permute.xlu0 %3459
      %3461 = vrot.lane.b32.xlu0 %v3262, 1
      %v3462 = vpop.permute.xlu0 %3461
      %3463 = vrot.lane.b32.xlu0 %v3268, 1
      %v3464 = vpop.permute.xlu0 %3463
      %3465 = vrot.lane.b32.xlu0 %v3272, 1
      %v3466 = vpop.permute.xlu0 %3465
      %3467 = vrot.lane.b32.xlu0 %v3329, 1
      %v3468 = vpop.permute.xlu0 %3467
      %3469 = vrot.lane.b32.xlu0 %v3333, 1
      %v3470 = vpop.permute.xlu0 %3469
      %3471 = vrot.lane.b32.xlu0 %v3339, 1
      %v3472 = vpop.permute.xlu0 %3471
      %3473 = vrot.lane.b32.xlu0 %v3343, 1
      %v3474 = vpop.permute.xlu0 %3473
      %3476 = vset.pattern.permute.xlu0 1
      %3477 = vperm.xlu0 %3476, %v3347
      %v3478 = vpop.permute.xlu0 %3477
      %3481 = vset.pattern.permute.xlu0 1
      %3482 = vperm.xlu0 %3481, %v3348
      %v3483 = vpop.permute.xlu0 %3482
      %3486 = vset.pattern.permute.xlu0 1
      %3487 = vperm.xlu0 %3486, %v3349
      %v3488 = vpop.permute.xlu0 %3487
      %3491 = vset.pattern.permute.xlu0 1
      %3492 = vperm.xlu0 %3491, %v3350
      %v3493 = vpop.permute.xlu0 %3492
      %v3495 = vmul.f32 %v3478, %v3444
      %v3496 = vmul.f32 %v3483, %v3446
      %v3497 = vmul.f32 %v3488, %v3448
      %v3498 = vmul.f32 %v3493, %v3450
      %3500 = vset.pattern.permute.xlu0 1
      %3501 = vperm.xlu0 %3500, %v3351
      %v3502 = vpop.permute.xlu0 %3501
      %3505 = vset.pattern.permute.xlu0 1
      %3506 = vperm.xlu0 %3505, %v3352
      %v3507 = vpop.permute.xlu0 %3506
      %3510 = vset.pattern.permute.xlu0 1
      %3511 = vperm.xlu0 %3510, %v3353
      %v3512 = vpop.permute.xlu0 %3511
      %3515 = vset.pattern.permute.xlu0 1
      %3516 = vperm.xlu0 %3515, %v3354
      %v3517 = vpop.permute.xlu0 %3516
      %v3519 = vmul.f32 %v3502, %v3452
      %v3520 = vmul.f32 %v3507, %v3454
      %v3521 = vmul.f32 %v3512, %v3456
      %v3522 = vmul.f32 %v3517, %v3458
      %v3523 = vsub.f32 %v3495, %v3519
      %v3524 = vsub.f32 %v3496, %v3520
      %v3525 = vsub.f32 %v3497, %v3521
      %v3526 = vsub.f32 %v3498, %v3522
      %v3527 = vmul.f32 %v3523, %v533
      %v3528 = vmul.f32 %v3524, %v533
      %v3529 = vmul.f32 %v3525, %v533
      %v3530 = vmul.f32 %v3526, %v533
      %v3531 = vadd.f32 %v3419, %v3527
      %v3532 = vadd.f32 %v3420, %v3528
      %v3533 = vadd.f32 %v3421, %v3529
      %v3534 = vadd.f32 %v3422, %v3530
      %v3535 = vmul.f32 %v3478, %v3460
      %v3536 = vmul.f32 %v3483, %v3462
      %v3537 = vmul.f32 %v3488, %v3464
      %v3538 = vmul.f32 %v3493, %v3466
      %v3539 = vmul.f32 %v3502, %v3468
      %v3540 = vmul.f32 %v3507, %v3470
      %v3541 = vmul.f32 %v3512, %v3472
      %v3542 = vmul.f32 %v3517, %v3474
      %v3543 = vadd.f32 %v3535, %v3539
      %v3544 = vadd.f32 %v3536, %v3540
      %v3545 = vadd.f32 %v3537, %v3541
      %v3546 = vadd.f32 %v3538, %v3542
      %v3547 = vmul.f32 %v3543, %v533
      %v3548 = vmul.f32 %v3544, %v533
      %v3549 = vmul.f32 %v3545, %v533
      %v3550 = vmul.f32 %v3546, %v533
      %v3551 = vadd.f32 %v3439, %v3547
      %v3552 = vadd.f32 %v3440, %v3548
      %v3553 = vadd.f32 %v3441, %v3549
      %v3554 = vadd.f32 %v3442, %v3550
      %3555 = vrot.lane.b32.xlu0 %v3256, 2
      %v3556 = vpop.permute.xlu0 %3555
      %3557 = vrot.lane.b32.xlu0 %v3260, 2
      %v3558 = vpop.permute.xlu0 %3557
      %3559 = vrot.lane.b32.xlu0 %v3266, 2
      %v3560 = vpop.permute.xlu0 %3559
      %3561 = vrot.lane.b32.xlu0 %v3270, 2
      %v3562 = vpop.permute.xlu0 %3561
      %3563 = vrot.lane.b32.xlu0 %v3331, 2
      %v3564 = vpop.permute.xlu0 %3563
      %3565 = vrot.lane.b32.xlu0 %v3335, 2
      %v3566 = vpop.permute.xlu0 %3565
      %3567 = vrot.lane.b32.xlu0 %v3341, 2
      %v3568 = vpop.permute.xlu0 %3567
      %3569 = vrot.lane.b32.xlu0 %v3345, 2
      %v3570 = vpop.permute.xlu0 %3569
      %3571 = vrot.lane.b32.xlu0 %v3258, 2
      %v3572 = vpop.permute.xlu0 %3571
      %3573 = vrot.lane.b32.xlu0 %v3262, 2
      %v3574 = vpop.permute.xlu0 %3573
      %3575 = vrot.lane.b32.xlu0 %v3268, 2
      %v3576 = vpop.permute.xlu0 %3575
      %3577 = vrot.lane.b32.xlu0 %v3272, 2
      %v3578 = vpop.permute.xlu0 %3577
      %3579 = vrot.lane.b32.xlu0 %v3329, 2
      %v3580 = vpop.permute.xlu0 %3579
      %3581 = vrot.lane.b32.xlu0 %v3333, 2
      %v3582 = vpop.permute.xlu0 %3581
      %3583 = vrot.lane.b32.xlu0 %v3339, 2
      %v3584 = vpop.permute.xlu0 %3583
      %3585 = vrot.lane.b32.xlu0 %v3343, 2
      %v3586 = vpop.permute.xlu0 %3585
      %3587 = vset.pattern.permute.xlu0 2
      %3588 = vperm.xlu0 %3587, %v3347
      %v3589 = vpop.permute.xlu0 %3588
      %3591 = vset.pattern.permute.xlu0 2
      %3592 = vperm.xlu0 %3591, %v3348
      %v3593 = vpop.permute.xlu0 %3592
      %3595 = vset.pattern.permute.xlu0 2
      %3596 = vperm.xlu0 %3595, %v3349
      %v3597 = vpop.permute.xlu0 %3596
      %3599 = vset.pattern.permute.xlu0 2
      %3600 = vperm.xlu0 %3599, %v3350
      %v3601 = vpop.permute.xlu0 %3600
      %v3603 = vmul.f32 %v3589, %v3556
      %v3604 = vmul.f32 %v3593, %v3558
      %v3605 = vmul.f32 %v3597, %v3560
      %v3606 = vmul.f32 %v3601, %v3562
      %3607 = vset.pattern.permute.xlu0 2
      %3608 = vperm.xlu0 %3607, %v3351
      %v3609 = vpop.permute.xlu0 %3608
      %3611 = vset.pattern.permute.xlu0 2
      %3612 = vperm.xlu0 %3611, %v3352
      %v3613 = vpop.permute.xlu0 %3612
      %3615 = vset.pattern.permute.xlu0 2
      %3616 = vperm.xlu0 %3615, %v3353
      %v3617 = vpop.permute.xlu0 %3616
      %3619 = vset.pattern.permute.xlu0 2
      %3620 = vperm.xlu0 %3619, %v3354
      %v3621 = vpop.permute.xlu0 %3620
      %v3623 = vmul.f32 %v3609, %v3564
      %v3624 = vmul.f32 %v3613, %v3566
      %v3625 = vmul.f32 %v3617, %v3568
      %v3626 = vmul.f32 %v3621, %v3570
      %v3627 = vsub.f32 %v3603, %v3623
      %v3628 = vsub.f32 %v3604, %v3624
      %v3629 = vsub.f32 %v3605, %v3625
      %v3630 = vsub.f32 %v3606, %v3626
      %v3631 = vmul.f32 %v3627, %v536
      %v3632 = vmul.f32 %v3628, %v536
      %v3633 = vmul.f32 %v3629, %v536
      %v3634 = vmul.f32 %v3630, %v536
      %v3635 = vadd.f32 %v3531, %v3631
      %v3636 = vadd.f32 %v3532, %v3632
      %v3637 = vadd.f32 %v3533, %v3633
      %v3638 = vadd.f32 %v3534, %v3634
      %v3639 = vmul.f32 %v3589, %v3572
      %v3640 = vmul.f32 %v3593, %v3574
      %v3641 = vmul.f32 %v3597, %v3576
      %v3642 = vmul.f32 %v3601, %v3578
      %v3643 = vmul.f32 %v3609, %v3580
      %v3644 = vmul.f32 %v3613, %v3582
      %v3645 = vmul.f32 %v3617, %v3584
      %v3646 = vmul.f32 %v3621, %v3586
      %v3647 = vadd.f32 %v3639, %v3643
      %v3648 = vadd.f32 %v3640, %v3644
      %v3649 = vadd.f32 %v3641, %v3645
      %v3650 = vadd.f32 %v3642, %v3646
      %v3651 = vmul.f32 %v3647, %v536
      %v3652 = vmul.f32 %v3648, %v536
      %v3653 = vmul.f32 %v3649, %v536
      %v3654 = vmul.f32 %v3650, %v536
      %v3655 = vadd.f32 %v3551, %v3651
      %v3656 = vadd.f32 %v3552, %v3652
      %v3657 = vadd.f32 %v3553, %v3653
      %v3658 = vadd.f32 %v3554, %v3654
      %3659 = vrot.lane.b32.xlu0 %v3256, 3
      %v3660 = vpop.permute.xlu0 %3659
      %3661 = vrot.lane.b32.xlu0 %v3260, 3
      %v3662 = vpop.permute.xlu0 %3661
      %3663 = vrot.lane.b32.xlu0 %v3266, 3
      %v3664 = vpop.permute.xlu0 %3663
      %3665 = vrot.lane.b32.xlu0 %v3270, 3
      %v3666 = vpop.permute.xlu0 %3665
      %3667 = vrot.lane.b32.xlu0 %v3331, 3
      %v3668 = vpop.permute.xlu0 %3667
      %3669 = vrot.lane.b32.xlu0 %v3335, 3
      %v3670 = vpop.permute.xlu0 %3669
      %3671 = vrot.lane.b32.xlu0 %v3341, 3
      %v3672 = vpop.permute.xlu0 %3671
      %3673 = vrot.lane.b32.xlu0 %v3345, 3
      %v3674 = vpop.permute.xlu0 %3673
      %3675 = vrot.lane.b32.xlu0 %v3258, 3
      %v3676 = vpop.permute.xlu0 %3675
      %3677 = vrot.lane.b32.xlu0 %v3262, 3
      %v3678 = vpop.permute.xlu0 %3677
      %3679 = vrot.lane.b32.xlu0 %v3268, 3
      %v3680 = vpop.permute.xlu0 %3679
      %3681 = vrot.lane.b32.xlu0 %v3272, 3
      %v3682 = vpop.permute.xlu0 %3681
      %3683 = vrot.lane.b32.xlu0 %v3329, 3
      %v3684 = vpop.permute.xlu0 %3683
      %3685 = vrot.lane.b32.xlu0 %v3333, 3
      %v3686 = vpop.permute.xlu0 %3685
      %3687 = vrot.lane.b32.xlu0 %v3339, 3
      %v3688 = vpop.permute.xlu0 %3687
      %3689 = vrot.lane.b32.xlu0 %v3343, 3
      %v3690 = vpop.permute.xlu0 %3689
      %3691 = vset.pattern.permute.xlu0 3
      %3692 = vperm.xlu0 %3691, %v3347
      %v3693 = vpop.permute.xlu0 %3692
      %3695 = vset.pattern.permute.xlu0 3
      %3696 = vperm.xlu0 %3695, %v3348
      %v3697 = vpop.permute.xlu0 %3696
      %3699 = vset.pattern.permute.xlu0 3
      %3700 = vperm.xlu0 %3699, %v3349
      %v3701 = vpop.permute.xlu0 %3700
      %3703 = vset.pattern.permute.xlu0 3
      %3704 = vperm.xlu0 %3703, %v3350
      %v3705 = vpop.permute.xlu0 %3704
      %v3707 = vmul.f32 %v3693, %v3660
      %v3708 = vmul.f32 %v3697, %v3662
      %v3709 = vmul.f32 %v3701, %v3664
      %v3710 = vmul.f32 %v3705, %v3666
      %3711 = vset.pattern.permute.xlu0 3
      %3712 = vperm.xlu0 %3711, %v3351
      %v3713 = vpop.permute.xlu0 %3712
      %3715 = vset.pattern.permute.xlu0 3
      %3716 = vperm.xlu0 %3715, %v3352
      %v3717 = vpop.permute.xlu0 %3716
      %3719 = vset.pattern.permute.xlu0 3
      %3720 = vperm.xlu0 %3719, %v3353
      %v3721 = vpop.permute.xlu0 %3720
      %3723 = vset.pattern.permute.xlu0 3
      %3724 = vperm.xlu0 %3723, %v3354
      %v3725 = vpop.permute.xlu0 %3724
      %v3727 = vmul.f32 %v3713, %v3668
      %v3728 = vmul.f32 %v3717, %v3670
      %v3729 = vmul.f32 %v3721, %v3672
      %v3730 = vmul.f32 %v3725, %v3674
      %v3731 = vsub.f32 %v3707, %v3727
      %v3732 = vsub.f32 %v3708, %v3728
      %v3733 = vsub.f32 %v3709, %v3729
      %v3734 = vsub.f32 %v3710, %v3730
      %v3735 = vmul.f32 %v3731, %v539
      %v3736 = vmul.f32 %v3732, %v539
      %v3737 = vmul.f32 %v3733, %v539
      %v3738 = vmul.f32 %v3734, %v539
      %v3739 = vadd.f32 %v3635, %v3735
      %v3740 = vadd.f32 %v3636, %v3736
      %v3741 = vadd.f32 %v3637, %v3737
      %v3742 = vadd.f32 %v3638, %v3738
      %v3743 = vmul.f32 %v3693, %v3676
      %v3744 = vmul.f32 %v3697, %v3678
      %v3745 = vmul.f32 %v3701, %v3680
      %v3746 = vmul.f32 %v3705, %v3682
      %v3747 = vmul.f32 %v3713, %v3684
      %v3748 = vmul.f32 %v3717, %v3686
      %v3749 = vmul.f32 %v3721, %v3688
      %v3750 = vmul.f32 %v3725, %v3690
      %v3751 = vadd.f32 %v3743, %v3747
      %v3752 = vadd.f32 %v3744, %v3748
      %v3753 = vadd.f32 %v3745, %v3749
      %v3754 = vadd.f32 %v3746, %v3750
      %v3755 = vmul.f32 %v3751, %v539
      %v3756 = vmul.f32 %v3752, %v539
      %v3757 = vmul.f32 %v3753, %v539
      %v3758 = vmul.f32 %v3754, %v539
      %v3759 = vadd.f32 %v3655, %v3755
      %v3760 = vadd.f32 %v3656, %v3756
      %v3761 = vadd.f32 %v3657, %v3757
      %v3762 = vadd.f32 %v3658, %v3758
      %3763 = vrot.lane.b32.xlu0 %v3256, 4
      %v3764 = vpop.permute.xlu0 %3763
      %3765 = vrot.lane.b32.xlu0 %v3260, 4
      %v3766 = vpop.permute.xlu0 %3765
      %3767 = vrot.lane.b32.xlu0 %v3266, 4
      %v3768 = vpop.permute.xlu0 %3767
      %3769 = vrot.lane.b32.xlu0 %v3270, 4
      %v3770 = vpop.permute.xlu0 %3769
      %3771 = vrot.lane.b32.xlu0 %v3331, 4
      %v3772 = vpop.permute.xlu0 %3771
      %3773 = vrot.lane.b32.xlu0 %v3335, 4
      %v3774 = vpop.permute.xlu0 %3773
      %3775 = vrot.lane.b32.xlu0 %v3341, 4
      %v3776 = vpop.permute.xlu0 %3775
      %3777 = vrot.lane.b32.xlu0 %v3345, 4
      %v3778 = vpop.permute.xlu0 %3777
      %3779 = vrot.lane.b32.xlu0 %v3258, 4
      %v3780 = vpop.permute.xlu0 %3779
      %3781 = vrot.lane.b32.xlu0 %v3262, 4
      %v3782 = vpop.permute.xlu0 %3781
      %3783 = vrot.lane.b32.xlu0 %v3268, 4
      %v3784 = vpop.permute.xlu0 %3783
      %3785 = vrot.lane.b32.xlu0 %v3272, 4
      %v3786 = vpop.permute.xlu0 %3785
      %3787 = vrot.lane.b32.xlu0 %v3329, 4
      %v3788 = vpop.permute.xlu0 %3787
      %3789 = vrot.lane.b32.xlu0 %v3333, 4
      %v3790 = vpop.permute.xlu0 %3789
      %3791 = vrot.lane.b32.xlu0 %v3339, 4
      %v3792 = vpop.permute.xlu0 %3791
      %3793 = vrot.lane.b32.xlu0 %v3343, 4
      %v3794 = vpop.permute.xlu0 %3793
      %3795 = vset.pattern.permute.xlu0 4
      %3796 = vperm.xlu0 %3795, %v3347
      %v3797 = vpop.permute.xlu0 %3796
      %3799 = vset.pattern.permute.xlu0 4
      %3800 = vperm.xlu0 %3799, %v3348
      %v3801 = vpop.permute.xlu0 %3800
      %3803 = vset.pattern.permute.xlu0 4
      %3804 = vperm.xlu0 %3803, %v3349
      %v3805 = vpop.permute.xlu0 %3804
      %3807 = vset.pattern.permute.xlu0 4
      %3808 = vperm.xlu0 %3807, %v3350
      %v3809 = vpop.permute.xlu0 %3808
      %v3811 = vmul.f32 %v3797, %v3764
      %v3812 = vmul.f32 %v3801, %v3766
      %v3813 = vmul.f32 %v3805, %v3768
      %v3814 = vmul.f32 %v3809, %v3770
      %3815 = vset.pattern.permute.xlu0 4
      %3816 = vperm.xlu0 %3815, %v3351
      %v3817 = vpop.permute.xlu0 %3816
      %3819 = vset.pattern.permute.xlu0 4
      %3820 = vperm.xlu0 %3819, %v3352
      %v3821 = vpop.permute.xlu0 %3820
      %3823 = vset.pattern.permute.xlu0 4
      %3824 = vperm.xlu0 %3823, %v3353
      %v3825 = vpop.permute.xlu0 %3824
      %3827 = vset.pattern.permute.xlu0 4
      %3828 = vperm.xlu0 %3827, %v3354
      %v3829 = vpop.permute.xlu0 %3828
      %v3831 = vmul.f32 %v3817, %v3772
      %v3832 = vmul.f32 %v3821, %v3774
      %v3833 = vmul.f32 %v3825, %v3776
      %v3834 = vmul.f32 %v3829, %v3778
      %v3835 = vsub.f32 %v3811, %v3831
      %v3836 = vsub.f32 %v3812, %v3832
      %v3837 = vsub.f32 %v3813, %v3833
      %v3838 = vsub.f32 %v3814, %v3834
      %v3839 = vmul.f32 %v3835, %v542
      %v3840 = vmul.f32 %v3836, %v542
      %v3841 = vmul.f32 %v3837, %v542
      %v3842 = vmul.f32 %v3838, %v542
      %v3843 = vadd.f32 %v3739, %v3839
      %v3844 = vadd.f32 %v3740, %v3840
      %v3845 = vadd.f32 %v3741, %v3841
      %v3846 = vadd.f32 %v3742, %v3842
      %v3847 = vmul.f32 %v3797, %v3780
      %v3848 = vmul.f32 %v3801, %v3782
      %v3849 = vmul.f32 %v3805, %v3784
      %v3850 = vmul.f32 %v3809, %v3786
      %v3851 = vmul.f32 %v3817, %v3788
      %v3852 = vmul.f32 %v3821, %v3790
      %v3853 = vmul.f32 %v3825, %v3792
      %v3854 = vmul.f32 %v3829, %v3794
      %v3855 = vadd.f32 %v3847, %v3851
      %v3856 = vadd.f32 %v3848, %v3852
      %v3857 = vadd.f32 %v3849, %v3853
      %v3858 = vadd.f32 %v3850, %v3854
      %v3859 = vmul.f32 %v3855, %v542
      %v3860 = vmul.f32 %v3856, %v542
      %v3861 = vmul.f32 %v3857, %v542
      %v3862 = vmul.f32 %v3858, %v542
      %v3863 = vadd.f32 %v3759, %v3859
      %v3864 = vadd.f32 %v3760, %v3860
      %v3865 = vadd.f32 %v3761, %v3861
      %v3866 = vadd.f32 %v3762, %v3862
      %3867 = vrot.lane.b32.xlu0 %v3256, 5
      %v3868 = vpop.permute.xlu0 %3867
      %3869 = vrot.lane.b32.xlu0 %v3260, 5
      %v3870 = vpop.permute.xlu0 %3869
      %3871 = vrot.lane.b32.xlu0 %v3266, 5
      %v3872 = vpop.permute.xlu0 %3871
      %3873 = vrot.lane.b32.xlu0 %v3270, 5
      %v3874 = vpop.permute.xlu0 %3873
      %3875 = vrot.lane.b32.xlu0 %v3331, 5
      %v3876 = vpop.permute.xlu0 %3875
      %3877 = vrot.lane.b32.xlu0 %v3335, 5
      %v3878 = vpop.permute.xlu0 %3877
      %3879 = vrot.lane.b32.xlu0 %v3341, 5
      %v3880 = vpop.permute.xlu0 %3879
      %3881 = vrot.lane.b32.xlu0 %v3345, 5
      %v3882 = vpop.permute.xlu0 %3881
      %3883 = vrot.lane.b32.xlu0 %v3258, 5
      %v3884 = vpop.permute.xlu0 %3883
      %3885 = vrot.lane.b32.xlu0 %v3262, 5
      %v3886 = vpop.permute.xlu0 %3885
      %3887 = vrot.lane.b32.xlu0 %v3268, 5
      %v3888 = vpop.permute.xlu0 %3887
      %3889 = vrot.lane.b32.xlu0 %v3272, 5
      %v3890 = vpop.permute.xlu0 %3889
      %3891 = vrot.lane.b32.xlu0 %v3329, 5
      %v3892 = vpop.permute.xlu0 %3891
      %3893 = vrot.lane.b32.xlu0 %v3333, 5
      %v3894 = vpop.permute.xlu0 %3893
      %3895 = vrot.lane.b32.xlu0 %v3339, 5
      %v3896 = vpop.permute.xlu0 %3895
      %3897 = vrot.lane.b32.xlu0 %v3343, 5
      %v3898 = vpop.permute.xlu0 %3897
      %3899 = vset.pattern.permute.xlu0 5
      %3900 = vperm.xlu0 %3899, %v3347
      %v3901 = vpop.permute.xlu0 %3900
      %3903 = vset.pattern.permute.xlu0 5
      %3904 = vperm.xlu0 %3903, %v3348
      %v3905 = vpop.permute.xlu0 %3904
      %3907 = vset.pattern.permute.xlu0 5
      %3908 = vperm.xlu0 %3907, %v3349
      %v3909 = vpop.permute.xlu0 %3908
      %3911 = vset.pattern.permute.xlu0 5
      %3912 = vperm.xlu0 %3911, %v3350
      %v3913 = vpop.permute.xlu0 %3912
      %v3915 = vmul.f32 %v3901, %v3868
      %v3916 = vmul.f32 %v3905, %v3870
      %v3917 = vmul.f32 %v3909, %v3872
      %v3918 = vmul.f32 %v3913, %v3874
      %3919 = vset.pattern.permute.xlu0 5
      %3920 = vperm.xlu0 %3919, %v3351
      %v3921 = vpop.permute.xlu0 %3920
      %3923 = vset.pattern.permute.xlu0 5
      %3924 = vperm.xlu0 %3923, %v3352
      %v3925 = vpop.permute.xlu0 %3924
      %3927 = vset.pattern.permute.xlu0 5
      %3928 = vperm.xlu0 %3927, %v3353
      %v3929 = vpop.permute.xlu0 %3928
      %3931 = vset.pattern.permute.xlu0 5
      %3932 = vperm.xlu0 %3931, %v3354
      %v3933 = vpop.permute.xlu0 %3932
      %v3935 = vmul.f32 %v3921, %v3876
      %v3936 = vmul.f32 %v3925, %v3878
      %v3937 = vmul.f32 %v3929, %v3880
      %v3938 = vmul.f32 %v3933, %v3882
      %v3939 = vsub.f32 %v3915, %v3935
      %v3940 = vsub.f32 %v3916, %v3936
      %v3941 = vsub.f32 %v3917, %v3937
      %v3942 = vsub.f32 %v3918, %v3938
      %v3943 = vmul.f32 %v3939, %v545
      %v3944 = vmul.f32 %v3940, %v545
      %v3945 = vmul.f32 %v3941, %v545
      %v3946 = vmul.f32 %v3942, %v545
      %v3947 = vadd.f32 %v3843, %v3943
      %v3948 = vadd.f32 %v3844, %v3944
      %v3949 = vadd.f32 %v3845, %v3945
      %v3950 = vadd.f32 %v3846, %v3946
      %v3951 = vmul.f32 %v3901, %v3884
      %v3952 = vmul.f32 %v3905, %v3886
      %v3953 = vmul.f32 %v3909, %v3888
      %v3954 = vmul.f32 %v3913, %v3890
      %v3955 = vmul.f32 %v3921, %v3892
      %v3956 = vmul.f32 %v3925, %v3894
      %v3957 = vmul.f32 %v3929, %v3896
      %v3958 = vmul.f32 %v3933, %v3898
      %v3959 = vadd.f32 %v3951, %v3955
      %v3960 = vadd.f32 %v3952, %v3956
      %v3961 = vadd.f32 %v3953, %v3957
      %v3962 = vadd.f32 %v3954, %v3958
      %v3963 = vmul.f32 %v3959, %v545
      %v3964 = vmul.f32 %v3960, %v545
      %v3965 = vmul.f32 %v3961, %v545
      %v3966 = vmul.f32 %v3962, %v545
      %v3967 = vadd.f32 %v3863, %v3963
      %v3968 = vadd.f32 %v3864, %v3964
      %v3969 = vadd.f32 %v3865, %v3965
      %v3970 = vadd.f32 %v3866, %v3966
      %3971 = vrot.lane.b32.xlu0 %v3256, 6
      %v3972 = vpop.permute.xlu0 %3971
      %3973 = vrot.lane.b32.xlu0 %v3260, 6
      %v3974 = vpop.permute.xlu0 %3973
      %3975 = vrot.lane.b32.xlu0 %v3266, 6
      %v3976 = vpop.permute.xlu0 %3975
      %3977 = vrot.lane.b32.xlu0 %v3270, 6
      %v3978 = vpop.permute.xlu0 %3977
      %3979 = vrot.lane.b32.xlu0 %v3331, 6
      %v3980 = vpop.permute.xlu0 %3979
      %3981 = vrot.lane.b32.xlu0 %v3335, 6
      %v3982 = vpop.permute.xlu0 %3981
      %3983 = vrot.lane.b32.xlu0 %v3341, 6
      %v3984 = vpop.permute.xlu0 %3983
      %3985 = vrot.lane.b32.xlu0 %v3345, 6
      %v3986 = vpop.permute.xlu0 %3985
      %3987 = vrot.lane.b32.xlu0 %v3258, 6
      %v3988 = vpop.permute.xlu0 %3987
      %3989 = vrot.lane.b32.xlu0 %v3262, 6
      %v3990 = vpop.permute.xlu0 %3989
      %3991 = vrot.lane.b32.xlu0 %v3268, 6
      %v3992 = vpop.permute.xlu0 %3991
      %3993 = vrot.lane.b32.xlu0 %v3272, 6
      %v3994 = vpop.permute.xlu0 %3993
      %3995 = vrot.lane.b32.xlu0 %v3329, 6
      %v3996 = vpop.permute.xlu0 %3995
      %3997 = vrot.lane.b32.xlu0 %v3333, 6
      %v3998 = vpop.permute.xlu0 %3997
      %3999 = vrot.lane.b32.xlu0 %v3339, 6
      %v4000 = vpop.permute.xlu0 %3999
      %4001 = vrot.lane.b32.xlu0 %v3343, 6
      %v4002 = vpop.permute.xlu0 %4001
      %4003 = vset.pattern.permute.xlu0 6
      %4004 = vperm.xlu0 %4003, %v3347
      %v4005 = vpop.permute.xlu0 %4004
      %4007 = vset.pattern.permute.xlu0 6
      %4008 = vperm.xlu0 %4007, %v3348
      %v4009 = vpop.permute.xlu0 %4008
      %4011 = vset.pattern.permute.xlu0 6
      %4012 = vperm.xlu0 %4011, %v3349
      %v4013 = vpop.permute.xlu0 %4012
      %4015 = vset.pattern.permute.xlu0 6
      %4016 = vperm.xlu0 %4015, %v3350
      %v4017 = vpop.permute.xlu0 %4016
      %v4019 = vmul.f32 %v4005, %v3972
      %v4020 = vmul.f32 %v4009, %v3974
      %v4021 = vmul.f32 %v4013, %v3976
      %v4022 = vmul.f32 %v4017, %v3978
      %4023 = vset.pattern.permute.xlu0 6
      %4024 = vperm.xlu0 %4023, %v3351
      %v4025 = vpop.permute.xlu0 %4024
      %4027 = vset.pattern.permute.xlu0 6
      %4028 = vperm.xlu0 %4027, %v3352
      %v4029 = vpop.permute.xlu0 %4028
      %4031 = vset.pattern.permute.xlu0 6
      %4032 = vperm.xlu0 %4031, %v3353
      %v4033 = vpop.permute.xlu0 %4032
      %4035 = vset.pattern.permute.xlu0 6
      %4036 = vperm.xlu0 %4035, %v3354
      %v4037 = vpop.permute.xlu0 %4036
      %v4039 = vmul.f32 %v4025, %v3980
      %v4040 = vmul.f32 %v4029, %v3982
      %v4041 = vmul.f32 %v4033, %v3984
      %v4042 = vmul.f32 %v4037, %v3986
      %v4043 = vsub.f32 %v4019, %v4039
      %v4044 = vsub.f32 %v4020, %v4040
      %v4045 = vsub.f32 %v4021, %v4041
      %v4046 = vsub.f32 %v4022, %v4042
      %v4047 = vmul.f32 %v4043, %v548
      %v4048 = vmul.f32 %v4044, %v548
      %v4049 = vmul.f32 %v4045, %v548
      %v4050 = vmul.f32 %v4046, %v548
      %v4051 = vadd.f32 %v3947, %v4047
      %v4052 = vadd.f32 %v3948, %v4048
      %v4053 = vadd.f32 %v3949, %v4049
      %v4054 = vadd.f32 %v3950, %v4050
      %v4055 = vmul.f32 %v4005, %v3988
      %v4056 = vmul.f32 %v4009, %v3990
      %v4057 = vmul.f32 %v4013, %v3992
      %v4058 = vmul.f32 %v4017, %v3994
      %v4059 = vmul.f32 %v4025, %v3996
      %v4060 = vmul.f32 %v4029, %v3998
      %v4061 = vmul.f32 %v4033, %v4000
      %v4062 = vmul.f32 %v4037, %v4002
      %v4063 = vadd.f32 %v4055, %v4059
      %v4064 = vadd.f32 %v4056, %v4060
      %v4065 = vadd.f32 %v4057, %v4061
      %v4066 = vadd.f32 %v4058, %v4062
      %v4067 = vmul.f32 %v4063, %v548
      %v4068 = vmul.f32 %v4064, %v548
      %v4069 = vmul.f32 %v4065, %v548
      %v4070 = vmul.f32 %v4066, %v548
      %v4071 = vadd.f32 %v3967, %v4067
      %v4072 = vadd.f32 %v3968, %v4068
      %v4073 = vadd.f32 %v3969, %v4069
      %v4074 = vadd.f32 %v3970, %v4070
      %4075 = vrot.lane.b32.xlu0 %v3256, 7
      %v4076 = vpop.permute.xlu0 %4075
      %4077 = vrot.lane.b32.xlu0 %v3260, 7
      %v4078 = vpop.permute.xlu0 %4077
      %4079 = vrot.lane.b32.xlu0 %v3266, 7
      %v4080 = vpop.permute.xlu0 %4079
      %4081 = vrot.lane.b32.xlu0 %v3270, 7
      %v4082 = vpop.permute.xlu0 %4081
      %4083 = vrot.lane.b32.xlu0 %v3331, 7
      %v4084 = vpop.permute.xlu0 %4083
      %4085 = vrot.lane.b32.xlu0 %v3335, 7
      %v4086 = vpop.permute.xlu0 %4085
      %4087 = vrot.lane.b32.xlu0 %v3341, 7
      %v4088 = vpop.permute.xlu0 %4087
      %4089 = vrot.lane.b32.xlu0 %v3345, 7
      %v4090 = vpop.permute.xlu0 %4089
      %4091 = vrot.lane.b32.xlu0 %v3258, 7
      %v4092 = vpop.permute.xlu0 %4091
      %4093 = vrot.lane.b32.xlu0 %v3262, 7
      %v4094 = vpop.permute.xlu0 %4093
      %4095 = vrot.lane.b32.xlu0 %v3268, 7
      %v4096 = vpop.permute.xlu0 %4095
      %4097 = vrot.lane.b32.xlu0 %v3272, 7
      %v4098 = vpop.permute.xlu0 %4097
      %4099 = vrot.lane.b32.xlu0 %v3329, 7
      %v4100 = vpop.permute.xlu0 %4099
      %4101 = vrot.lane.b32.xlu0 %v3333, 7
      %v4102 = vpop.permute.xlu0 %4101
      %4103 = vrot.lane.b32.xlu0 %v3339, 7
      %v4104 = vpop.permute.xlu0 %4103
      %4105 = vrot.lane.b32.xlu0 %v3343, 7
      %v4106 = vpop.permute.xlu0 %4105
      %4107 = vset.pattern.permute.xlu0 7
      %4108 = vperm.xlu0 %4107, %v3347
      %v4109 = vpop.permute.xlu0 %4108
      %4111 = vset.pattern.permute.xlu0 7
      %4112 = vperm.xlu0 %4111, %v3348
      %v4113 = vpop.permute.xlu0 %4112
      %4115 = vset.pattern.permute.xlu0 7
      %4116 = vperm.xlu0 %4115, %v3349
      %v4117 = vpop.permute.xlu0 %4116
      %4119 = vset.pattern.permute.xlu0 7
      %4120 = vperm.xlu0 %4119, %v3350
      %v4121 = vpop.permute.xlu0 %4120
      %v4123 = vmul.f32 %v4109, %v4076
      %v4124 = vmul.f32 %v4113, %v4078
      %v4125 = vmul.f32 %v4117, %v4080
      %v4126 = vmul.f32 %v4121, %v4082
      %4127 = vset.pattern.permute.xlu0 7
      %4128 = vperm.xlu0 %4127, %v3351
      %v4129 = vpop.permute.xlu0 %4128
      %4131 = vset.pattern.permute.xlu0 7
      %4132 = vperm.xlu0 %4131, %v3352
      %v4133 = vpop.permute.xlu0 %4132
      %4135 = vset.pattern.permute.xlu0 7
      %4136 = vperm.xlu0 %4135, %v3353
      %v4137 = vpop.permute.xlu0 %4136
      %4139 = vset.pattern.permute.xlu0 7
      %4140 = vperm.xlu0 %4139, %v3354
      %v4141 = vpop.permute.xlu0 %4140
      %v4143 = vmul.f32 %v4129, %v4084
      %v4144 = vmul.f32 %v4133, %v4086
      %v4145 = vmul.f32 %v4137, %v4088
      %v4146 = vmul.f32 %v4141, %v4090
      %v4147 = vsub.f32 %v4123, %v4143
      %v4148 = vsub.f32 %v4124, %v4144
      %v4149 = vsub.f32 %v4125, %v4145
      %v4150 = vsub.f32 %v4126, %v4146
      %v4151 = vmul.f32 %v4147, %v551
      %v4152 = vmul.f32 %v4148, %v551
      %v4153 = vmul.f32 %v4149, %v551
      %v4154 = vmul.f32 %v4150, %v551
      %v4155 = vadd.f32 %v4051, %v4151
      %v4156 = vadd.f32 %v4052, %v4152
      %v4157 = vadd.f32 %v4053, %v4153
      %v4158 = vadd.f32 %v4054, %v4154
      %v4159 = vmul.f32 %v4109, %v4092
      %v4160 = vmul.f32 %v4113, %v4094
      %v4161 = vmul.f32 %v4117, %v4096
      %v4162 = vmul.f32 %v4121, %v4098
      %v4163 = vmul.f32 %v4129, %v4100
      %v4164 = vmul.f32 %v4133, %v4102
      %v4165 = vmul.f32 %v4137, %v4104
      %v4166 = vmul.f32 %v4141, %v4106
      %v4167 = vadd.f32 %v4159, %v4163
      %v4168 = vadd.f32 %v4160, %v4164
      %v4169 = vadd.f32 %v4161, %v4165
      %v4170 = vadd.f32 %v4162, %v4166
      %v4171 = vmul.f32 %v4167, %v551
      %v4172 = vmul.f32 %v4168, %v551
      %v4173 = vmul.f32 %v4169, %v551
      %v4174 = vmul.f32 %v4170, %v551
      %v4175 = vadd.f32 %v4071, %v4171
      %v4176 = vadd.f32 %v4072, %v4172
      %v4177 = vadd.f32 %v4073, %v4173
      %v4178 = vadd.f32 %v4074, %v4174
      %4179 = vrot.lane.b32.xlu0 %v3256, 8
      %v4180 = vpop.permute.xlu0 %4179
      %4181 = vrot.lane.b32.xlu0 %v3260, 8
      %v4182 = vpop.permute.xlu0 %4181
      %4183 = vrot.lane.b32.xlu0 %v3266, 8
      %v4184 = vpop.permute.xlu0 %4183
      %4185 = vrot.lane.b32.xlu0 %v3270, 8
      %v4186 = vpop.permute.xlu0 %4185
      %4187 = vrot.lane.b32.xlu0 %v3331, 8
      %v4188 = vpop.permute.xlu0 %4187
      %4189 = vrot.lane.b32.xlu0 %v3335, 8
      %v4190 = vpop.permute.xlu0 %4189
      %4191 = vrot.lane.b32.xlu0 %v3341, 8
      %v4192 = vpop.permute.xlu0 %4191
      %4193 = vrot.lane.b32.xlu0 %v3345, 8
      %v4194 = vpop.permute.xlu0 %4193
      %4195 = vrot.lane.b32.xlu0 %v3258, 8
      %v4196 = vpop.permute.xlu0 %4195
      %4197 = vrot.lane.b32.xlu0 %v3262, 8
      %v4198 = vpop.permute.xlu0 %4197
      %4199 = vrot.lane.b32.xlu0 %v3268, 8
      %v4200 = vpop.permute.xlu0 %4199
      %4201 = vrot.lane.b32.xlu0 %v3272, 8
      %v4202 = vpop.permute.xlu0 %4201
      %4203 = vrot.lane.b32.xlu0 %v3329, 8
      %v4204 = vpop.permute.xlu0 %4203
      %4205 = vrot.lane.b32.xlu0 %v3333, 8
      %v4206 = vpop.permute.xlu0 %4205
      %4207 = vrot.lane.b32.xlu0 %v3339, 8
      %v4208 = vpop.permute.xlu0 %4207
      %4209 = vrot.lane.b32.xlu0 %v3343, 8
      %v4210 = vpop.permute.xlu0 %4209
      %4211 = vset.pattern.permute.xlu0 8
      %4212 = vperm.xlu0 %4211, %v3347
      %v4213 = vpop.permute.xlu0 %4212
      %4215 = vset.pattern.permute.xlu0 8
      %4216 = vperm.xlu0 %4215, %v3348
      %v4217 = vpop.permute.xlu0 %4216
      %4219 = vset.pattern.permute.xlu0 8
      %4220 = vperm.xlu0 %4219, %v3349
      %v4221 = vpop.permute.xlu0 %4220
      %4223 = vset.pattern.permute.xlu0 8
      %4224 = vperm.xlu0 %4223, %v3350
      %v4225 = vpop.permute.xlu0 %4224
      %v4227 = vmul.f32 %v4213, %v4180
      %v4228 = vmul.f32 %v4217, %v4182
      %v4229 = vmul.f32 %v4221, %v4184
      %v4230 = vmul.f32 %v4225, %v4186
      %4231 = vset.pattern.permute.xlu0 8
      %4232 = vperm.xlu0 %4231, %v3351
      %v4233 = vpop.permute.xlu0 %4232
      %4235 = vset.pattern.permute.xlu0 8
      %4236 = vperm.xlu0 %4235, %v3352
      %v4237 = vpop.permute.xlu0 %4236
      %4239 = vset.pattern.permute.xlu0 8
      %4240 = vperm.xlu0 %4239, %v3353
      %v4241 = vpop.permute.xlu0 %4240
      %4243 = vset.pattern.permute.xlu0 8
      %4244 = vperm.xlu0 %4243, %v3354
      %v4245 = vpop.permute.xlu0 %4244
      %v4247 = vmul.f32 %v4233, %v4188
      %v4248 = vmul.f32 %v4237, %v4190
      %v4249 = vmul.f32 %v4241, %v4192
      %v4250 = vmul.f32 %v4245, %v4194
      %v4251 = vsub.f32 %v4227, %v4247
      %v4252 = vsub.f32 %v4228, %v4248
      %v4253 = vsub.f32 %v4229, %v4249
      %v4254 = vsub.f32 %v4230, %v4250
      %v4255 = vmul.f32 %v4251, %v554
      %v4256 = vmul.f32 %v4252, %v554
      %v4257 = vmul.f32 %v4253, %v554
      %v4258 = vmul.f32 %v4254, %v554
      %v4259 = vadd.f32 %v4155, %v4255
      %v4260 = vadd.f32 %v4156, %v4256
      %v4261 = vadd.f32 %v4157, %v4257
      %v4262 = vadd.f32 %v4158, %v4258
      %v4263 = vmul.f32 %v4213, %v4196
      %v4264 = vmul.f32 %v4217, %v4198
      %v4265 = vmul.f32 %v4221, %v4200
      %v4266 = vmul.f32 %v4225, %v4202
      %v4267 = vmul.f32 %v4233, %v4204
      %v4268 = vmul.f32 %v4237, %v4206
      %v4269 = vmul.f32 %v4241, %v4208
      %v4270 = vmul.f32 %v4245, %v4210
      %v4271 = vadd.f32 %v4263, %v4267
      %v4272 = vadd.f32 %v4264, %v4268
      %v4273 = vadd.f32 %v4265, %v4269
      %v4274 = vadd.f32 %v4266, %v4270
      %v4275 = vmul.f32 %v4271, %v554
      %v4276 = vmul.f32 %v4272, %v554
      %v4277 = vmul.f32 %v4273, %v554
      %v4278 = vmul.f32 %v4274, %v554
      %v4279 = vadd.f32 %v4175, %v4275
      %v4280 = vadd.f32 %v4176, %v4276
      %v4281 = vadd.f32 %v4177, %v4277
      %v4282 = vadd.f32 %v4178, %v4278
      %4283 = vrot.lane.b32.xlu0 %v3256, 9
      %v4284 = vpop.permute.xlu0 %4283
      %4285 = vrot.lane.b32.xlu0 %v3260, 9
      %v4286 = vpop.permute.xlu0 %4285
      %4287 = vrot.lane.b32.xlu0 %v3266, 9
      %v4288 = vpop.permute.xlu0 %4287
      %4289 = vrot.lane.b32.xlu0 %v3270, 9
      %v4290 = vpop.permute.xlu0 %4289
      %4291 = vrot.lane.b32.xlu0 %v3331, 9
      %v4292 = vpop.permute.xlu0 %4291
      %4293 = vrot.lane.b32.xlu0 %v3335, 9
      %v4294 = vpop.permute.xlu0 %4293
      %4295 = vrot.lane.b32.xlu0 %v3341, 9
      %v4296 = vpop.permute.xlu0 %4295
      %4297 = vrot.lane.b32.xlu0 %v3345, 9
      %v4298 = vpop.permute.xlu0 %4297
      %4299 = vrot.lane.b32.xlu0 %v3258, 9
      %v4300 = vpop.permute.xlu0 %4299
      %4301 = vrot.lane.b32.xlu0 %v3262, 9
      %v4302 = vpop.permute.xlu0 %4301
      %4303 = vrot.lane.b32.xlu0 %v3268, 9
      %v4304 = vpop.permute.xlu0 %4303
      %4305 = vrot.lane.b32.xlu0 %v3272, 9
      %v4306 = vpop.permute.xlu0 %4305
      %4307 = vrot.lane.b32.xlu0 %v3329, 9
      %v4308 = vpop.permute.xlu0 %4307
      %4309 = vrot.lane.b32.xlu0 %v3333, 9
      %v4310 = vpop.permute.xlu0 %4309
      %4311 = vrot.lane.b32.xlu0 %v3339, 9
      %v4312 = vpop.permute.xlu0 %4311
      %4313 = vrot.lane.b32.xlu0 %v3343, 9
      %v4314 = vpop.permute.xlu0 %4313
      %4315 = vset.pattern.permute.xlu0 9
      %4316 = vperm.xlu0 %4315, %v3347
      %v4317 = vpop.permute.xlu0 %4316
      %4319 = vset.pattern.permute.xlu0 9
      %4320 = vperm.xlu0 %4319, %v3348
      %v4321 = vpop.permute.xlu0 %4320
      %4323 = vset.pattern.permute.xlu0 9
      %4324 = vperm.xlu0 %4323, %v3349
      %v4325 = vpop.permute.xlu0 %4324
      %4327 = vset.pattern.permute.xlu0 9
      %4328 = vperm.xlu0 %4327, %v3350
      %v4329 = vpop.permute.xlu0 %4328
      %v4331 = vmul.f32 %v4317, %v4284
      %v4332 = vmul.f32 %v4321, %v4286
      %v4333 = vmul.f32 %v4325, %v4288
      %v4334 = vmul.f32 %v4329, %v4290
      %4335 = vset.pattern.permute.xlu0 9
      %4336 = vperm.xlu0 %4335, %v3351
      %v4337 = vpop.permute.xlu0 %4336
      %4339 = vset.pattern.permute.xlu0 9
      %4340 = vperm.xlu0 %4339, %v3352
      %v4341 = vpop.permute.xlu0 %4340
      %4343 = vset.pattern.permute.xlu0 9
      %4344 = vperm.xlu0 %4343, %v3353
      %v4345 = vpop.permute.xlu0 %4344
      %4347 = vset.pattern.permute.xlu0 9
      %4348 = vperm.xlu0 %4347, %v3354
      %v4349 = vpop.permute.xlu0 %4348
      %v4351 = vmul.f32 %v4337, %v4292
      %v4352 = vmul.f32 %v4341, %v4294
      %v4353 = vmul.f32 %v4345, %v4296
      %v4354 = vmul.f32 %v4349, %v4298
      %v4355 = vsub.f32 %v4331, %v4351
      %v4356 = vsub.f32 %v4332, %v4352
      %v4357 = vsub.f32 %v4333, %v4353
      %v4358 = vsub.f32 %v4334, %v4354
      %v4359 = vmul.f32 %v4355, %v557
      %v4360 = vmul.f32 %v4356, %v557
      %v4361 = vmul.f32 %v4357, %v557
      %v4362 = vmul.f32 %v4358, %v557
      %v4363 = vadd.f32 %v4259, %v4359
      %v4364 = vadd.f32 %v4260, %v4360
      %v4365 = vadd.f32 %v4261, %v4361
      %v4366 = vadd.f32 %v4262, %v4362
      %v4367 = vmul.f32 %v4317, %v4300
      %v4368 = vmul.f32 %v4321, %v4302
      %v4369 = vmul.f32 %v4325, %v4304
      %v4370 = vmul.f32 %v4329, %v4306
      %v4371 = vmul.f32 %v4337, %v4308
      %v4372 = vmul.f32 %v4341, %v4310
      %v4373 = vmul.f32 %v4345, %v4312
      %v4374 = vmul.f32 %v4349, %v4314
      %v4375 = vadd.f32 %v4367, %v4371
      %v4376 = vadd.f32 %v4368, %v4372
      %v4377 = vadd.f32 %v4369, %v4373
      %v4378 = vadd.f32 %v4370, %v4374
      %v4379 = vmul.f32 %v4375, %v557
      %v4380 = vmul.f32 %v4376, %v557
      %v4381 = vmul.f32 %v4377, %v557
      %v4382 = vmul.f32 %v4378, %v557
      %v4383 = vadd.f32 %v4279, %v4379
      %v4384 = vadd.f32 %v4280, %v4380
      %v4385 = vadd.f32 %v4281, %v4381
      %v4386 = vadd.f32 %v4282, %v4382
      %4387 = vrot.lane.b32.xlu0 %v3256, 10
      %v4388 = vpop.permute.xlu0 %4387
      %4389 = vrot.lane.b32.xlu0 %v3260, 10
      %v4390 = vpop.permute.xlu0 %4389
      %4391 = vrot.lane.b32.xlu0 %v3266, 10
      %v4392 = vpop.permute.xlu0 %4391
      %4393 = vrot.lane.b32.xlu0 %v3270, 10
      %v4394 = vpop.permute.xlu0 %4393
      %4395 = vrot.lane.b32.xlu0 %v3331, 10
      %v4396 = vpop.permute.xlu0 %4395
      %4397 = vrot.lane.b32.xlu0 %v3335, 10
      %v4398 = vpop.permute.xlu0 %4397
      %4399 = vrot.lane.b32.xlu0 %v3341, 10
      %v4400 = vpop.permute.xlu0 %4399
      %4401 = vrot.lane.b32.xlu0 %v3345, 10
      %v4402 = vpop.permute.xlu0 %4401
      %4403 = vrot.lane.b32.xlu0 %v3258, 10
      %v4404 = vpop.permute.xlu0 %4403
      %4405 = vrot.lane.b32.xlu0 %v3262, 10
      %v4406 = vpop.permute.xlu0 %4405
      %4407 = vrot.lane.b32.xlu0 %v3268, 10
      %v4408 = vpop.permute.xlu0 %4407
      %4409 = vrot.lane.b32.xlu0 %v3272, 10
      %v4410 = vpop.permute.xlu0 %4409
      %4411 = vrot.lane.b32.xlu0 %v3329, 10
      %v4412 = vpop.permute.xlu0 %4411
      %4413 = vrot.lane.b32.xlu0 %v3333, 10
      %v4414 = vpop.permute.xlu0 %4413
      %4415 = vrot.lane.b32.xlu0 %v3339, 10
      %v4416 = vpop.permute.xlu0 %4415
      %4417 = vrot.lane.b32.xlu0 %v3343, 10
      %v4418 = vpop.permute.xlu0 %4417
      %4419 = vset.pattern.permute.xlu0 10
      %4420 = vperm.xlu0 %4419, %v3347
      %v4421 = vpop.permute.xlu0 %4420
      %4423 = vset.pattern.permute.xlu0 10
      %4424 = vperm.xlu0 %4423, %v3348
      %v4425 = vpop.permute.xlu0 %4424
      %4427 = vset.pattern.permute.xlu0 10
      %4428 = vperm.xlu0 %4427, %v3349
      %v4429 = vpop.permute.xlu0 %4428
      %4431 = vset.pattern.permute.xlu0 10
      %4432 = vperm.xlu0 %4431, %v3350
      %v4433 = vpop.permute.xlu0 %4432
      %v4435 = vmul.f32 %v4421, %v4388
      %v4436 = vmul.f32 %v4425, %v4390
      %v4437 = vmul.f32 %v4429, %v4392
      %v4438 = vmul.f32 %v4433, %v4394
      %4439 = vset.pattern.permute.xlu0 10
      %4440 = vperm.xlu0 %4439, %v3351
      %v4441 = vpop.permute.xlu0 %4440
      %4443 = vset.pattern.permute.xlu0 10
      %4444 = vperm.xlu0 %4443, %v3352
      %v4445 = vpop.permute.xlu0 %4444
      %4447 = vset.pattern.permute.xlu0 10
      %4448 = vperm.xlu0 %4447, %v3353
      %v4449 = vpop.permute.xlu0 %4448
      %4451 = vset.pattern.permute.xlu0 10
      %4452 = vperm.xlu0 %4451, %v3354
      %v4453 = vpop.permute.xlu0 %4452
      %v4455 = vmul.f32 %v4441, %v4396
      %v4456 = vmul.f32 %v4445, %v4398
      %v4457 = vmul.f32 %v4449, %v4400
      %v4458 = vmul.f32 %v4453, %v4402
      %v4459 = vsub.f32 %v4435, %v4455
      %v4460 = vsub.f32 %v4436, %v4456
      %v4461 = vsub.f32 %v4437, %v4457
      %v4462 = vsub.f32 %v4438, %v4458
      %v4463 = vmul.f32 %v4459, %v560
      %v4464 = vmul.f32 %v4460, %v560
      %v4465 = vmul.f32 %v4461, %v560
      %v4466 = vmul.f32 %v4462, %v560
      %v4467 = vadd.f32 %v4363, %v4463
      %v4468 = vadd.f32 %v4364, %v4464
      %v4469 = vadd.f32 %v4365, %v4465
      %v4470 = vadd.f32 %v4366, %v4466
      %v4471 = vmul.f32 %v4421, %v4404
      %v4472 = vmul.f32 %v4425, %v4406
      %v4473 = vmul.f32 %v4429, %v4408
      %v4474 = vmul.f32 %v4433, %v4410
      %v4475 = vmul.f32 %v4441, %v4412
      %v4476 = vmul.f32 %v4445, %v4414
      %v4477 = vmul.f32 %v4449, %v4416
      %v4478 = vmul.f32 %v4453, %v4418
      %v4479 = vadd.f32 %v4471, %v4475
      %v4480 = vadd.f32 %v4472, %v4476
      %v4481 = vadd.f32 %v4473, %v4477
      %v4482 = vadd.f32 %v4474, %v4478
      %v4483 = vmul.f32 %v4479, %v560
      %v4484 = vmul.f32 %v4480, %v560
      %v4485 = vmul.f32 %v4481, %v560
      %v4486 = vmul.f32 %v4482, %v560
      %v4487 = vadd.f32 %v4383, %v4483
      %v4488 = vadd.f32 %v4384, %v4484
      %v4489 = vadd.f32 %v4385, %v4485
      %v4490 = vadd.f32 %v4386, %v4486
      %4491 = vrot.lane.b32.xlu0 %v3256, 11
      %v4492 = vpop.permute.xlu0 %4491
      %4493 = vrot.lane.b32.xlu0 %v3260, 11
      %v4494 = vpop.permute.xlu0 %4493
      %4495 = vrot.lane.b32.xlu0 %v3266, 11
      %v4496 = vpop.permute.xlu0 %4495
      %4497 = vrot.lane.b32.xlu0 %v3270, 11
      %v4498 = vpop.permute.xlu0 %4497
      %4499 = vrot.lane.b32.xlu0 %v3331, 11
      %v4500 = vpop.permute.xlu0 %4499
      %4501 = vrot.lane.b32.xlu0 %v3335, 11
      %v4502 = vpop.permute.xlu0 %4501
      %4503 = vrot.lane.b32.xlu0 %v3341, 11
      %v4504 = vpop.permute.xlu0 %4503
      %4505 = vrot.lane.b32.xlu0 %v3345, 11
      %v4506 = vpop.permute.xlu0 %4505
      %4507 = vrot.lane.b32.xlu0 %v3258, 11
      %v4508 = vpop.permute.xlu0 %4507
      %4509 = vrot.lane.b32.xlu0 %v3262, 11
      %v4510 = vpop.permute.xlu0 %4509
      %4511 = vrot.lane.b32.xlu0 %v3268, 11
      %v4512 = vpop.permute.xlu0 %4511
      %4513 = vrot.lane.b32.xlu0 %v3272, 11
      %v4514 = vpop.permute.xlu0 %4513
      %4515 = vrot.lane.b32.xlu0 %v3329, 11
      %v4516 = vpop.permute.xlu0 %4515
      %4517 = vrot.lane.b32.xlu0 %v3333, 11
      %v4518 = vpop.permute.xlu0 %4517
      %4519 = vrot.lane.b32.xlu0 %v3339, 11
      %v4520 = vpop.permute.xlu0 %4519
      %4521 = vrot.lane.b32.xlu0 %v3343, 11
      %v4522 = vpop.permute.xlu0 %4521
      %4523 = vset.pattern.permute.xlu0 11
      %4524 = vperm.xlu0 %4523, %v3347
      %v4525 = vpop.permute.xlu0 %4524
      %4527 = vset.pattern.permute.xlu0 11
      %4528 = vperm.xlu0 %4527, %v3348
      %v4529 = vpop.permute.xlu0 %4528
      %4531 = vset.pattern.permute.xlu0 11
      %4532 = vperm.xlu0 %4531, %v3349
      %v4533 = vpop.permute.xlu0 %4532
      %4535 = vset.pattern.permute.xlu0 11
      %4536 = vperm.xlu0 %4535, %v3350
      %v4537 = vpop.permute.xlu0 %4536
      %v4539 = vmul.f32 %v4525, %v4492
      %v4540 = vmul.f32 %v4529, %v4494
      %v4541 = vmul.f32 %v4533, %v4496
      %v4542 = vmul.f32 %v4537, %v4498
      %4543 = vset.pattern.permute.xlu0 11
      %4544 = vperm.xlu0 %4543, %v3351
      %v4545 = vpop.permute.xlu0 %4544
      %4547 = vset.pattern.permute.xlu0 11
      %4548 = vperm.xlu0 %4547, %v3352
      %v4549 = vpop.permute.xlu0 %4548
      %4551 = vset.pattern.permute.xlu0 11
      %4552 = vperm.xlu0 %4551, %v3353
      %v4553 = vpop.permute.xlu0 %4552
      %4555 = vset.pattern.permute.xlu0 11
      %4556 = vperm.xlu0 %4555, %v3354
      %v4557 = vpop.permute.xlu0 %4556
      %v4559 = vmul.f32 %v4545, %v4500
      %v4560 = vmul.f32 %v4549, %v4502
      %v4561 = vmul.f32 %v4553, %v4504
      %v4562 = vmul.f32 %v4557, %v4506
      %v4563 = vsub.f32 %v4539, %v4559
      %v4564 = vsub.f32 %v4540, %v4560
      %v4565 = vsub.f32 %v4541, %v4561
      %v4566 = vsub.f32 %v4542, %v4562
      %v4567 = vmul.f32 %v4563, %v563
      %v4568 = vmul.f32 %v4564, %v563
      %v4569 = vmul.f32 %v4565, %v563
      %v4570 = vmul.f32 %v4566, %v563
      %v4571 = vadd.f32 %v4467, %v4567
      %v4572 = vadd.f32 %v4468, %v4568
      %v4573 = vadd.f32 %v4469, %v4569
      %v4574 = vadd.f32 %v4470, %v4570
      %v4575 = vmul.f32 %v4525, %v4508
      %v4576 = vmul.f32 %v4529, %v4510
      %v4577 = vmul.f32 %v4533, %v4512
      %v4578 = vmul.f32 %v4537, %v4514
      %v4579 = vmul.f32 %v4545, %v4516
      %v4580 = vmul.f32 %v4549, %v4518
      %v4581 = vmul.f32 %v4553, %v4520
      %v4582 = vmul.f32 %v4557, %v4522
      %v4583 = vadd.f32 %v4575, %v4579
      %v4584 = vadd.f32 %v4576, %v4580
      %v4585 = vadd.f32 %v4577, %v4581
      %v4586 = vadd.f32 %v4578, %v4582
      %v4587 = vmul.f32 %v4583, %v563
      %v4588 = vmul.f32 %v4584, %v563
      %v4589 = vmul.f32 %v4585, %v563
      %v4590 = vmul.f32 %v4586, %v563
      %v4591 = vadd.f32 %v4487, %v4587
      %v4592 = vadd.f32 %v4488, %v4588
      %v4593 = vadd.f32 %v4489, %v4589
      %v4594 = vadd.f32 %v4490, %v4590
      %4595 = vrot.lane.b32.xlu0 %v3256, 12
      %v4596 = vpop.permute.xlu0 %4595
      %4597 = vrot.lane.b32.xlu0 %v3260, 12
      %v4598 = vpop.permute.xlu0 %4597
      %4599 = vrot.lane.b32.xlu0 %v3266, 12
      %v4600 = vpop.permute.xlu0 %4599
      %4601 = vrot.lane.b32.xlu0 %v3270, 12
      %v4602 = vpop.permute.xlu0 %4601
      %4603 = vrot.lane.b32.xlu0 %v3331, 12
      %v4604 = vpop.permute.xlu0 %4603
      %4605 = vrot.lane.b32.xlu0 %v3335, 12
      %v4606 = vpop.permute.xlu0 %4605
      %4607 = vrot.lane.b32.xlu0 %v3341, 12
      %v4608 = vpop.permute.xlu0 %4607
      %4609 = vrot.lane.b32.xlu0 %v3345, 12
      %v4610 = vpop.permute.xlu0 %4609
      %4611 = vrot.lane.b32.xlu0 %v3258, 12
      %v4612 = vpop.permute.xlu0 %4611
      %4613 = vrot.lane.b32.xlu0 %v3262, 12
      %v4614 = vpop.permute.xlu0 %4613
      %4615 = vrot.lane.b32.xlu0 %v3268, 12
      %v4616 = vpop.permute.xlu0 %4615
      %4617 = vrot.lane.b32.xlu0 %v3272, 12
      %v4618 = vpop.permute.xlu0 %4617
      %4619 = vrot.lane.b32.xlu0 %v3329, 12
      %v4620 = vpop.permute.xlu0 %4619
      %4621 = vrot.lane.b32.xlu0 %v3333, 12
      %v4622 = vpop.permute.xlu0 %4621
      %4623 = vrot.lane.b32.xlu0 %v3339, 12
      %v4624 = vpop.permute.xlu0 %4623
      %4625 = vrot.lane.b32.xlu0 %v3343, 12
      %v4626 = vpop.permute.xlu0 %4625
      %4627 = vset.pattern.permute.xlu0 12
      %4628 = vperm.xlu0 %4627, %v3347
      %v4629 = vpop.permute.xlu0 %4628
      %4631 = vset.pattern.permute.xlu0 12
      %4632 = vperm.xlu0 %4631, %v3348
      %v4633 = vpop.permute.xlu0 %4632
      %4635 = vset.pattern.permute.xlu0 12
      %4636 = vperm.xlu0 %4635, %v3349
      %v4637 = vpop.permute.xlu0 %4636
      %4639 = vset.pattern.permute.xlu0 12
      %4640 = vperm.xlu0 %4639, %v3350
      %v4641 = vpop.permute.xlu0 %4640
      %v4643 = vmul.f32 %v4629, %v4596
      %v4644 = vmul.f32 %v4633, %v4598
      %v4645 = vmul.f32 %v4637, %v4600
      %v4646 = vmul.f32 %v4641, %v4602
      %4647 = vset.pattern.permute.xlu0 12
      %4648 = vperm.xlu0 %4647, %v3351
      %v4649 = vpop.permute.xlu0 %4648
      %4651 = vset.pattern.permute.xlu0 12
      %4652 = vperm.xlu0 %4651, %v3352
      %v4653 = vpop.permute.xlu0 %4652
      %4655 = vset.pattern.permute.xlu0 12
      %4656 = vperm.xlu0 %4655, %v3353
      %v4657 = vpop.permute.xlu0 %4656
      %4659 = vset.pattern.permute.xlu0 12
      %4660 = vperm.xlu0 %4659, %v3354
      %v4661 = vpop.permute.xlu0 %4660
      %v4663 = vmul.f32 %v4649, %v4604
      %v4664 = vmul.f32 %v4653, %v4606
      %v4665 = vmul.f32 %v4657, %v4608
      %v4666 = vmul.f32 %v4661, %v4610
      %v4667 = vsub.f32 %v4643, %v4663
      %v4668 = vsub.f32 %v4644, %v4664
      %v4669 = vsub.f32 %v4645, %v4665
      %v4670 = vsub.f32 %v4646, %v4666
      %v4671 = vmul.f32 %v4667, %v566
      %v4672 = vmul.f32 %v4668, %v566
      %v4673 = vmul.f32 %v4669, %v566
      %v4674 = vmul.f32 %v4670, %v566
      %v4675 = vadd.f32 %v4571, %v4671
      %v4676 = vadd.f32 %v4572, %v4672
      %v4677 = vadd.f32 %v4573, %v4673
      %v4678 = vadd.f32 %v4574, %v4674
      %v4679 = vmul.f32 %v4629, %v4612
      %v4680 = vmul.f32 %v4633, %v4614
      %v4681 = vmul.f32 %v4637, %v4616
      %v4682 = vmul.f32 %v4641, %v4618
      %v4683 = vmul.f32 %v4649, %v4620
      %v4684 = vmul.f32 %v4653, %v4622
      %v4685 = vmul.f32 %v4657, %v4624
      %v4686 = vmul.f32 %v4661, %v4626
      %v4687 = vadd.f32 %v4679, %v4683
      %v4688 = vadd.f32 %v4680, %v4684
      %v4689 = vadd.f32 %v4681, %v4685
      %v4690 = vadd.f32 %v4682, %v4686
      %v4691 = vmul.f32 %v4687, %v566
      %v4692 = vmul.f32 %v4688, %v566
      %v4693 = vmul.f32 %v4689, %v566
      %v4694 = vmul.f32 %v4690, %v566
      %v4695 = vadd.f32 %v4591, %v4691
      %v4696 = vadd.f32 %v4592, %v4692
      %v4697 = vadd.f32 %v4593, %v4693
      %v4698 = vadd.f32 %v4594, %v4694
      %4699 = vrot.lane.b32.xlu0 %v3256, 13
      %v4700 = vpop.permute.xlu0 %4699
      %4701 = vrot.lane.b32.xlu0 %v3260, 13
      %v4702 = vpop.permute.xlu0 %4701
      %4703 = vrot.lane.b32.xlu0 %v3266, 13
      %v4704 = vpop.permute.xlu0 %4703
      %4705 = vrot.lane.b32.xlu0 %v3270, 13
      %v4706 = vpop.permute.xlu0 %4705
      %4707 = vrot.lane.b32.xlu0 %v3331, 13
      %v4708 = vpop.permute.xlu0 %4707
      %4709 = vrot.lane.b32.xlu0 %v3335, 13
      %v4710 = vpop.permute.xlu0 %4709
      %4711 = vrot.lane.b32.xlu0 %v3341, 13
      %v4712 = vpop.permute.xlu0 %4711
      %4713 = vrot.lane.b32.xlu0 %v3345, 13
      %v4714 = vpop.permute.xlu0 %4713
      %4715 = vrot.lane.b32.xlu0 %v3258, 13
      %v4716 = vpop.permute.xlu0 %4715
      %4717 = vrot.lane.b32.xlu0 %v3262, 13
      %v4718 = vpop.permute.xlu0 %4717
      %4719 = vrot.lane.b32.xlu0 %v3268, 13
      %v4720 = vpop.permute.xlu0 %4719
      %4721 = vrot.lane.b32.xlu0 %v3272, 13
      %v4722 = vpop.permute.xlu0 %4721
      %4723 = vrot.lane.b32.xlu0 %v3329, 13
      %v4724 = vpop.permute.xlu0 %4723
      %4725 = vrot.lane.b32.xlu0 %v3333, 13
      %v4726 = vpop.permute.xlu0 %4725
      %4727 = vrot.lane.b32.xlu0 %v3339, 13
      %v4728 = vpop.permute.xlu0 %4727
      %4729 = vrot.lane.b32.xlu0 %v3343, 13
      %v4730 = vpop.permute.xlu0 %4729
      %4731 = vset.pattern.permute.xlu0 13
      %4732 = vperm.xlu0 %4731, %v3347
      %v4733 = vpop.permute.xlu0 %4732
      %4735 = vset.pattern.permute.xlu0 13
      %4736 = vperm.xlu0 %4735, %v3348
      %v4737 = vpop.permute.xlu0 %4736
      %4739 = vset.pattern.permute.xlu0 13
      %4740 = vperm.xlu0 %4739, %v3349
      %v4741 = vpop.permute.xlu0 %4740
      %4743 = vset.pattern.permute.xlu0 13
      %4744 = vperm.xlu0 %4743, %v3350
      %v4745 = vpop.permute.xlu0 %4744
      %v4747 = vmul.f32 %v4733, %v4700
      %v4748 = vmul.f32 %v4737, %v4702
      %v4749 = vmul.f32 %v4741, %v4704
      %v4750 = vmul.f32 %v4745, %v4706
      %4751 = vset.pattern.permute.xlu0 13
      %4752 = vperm.xlu0 %4751, %v3351
      %v4753 = vpop.permute.xlu0 %4752
      %4755 = vset.pattern.permute.xlu0 13
      %4756 = vperm.xlu0 %4755, %v3352
      %v4757 = vpop.permute.xlu0 %4756
      %4759 = vset.pattern.permute.xlu0 13
      %4760 = vperm.xlu0 %4759, %v3353
      %v4761 = vpop.permute.xlu0 %4760
      %4763 = vset.pattern.permute.xlu0 13
      %4764 = vperm.xlu0 %4763, %v3354
      %v4765 = vpop.permute.xlu0 %4764
      %v4767 = vmul.f32 %v4753, %v4708
      %v4768 = vmul.f32 %v4757, %v4710
      %v4769 = vmul.f32 %v4761, %v4712
      %v4770 = vmul.f32 %v4765, %v4714
      %v4771 = vsub.f32 %v4747, %v4767
      %v4772 = vsub.f32 %v4748, %v4768
      %v4773 = vsub.f32 %v4749, %v4769
      %v4774 = vsub.f32 %v4750, %v4770
      %v4775 = vmul.f32 %v4771, %v569
      %v4776 = vmul.f32 %v4772, %v569
      %v4777 = vmul.f32 %v4773, %v569
      %v4778 = vmul.f32 %v4774, %v569
      %v4779 = vadd.f32 %v4675, %v4775
      %v4780 = vadd.f32 %v4676, %v4776
      %v4781 = vadd.f32 %v4677, %v4777
      %v4782 = vadd.f32 %v4678, %v4778
      %v4783 = vmul.f32 %v4733, %v4716
      %v4784 = vmul.f32 %v4737, %v4718
      %v4785 = vmul.f32 %v4741, %v4720
      %v4786 = vmul.f32 %v4745, %v4722
      %v4787 = vmul.f32 %v4753, %v4724
      %v4788 = vmul.f32 %v4757, %v4726
      %v4789 = vmul.f32 %v4761, %v4728
      %v4790 = vmul.f32 %v4765, %v4730
      %v4791 = vadd.f32 %v4783, %v4787
      %v4792 = vadd.f32 %v4784, %v4788
      %v4793 = vadd.f32 %v4785, %v4789
      %v4794 = vadd.f32 %v4786, %v4790
      %v4795 = vmul.f32 %v4791, %v569
      %v4796 = vmul.f32 %v4792, %v569
      %v4797 = vmul.f32 %v4793, %v569
      %v4798 = vmul.f32 %v4794, %v569
      %v4799 = vadd.f32 %v4695, %v4795
      %v4800 = vadd.f32 %v4696, %v4796
      %v4801 = vadd.f32 %v4697, %v4797
      %v4802 = vadd.f32 %v4698, %v4798
      %4803 = vrot.lane.b32.xlu0 %v3256, 14
      %v4804 = vpop.permute.xlu0 %4803
      %4805 = vrot.lane.b32.xlu0 %v3260, 14
      %v4806 = vpop.permute.xlu0 %4805
      %4807 = vrot.lane.b32.xlu0 %v3266, 14
      %v4808 = vpop.permute.xlu0 %4807
      %4809 = vrot.lane.b32.xlu0 %v3270, 14
      %v4810 = vpop.permute.xlu0 %4809
      %4811 = vrot.lane.b32.xlu0 %v3331, 14
      %v4812 = vpop.permute.xlu0 %4811
      %4813 = vrot.lane.b32.xlu0 %v3335, 14
      %v4814 = vpop.permute.xlu0 %4813
      %4815 = vrot.lane.b32.xlu0 %v3341, 14
      %v4816 = vpop.permute.xlu0 %4815
      %4817 = vrot.lane.b32.xlu0 %v3345, 14
      %v4818 = vpop.permute.xlu0 %4817
      %4819 = vrot.lane.b32.xlu0 %v3258, 14
      %v4820 = vpop.permute.xlu0 %4819
      %4821 = vrot.lane.b32.xlu0 %v3262, 14
      %v4822 = vpop.permute.xlu0 %4821
      %4823 = vrot.lane.b32.xlu0 %v3268, 14
      %v4824 = vpop.permute.xlu0 %4823
      %4825 = vrot.lane.b32.xlu0 %v3272, 14
      %v4826 = vpop.permute.xlu0 %4825
      %4827 = vrot.lane.b32.xlu0 %v3329, 14
      %v4828 = vpop.permute.xlu0 %4827
      %4829 = vrot.lane.b32.xlu0 %v3333, 14
      %v4830 = vpop.permute.xlu0 %4829
      %4831 = vrot.lane.b32.xlu0 %v3339, 14
      %v4832 = vpop.permute.xlu0 %4831
      %4833 = vrot.lane.b32.xlu0 %v3343, 14
      %v4834 = vpop.permute.xlu0 %4833
      %4835 = vset.pattern.permute.xlu0 14
      %4836 = vperm.xlu0 %4835, %v3347
      %v4837 = vpop.permute.xlu0 %4836
      %4839 = vset.pattern.permute.xlu0 14
      %4840 = vperm.xlu0 %4839, %v3348
      %v4841 = vpop.permute.xlu0 %4840
      %4843 = vset.pattern.permute.xlu0 14
      %4844 = vperm.xlu0 %4843, %v3349
      %v4845 = vpop.permute.xlu0 %4844
      %4847 = vset.pattern.permute.xlu0 14
      %4848 = vperm.xlu0 %4847, %v3350
      %v4849 = vpop.permute.xlu0 %4848
      %v4851 = vmul.f32 %v4837, %v4804
      %v4852 = vmul.f32 %v4841, %v4806
      %v4853 = vmul.f32 %v4845, %v4808
      %v4854 = vmul.f32 %v4849, %v4810
      %4855 = vset.pattern.permute.xlu0 14
      %4856 = vperm.xlu0 %4855, %v3351
      %v4857 = vpop.permute.xlu0 %4856
      %4859 = vset.pattern.permute.xlu0 14
      %4860 = vperm.xlu0 %4859, %v3352
      %v4861 = vpop.permute.xlu0 %4860
      %4863 = vset.pattern.permute.xlu0 14
      %4864 = vperm.xlu0 %4863, %v3353
      %v4865 = vpop.permute.xlu0 %4864
      %4867 = vset.pattern.permute.xlu0 14
      %4868 = vperm.xlu0 %4867, %v3354
      %v4869 = vpop.permute.xlu0 %4868
      %v4871 = vmul.f32 %v4857, %v4812
      %v4872 = vmul.f32 %v4861, %v4814
      %v4873 = vmul.f32 %v4865, %v4816
      %v4874 = vmul.f32 %v4869, %v4818
      %v4875 = vsub.f32 %v4851, %v4871
      %v4876 = vsub.f32 %v4852, %v4872
      %v4877 = vsub.f32 %v4853, %v4873
      %v4878 = vsub.f32 %v4854, %v4874
      %v4879 = vmul.f32 %v4875, %v572
      %v4880 = vmul.f32 %v4876, %v572
      %v4881 = vmul.f32 %v4877, %v572
      %v4882 = vmul.f32 %v4878, %v572
      %v4883 = vadd.f32 %v4779, %v4879
      %v4884 = vadd.f32 %v4780, %v4880
      %v4885 = vadd.f32 %v4781, %v4881
      %v4886 = vadd.f32 %v4782, %v4882
      %v4887 = vmul.f32 %v4837, %v4820
      %v4888 = vmul.f32 %v4841, %v4822
      %v4889 = vmul.f32 %v4845, %v4824
      %v4890 = vmul.f32 %v4849, %v4826
      %v4891 = vmul.f32 %v4857, %v4828
      %v4892 = vmul.f32 %v4861, %v4830
      %v4893 = vmul.f32 %v4865, %v4832
      %v4894 = vmul.f32 %v4869, %v4834
      %v4895 = vadd.f32 %v4887, %v4891
      %v4896 = vadd.f32 %v4888, %v4892
      %v4897 = vadd.f32 %v4889, %v4893
      %v4898 = vadd.f32 %v4890, %v4894
      %v4899 = vmul.f32 %v4895, %v572
      %v4900 = vmul.f32 %v4896, %v572
      %v4901 = vmul.f32 %v4897, %v572
      %v4902 = vmul.f32 %v4898, %v572
      %v4903 = vadd.f32 %v4799, %v4899
      %v4904 = vadd.f32 %v4800, %v4900
      %v4905 = vadd.f32 %v4801, %v4901
      %v4906 = vadd.f32 %v4802, %v4902
      %4907 = vrot.lane.b32.xlu0 %v3256, 15
      %v4908 = vpop.permute.xlu0 %4907
      %4909 = vrot.lane.b32.xlu0 %v3260, 15
      %v4910 = vpop.permute.xlu0 %4909
      %4911 = vrot.lane.b32.xlu0 %v3266, 15
      %v4912 = vpop.permute.xlu0 %4911
      %4913 = vrot.lane.b32.xlu0 %v3270, 15
      %v4914 = vpop.permute.xlu0 %4913
      %4915 = vrot.lane.b32.xlu0 %v3331, 15
      %v4916 = vpop.permute.xlu0 %4915
      %4917 = vrot.lane.b32.xlu0 %v3335, 15
      %v4918 = vpop.permute.xlu0 %4917
      %4919 = vrot.lane.b32.xlu0 %v3341, 15
      %v4920 = vpop.permute.xlu0 %4919
      %4921 = vrot.lane.b32.xlu0 %v3345, 15
      %v4922 = vpop.permute.xlu0 %4921
      %4923 = vrot.lane.b32.xlu0 %v3258, 15
      %v4924 = vpop.permute.xlu0 %4923
      %4925 = vrot.lane.b32.xlu0 %v3262, 15
      %v4926 = vpop.permute.xlu0 %4925
      %4927 = vrot.lane.b32.xlu0 %v3268, 15
      %v4928 = vpop.permute.xlu0 %4927
      %4929 = vrot.lane.b32.xlu0 %v3272, 15
      %v4930 = vpop.permute.xlu0 %4929
      %4931 = vrot.lane.b32.xlu0 %v3329, 15
      %v4932 = vpop.permute.xlu0 %4931
      %4933 = vrot.lane.b32.xlu0 %v3333, 15
      %v4934 = vpop.permute.xlu0 %4933
      %4935 = vrot.lane.b32.xlu0 %v3339, 15
      %v4936 = vpop.permute.xlu0 %4935
      %4937 = vrot.lane.b32.xlu0 %v3343, 15
      %v4938 = vpop.permute.xlu0 %4937
      %4939 = vset.pattern.permute.xlu0 15
      %4940 = vperm.xlu0 %4939, %v3347
      %v4941 = vpop.permute.xlu0 %4940
      %4943 = vset.pattern.permute.xlu0 15
      %4944 = vperm.xlu0 %4943, %v3348
      %v4945 = vpop.permute.xlu0 %4944
      %4947 = vset.pattern.permute.xlu0 15
      %4948 = vperm.xlu0 %4947, %v3349
      %v4949 = vpop.permute.xlu0 %4948
      %4951 = vset.pattern.permute.xlu0 15
      %4952 = vperm.xlu0 %4951, %v3350
      %v4953 = vpop.permute.xlu0 %4952
      %v4955 = vmul.f32 %v4941, %v4908
      %v4956 = vmul.f32 %v4945, %v4910
      %v4957 = vmul.f32 %v4949, %v4912
      %v4958 = vmul.f32 %v4953, %v4914
      %4959 = vset.pattern.permute.xlu0 15
      %4960 = vperm.xlu0 %4959, %v3351
      %v4961 = vpop.permute.xlu0 %4960
      %4963 = vset.pattern.permute.xlu0 15
      %4964 = vperm.xlu0 %4963, %v3352
      %v4965 = vpop.permute.xlu0 %4964
      %4967 = vset.pattern.permute.xlu0 15
      %4968 = vperm.xlu0 %4967, %v3353
      %v4969 = vpop.permute.xlu0 %4968
      %4971 = vset.pattern.permute.xlu0 15
      %4972 = vperm.xlu0 %4971, %v3354
      %v4973 = vpop.permute.xlu0 %4972
      %v4975 = vmul.f32 %v4961, %v4916
      %v4976 = vmul.f32 %v4965, %v4918
      %v4977 = vmul.f32 %v4969, %v4920
      %v4978 = vmul.f32 %v4973, %v4922
      %v4979 = vsub.f32 %v4955, %v4975
      %v4980 = vsub.f32 %v4956, %v4976
      %v4981 = vsub.f32 %v4957, %v4977
      %v4982 = vsub.f32 %v4958, %v4978
      %v4983 = vmul.f32 %v4979, %v575
      %v4984 = vmul.f32 %v4980, %v575
      %v4985 = vmul.f32 %v4981, %v575
      %v4986 = vmul.f32 %v4982, %v575
      %v4987 = vadd.f32 %v4883, %v4983
      %v4988 = vadd.f32 %v4884, %v4984
      %v4989 = vadd.f32 %v4885, %v4985
      %v4990 = vadd.f32 %v4886, %v4986
      %v4991 = vmul.f32 %v4941, %v4924
      %v4992 = vmul.f32 %v4945, %v4926
      %v4993 = vmul.f32 %v4949, %v4928
      %v4994 = vmul.f32 %v4953, %v4930
      %v4995 = vmul.f32 %v4961, %v4932
      %v4996 = vmul.f32 %v4965, %v4934
      %v4997 = vmul.f32 %v4969, %v4936
      %v4998 = vmul.f32 %v4973, %v4938
      %v4999 = vadd.f32 %v4991, %v4995
      %v5000 = vadd.f32 %v4992, %v4996
      %v5001 = vadd.f32 %v4993, %v4997
      %v5002 = vadd.f32 %v4994, %v4998
      %v5003 = vmul.f32 %v4999, %v575
      %v5004 = vmul.f32 %v5000, %v575
      %v5005 = vmul.f32 %v5001, %v575
      %v5006 = vmul.f32 %v5002, %v575
      %v5007 = vadd.f32 %v4903, %v5003
      %v5008 = vadd.f32 %v4904, %v5004
      %v5009 = vadd.f32 %v4905, %v5005
      %v5010 = vadd.f32 %v4906, %v5006
      %5011 = vrot.lane.b32.xlu0 %v3256, 16
      %v5012 = vpop.permute.xlu0 %5011
      %5013 = vrot.lane.b32.xlu0 %v3260, 16
      %v5014 = vpop.permute.xlu0 %5013
      %5015 = vrot.lane.b32.xlu0 %v3266, 16
      %v5016 = vpop.permute.xlu0 %5015
      %5017 = vrot.lane.b32.xlu0 %v3270, 16
      %v5018 = vpop.permute.xlu0 %5017
      %5019 = vrot.lane.b32.xlu0 %v3331, 16
      %v5020 = vpop.permute.xlu0 %5019
      %5021 = vrot.lane.b32.xlu0 %v3335, 16
      %v5022 = vpop.permute.xlu0 %5021
      %5023 = vrot.lane.b32.xlu0 %v3341, 16
      %v5024 = vpop.permute.xlu0 %5023
      %5025 = vrot.lane.b32.xlu0 %v3345, 16
      %v5026 = vpop.permute.xlu0 %5025
      %5027 = vrot.lane.b32.xlu0 %v3258, 16
      %v5028 = vpop.permute.xlu0 %5027
      %5029 = vrot.lane.b32.xlu0 %v3262, 16
      %v5030 = vpop.permute.xlu0 %5029
      %5031 = vrot.lane.b32.xlu0 %v3268, 16
      %v5032 = vpop.permute.xlu0 %5031
      %5033 = vrot.lane.b32.xlu0 %v3272, 16
      %v5034 = vpop.permute.xlu0 %5033
      %5035 = vrot.lane.b32.xlu0 %v3329, 16
      %v5036 = vpop.permute.xlu0 %5035
      %5037 = vrot.lane.b32.xlu0 %v3333, 16
      %v5038 = vpop.permute.xlu0 %5037
      %5039 = vrot.lane.b32.xlu0 %v3339, 16
      %v5040 = vpop.permute.xlu0 %5039
      %5041 = vrot.lane.b32.xlu0 %v3343, 16
      %v5042 = vpop.permute.xlu0 %5041
      %5043 = vset.pattern.permute.xlu0 16
      %5044 = vperm.xlu0 %5043, %v3347
      %v5045 = vpop.permute.xlu0 %5044
      %5047 = vset.pattern.permute.xlu0 16
      %5048 = vperm.xlu0 %5047, %v3348
      %v5049 = vpop.permute.xlu0 %5048
      %5051 = vset.pattern.permute.xlu0 16
      %5052 = vperm.xlu0 %5051, %v3349
      %v5053 = vpop.permute.xlu0 %5052
      %5055 = vset.pattern.permute.xlu0 16
      %5056 = vperm.xlu0 %5055, %v3350
      %v5057 = vpop.permute.xlu0 %5056
      %v5059 = vmul.f32 %v5045, %v5012
      %v5060 = vmul.f32 %v5049, %v5014
      %v5061 = vmul.f32 %v5053, %v5016
      %v5062 = vmul.f32 %v5057, %v5018
      %5063 = vset.pattern.permute.xlu0 16
      %5064 = vperm.xlu0 %5063, %v3351
      %v5065 = vpop.permute.xlu0 %5064
      %5067 = vset.pattern.permute.xlu0 16
      %5068 = vperm.xlu0 %5067, %v3352
      %v5069 = vpop.permute.xlu0 %5068
      %5071 = vset.pattern.permute.xlu0 16
      %5072 = vperm.xlu0 %5071, %v3353
      %v5073 = vpop.permute.xlu0 %5072
      %5075 = vset.pattern.permute.xlu0 16
      %5076 = vperm.xlu0 %5075, %v3354
      %v5077 = vpop.permute.xlu0 %5076
      %v5079 = vmul.f32 %v5065, %v5020
      %v5080 = vmul.f32 %v5069, %v5022
      %v5081 = vmul.f32 %v5073, %v5024
      %v5082 = vmul.f32 %v5077, %v5026
      %v5083 = vsub.f32 %v5059, %v5079
      %v5084 = vsub.f32 %v5060, %v5080
      %v5085 = vsub.f32 %v5061, %v5081
      %v5086 = vsub.f32 %v5062, %v5082
      %v5087 = vmul.f32 %v5083, %v578
      %v5088 = vmul.f32 %v5084, %v578
      %v5089 = vmul.f32 %v5085, %v578
      %v5090 = vmul.f32 %v5086, %v578
      %v5091 = vadd.f32 %v4987, %v5087
      %v5092 = vadd.f32 %v4988, %v5088
      %v5093 = vadd.f32 %v4989, %v5089
      %v5094 = vadd.f32 %v4990, %v5090
      %v5095 = vmul.f32 %v5045, %v5028
      %v5096 = vmul.f32 %v5049, %v5030
      %v5097 = vmul.f32 %v5053, %v5032
      %v5098 = vmul.f32 %v5057, %v5034
      %v5099 = vmul.f32 %v5065, %v5036
      %v5100 = vmul.f32 %v5069, %v5038
      %v5101 = vmul.f32 %v5073, %v5040
      %v5102 = vmul.f32 %v5077, %v5042
      %v5103 = vadd.f32 %v5095, %v5099
      %v5104 = vadd.f32 %v5096, %v5100
      %v5105 = vadd.f32 %v5097, %v5101
      %v5106 = vadd.f32 %v5098, %v5102
      %v5107 = vmul.f32 %v5103, %v578
      %v5108 = vmul.f32 %v5104, %v578
      %v5109 = vmul.f32 %v5105, %v578
      %v5110 = vmul.f32 %v5106, %v578
      %v5111 = vadd.f32 %v5007, %v5107
      %v5112 = vadd.f32 %v5008, %v5108
      %v5113 = vadd.f32 %v5009, %v5109
      %v5114 = vadd.f32 %v5010, %v5110
      %5115 = vrot.lane.b32.xlu0 %v3256, 17
      %v5116 = vpop.permute.xlu0 %5115
      %5117 = vrot.lane.b32.xlu0 %v3260, 17
      %v5118 = vpop.permute.xlu0 %5117
      %5119 = vrot.lane.b32.xlu0 %v3266, 17
      %v5120 = vpop.permute.xlu0 %5119
      %5121 = vrot.lane.b32.xlu0 %v3270, 17
      %v5122 = vpop.permute.xlu0 %5121
      %5123 = vrot.lane.b32.xlu0 %v3331, 17
      %v5124 = vpop.permute.xlu0 %5123
      %5125 = vrot.lane.b32.xlu0 %v3335, 17
      %v5126 = vpop.permute.xlu0 %5125
      %5127 = vrot.lane.b32.xlu0 %v3341, 17
      %v5128 = vpop.permute.xlu0 %5127
      %5129 = vrot.lane.b32.xlu0 %v3345, 17
      %v5130 = vpop.permute.xlu0 %5129
      %5131 = vrot.lane.b32.xlu0 %v3258, 17
      %v5132 = vpop.permute.xlu0 %5131
      %5133 = vrot.lane.b32.xlu0 %v3262, 17
      %v5134 = vpop.permute.xlu0 %5133
      %5135 = vrot.lane.b32.xlu0 %v3268, 17
      %v5136 = vpop.permute.xlu0 %5135
      %5137 = vrot.lane.b32.xlu0 %v3272, 17
      %v5138 = vpop.permute.xlu0 %5137
      %5139 = vrot.lane.b32.xlu0 %v3329, 17
      %v5140 = vpop.permute.xlu0 %5139
      %5141 = vrot.lane.b32.xlu0 %v3333, 17
      %v5142 = vpop.permute.xlu0 %5141
      %5143 = vrot.lane.b32.xlu0 %v3339, 17
      %v5144 = vpop.permute.xlu0 %5143
      %5145 = vrot.lane.b32.xlu0 %v3343, 17
      %v5146 = vpop.permute.xlu0 %5145
      %5147 = vset.pattern.permute.xlu0 17
      %5148 = vperm.xlu0 %5147, %v3347
      %v5149 = vpop.permute.xlu0 %5148
      %5151 = vset.pattern.permute.xlu0 17
      %5152 = vperm.xlu0 %5151, %v3348
      %v5153 = vpop.permute.xlu0 %5152
      %5155 = vset.pattern.permute.xlu0 17
      %5156 = vperm.xlu0 %5155, %v3349
      %v5157 = vpop.permute.xlu0 %5156
      %5159 = vset.pattern.permute.xlu0 17
      %5160 = vperm.xlu0 %5159, %v3350
      %v5161 = vpop.permute.xlu0 %5160
      %v5163 = vmul.f32 %v5149, %v5116
      %v5164 = vmul.f32 %v5153, %v5118
      %v5165 = vmul.f32 %v5157, %v5120
      %v5166 = vmul.f32 %v5161, %v5122
      %5167 = vset.pattern.permute.xlu0 17
      %5168 = vperm.xlu0 %5167, %v3351
      %v5169 = vpop.permute.xlu0 %5168
      %5171 = vset.pattern.permute.xlu0 17
      %5172 = vperm.xlu0 %5171, %v3352
      %v5173 = vpop.permute.xlu0 %5172
      %5175 = vset.pattern.permute.xlu0 17
      %5176 = vperm.xlu0 %5175, %v3353
      %v5177 = vpop.permute.xlu0 %5176
      %5179 = vset.pattern.permute.xlu0 17
      %5180 = vperm.xlu0 %5179, %v3354
      %v5181 = vpop.permute.xlu0 %5180
      %v5183 = vmul.f32 %v5169, %v5124
      %v5184 = vmul.f32 %v5173, %v5126
      %v5185 = vmul.f32 %v5177, %v5128
      %v5186 = vmul.f32 %v5181, %v5130
      %v5187 = vsub.f32 %v5163, %v5183
      %v5188 = vsub.f32 %v5164, %v5184
      %v5189 = vsub.f32 %v5165, %v5185
      %v5190 = vsub.f32 %v5166, %v5186
      %v5191 = vmul.f32 %v5187, %v581
      %v5192 = vmul.f32 %v5188, %v581
      %v5193 = vmul.f32 %v5189, %v581
      %v5194 = vmul.f32 %v5190, %v581
      %v5195 = vadd.f32 %v5091, %v5191
      %v5196 = vadd.f32 %v5092, %v5192
      %v5197 = vadd.f32 %v5093, %v5193
      %v5198 = vadd.f32 %v5094, %v5194
      %v5199 = vmul.f32 %v5149, %v5132
      %v5200 = vmul.f32 %v5153, %v5134
      %v5201 = vmul.f32 %v5157, %v5136
      %v5202 = vmul.f32 %v5161, %v5138
      %v5203 = vmul.f32 %v5169, %v5140
      %v5204 = vmul.f32 %v5173, %v5142
      %v5205 = vmul.f32 %v5177, %v5144
      %v5206 = vmul.f32 %v5181, %v5146
      %v5207 = vadd.f32 %v5199, %v5203
      %v5208 = vadd.f32 %v5200, %v5204
      %v5209 = vadd.f32 %v5201, %v5205
      %v5210 = vadd.f32 %v5202, %v5206
      %v5211 = vmul.f32 %v5207, %v581
      %v5212 = vmul.f32 %v5208, %v581
      %v5213 = vmul.f32 %v5209, %v581
      %v5214 = vmul.f32 %v5210, %v581
      %v5215 = vadd.f32 %v5111, %v5211
      %v5216 = vadd.f32 %v5112, %v5212
      %v5217 = vadd.f32 %v5113, %v5213
      %v5218 = vadd.f32 %v5114, %v5214
      %5219 = vrot.lane.b32.xlu0 %v3256, 18
      %v5220 = vpop.permute.xlu0 %5219
      %5221 = vrot.lane.b32.xlu0 %v3260, 18
      %v5222 = vpop.permute.xlu0 %5221
      %5223 = vrot.lane.b32.xlu0 %v3266, 18
      %v5224 = vpop.permute.xlu0 %5223
      %5225 = vrot.lane.b32.xlu0 %v3270, 18
      %v5226 = vpop.permute.xlu0 %5225
      %5227 = vrot.lane.b32.xlu0 %v3331, 18
      %v5228 = vpop.permute.xlu0 %5227
      %5229 = vrot.lane.b32.xlu0 %v3335, 18
      %v5230 = vpop.permute.xlu0 %5229
      %5231 = vrot.lane.b32.xlu0 %v3341, 18
      %v5232 = vpop.permute.xlu0 %5231
      %5233 = vrot.lane.b32.xlu0 %v3345, 18
      %v5234 = vpop.permute.xlu0 %5233
      %5235 = vrot.lane.b32.xlu0 %v3258, 18
      %v5236 = vpop.permute.xlu0 %5235
      %5237 = vrot.lane.b32.xlu0 %v3262, 18
      %v5238 = vpop.permute.xlu0 %5237
      %5239 = vrot.lane.b32.xlu0 %v3268, 18
      %v5240 = vpop.permute.xlu0 %5239
      %5241 = vrot.lane.b32.xlu0 %v3272, 18
      %v5242 = vpop.permute.xlu0 %5241
      %5243 = vrot.lane.b32.xlu0 %v3329, 18
      %v5244 = vpop.permute.xlu0 %5243
      %5245 = vrot.lane.b32.xlu0 %v3333, 18
      %v5246 = vpop.permute.xlu0 %5245
      %5247 = vrot.lane.b32.xlu0 %v3339, 18
      %v5248 = vpop.permute.xlu0 %5247
      %5249 = vrot.lane.b32.xlu0 %v3343, 18
      %v5250 = vpop.permute.xlu0 %5249
      %5251 = vset.pattern.permute.xlu0 18
      %5252 = vperm.xlu0 %5251, %v3347
      %v5253 = vpop.permute.xlu0 %5252
      %5255 = vset.pattern.permute.xlu0 18
      %5256 = vperm.xlu0 %5255, %v3348
      %v5257 = vpop.permute.xlu0 %5256
      %5259 = vset.pattern.permute.xlu0 18
      %5260 = vperm.xlu0 %5259, %v3349
      %v5261 = vpop.permute.xlu0 %5260
      %5263 = vset.pattern.permute.xlu0 18
      %5264 = vperm.xlu0 %5263, %v3350
      %v5265 = vpop.permute.xlu0 %5264
      %v5267 = vmul.f32 %v5253, %v5220
      %v5268 = vmul.f32 %v5257, %v5222
      %v5269 = vmul.f32 %v5261, %v5224
      %v5270 = vmul.f32 %v5265, %v5226
      %5271 = vset.pattern.permute.xlu0 18
      %5272 = vperm.xlu0 %5271, %v3351
      %v5273 = vpop.permute.xlu0 %5272
      %5275 = vset.pattern.permute.xlu0 18
      %5276 = vperm.xlu0 %5275, %v3352
      %v5277 = vpop.permute.xlu0 %5276
      %5279 = vset.pattern.permute.xlu0 18
      %5280 = vperm.xlu0 %5279, %v3353
      %v5281 = vpop.permute.xlu0 %5280
      %5283 = vset.pattern.permute.xlu0 18
      %5284 = vperm.xlu0 %5283, %v3354
      %v5285 = vpop.permute.xlu0 %5284
      %v5287 = vmul.f32 %v5273, %v5228
      %v5288 = vmul.f32 %v5277, %v5230
      %v5289 = vmul.f32 %v5281, %v5232
      %v5290 = vmul.f32 %v5285, %v5234
      %v5291 = vsub.f32 %v5267, %v5287
      %v5292 = vsub.f32 %v5268, %v5288
      %v5293 = vsub.f32 %v5269, %v5289
      %v5294 = vsub.f32 %v5270, %v5290
      %v5295 = vmul.f32 %v5291, %v584
      %v5296 = vmul.f32 %v5292, %v584
      %v5297 = vmul.f32 %v5293, %v584
      %v5298 = vmul.f32 %v5294, %v584
      %v5299 = vadd.f32 %v5195, %v5295
      %v5300 = vadd.f32 %v5196, %v5296
      %v5301 = vadd.f32 %v5197, %v5297
      %v5302 = vadd.f32 %v5198, %v5298
      %v5303 = vmul.f32 %v5253, %v5236
      %v5304 = vmul.f32 %v5257, %v5238
      %v5305 = vmul.f32 %v5261, %v5240
      %v5306 = vmul.f32 %v5265, %v5242
      %v5307 = vmul.f32 %v5273, %v5244
      %v5308 = vmul.f32 %v5277, %v5246
      %v5309 = vmul.f32 %v5281, %v5248
      %v5310 = vmul.f32 %v5285, %v5250
      %v5311 = vadd.f32 %v5303, %v5307
      %v5312 = vadd.f32 %v5304, %v5308
      %v5313 = vadd.f32 %v5305, %v5309
      %v5314 = vadd.f32 %v5306, %v5310
      %v5315 = vmul.f32 %v5311, %v584
      %v5316 = vmul.f32 %v5312, %v584
      %v5317 = vmul.f32 %v5313, %v584
      %v5318 = vmul.f32 %v5314, %v584
      %v5319 = vadd.f32 %v5215, %v5315
      %v5320 = vadd.f32 %v5216, %v5316
      %v5321 = vadd.f32 %v5217, %v5317
      %v5322 = vadd.f32 %v5218, %v5318
      %5323 = vrot.lane.b32.xlu0 %v3256, 19
      %v5324 = vpop.permute.xlu0 %5323
      %5325 = vrot.lane.b32.xlu0 %v3260, 19
      %v5326 = vpop.permute.xlu0 %5325
      %5327 = vrot.lane.b32.xlu0 %v3266, 19
      %v5328 = vpop.permute.xlu0 %5327
      %5329 = vrot.lane.b32.xlu0 %v3270, 19
      %v5330 = vpop.permute.xlu0 %5329
      %5331 = vrot.lane.b32.xlu0 %v3331, 19
      %v5332 = vpop.permute.xlu0 %5331
      %5333 = vrot.lane.b32.xlu0 %v3335, 19
      %v5334 = vpop.permute.xlu0 %5333
      %5335 = vrot.lane.b32.xlu0 %v3341, 19
      %v5336 = vpop.permute.xlu0 %5335
      %5337 = vrot.lane.b32.xlu0 %v3345, 19
      %v5338 = vpop.permute.xlu0 %5337
      %5339 = vrot.lane.b32.xlu0 %v3258, 19
      %v5340 = vpop.permute.xlu0 %5339
      %5341 = vrot.lane.b32.xlu0 %v3262, 19
      %v5342 = vpop.permute.xlu0 %5341
      %5343 = vrot.lane.b32.xlu0 %v3268, 19
      %v5344 = vpop.permute.xlu0 %5343
      %5345 = vrot.lane.b32.xlu0 %v3272, 19
      %v5346 = vpop.permute.xlu0 %5345
      %5347 = vrot.lane.b32.xlu0 %v3329, 19
      %v5348 = vpop.permute.xlu0 %5347
      %5349 = vrot.lane.b32.xlu0 %v3333, 19
      %v5350 = vpop.permute.xlu0 %5349
      %5351 = vrot.lane.b32.xlu0 %v3339, 19
      %v5352 = vpop.permute.xlu0 %5351
      %5353 = vrot.lane.b32.xlu0 %v3343, 19
      %v5354 = vpop.permute.xlu0 %5353
      %5355 = vset.pattern.permute.xlu0 19
      %5356 = vperm.xlu0 %5355, %v3347
      %v5357 = vpop.permute.xlu0 %5356
      %5359 = vset.pattern.permute.xlu0 19
      %5360 = vperm.xlu0 %5359, %v3348
      %v5361 = vpop.permute.xlu0 %5360
      %5363 = vset.pattern.permute.xlu0 19
      %5364 = vperm.xlu0 %5363, %v3349
      %v5365 = vpop.permute.xlu0 %5364
      %5367 = vset.pattern.permute.xlu0 19
      %5368 = vperm.xlu0 %5367, %v3350
      %v5369 = vpop.permute.xlu0 %5368
      %v5371 = vmul.f32 %v5357, %v5324
      %v5372 = vmul.f32 %v5361, %v5326
      %v5373 = vmul.f32 %v5365, %v5328
      %v5374 = vmul.f32 %v5369, %v5330
      %5375 = vset.pattern.permute.xlu0 19
      %5376 = vperm.xlu0 %5375, %v3351
      %v5377 = vpop.permute.xlu0 %5376
      %5379 = vset.pattern.permute.xlu0 19
      %5380 = vperm.xlu0 %5379, %v3352
      %v5381 = vpop.permute.xlu0 %5380
      %5383 = vset.pattern.permute.xlu0 19
      %5384 = vperm.xlu0 %5383, %v3353
      %v5385 = vpop.permute.xlu0 %5384
      %5387 = vset.pattern.permute.xlu0 19
      %5388 = vperm.xlu0 %5387, %v3354
      %v5389 = vpop.permute.xlu0 %5388
      %v5391 = vmul.f32 %v5377, %v5332
      %v5392 = vmul.f32 %v5381, %v5334
      %v5393 = vmul.f32 %v5385, %v5336
      %v5394 = vmul.f32 %v5389, %v5338
      %v5395 = vsub.f32 %v5371, %v5391
      %v5396 = vsub.f32 %v5372, %v5392
      %v5397 = vsub.f32 %v5373, %v5393
      %v5398 = vsub.f32 %v5374, %v5394
      %v5399 = vmul.f32 %v5395, %v587
      %v5400 = vmul.f32 %v5396, %v587
      %v5401 = vmul.f32 %v5397, %v587
      %v5402 = vmul.f32 %v5398, %v587
      %v5403 = vadd.f32 %v5299, %v5399
      %v5404 = vadd.f32 %v5300, %v5400
      %v5405 = vadd.f32 %v5301, %v5401
      %v5406 = vadd.f32 %v5302, %v5402
      %v5407 = vmul.f32 %v5357, %v5340
      %v5408 = vmul.f32 %v5361, %v5342
      %v5409 = vmul.f32 %v5365, %v5344
      %v5410 = vmul.f32 %v5369, %v5346
      %v5411 = vmul.f32 %v5377, %v5348
      %v5412 = vmul.f32 %v5381, %v5350
      %v5413 = vmul.f32 %v5385, %v5352
      %v5414 = vmul.f32 %v5389, %v5354
      %v5415 = vadd.f32 %v5407, %v5411
      %v5416 = vadd.f32 %v5408, %v5412
      %v5417 = vadd.f32 %v5409, %v5413
      %v5418 = vadd.f32 %v5410, %v5414
      %v5419 = vmul.f32 %v5415, %v587
      %v5420 = vmul.f32 %v5416, %v587
      %v5421 = vmul.f32 %v5417, %v587
      %v5422 = vmul.f32 %v5418, %v587
      %v5423 = vadd.f32 %v5319, %v5419
      %v5424 = vadd.f32 %v5320, %v5420
      %v5425 = vadd.f32 %v5321, %v5421
      %v5426 = vadd.f32 %v5322, %v5422
      %5427 = vst [vmem:[%s522] sm:$0xff] %v5403
      %5428 = vst [vmem:[%s522 + $0x8] sm:$0xff] %v5404
      %5429 = vst [vmem:[%s522 + $0x10] sm:$0xff] %v5405
      %5430 = vst [vmem:[%s522 + $0x18] sm:$0xff] %v5406
      %5431 = vst [vmem:[%s527] sm:$0xff] %v5423
      %5432 = vst [vmem:[%s527 + $0x8] sm:$0xff] %v5424
      %5433 = vst [vmem:[%s527 + $0x10] sm:$0xff] %v5425
      %5434 = vst [vmem:[%s527 + $0x18] sm:$0xff] %v5426
      %p5435 = scmp.lt.s32.totalorder %s27, 1
      %s5436 = scalar_select %p5435, %s27, 1
      %s5437 = smul.addr %s5436, 4
      %s5438 = smul.addr %s5437, 8
      %s5439 = scalar_lea.vmem %s14, %s5438
      %p5440 = scmp.lt.s32.totalorder %s27, 1
      %s5441 = scalar_select %p5440, %s27, 1
      %s5442 = smul.addr %s5441, 4
      %s5443 = smul.addr %s5442, 8
      %s5444 = scalar_lea.vmem %s15, %s5443
      // Predicated region
      $region77: #{complex_uni_deep_fsmn.1} parent=75 // pred_check
        %p5445 = pneg %p349
      $region78: #{complex_uni_deep_fsmn.1} parent=75 // pred_check_branch
        %5447 = sbr.rel (%p5445) target = $region80
      $region79: #{complex_uni_deep_fsmn.1} parent=75 // pred_region
        _
      $region80: #{complex_uni_deep_fsmn.1} parent=75 // pred_fallthru
        _
      // Predicated region
      $region81: #{complex_uni_deep_fsmn.1} parent=75 // pred_check
        %p5448 = pneg %p375
      $region82: #{complex_uni_deep_fsmn.1} parent=75 // pred_check_branch
        %5450 = sbr.rel (%p5448) target = $region84
      $region83: #{complex_uni_deep_fsmn.1} parent=75 // pred_region
        _
      $region84: #{complex_uni_deep_fsmn.1} parent=75 // pred_fallthru
        _
    $region76: #{complex_uni_deep_fsmn.1} parent=5 // pred_fallthru
      _
    %p5451 = scmp.le.s32.totalorder 2, %s22
    // Predicated region
    $region85: #{complex_uni_deep_fsmn.1} parent=5 // pred_check
      %p5452 = pneg %p5451
    $region86: #{complex_uni_deep_fsmn.1} parent=5 // pred_check_branch
      %5454 = sbr.rel (%p5452) target = $region88
    $region87: #{complex_uni_deep_fsmn.1} parent=5 // pred_region
      %s5455 = ssub.s32 %s22, 2
      // Predicated region
      $region89: #{complex_uni_deep_fsmn.1} parent=87 // pred_check
        %p5456 = pneg %p355
      $region90: #{complex_uni_deep_fsmn.1} parent=87 // pred_check_branch
        %5458 = sbr.rel (%p5456) target = $region92
      $region91: #{complex_uni_deep_fsmn.1} parent=87 // pred_region
        %p5459 = scmp.lt.s32.totalorder %s28, 1
        %s5460 = scalar_select %p5459, %s28, 1
        %s5461 = smul.addr %s5460, 4
        %s5462 = smul.addr %s5461, 8
        %s5463 = scalar_lea.vmem %s14, %s5462
      $region92: #{complex_uni_deep_fsmn.1} parent=87 // pred_fallthru
        _
      // Predicated region
      $region93: #{complex_uni_deep_fsmn.1} parent=87 // pred_check
        %p5464 = pneg %p381
      $region94: #{complex_uni_deep_fsmn.1} parent=87 // pred_check_branch
        %5466 = sbr.rel (%p5464) target = $region96
      $region95: #{complex_uni_deep_fsmn.1} parent=87 // pred_region
        %p5467 = scmp.lt.s32.totalorder %s28, 1
        %s5468 = scalar_select %p5467, %s28, 1
        %s5469 = smul.addr %s5468, 4
        %s5470 = smul.addr %s5469, 8
        %s5471 = scalar_lea.vmem %s15, %s5470
      $region96: #{complex_uni_deep_fsmn.1} parent=87 // pred_fallthru
        _
    $region88: #{complex_uni_deep_fsmn.1} parent=5 // pred_fallthru
      _
  $region6: #{complex_uni_deep_fsmn.1} parent=0 // loop_footer
    %s26 = sadd.s32 1, %s22
  $region7: #{complex_uni_deep_fsmn.1} parent=0 // loop_footer_branch
    %21 = sbr.rel target = $region3
  $region8: #{complex_uni_deep_fsmn.1} parent=0 // loop_exit
    _

</llo_original>
